<compile_context>
chip_gen: v6e
topology: v6e:2x2x1
jax: 0.10.0
libtpu: 0.0.40
codegen_flags: <defaults>
</compile_context>

<pallas_src>
import jax
import jax.numpy as jnp
from jax.experimental import pallas as pl
from jax.experimental.pallas import tpu as pltpu

IRREP = (2, 2)                 # multiplicities for l = 0, 1 (the `irrep` arg)
M0, M1 = IRREP
C_FEAT = M0 + 3 * M1           # point / voxel feature channels (= 8)
C_GATE = C_FEAT + M1           # conv output channels incl. gate scalars (= 10)
KSIZE = 3
VOXEL_DIM = 8                  # voxel_num_limit = [8, 8, 8] (small synthetic)
NVOX = VOXEL_DIM ** 3          # 512 voxels -> lane-dense
UNIT_EXTENT = 0.25             # unit_voxel_extent
HALF_EXTENT = 0.5 * VOXEL_DIM * UNIT_EXTENT
TN = 256                       # point tile (lanes)
PK_ROWS = 24                   # packed rows: p(3) t(3) s(1) valid(1) | r(9) | pad(7)
AUG = 16                       # rotated feats(8) + count row(1) + pad(7)
K_DIM = KSIZE ** 3 * C_FEAT    # 216 im2col rows, ordered offset-major / cin-minor


def _fsm_kernel(pk_ref, f_ref, w1_ref, w2_ref, gb1_ref, gb2_ref,
                np_ref, flag_ref, vox_ref, acc_ref, patch_ref):
    step = pl.program_id(0)

    pk = pk_ref[...]                                    # (24, TN)
    f = f_ref[...]                                      # (C_FEAT, TN)
    diff = pk[0:3] - pk[3:6]                            # p - t            (3, TN)
    inv_s = pl.reciprocal(pk[6:7] + 1e-8, approx=True)  # 1/(s + eps)      (1, TN)
    valid = pk[7:8]                                     # 1 for real points
    r0, r1, r2 = pk[8:11], pk[11:14], pk[14:17]         # r rows, sublane-8 aligned

    # new_p[j] = sum_i (p - t)_i * r[i, j]  ==  (p - t) @ r  (PyTorch convention)
    new_p = (diff[0:1] * r0 + diff[1:2] * r1 + diff[2:3] * r2) * inv_s
    np_ref[...] = new_p

    # Block-diagonal Wigner-D: l=0 scalars pass through, each l=1 triplet @ r.
    # TODO(synk): exact real-SH D_from_matrix basis not reproduced.
    trips = [f[M0 + 3 * k:M0 + 3 * k + 1] * r0
             + f[M0 + 3 * k + 1:M0 + 3 * k + 2] * r1
             + f[M0 + 3 * k + 2:M0 + 3 * k + 3] * r2 for k in range(M1)]

    # Voxelization (Point2Voxel scatter-mean) as a one-hot MXU matmul.
    idx = jnp.floor((new_p + HALF_EXTENT) * (1.0 / UNIT_EXTENT)).astype(jnp.int32)
    i0, i1, i2 = idx[0:1], idx[1:2], idx[2:3]
    inb = ((i0 >= 0) & (i0 < VOXEL_DIM) & (i1 >= 0) & (i1 < VOXEL_DIM)
           & (i2 >= 0) & (i2 < VOXEL_DIM) & (valid > 0.5))
    flag_ref[...] = inb.astype(jnp.float32)
    flat = jnp.where(inb, i0 * (VOXEL_DIM * VOXEL_DIM) + i1 * VOXEL_DIM + i2, -1)
    vix = jax.lax.broadcasted_iota(jnp.int32, (NVOX, TN), 0)
    onehot = (vix == flat).astype(jnp.float32)          # (NVOX, TN)

    f_aug = jnp.concatenate(
        [f[0:M0]] + trips
        + [jnp.ones((1, TN), jnp.float32),
           jnp.zeros((AUG - C_FEAT - 1, TN), jnp.float32)], axis=0)   # (AUG, TN)
    contrib = jax.lax.dot_general(                      # (AUG, NVOX) feat sums + counts
        f_aug, onehot, (((1,), (1,)), ((), ())),
        preferred_element_type=jnp.float32)

    @pl.when(step == 0)
    def _():
        acc_ref[...] = jnp.zeros_like(acc_ref)

    acc_ref[...] += contrib

    @pl.when(step == pl.num_programs(0) - 1)
    def _():
        cnt = acc_ref[C_FEAT:C_FEAT + 1, :]
        vox = acc_ref[0:C_FEAT, :] / jnp.maximum(cnt, 1.0)   # mean; empty voxel -> 0

        lane = jax.lax.broadcasted_iota(jnp.int32, (1, NVOX), 1)
        ipos, jpos, kpos = lane >> 6, (lane >> 3) & 7, lane & 7

        def conv_bn_gate(x, w_ref, gb_ref):
            # 3x3x3 conv (padding=1): in-kernel im2col via lane rolls + masks,
            # then one (C_GATE, K_DIM) x (K_DIM, NVOX) MXU matmul.
            for a in range(KSIZE):
                for b in range(KSIZE):
                    for c in range(KSIZE):
                        m = (a * KSIZE + b) * KSIZE + c
                        d = ((a - 1) * VOXEL_DIM * VOXEL_DIM
                             + (b - 1) * VOXEL_DIM + (c - 1))
                        sh = x if d == 0 else pltpu.roll(x, shift=(-d) % NVOX, axis=1)
                        ia, jb, kc = ipos + (a - 1), jpos + (b - 1), kpos + (c - 1)
                        msk = ((ia >= 0) & (ia < VOXEL_DIM)
                               & (jb >= 0) & (jb < VOXEL_DIM)
                               & (kc >= 0) & (kc < VOXEL_DIM)).astype(jnp.float32)
                        patch_ref[m * C_FEAT:(m + 1) * C_FEAT, :] = sh * msk
            y = jnp.dot(w_ref[...], patch_ref[...],
                        preferred_element_type=jnp.float32)          # (C_GATE, NVOX)
            # BatchNorm over the voxel axis (batch stats, centered variance).
            # TODO(synk): running-statistics (eval-mode) BatchNorm not reproduced.
            mean = jnp.sum(y, axis=1, keepdims=True) * (1.0 / NVOX)
            yc = y - mean
            var = jnp.sum(yc * yc, axis=1, keepdims=True) * (1.0 / NVOX)
            ybn = yc * (gb_ref[:, 0:1] * jax.lax.rsqrt(var + 1e-5)) + gb_ref[:, 1:2]
            # Gated activation: relu on l=0 scalars, sigmoid gates on l=1 triplets.
            parts = [jnp.maximum(ybn[0:M0], 0.0)]
            for k in range(M1):
                g = jax.nn.sigmoid(ybn[C_FEAT + k:C_FEAT + k + 1])
                parts.append(ybn[M0 + 3 * k:M0 + 3 * k + 3] * g)
            return jnp.concatenate(parts, axis=0)                    # (C_FEAT, NVOX)

        # TODO(synk): conv2 is subm=True (submanifold sparse conv) in the
        # reference; dense stand-in uses a regular conv over the full grid.
        # Irrep-wise Dropout omitted (eval-mode semantics).
        y1 = conv_bn_gate(vox, w1_ref, gb1_ref)
        vox_ref[...] = conv_bn_gate(y1, w2_ref, gb2_ref)


def feature_steering_forward(points, feats, ids, r, t, s, params):
    n = points.shape[0]
    n_pad = pl.cdiv(n, TN) * TN

    r_pt = r[ids].reshape(n, 9)          # r[ids, :, :], row-major: r[i, j] at 3*i + j
    t_pt = t[ids]                        # t[ids, :]
    s_pt = s[ids].reshape(n, 1)          # s[ids]
    base = jnp.concatenate(
        [points, t_pt, s_pt, jnp.ones((n, 1), jnp.float32), r_pt], axis=1)    # (n, 17)
    packed = jnp.pad(base, ((0, n_pad - n), (0, PK_ROWS - base.shape[1]))).T  # (24, Npad)
    feats_cm = jnp.pad(feats, ((0, n_pad - n), (0, 0))).T                     # (C, Npad)

    # TODO(synk): se3cnn equivariant kernel basis (radial window x spherical
    # harmonics) not reproduced; dense weights, columns ordered offset-major /
    # cin-minor to match the in-kernel im2col.
    w1 = jnp.transpose(params["w1"], (0, 2, 3, 4, 1)).reshape(C_GATE, K_DIM)
    w2 = jnp.transpose(params["w2"], (0, 2, 3, 4, 1)).reshape(C_GATE, K_DIM)
    gb1 = jnp.stack([params["g1"], params["b1"]], axis=1)                     # (C_GATE, 2)
    gb2 = jnp.stack([params["g2"], params["b2"]], axis=1)

    new_p_cm, flag_f, vox = pl.pallas_call(
        _fsm_kernel,
        out_shape=(jax.ShapeDtypeStruct((3, n_pad), jnp.float32),
                   jax.ShapeDtypeStruct((1, n_pad), jnp.float32),
                   jax.ShapeDtypeStruct((C_FEAT, NVOX), jnp.float32)),
        grid_spec=pltpu.PrefetchScalarGridSpec(
            num_scalar_prefetch=0, grid=(n_pad // TN,),
            in_specs=[pl.BlockSpec((PK_ROWS, TN), lambda i: (0, i)),
                      pl.BlockSpec((C_FEAT, TN), lambda i: (0, i)),
                      pl.BlockSpec((C_GATE, K_DIM), lambda i: (0, 0)),
                      pl.BlockSpec((C_GATE, K_DIM), lambda i: (0, 0)),
                      pl.BlockSpec((C_GATE, 2), lambda i: (0, 0)),
                      pl.BlockSpec((C_GATE, 2), lambda i: (0, 0))],
            out_specs=[pl.BlockSpec((3, TN), lambda i: (0, i)),
                       pl.BlockSpec((1, TN), lambda i: (0, i)),
                       pl.BlockSpec((C_FEAT, NVOX), lambda i: (0, 0))],
            scratch_shapes=[pltpu.VMEM((AUG, NVOX), jnp.float32),
                            pltpu.VMEM((K_DIM, NVOX), jnp.float32)]),
        compiler_params=pltpu.CompilerParams(
            # voxel accumulation makes the point-tile axis a reduction axis
            dimension_semantics=("arbitrary",)),
    )(packed, feats_cm, w1, w2, gb1, gb2)

    valid_points = new_p_cm[:, :n].T                 # (N, 3)
    flag = flag_f[0, :n] > 0.5                       # (N,) bool
    voxel_feats = vox.reshape(C_FEAT, VOXEL_DIM, VOXEL_DIM, VOXEL_DIM)
    # `if torch.sum(flag) > 0:` — convs always applied (empty grid is all zeros).
    # Dense semantics: keep all N rows and return `flag` instead of filtering M<N.
    return valid_points, voxel_feats, ids, flag


if __name__ == "__main__":
    key = jax.random.PRNGKey(0)
    kp, kf, ki, kr, kt, ks, kw1, kw2 = jax.random.split(key, 8)
    N, B = 200, 2
    points = jax.random.uniform(kp, (N, 3), jnp.float32, -0.8, 0.8)
    feats = jax.random.normal(kf, (N, C_FEAT), jnp.float32)
    ids = jax.random.randint(ki, (N,), 0, B)
    rmats = jnp.linalg.qr(jax.random.normal(kr, (B, 3, 3), jnp.float32))[0]
    t = 0.1 * jax.random.normal(kt, (B, 3), jnp.float32)
    s = 1.0 + 0.05 * jax.random.normal(ks, (B,), jnp.float32)
    params = {
        "w1": 0.1 * jax.random.normal(kw1, (C_GATE, C_FEAT, KSIZE, KSIZE, KSIZE), jnp.float32),
        "w2": 0.1 * jax.random.normal(kw2, (C_GATE, C_FEAT, KSIZE, KSIZE, KSIZE), jnp.float32),
        "g1": jnp.ones((C_GATE,), jnp.float32),
        "b1": jnp.zeros((C_GATE,), jnp.float32),
        "g2": jnp.ones((C_GATE,), jnp.float32),
        "b2": jnp.zeros((C_GATE,), jnp.float32),
    }
    outs = jax.jit(feature_steering_forward)(points, feats, ids, rmats, t, s, params)
    jax.block_until_ready(outs)
    print("KERNEL_OK")
</pallas_src>

<mosaic_0001>
module attributes {stable_mosaic.version = 11 : i64} {
  func.func @_fsm_kernel(%arg0: i32, %arg1: memref<24x256xf32, #tpu.memory_space<vmem>>, %arg2: memref<8x256xf32, #tpu.memory_space<vmem>>, %arg3: memref<10x216xf32, #tpu.memory_space<vmem>>, %arg4: memref<10x216xf32, #tpu.memory_space<vmem>>, %arg5: memref<10x2xf32, #tpu.memory_space<vmem>>, %arg6: memref<10x2xf32, #tpu.memory_space<vmem>>, %arg7: memref<3x256xf32, #tpu.memory_space<vmem>>, %arg8: memref<1x256xf32, #tpu.memory_space<vmem>>, %arg9: memref<8x512xf32, #tpu.memory_space<vmem>>, %arg10: memref<16x512xf32, #tpu.memory_space<vmem>>, %arg11: memref<216x512xf32, #tpu.memory_space<vmem>>) attributes {dimension_semantics = [#tpu.dimension_semantics<arbitrary>], iteration_bounds = array<i64: 1>, scalar_prefetch = 0 : i64, scratch_operands = 2 : i64, tpu.core_type = #tpu.core_type<tc>, window_params = [{transform_indices = @transform_0, window_bounds = array<i64: 24, 256>}, {transform_indices = @transform_1, window_bounds = array<i64: 8, 256>}, {pipeline_mode = #tpu.pipeline_mode<synchronous>, transform_indices = @transform_2, window_bounds = array<i64: 10, 216>}, {pipeline_mode = #tpu.pipeline_mode<synchronous>, transform_indices = @transform_3, window_bounds = array<i64: 10, 216>}, {pipeline_mode = #tpu.pipeline_mode<synchronous>, transform_indices = @transform_4, window_bounds = array<i64: 10, 2>}, {pipeline_mode = #tpu.pipeline_mode<synchronous>, transform_indices = @transform_5, window_bounds = array<i64: 10, 2>}, {transform_indices = @transform_6, window_bounds = array<i64: 3, 256>}, {transform_indices = @transform_7, window_bounds = array<i64: 1, 256>}, {pipeline_mode = #tpu.pipeline_mode<synchronous>, transform_indices = @transform_8, window_bounds = array<i64: 8, 512>}]} {
    %c0 = arith.constant 0 : index
    %c0_0 = arith.constant 0 : index
    %0 = vector.load %arg1[%c0, %c0_0] : memref<24x256xf32, #tpu.memory_space<vmem>>, vector<24x256xf32>
    %c0_1 = arith.constant 0 : index
    %c0_2 = arith.constant 0 : index
    %1 = vector.load %arg2[%c0_1, %c0_2] : memref<8x256xf32, #tpu.memory_space<vmem>>, vector<8x256xf32>
    %2 = vector.extract_strided_slice %0 {offsets = [0, 0], sizes = [3, 256], strides = [1, 1]} : vector<24x256xf32> to vector<3x256xf32>
    %3 = vector.extract_strided_slice %0 {offsets = [3, 0], sizes = [3, 256], strides = [1, 1]} : vector<24x256xf32> to vector<3x256xf32>
    %4 = arith.subf %2, %3 : vector<3x256xf32>
    %5 = vector.extract_strided_slice %0 {offsets = [6, 0], sizes = [1, 256], strides = [1, 1]} : vector<24x256xf32> to vector<1x256xf32>
    %cst = arith.constant 9.99999993E-9 : f32
    %6 = vector.broadcast %cst : f32 to vector<1x256xf32>
    %7 = arith.addf %5, %6 : vector<1x256xf32>
    %8 = tpu.reciprocal %7 {approx = true} : vector<1x256xf32> -> vector<1x256xf32>
    %9 = vector.extract_strided_slice %0 {offsets = [7, 0], sizes = [1, 256], strides = [1, 1]} : vector<24x256xf32> to vector<1x256xf32>
    %10 = vector.extract_strided_slice %0 {offsets = [8, 0], sizes = [3, 256], strides = [1, 1]} : vector<24x256xf32> to vector<3x256xf32>
    %11 = vector.extract_strided_slice %0 {offsets = [11, 0], sizes = [3, 256], strides = [1, 1]} : vector<24x256xf32> to vector<3x256xf32>
    %12 = vector.extract_strided_slice %0 {offsets = [14, 0], sizes = [3, 256], strides = [1, 1]} : vector<24x256xf32> to vector<3x256xf32>
    %13 = vector.extract_strided_slice %4 {offsets = [0, 0], sizes = [1, 256], strides = [1, 1]} : vector<3x256xf32> to vector<1x256xf32>
    %14 = vector.broadcast %13 : vector<1x256xf32> to vector<3x256xf32>
    %15 = arith.mulf %14, %10 : vector<3x256xf32>
    %16 = vector.extract_strided_slice %4 {offsets = [1, 0], sizes = [1, 256], strides = [1, 1]} : vector<3x256xf32> to vector<1x256xf32>
    %17 = vector.broadcast %16 : vector<1x256xf32> to vector<3x256xf32>
    %18 = arith.mulf %17, %11 : vector<3x256xf32>
    %19 = arith.addf %15, %18 : vector<3x256xf32>
    %20 = vector.extract_strided_slice %4 {offsets = [2, 0], sizes = [1, 256], strides = [1, 1]} : vector<3x256xf32> to vector<1x256xf32>
    %21 = vector.broadcast %20 : vector<1x256xf32> to vector<3x256xf32>
    %22 = arith.mulf %21, %12 : vector<3x256xf32>
    %23 = arith.addf %19, %22 : vector<3x256xf32>
    %24 = vector.broadcast %8 : vector<1x256xf32> to vector<3x256xf32>
    %25 = arith.mulf %23, %24 : vector<3x256xf32>
    %c0_3 = arith.constant 0 : index
    %c0_4 = arith.constant 0 : index
    %26 = vector.load %arg7[%c0_3, %c0_4] : memref<3x256xf32, #tpu.memory_space<vmem>>, vector<3x256xf32>
    tpu.vector_store %arg7[%c0_3, %c0_4], %25 {strides = array<i32>} : memref<3x256xf32, #tpu.memory_space<vmem>>, vector<3x256xf32>,
    %27 = vector.extract_strided_slice %1 {offsets = [2, 0], sizes = [1, 256], strides = [1, 1]} : vector<8x256xf32> to vector<1x256xf32>
    %28 = vector.broadcast %27 : vector<1x256xf32> to vector<3x256xf32>
    %29 = arith.mulf %28, %10 : vector<3x256xf32>
    %30 = vector.extract_strided_slice %1 {offsets = [3, 0], sizes = [1, 256], strides = [1, 1]} : vector<8x256xf32> to vector<1x256xf32>
    %31 = vector.broadcast %30 : vector<1x256xf32> to vector<3x256xf32>
    %32 = arith.mulf %31, %11 : vector<3x256xf32>
    %33 = arith.addf %29, %32 : vector<3x256xf32>
    %34 = vector.extract_strided_slice %1 {offsets = [4, 0], sizes = [1, 256], strides = [1, 1]} : vector<8x256xf32> to vector<1x256xf32>
    %35 = vector.broadcast %34 : vector<1x256xf32> to vector<3x256xf32>
    %36 = arith.mulf %35, %12 : vector<3x256xf32>
    %37 = arith.addf %33, %36 : vector<3x256xf32>
    %38 = vector.extract_strided_slice %1 {offsets = [5, 0], sizes = [1, 256], strides = [1, 1]} : vector<8x256xf32> to vector<1x256xf32>
    %39 = vector.broadcast %38 : vector<1x256xf32> to vector<3x256xf32>
    %40 = arith.mulf %39, %10 : vector<3x256xf32>
    %41 = vector.extract_strided_slice %1 {offsets = [6, 0], sizes = [1, 256], strides = [1, 1]} : vector<8x256xf32> to vector<1x256xf32>
    %42 = vector.broadcast %41 : vector<1x256xf32> to vector<3x256xf32>
    %43 = arith.mulf %42, %11 : vector<3x256xf32>
    %44 = arith.addf %40, %43 : vector<3x256xf32>
    %45 = vector.extract_strided_slice %1 {offsets = [7, 0], sizes = [1, 256], strides = [1, 1]} : vector<8x256xf32> to vector<1x256xf32>
    %46 = vector.broadcast %45 : vector<1x256xf32> to vector<3x256xf32>
    %47 = arith.mulf %46, %12 : vector<3x256xf32>
    %48 = arith.addf %44, %47 : vector<3x256xf32>
    %cst_5 = arith.constant 1.000000e+00 : f32
    %49 = vector.broadcast %cst_5 : f32 to vector<3x256xf32>
    %50 = arith.addf %25, %49 : vector<3x256xf32>
    %cst_6 = arith.constant 4.000000e+00 : f32
    %51 = vector.broadcast %cst_6 : f32 to vector<3x256xf32>
    %52 = arith.mulf %50, %51 : vector<3x256xf32>
    %53 = math.floor %52 : vector<3x256xf32>
    %54 = arith.fptosi %53 : vector<3x256xf32> to vector<3x256xi32>
    %55 = vector.extract_strided_slice %54 {offsets = [0, 0], sizes = [1, 256], strides = [1, 1]} : vector<3x256xi32> to vector<1x256xi32>
    %56 = vector.extract_strided_slice %54 {offsets = [1, 0], sizes = [1, 256], strides = [1, 1]} : vector<3x256xi32> to vector<1x256xi32>
    %57 = vector.extract_strided_slice %54 {offsets = [2, 0], sizes = [1, 256], strides = [1, 1]} : vector<3x256xi32> to vector<1x256xi32>
    %c0_i32 = arith.constant 0 : i32
    %58 = vector.broadcast %c0_i32 : i32 to vector<1x256xi32>
    %59 = arith.cmpi sge, %55, %58 : vector<1x256xi32>
    %c8_i32 = arith.constant 8 : i32
    %60 = vector.broadcast %c8_i32 : i32 to vector<1x256xi32>
    %61 = arith.cmpi slt, %55, %60 : vector<1x256xi32>
    %62 = arith.andi %59, %61 : vector<1x256xi1>
    %c0_i32_7 = arith.constant 0 : i32
    %63 = vector.broadcast %c0_i32_7 : i32 to vector<1x256xi32>
    %64 = arith.cmpi sge, %56, %63 : vector<1x256xi32>
    %65 = arith.andi %62, %64 : vector<1x256xi1>
    %c8_i32_8 = arith.constant 8 : i32
    %66 = vector.broadcast %c8_i32_8 : i32 to vector<1x256xi32>
    %67 = arith.cmpi slt, %56, %66 : vector<1x256xi32>
    %68 = arith.andi %65, %67 : vector<1x256xi1>
    %c0_i32_9 = arith.constant 0 : i32
    %69 = vector.broadcast %c0_i32_9 : i32 to vector<1x256xi32>
    %70 = arith.cmpi sge, %57, %69 : vector<1x256xi32>
    %71 = arith.andi %68, %70 : vector<1x256xi1>
    %c8_i32_10 = arith.constant 8 : i32
    %72 = vector.broadcast %c8_i32_10 : i32 to vector<1x256xi32>
    %73 = arith.cmpi slt, %57, %72 : vector<1x256xi32>
    %74 = arith.andi %71, %73 : vector<1x256xi1>
    %cst_11 = arith.constant 5.000000e-01 : f32
    %75 = vector.broadcast %cst_11 : f32 to vector<1x256xf32>
    %76 = arith.cmpf ogt, %9, %75 : vector<1x256xf32>
    %77 = arith.andi %74, %76 : vector<1x256xi1>
    %78 = arith.extui %77 : vector<1x256xi1> to vector<1x256xi32>
    %79 = arith.sitofp %78 : vector<1x256xi32> to vector<1x256xf32>
    %c0_12 = arith.constant 0 : index
    %c0_13 = arith.constant 0 : index
    %80 = vector.load %arg8[%c0_12, %c0_13] : memref<1x256xf32, #tpu.memory_space<vmem>>, vector<1x256xf32>
    tpu.vector_store %arg8[%c0_12, %c0_13], %79 {strides = array<i32>} : memref<1x256xf32, #tpu.memory_space<vmem>>, vector<1x256xf32>,
    %c64_i32 = arith.constant 64 : i32
    %81 = vector.broadcast %c64_i32 : i32 to vector<1x256xi32>
    %82 = arith.muli %55, %81 : vector<1x256xi32>
    %c8_i32_14 = arith.constant 8 : i32
    %83 = vector.broadcast %c8_i32_14 : i32 to vector<1x256xi32>
    %84 = arith.muli %56, %83 : vector<1x256xi32>
    %85 = arith.addi %82, %84 : vector<1x256xi32>
    %86 = arith.addi %85, %57 : vector<1x256xi32>
    %c-1_i32 = arith.constant -1 : i32
    %87 = vector.broadcast %c-1_i32 : i32 to vector<1x256xi32>
    %88 = arith.select %77, %86, %87 : vector<1x256xi1>, vector<1x256xi32>
    %89 = tpu.iota {dimensions = array<i32: 0>} : vector<512x256xi32>
    %90 = vector.broadcast %88 : vector<1x256xi32> to vector<512x256xi32>
    %91 = arith.cmpi eq, %89, %90 : vector<512x256xi32>
    %92 = arith.extui %91 : vector<512x256xi1> to vector<512x256xi32>
    %93 = arith.sitofp %92 : vector<512x256xi32> to vector<512x256xf32>
    %94 = vector.extract_strided_slice %1 {offsets = [0, 0], sizes = [2, 256], strides = [1, 1]} : vector<8x256xf32> to vector<2x256xf32>
    %cst_15 = arith.constant 1.000000e+00 : f32
    %95 = vector.broadcast %cst_15 : f32 to vector<1x256xf32>
    %cst_16 = arith.constant 0.000000e+00 : f32
    %96 = vector.broadcast %cst_16 : f32 to vector<7x256xf32>
    %97 = tpu.concatenate %94, %37, %48, %95, %96 in 0 : vector<2x256xf32>, vector<3x256xf32>, vector<3x256xf32>, vector<1x256xf32>, vector<7x256xf32> -> vector<16x256xf32>
    %cst_17 = arith.constant dense<0.000000e+00> : vector<16x512xf32>
    %98 = tpu.matmul %97, %93, %cst_17 {dimension_numbers = #tpu.dot_dimension_numbers<[1], [1], [0], [0], [0, 0, 1, 0], [], []>} : vector<16x256xf32>, vector<512x256xf32>, vector<16x512xf32> -> vector<16x512xf32>
    %c0_i32_18 = arith.constant 0 : i32
    %99 = arith.cmpi eq, %arg0, %c0_i32_18 : i32
    %100 = arith.extui %99 : i1 to i32
    %c0_i32_19 = arith.constant 0 : i32
    %101 = arith.cmpi ne, %100, %c0_i32_19 : i32
    scf.if %101 {
      %cst_26 = arith.constant 0.000000e+00 : f32
      %108 = vector.broadcast %cst_26 : f32 to vector<16x512xf32>
      %c0_27 = arith.constant 0 : index
      %c0_28 = arith.constant 0 : index
      %109 = vector.load %arg10[%c0_27, %c0_28] : memref<16x512xf32, #tpu.memory_space<vmem>>, vector<16x512xf32>
      tpu.vector_store %arg10[%c0_27, %c0_28], %108 {strides = array<i32>} : memref<16x512xf32, #tpu.memory_space<vmem>>, vector<16x512xf32>,
    } else {
    }
    %c0_20 = arith.constant 0 : index
    %c0_21 = arith.constant 0 : index
    %102 = vector.load %arg10[%c0_20, %c0_21] : memref<16x512xf32, #tpu.memory_space<vmem>>, vector<16x512xf32>
    %103 = arith.addf %102, %98 : vector<16x512xf32>
    %c0_22 = arith.constant 0 : index
    %c0_23 = arith.constant 0 : index
    %104 = vector.load %arg10[%c0_22, %c0_23] : memref<16x512xf32, #tpu.memory_space<vmem>>, vector<16x512xf32>
    tpu.vector_store %arg10[%c0_22, %c0_23], %103 {strides = array<i32>} : memref<16x512xf32, #tpu.memory_space<vmem>>, vector<16x512xf32>,
    %c0_i32_24 = arith.constant 0 : i32
    %105 = arith.cmpi eq, %arg0, %c0_i32_24 : i32
    %106 = arith.extui %105 : i1 to i32
    %c0_i32_25 = arith.constant 0 : i32
    %107 = arith.cmpi ne, %106, %c0_i32_25 : i32
    scf.if %107 {
      %c8 = arith.constant 8 : index
      %c0_26 = arith.constant 0 : index
      %108 = vector.load %arg10[%c8, %c0_26] : memref<16x512xf32, #tpu.memory_space<vmem>>, vector<1x512xf32>
      %c0_27 = arith.constant 0 : index
      %c0_28 = arith.constant 0 : index
      %109 = vector.load %arg10[%c0_27, %c0_28] : memref<16x512xf32, #tpu.memory_space<vmem>>, vector<8x512xf32>
      %cst_29 = arith.constant 1.000000e+00 : f32
      %110 = vector.broadcast %cst_29 : f32 to vector<1x512xf32>
      %111 = arith.maximumf %108, %110 : vector<1x512xf32>
      %112 = vector.broadcast %111 : vector<1x512xf32> to vector<8x512xf32>
      %113 = arith.divf %109, %112 : vector<8x512xf32>
      %114 = tpu.iota {dimensions = array<i32: 1>} : vector<1x512xi32>
      %c6_i32 = arith.constant 6 : i32
      %115 = vector.broadcast %c6_i32 : i32 to vector<1x512xi32>
      %116 = arith.shrsi %114, %115 : vector<1x512xi32>
      %c3_i32 = arith.constant 3 : i32
      %117 = vector.broadcast %c3_i32 : i32 to vector<1x512xi32>
      %118 = arith.shrsi %114, %117 : vector<1x512xi32>
      %c7_i32 = arith.constant 7 : i32
      %119 = vector.broadcast %c7_i32 : i32 to vector<1x512xi32>
      %120 = arith.andi %118, %119 : vector<1x512xi32>
      %c7_i32_30 = arith.constant 7 : i32
      %121 = vector.broadcast %c7_i32_30 : i32 to vector<1x512xi32>
      %122 = arith.andi %114, %121 : vector<1x512xi32>
      %c73_i32 = arith.constant 73 : i32
      %123 = tpu.dynamic_rotate %113 by %c73_i32 dim 1 : vector<8x512xf32>, i32 -> vector<8x512xf32>
      %c-1_i32_31 = arith.constant -1 : i32
      %124 = vector.broadcast %c-1_i32_31 : i32 to vector<1x512xi32>
      %125 = arith.addi %116, %124 : vector<1x512xi32>
      %c-1_i32_32 = arith.constant -1 : i32
      %126 = vector.broadcast %c-1_i32_32 : i32 to vector<1x512xi32>
      %127 = arith.addi %120, %126 : vector<1x512xi32>
      %c-1_i32_33 = arith.constant -1 : i32
      %128 = vector.broadcast %c-1_i32_33 : i32 to vector<1x512xi32>
      %129 = arith.addi %122, %128 : vector<1x512xi32>
      %c0_i32_34 = arith.constant 0 : i32
      %130 = vector.broadcast %c0_i32_34 : i32 to vector<1x512xi32>
      %131 = arith.cmpi sge, %125, %130 : vector<1x512xi32>
      %c8_i32_35 = arith.constant 8 : i32
      %132 = vector.broadcast %c8_i32_35 : i32 to vector<1x512xi32>
      %133 = arith.cmpi slt, %125, %132 : vector<1x512xi32>
      %134 = arith.andi %131, %133 : vector<1x512xi1>
      %c0_i32_36 = arith.constant 0 : i32
      %135 = vector.broadcast %c0_i32_36 : i32 to vector<1x512xi32>
      %136 = arith.cmpi sge, %127, %135 : vector<1x512xi32>
      %137 = arith.andi %134, %136 : vector<1x512xi1>
      %c8_i32_37 = arith.constant 8 : i32
      %138 = vector.broadcast %c8_i32_37 : i32 to vector<1x512xi32>
      %139 = arith.cmpi slt, %127, %138 : vector<1x512xi32>
      %140 = arith.andi %137, %139 : vector<1x512xi1>
      %c0_i32_38 = arith.constant 0 : i32
      %141 = vector.broadcast %c0_i32_38 : i32 to vector<1x512xi32>
      %142 = arith.cmpi sge, %129, %141 : vector<1x512xi32>
      %143 = arith.andi %140, %142 : vector<1x512xi1>
      %c8_i32_39 = arith.constant 8 : i32
      %144 = vector.broadcast %c8_i32_39 : i32 to vector<1x512xi32>
      %145 = arith.cmpi slt, %129, %144 : vector<1x512xi32>
      %146 = arith.andi %143, %145 : vector<1x512xi1>
      %147 = arith.extui %146 : vector<1x512xi1> to vector<1x512xi32>
      %148 = arith.sitofp %147 : vector<1x512xi32> to vector<1x512xf32>
      %149 = vector.broadcast %148 : vector<1x512xf32> to vector<8x512xf32>
      %150 = arith.mulf %123, %149 : vector<8x512xf32>
      %c0_40 = arith.constant 0 : index
      %c0_41 = arith.constant 0 : index
      %151 = vector.load %arg11[%c0_40, %c0_41] : memref<216x512xf32, #tpu.memory_space<vmem>>, vector<8x512xf32>
      tpu.vector_store %arg11[%c0_40, %c0_41], %150 {strides = array<i32>} : memref<216x512xf32, #tpu.memory_space<vmem>>, vector<8x512xf32>,
      %c72_i32 = arith.constant 72 : i32
      %152 = tpu.dynamic_rotate %113 by %c72_i32 dim 1 : vector<8x512xf32>, i32 -> vector<8x512xf32>
      %c-1_i32_42 = arith.constant -1 : i32
      %153 = vector.broadcast %c-1_i32_42 : i32 to vector<1x512xi32>
      %154 = arith.addi %116, %153 : vector<1x512xi32>
      %c-1_i32_43 = arith.constant -1 : i32
      %155 = vector.broadcast %c-1_i32_43 : i32 to vector<1x512xi32>
      %156 = arith.addi %120, %155 : vector<1x512xi32>
      %c0_i32_44 = arith.constant 0 : i32
      %157 = vector.broadcast %c0_i32_44 : i32 to vector<1x512xi32>
      %158 = arith.addi %122, %157 : vector<1x512xi32>
      %c0_i32_45 = arith.constant 0 : i32
      %159 = vector.broadcast %c0_i32_45 : i32 to vector<1x512xi32>
      %160 = arith.cmpi sge, %154, %159 : vector<1x512xi32>
      %c8_i32_46 = arith.constant 8 : i32
      %161 = vector.broadcast %c8_i32_46 : i32 to vector<1x512xi32>
      %162 = arith.cmpi slt, %154, %161 : vector<1x512xi32>
      %163 = arith.andi %160, %162 : vector<1x512xi1>
      %c0_i32_47 = arith.constant 0 : i32
      %164 = vector.broadcast %c0_i32_47 : i32 to vector<1x512xi32>
      %165 = arith.cmpi sge, %156, %164 : vector<1x512xi32>
      %166 = arith.andi %163, %165 : vector<1x512xi1>
      %c8_i32_48 = arith.constant 8 : i32
      %167 = vector.broadcast %c8_i32_48 : i32 to vector<1x512xi32>
      %168 = arith.cmpi slt, %156, %167 : vector<1x512xi32>
      %169 = arith.andi %166, %168 : vector<1x512xi1>
      %c0_i32_49 = arith.constant 0 : i32
      %170 = vector.broadcast %c0_i32_49 : i32 to vector<1x512xi32>
      %171 = arith.cmpi sge, %158, %170 : vector<1x512xi32>
      %172 = arith.andi %169, %171 : vector<1x512xi1>
      %c8_i32_50 = arith.constant 8 : i32
      %173 = vector.broadcast %c8_i32_50 : i32 to vector<1x512xi32>
      %174 = arith.cmpi slt, %158, %173 : vector<1x512xi32>
      %175 = arith.andi %172, %174 : vector<1x512xi1>
      %176 = arith.extui %175 : vector<1x512xi1> to vector<1x512xi32>
      %177 = arith.sitofp %176 : vector<1x512xi32> to vector<1x512xf32>
      %178 = vector.broadcast %177 : vector<1x512xf32> to vector<8x512xf32>
      %179 = arith.mulf %152, %178 : vector<8x512xf32>
      %c8_51 = arith.constant 8 : index
      %c0_52 = arith.constant 0 : index
      %180 = vector.load %arg11[%c8_51, %c0_52] : memref<216x512xf32, #tpu.memory_space<vmem>>, vector<8x512xf32>
      tpu.vector_store %arg11[%c8_51, %c0_52], %179 {strides = array<i32>} : memref<216x512xf32, #tpu.memory_space<vmem>>, vector<8x512xf32>,
      %c71_i32 = arith.constant 71 : i32
      %181 = tpu.dynamic_rotate %113 by %c71_i32 dim 1 : vector<8x512xf32>, i32 -> vector<8x512xf32>
      %c-1_i32_53 = arith.constant -1 : i32
      %182 = vector.broadcast %c-1_i32_53 : i32 to vector<1x512xi32>
      %183 = arith.addi %116, %182 : vector<1x512xi32>
      %c-1_i32_54 = arith.constant -1 : i32
      %184 = vector.broadcast %c-1_i32_54 : i32 to vector<1x512xi32>
      %185 = arith.addi %120, %184 : vector<1x512xi32>
      %c1_i32 = arith.constant 1 : i32
      %186 = vector.broadcast %c1_i32 : i32 to vector<1x512xi32>
      %187 = arith.addi %122, %186 : vector<1x512xi32>
      %c0_i32_55 = arith.constant 0 : i32
      %188 = vector.broadcast %c0_i32_55 : i32 to vector<1x512xi32>
      %189 = arith.cmpi sge, %183, %188 : vector<1x512xi32>
      %c8_i32_56 = arith.constant 8 : i32
      %190 = vector.broadcast %c8_i32_56 : i32 to vector<1x512xi32>
      %191 = arith.cmpi slt, %183, %190 : vector<1x512xi32>
      %192 = arith.andi %189, %191 : vector<1x512xi1>
      %c0_i32_57 = arith.constant 0 : i32
      %193 = vector.broadcast %c0_i32_57 : i32 to vector<1x512xi32>
      %194 = arith.cmpi sge, %185, %193 : vector<1x512xi32>
      %195 = arith.andi %192, %194 : vector<1x512xi1>
      %c8_i32_58 = arith.constant 8 : i32
      %196 = vector.broadcast %c8_i32_58 : i32 to vector<1x512xi32>
      %197 = arith.cmpi slt, %185, %196 : vector<1x512xi32>
      %198 = arith.andi %195, %197 : vector<1x512xi1>
      %c0_i32_59 = arith.constant 0 : i32
      %199 = vector.broadcast %c0_i32_59 : i32 to vector<1x512xi32>
      %200 = arith.cmpi sge, %187, %199 : vector<1x512xi32>
      %201 = arith.andi %198, %200 : vector<1x512xi1>
      %c8_i32_60 = arith.constant 8 : i32
      %202 = vector.broadcast %c8_i32_60 : i32 to vector<1x512xi32>
      %203 = arith.cmpi slt, %187, %202 : vector<1x512xi32>
      %204 = arith.andi %201, %203 : vector<1x512xi1>
      %205 = arith.extui %204 : vector<1x512xi1> to vector<1x512xi32>
      %206 = arith.sitofp %205 : vector<1x512xi32> to vector<1x512xf32>
      %207 = vector.broadcast %206 : vector<1x512xf32> to vector<8x512xf32>
      %208 = arith.mulf %181, %207 : vector<8x512xf32>
      %c16 = arith.constant 16 : index
      %c0_61 = arith.constant 0 : index
      %209 = vector.load %arg11[%c16, %c0_61] : memref<216x512xf32, #tpu.memory_space<vmem>>, vector<8x512xf32>
      tpu.vector_store %arg11[%c16, %c0_61], %208 {strides = array<i32>} : memref<216x512xf32, #tpu.memory_space<vmem>>, vector<8x512xf32>,
      %c65_i32 = arith.constant 65 : i32
      %210 = tpu.dynamic_rotate %113 by %c65_i32 dim 1 : vector<8x512xf32>, i32 -> vector<8x512xf32>
      %c-1_i32_62 = arith.constant -1 : i32
      %211 = vector.broadcast %c-1_i32_62 : i32 to vector<1x512xi32>
      %212 = arith.addi %116, %211 : vector<1x512xi32>
      %c0_i32_63 = arith.constant 0 : i32
      %213 = vector.broadcast %c0_i32_63 : i32 to vector<1x512xi32>
      %214 = arith.addi %120, %213 : vector<1x512xi32>
      %c-1_i32_64 = arith.constant -1 : i32
      %215 = vector.broadcast %c-1_i32_64 : i32 to vector<1x512xi32>
      %216 = arith.addi %122, %215 : vector<1x512xi32>
      %c0_i32_65 = arith.constant 0 : i32
      %217 = vector.broadcast %c0_i32_65 : i32 to vector<1x512xi32>
      %218 = arith.cmpi sge, %212, %217 : vector<1x512xi32>
      %c8_i32_66 = arith.constant 8 : i32
      %219 = vector.broadcast %c8_i32_66 : i32 to vector<1x512xi32>
      %220 = arith.cmpi slt, %212, %219 : vector<1x512xi32>
      %221 = arith.andi %218, %220 : vector<1x512xi1>
      %c0_i32_67 = arith.constant 0 : i32
      %222 = vector.broadcast %c0_i32_67 : i32 to vector<1x512xi32>
      %223 = arith.cmpi sge, %214, %222 : vector<1x512xi32>
      %224 = arith.andi %221, %223 : vector<1x512xi1>
      %c8_i32_68 = arith.constant 8 : i32
      %225 = vector.broadcast %c8_i32_68 : i32 to vector<1x512xi32>
      %226 = arith.cmpi slt, %214, %225 : vector<1x512xi32>
      %227 = arith.andi %224, %226 : vector<1x512xi1>
      %c0_i32_69 = arith.constant 0 : i32
      %228 = vector.broadcast %c0_i32_69 : i32 to vector<1x512xi32>
      %229 = arith.cmpi sge, %216, %228 : vector<1x512xi32>
      %230 = arith.andi %227, %229 : vector<1x512xi1>
      %c8_i32_70 = arith.constant 8 : i32
      %231 = vector.broadcast %c8_i32_70 : i32 to vector<1x512xi32>
      %232 = arith.cmpi slt, %216, %231 : vector<1x512xi32>
      %233 = arith.andi %230, %232 : vector<1x512xi1>
      %234 = arith.extui %233 : vector<1x512xi1> to vector<1x512xi32>
      %235 = arith.sitofp %234 : vector<1x512xi32> to vector<1x512xf32>
      %236 = vector.broadcast %235 : vector<1x512xf32> to vector<8x512xf32>
      %237 = arith.mulf %210, %236 : vector<8x512xf32>
      %c24 = arith.constant 24 : index
      %c0_71 = arith.constant 0 : index
      %238 = vector.load %arg11[%c24, %c0_71] : memref<216x512xf32, #tpu.memory_space<vmem>>, vector<8x512xf32>
      tpu.vector_store %arg11[%c24, %c0_71], %237 {strides = array<i32>} : memref<216x512xf32, #tpu.memory_space<vmem>>, vector<8x512xf32>,
      %c64_i32_72 = arith.constant 64 : i32
      %239 = tpu.dynamic_rotate %113 by %c64_i32_72 dim 1 : vector<8x512xf32>, i32 -> vector<8x512xf32>
      %c-1_i32_73 = arith.constant -1 : i32
      %240 = vector.broadcast %c-1_i32_73 : i32 to vector<1x512xi32>
      %241 = arith.addi %116, %240 : vector<1x512xi32>
      %c0_i32_74 = arith.constant 0 : i32
      %242 = vector.broadcast %c0_i32_74 : i32 to vector<1x512xi32>
      %243 = arith.addi %120, %242 : vector<1x512xi32>
      %c0_i32_75 = arith.constant 0 : i32
      %244 = vector.broadcast %c0_i32_75 : i32 to vector<1x512xi32>
      %245 = arith.addi %122, %244 : vector<1x512xi32>
      %c0_i32_76 = arith.constant 0 : i32
      %246 = vector.broadcast %c0_i32_76 : i32 to vector<1x512xi32>
      %247 = arith.cmpi sge, %241, %246 : vector<1x512xi32>
      %c8_i32_77 = arith.constant 8 : i32
      %248 = vector.broadcast %c8_i32_77 : i32 to vector<1x512xi32>
      %249 = arith.cmpi slt, %241, %248 : vector<1x512xi32>
      %250 = arith.andi %247, %249 : vector<1x512xi1>
      %c0_i32_78 = arith.constant 0 : i32
      %251 = vector.broadcast %c0_i32_78 : i32 to vector<1x512xi32>
      %252 = arith.cmpi sge, %243, %251 : vector<1x512xi32>
      %253 = arith.andi %250, %252 : vector<1x512xi1>
      %c8_i32_79 = arith.constant 8 : i32
      %254 = vector.broadcast %c8_i32_79 : i32 to vector<1x512xi32>
      %255 = arith.cmpi slt, %243, %254 : vector<1x512xi32>
      %256 = arith.andi %253, %255 : vector<1x512xi1>
      %c0_i32_80 = arith.constant 0 : i32
      %257 = vector.broadcast %c0_i32_80 : i32 to vector<1x512xi32>
      %258 = arith.cmpi sge, %245, %257 : vector<1x512xi32>
      %259 = arith.andi %256, %258 : vector<1x512xi1>
      %c8_i32_81 = arith.constant 8 : i32
      %260 = vector.broadcast %c8_i32_81 : i32 to vector<1x512xi32>
      %261 = arith.cmpi slt, %245, %260 : vector<1x512xi32>
      %262 = arith.andi %259, %261 : vector<1x512xi1>
      %263 = arith.extui %262 : vector<1x512xi1> to vector<1x512xi32>
      %264 = arith.sitofp %263 : vector<1x512xi32> to vector<1x512xf32>
      %265 = vector.broadcast %264 : vector<1x512xf32> to vector<8x512xf32>
      %266 = arith.mulf %239, %265 : vector<8x512xf32>
      %c32 = arith.constant 32 : index
      %c0_82 = arith.constant 0 : index
      %267 = vector.load %arg11[%c32, %c0_82] : memref<216x512xf32, #tpu.memory_space<vmem>>, vector<8x512xf32>
      tpu.vector_store %arg11[%c32, %c0_82], %266 {strides = array<i32>} : memref<216x512xf32, #tpu.memory_space<vmem>>, vector<8x512xf32>,
      %c63_i32 = arith.constant 63 : i32
      %268 = tpu.dynamic_rotate %113 by %c63_i32 dim 1 : vector<8x512xf32>, i32 -> vector<8x512xf32>
      %c-1_i32_83 = arith.constant -1 : i32
      %269 = vector.broadcast %c-1_i32_83 : i32 to vector<1x512xi32>
      %270 = arith.addi %116, %269 : vector<1x512xi32>
      %c0_i32_84 = arith.constant 0 : i32
      %271 = vector.broadcast %c0_i32_84 : i32 to vector<1x512xi32>
      %272 = arith.addi %120, %271 : vector<1x512xi32>
      %c1_i32_85 = arith.constant 1 : i32
      %273 = vector.broadcast %c1_i32_85 : i32 to vector<1x512xi32>
      %274 = arith.addi %122, %273 : vector<1x512xi32>
      %c0_i32_86 = arith.constant 0 : i32
      %275 = vector.broadcast %c0_i32_86 : i32 to vector<1x512xi32>
      %276 = arith.cmpi sge, %270, %275 : vector<1x512xi32>
      %c8_i32_87 = arith.constant 8 : i32
      %277 = vector.broadcast %c8_i32_87 : i32 to vector<1x512xi32>
      %278 = arith.cmpi slt, %270, %277 : vector<1x512xi32>
      %279 = arith.andi %276, %278 : vector<1x512xi1>
      %c0_i32_88 = arith.constant 0 : i32
      %280 = vector.broadcast %c0_i32_88 : i32 to vector<1x512xi32>
      %281 = arith.cmpi sge, %272, %280 : vector<1x512xi32>
      %282 = arith.andi %279, %281 : vector<1x512xi1>
      %c8_i32_89 = arith.constant 8 : i32
      %283 = vector.broadcast %c8_i32_89 : i32 to vector<1x512xi32>
      %284 = arith.cmpi slt, %272, %283 : vector<1x512xi32>
      %285 = arith.andi %282, %284 : vector<1x512xi1>
      %c0_i32_90 = arith.constant 0 : i32
      %286 = vector.broadcast %c0_i32_90 : i32 to vector<1x512xi32>
      %287 = arith.cmpi sge, %274, %286 : vector<1x512xi32>
      %288 = arith.andi %285, %287 : vector<1x512xi1>
      %c8_i32_91 = arith.constant 8 : i32
      %289 = vector.broadcast %c8_i32_91 : i32 to vector<1x512xi32>
      %290 = arith.cmpi slt, %274, %289 : vector<1x512xi32>
      %291 = arith.andi %288, %290 : vector<1x512xi1>
      %292 = arith.extui %291 : vector<1x512xi1> to vector<1x512xi32>
      %293 = arith.sitofp %292 : vector<1x512xi32> to vector<1x512xf32>
      %294 = vector.broadcast %293 : vector<1x512xf32> to vector<8x512xf32>
      %295 = arith.mulf %268, %294 : vector<8x512xf32>
      %c40 = arith.constant 40 : index
      %c0_92 = arith.constant 0 : index
      %296 = vector.load %arg11[%c40, %c0_92] : memref<216x512xf32, #tpu.memory_space<vmem>>, vector<8x512xf32>
      tpu.vector_store %arg11[%c40, %c0_92], %295 {strides = array<i32>} : memref<216x512xf32, #tpu.memory_space<vmem>>, vector<8x512xf32>,
      %c57_i32 = arith.constant 57 : i32
      %297 = tpu.dynamic_rotate %113 by %c57_i32 dim 1 : vector<8x512xf32>, i32 -> vector<8x512xf32>
      %c-1_i32_93 = arith.constant -1 : i32
      %298 = vector.broadcast %c-1_i32_93 : i32 to vector<1x512xi32>
      %299 = arith.addi %116, %298 : vector<1x512xi32>
      %c1_i32_94 = arith.constant 1 : i32
      %300 = vector.broadcast %c1_i32_94 : i32 to vector<1x512xi32>
      %301 = arith.addi %120, %300 : vector<1x512xi32>
      %c-1_i32_95 = arith.constant -1 : i32
      %302 = vector.broadcast %c-1_i32_95 : i32 to vector<1x512xi32>
      %303 = arith.addi %122, %302 : vector<1x512xi32>
      %c0_i32_96 = arith.constant 0 : i32
      %304 = vector.broadcast %c0_i32_96 : i32 to vector<1x512xi32>
      %305 = arith.cmpi sge, %299, %304 : vector<1x512xi32>
      %c8_i32_97 = arith.constant 8 : i32
      %306 = vector.broadcast %c8_i32_97 : i32 to vector<1x512xi32>
      %307 = arith.cmpi slt, %299, %306 : vector<1x512xi32>
      %308 = arith.andi %305, %307 : vector<1x512xi1>
      %c0_i32_98 = arith.constant 0 : i32
      %309 = vector.broadcast %c0_i32_98 : i32 to vector<1x512xi32>
      %310 = arith.cmpi sge, %301, %309 : vector<1x512xi32>
      %311 = arith.andi %308, %310 : vector<1x512xi1>
      %c8_i32_99 = arith.constant 8 : i32
      %312 = vector.broadcast %c8_i32_99 : i32 to vector<1x512xi32>
      %313 = arith.cmpi slt, %301, %312 : vector<1x512xi32>
      %314 = arith.andi %311, %313 : vector<1x512xi1>
      %c0_i32_100 = arith.constant 0 : i32
      %315 = vector.broadcast %c0_i32_100 : i32 to vector<1x512xi32>
      %316 = arith.cmpi sge, %303, %315 : vector<1x512xi32>
      %317 = arith.andi %314, %316 : vector<1x512xi1>
      %c8_i32_101 = arith.constant 8 : i32
      %318 = vector.broadcast %c8_i32_101 : i32 to vector<1x512xi32>
      %319 = arith.cmpi slt, %303, %318 : vector<1x512xi32>
      %320 = arith.andi %317, %319 : vector<1x512xi1>
      %321 = arith.extui %320 : vector<1x512xi1> to vector<1x512xi32>
      %322 = arith.sitofp %321 : vector<1x512xi32> to vector<1x512xf32>
      %323 = vector.broadcast %322 : vector<1x512xf32> to vector<8x512xf32>
      %324 = arith.mulf %297, %323 : vector<8x512xf32>
      %c48 = arith.constant 48 : index
      %c0_102 = arith.constant 0 : index
      %325 = vector.load %arg11[%c48, %c0_102] : memref<216x512xf32, #tpu.memory_space<vmem>>, vector<8x512xf32>
      tpu.vector_store %arg11[%c48, %c0_102], %324 {strides = array<i32>} : memref<216x512xf32, #tpu.memory_space<vmem>>, vector<8x512xf32>,
      %c56_i32 = arith.constant 56 : i32
      %326 = tpu.dynamic_rotate %113 by %c56_i32 dim 1 : vector<8x512xf32>, i32 -> vector<8x512xf32>
      %c-1_i32_103 = arith.constant -1 : i32
      %327 = vector.broadcast %c-1_i32_103 : i32 to vector<1x512xi32>
      %328 = arith.addi %116, %327 : vector<1x512xi32>
      %c1_i32_104 = arith.constant 1 : i32
      %329 = vector.broadcast %c1_i32_104 : i32 to vector<1x512xi32>
      %330 = arith.addi %120, %329 : vector<1x512xi32>
      %c0_i32_105 = arith.constant 0 : i32
      %331 = vector.broadcast %c0_i32_105 : i32 to vector<1x512xi32>
      %332 = arith.addi %122, %331 : vector<1x512xi32>
      %c0_i32_106 = arith.constant 0 : i32
      %333 = vector.broadcast %c0_i32_106 : i32 to vector<1x512xi32>
      %334 = arith.cmpi sge, %328, %333 : vector<1x512xi32>
      %c8_i32_107 = arith.constant 8 : i32
      %335 = vector.broadcast %c8_i32_107 : i32 to vector<1x512xi32>
      %336 = arith.cmpi slt, %328, %335 : vector<1x512xi32>
      %337 = arith.andi %334, %336 : vector<1x512xi1>
      %c0_i32_108 = arith.constant 0 : i32
      %338 = vector.broadcast %c0_i32_108 : i32 to vector<1x512xi32>
      %339 = arith.cmpi sge, %330, %338 : vector<1x512xi32>
      %340 = arith.andi %337, %339 : vector<1x512xi1>
      %c8_i32_109 = arith.constant 8 : i32
      %341 = vector.broadcast %c8_i32_109 : i32 to vector<1x512xi32>
      %342 = arith.cmpi slt, %330, %341 : vector<1x512xi32>
      %343 = arith.andi %340, %342 : vector<1x512xi1>
      %c0_i32_110 = arith.constant 0 : i32
      %344 = vector.broadcast %c0_i32_110 : i32 to vector<1x512xi32>
      %345 = arith.cmpi sge, %332, %344 : vector<1x512xi32>
      %346 = arith.andi %343, %345 : vector<1x512xi1>
      %c8_i32_111 = arith.constant 8 : i32
      %347 = vector.broadcast %c8_i32_111 : i32 to vector<1x512xi32>
      %348 = arith.cmpi slt, %332, %347 : vector<1x512xi32>
      %349 = arith.andi %346, %348 : vector<1x512xi1>
      %350 = arith.extui %349 : vector<1x512xi1> to vector<1x512xi32>
      %351 = arith.sitofp %350 : vector<1x512xi32> to vector<1x512xf32>
      %352 = vector.broadcast %351 : vector<1x512xf32> to vector<8x512xf32>
      %353 = arith.mulf %326, %352 : vector<8x512xf32>
      %c56 = arith.constant 56 : index
      %c0_112 = arith.constant 0 : index
      %354 = vector.load %arg11[%c56, %c0_112] : memref<216x512xf32, #tpu.memory_space<vmem>>, vector<8x512xf32>
      tpu.vector_store %arg11[%c56, %c0_112], %353 {strides = array<i32>} : memref<216x512xf32, #tpu.memory_space<vmem>>, vector<8x512xf32>,
      %c55_i32 = arith.constant 55 : i32
      %355 = tpu.dynamic_rotate %113 by %c55_i32 dim 1 : vector<8x512xf32>, i32 -> vector<8x512xf32>
      %c-1_i32_113 = arith.constant -1 : i32
      %356 = vector.broadcast %c-1_i32_113 : i32 to vector<1x512xi32>
      %357 = arith.addi %116, %356 : vector<1x512xi32>
      %c1_i32_114 = arith.constant 1 : i32
      %358 = vector.broadcast %c1_i32_114 : i32 to vector<1x512xi32>
      %359 = arith.addi %120, %358 : vector<1x512xi32>
      %c1_i32_115 = arith.constant 1 : i32
      %360 = vector.broadcast %c1_i32_115 : i32 to vector<1x512xi32>
      %361 = arith.addi %122, %360 : vector<1x512xi32>
      %c0_i32_116 = arith.constant 0 : i32
      %362 = vector.broadcast %c0_i32_116 : i32 to vector<1x512xi32>
      %363 = arith.cmpi sge, %357, %362 : vector<1x512xi32>
      %c8_i32_117 = arith.constant 8 : i32
      %364 = vector.broadcast %c8_i32_117 : i32 to vector<1x512xi32>
      %365 = arith.cmpi slt, %357, %364 : vector<1x512xi32>
      %366 = arith.andi %363, %365 : vector<1x512xi1>
      %c0_i32_118 = arith.constant 0 : i32
      %367 = vector.broadcast %c0_i32_118 : i32 to vector<1x512xi32>
      %368 = arith.cmpi sge, %359, %367 : vector<1x512xi32>
      %369 = arith.andi %366, %368 : vector<1x512xi1>
      %c8_i32_119 = arith.constant 8 : i32
      %370 = vector.broadcast %c8_i32_119 : i32 to vector<1x512xi32>
      %371 = arith.cmpi slt, %359, %370 : vector<1x512xi32>
      %372 = arith.andi %369, %371 : vector<1x512xi1>
      %c0_i32_120 = arith.constant 0 : i32
      %373 = vector.broadcast %c0_i32_120 : i32 to vector<1x512xi32>
      %374 = arith.cmpi sge, %361, %373 : vector<1x512xi32>
      %375 = arith.andi %372, %374 : vector<1x512xi1>
      %c8_i32_121 = arith.constant 8 : i32
      %376 = vector.broadcast %c8_i32_121 : i32 to vector<1x512xi32>
      %377 = arith.cmpi slt, %361, %376 : vector<1x512xi32>
      %378 = arith.andi %375, %377 : vector<1x512xi1>
      %379 = arith.extui %378 : vector<1x512xi1> to vector<1x512xi32>
      %380 = arith.sitofp %379 : vector<1x512xi32> to vector<1x512xf32>
      %381 = vector.broadcast %380 : vector<1x512xf32> to vector<8x512xf32>
      %382 = arith.mulf %355, %381 : vector<8x512xf32>
      %c64 = arith.constant 64 : index
      %c0_122 = arith.constant 0 : index
      %383 = vector.load %arg11[%c64, %c0_122] : memref<216x512xf32, #tpu.memory_space<vmem>>, vector<8x512xf32>
      tpu.vector_store %arg11[%c64, %c0_122], %382 {strides = array<i32>} : memref<216x512xf32, #tpu.memory_space<vmem>>, vector<8x512xf32>,
      %c9_i32 = arith.constant 9 : i32
      %384 = tpu.dynamic_rotate %113 by %c9_i32 dim 1 : vector<8x512xf32>, i32 -> vector<8x512xf32>
      %c0_i32_123 = arith.constant 0 : i32
      %385 = vector.broadcast %c0_i32_123 : i32 to vector<1x512xi32>
      %386 = arith.addi %116, %385 : vector<1x512xi32>
      %c-1_i32_124 = arith.constant -1 : i32
      %387 = vector.broadcast %c-1_i32_124 : i32 to vector<1x512xi32>
      %388 = arith.addi %120, %387 : vector<1x512xi32>
      %c-1_i32_125 = arith.constant -1 : i32
      %389 = vector.broadcast %c-1_i32_125 : i32 to vector<1x512xi32>
      %390 = arith.addi %122, %389 : vector<1x512xi32>
      %c0_i32_126 = arith.constant 0 : i32
      %391 = vector.broadcast %c0_i32_126 : i32 to vector<1x512xi32>
      %392 = arith.cmpi sge, %386, %391 : vector<1x512xi32>
      %c8_i32_127 = arith.constant 8 : i32
      %393 = vector.broadcast %c8_i32_127 : i32 to vector<1x512xi32>
      %394 = arith.cmpi slt, %386, %393 : vector<1x512xi32>
      %395 = arith.andi %392, %394 : vector<1x512xi1>
      %c0_i32_128 = arith.constant 0 : i32
      %396 = vector.broadcast %c0_i32_128 : i32 to vector<1x512xi32>
      %397 = arith.cmpi sge, %388, %396 : vector<1x512xi32>
      %398 = arith.andi %395, %397 : vector<1x512xi1>
      %c8_i32_129 = arith.constant 8 : i32
      %399 = vector.broadcast %c8_i32_129 : i32 to vector<1x512xi32>
      %400 = arith.cmpi slt, %388, %399 : vector<1x512xi32>
      %401 = arith.andi %398, %400 : vector<1x512xi1>
      %c0_i32_130 = arith.constant 0 : i32
      %402 = vector.broadcast %c0_i32_130 : i32 to vector<1x512xi32>
      %403 = arith.cmpi sge, %390, %402 : vector<1x512xi32>
      %404 = arith.andi %401, %403 : vector<1x512xi1>
      %c8_i32_131 = arith.constant 8 : i32
      %405 = vector.broadcast %c8_i32_131 : i32 to vector<1x512xi32>
      %406 = arith.cmpi slt, %390, %405 : vector<1x512xi32>
      %407 = arith.andi %404, %406 : vector<1x512xi1>
      %408 = arith.extui %407 : vector<1x512xi1> to vector<1x512xi32>
      %409 = arith.sitofp %408 : vector<1x512xi32> to vector<1x512xf32>
      %410 = vector.broadcast %409 : vector<1x512xf32> to vector<8x512xf32>
      %411 = arith.mulf %384, %410 : vector<8x512xf32>
      %c72 = arith.constant 72 : index
      %c0_132 = arith.constant 0 : index
      %412 = vector.load %arg11[%c72, %c0_132] : memref<216x512xf32, #tpu.memory_space<vmem>>, vector<8x512xf32>
      tpu.vector_store %arg11[%c72, %c0_132], %411 {strides = array<i32>} : memref<216x512xf32, #tpu.memory_space<vmem>>, vector<8x512xf32>,
      %c8_i32_133 = arith.constant 8 : i32
      %413 = tpu.dynamic_rotate %113 by %c8_i32_133 dim 1 : vector<8x512xf32>, i32 -> vector<8x512xf32>
      %c0_i32_134 = arith.constant 0 : i32
      %414 = vector.broadcast %c0_i32_134 : i32 to vector<1x512xi32>
      %415 = arith.addi %116, %414 : vector<1x512xi32>
      %c-1_i32_135 = arith.constant -1 : i32
      %416 = vector.broadcast %c-1_i32_135 : i32 to vector<1x512xi32>
      %417 = arith.addi %120, %416 : vector<1x512xi32>
      %c0_i32_136 = arith.constant 0 : i32
      %418 = vector.broadcast %c0_i32_136 : i32 to vector<1x512xi32>
      %419 = arith.addi %122, %418 : vector<1x512xi32>
      %c0_i32_137 = arith.constant 0 : i32
      %420 = vector.broadcast %c0_i32_137 : i32 to vector<1x512xi32>
      %421 = arith.cmpi sge, %415, %420 : vector<1x512xi32>
      %c8_i32_138 = arith.constant 8 : i32
      %422 = vector.broadcast %c8_i32_138 : i32 to vector<1x512xi32>
      %423 = arith.cmpi slt, %415, %422 : vector<1x512xi32>
      %424 = arith.andi %421, %423 : vector<1x512xi1>
      %c0_i32_139 = arith.constant 0 : i32
      %425 = vector.broadcast %c0_i32_139 : i32 to vector<1x512xi32>
      %426 = arith.cmpi sge, %417, %425 : vector<1x512xi32>
      %427 = arith.andi %424, %426 : vector<1x512xi1>
      %c8_i32_140 = arith.constant 8 : i32
      %428 = vector.broadcast %c8_i32_140 : i32 to vector<1x512xi32>
      %429 = arith.cmpi slt, %417, %428 : vector<1x512xi32>
      %430 = arith.andi %427, %429 : vector<1x512xi1>
      %c0_i32_141 = arith.constant 0 : i32
      %431 = vector.broadcast %c0_i32_141 : i32 to vector<1x512xi32>
      %432 = arith.cmpi sge, %419, %431 : vector<1x512xi32>
      %433 = arith.andi %430, %432 : vector<1x512xi1>
      %c8_i32_142 = arith.constant 8 : i32
      %434 = vector.broadcast %c8_i32_142 : i32 to vector<1x512xi32>
      %435 = arith.cmpi slt, %419, %434 : vector<1x512xi32>
      %436 = arith.andi %433, %435 : vector<1x512xi1>
      %437 = arith.extui %436 : vector<1x512xi1> to vector<1x512xi32>
      %438 = arith.sitofp %437 : vector<1x512xi32> to vector<1x512xf32>
      %439 = vector.broadcast %438 : vector<1x512xf32> to vector<8x512xf32>
      %440 = arith.mulf %413, %439 : vector<8x512xf32>
      %c80 = arith.constant 80 : index
      %c0_143 = arith.constant 0 : index
      %441 = vector.load %arg11[%c80, %c0_143] : memref<216x512xf32, #tpu.memory_space<vmem>>, vector<8x512xf32>
      tpu.vector_store %arg11[%c80, %c0_143], %440 {strides = array<i32>} : memref<216x512xf32, #tpu.memory_space<vmem>>, vector<8x512xf32>,
      %c7_i32_144 = arith.constant 7 : i32
      %442 = tpu.dynamic_rotate %113 by %c7_i32_144 dim 1 : vector<8x512xf32>, i32 -> vector<8x512xf32>
      %c0_i32_145 = arith.constant 0 : i32
      %443 = vector.broadcast %c0_i32_145 : i32 to vector<1x512xi32>
      %444 = arith.addi %116, %443 : vector<1x512xi32>
      %c-1_i32_146 = arith.constant -1 : i32
      %445 = vector.broadcast %c-1_i32_146 : i32 to vector<1x512xi32>
      %446 = arith.addi %120, %445 : vector<1x512xi32>
      %c1_i32_147 = arith.constant 1 : i32
      %447 = vector.broadcast %c1_i32_147 : i32 to vector<1x512xi32>
      %448 = arith.addi %122, %447 : vector<1x512xi32>
      %c0_i32_148 = arith.constant 0 : i32
      %449 = vector.broadcast %c0_i32_148 : i32 to vector<1x512xi32>
      %450 = arith.cmpi sge, %444, %449 : vector<1x512xi32>
      %c8_i32_149 = arith.constant 8 : i32
      %451 = vector.broadcast %c8_i32_149 : i32 to vector<1x512xi32>
      %452 = arith.cmpi slt, %444, %451 : vector<1x512xi32>
      %453 = arith.andi %450, %452 : vector<1x512xi1>
      %c0_i32_150 = arith.constant 0 : i32
      %454 = vector.broadcast %c0_i32_150 : i32 to vector<1x512xi32>
      %455 = arith.cmpi sge, %446, %454 : vector<1x512xi32>
      %456 = arith.andi %453, %455 : vector<1x512xi1>
      %c8_i32_151 = arith.constant 8 : i32
      %457 = vector.broadcast %c8_i32_151 : i32 to vector<1x512xi32>
      %458 = arith.cmpi slt, %446, %457 : vector<1x512xi32>
      %459 = arith.andi %456, %458 : vector<1x512xi1>
      %c0_i32_152 = arith.constant 0 : i32
      %460 = vector.broadcast %c0_i32_152 : i32 to vector<1x512xi32>
      %461 = arith.cmpi sge, %448, %460 : vector<1x512xi32>
      %462 = arith.andi %459, %461 : vector<1x512xi1>
      %c8_i32_153 = arith.constant 8 : i32
      %463 = vector.broadcast %c8_i32_153 : i32 to vector<1x512xi32>
      %464 = arith.cmpi slt, %448, %463 : vector<1x512xi32>
      %465 = arith.andi %462, %464 : vector<1x512xi1>
      %466 = arith.extui %465 : vector<1x512xi1> to vector<1x512xi32>
      %467 = arith.sitofp %466 : vector<1x512xi32> to vector<1x512xf32>
      %468 = vector.broadcast %467 : vector<1x512xf32> to vector<8x512xf32>
      %469 = arith.mulf %442, %468 : vector<8x512xf32>
      %c88 = arith.constant 88 : index
      %c0_154 = arith.constant 0 : index
      %470 = vector.load %arg11[%c88, %c0_154] : memref<216x512xf32, #tpu.memory_space<vmem>>, vector<8x512xf32>
      tpu.vector_store %arg11[%c88, %c0_154], %469 {strides = array<i32>} : memref<216x512xf32, #tpu.memory_space<vmem>>, vector<8x512xf32>,
      %c1_i32_155 = arith.constant 1 : i32
      %471 = tpu.dynamic_rotate %113 by %c1_i32_155 dim 1 : vector<8x512xf32>, i32 -> vector<8x512xf32>
      %c0_i32_156 = arith.constant 0 : i32
      %472 = vector.broadcast %c0_i32_156 : i32 to vector<1x512xi32>
      %473 = arith.addi %116, %472 : vector<1x512xi32>
      %c0_i32_157 = arith.constant 0 : i32
      %474 = vector.broadcast %c0_i32_157 : i32 to vector<1x512xi32>
      %475 = arith.addi %120, %474 : vector<1x512xi32>
      %c-1_i32_158 = arith.constant -1 : i32
      %476 = vector.broadcast %c-1_i32_158 : i32 to vector<1x512xi32>
      %477 = arith.addi %122, %476 : vector<1x512xi32>
      %c0_i32_159 = arith.constant 0 : i32
      %478 = vector.broadcast %c0_i32_159 : i32 to vector<1x512xi32>
      %479 = arith.cmpi sge, %473, %478 : vector<1x512xi32>
      %c8_i32_160 = arith.constant 8 : i32
      %480 = vector.broadcast %c8_i32_160 : i32 to vector<1x512xi32>
      %481 = arith.cmpi slt, %473, %480 : vector<1x512xi32>
      %482 = arith.andi %479, %481 : vector<1x512xi1>
      %c0_i32_161 = arith.constant 0 : i32
      %483 = vector.broadcast %c0_i32_161 : i32 to vector<1x512xi32>
      %484 = arith.cmpi sge, %475, %483 : vector<1x512xi32>
      %485 = arith.andi %482, %484 : vector<1x512xi1>
      %c8_i32_162 = arith.constant 8 : i32
      %486 = vector.broadcast %c8_i32_162 : i32 to vector<1x512xi32>
      %487 = arith.cmpi slt, %475, %486 : vector<1x512xi32>
      %488 = arith.andi %485, %487 : vector<1x512xi1>
      %c0_i32_163 = arith.constant 0 : i32
      %489 = vector.broadcast %c0_i32_163 : i32 to vector<1x512xi32>
      %490 = arith.cmpi sge, %477, %489 : vector<1x512xi32>
      %491 = arith.andi %488, %490 : vector<1x512xi1>
      %c8_i32_164 = arith.constant 8 : i32
      %492 = vector.broadcast %c8_i32_164 : i32 to vector<1x512xi32>
      %493 = arith.cmpi slt, %477, %492 : vector<1x512xi32>
      %494 = arith.andi %491, %493 : vector<1x512xi1>
      %495 = arith.extui %494 : vector<1x512xi1> to vector<1x512xi32>
      %496 = arith.sitofp %495 : vector<1x512xi32> to vector<1x512xf32>
      %497 = vector.broadcast %496 : vector<1x512xf32> to vector<8x512xf32>
      %498 = arith.mulf %471, %497 : vector<8x512xf32>
      %c96 = arith.constant 96 : index
      %c0_165 = arith.constant 0 : index
      %499 = vector.load %arg11[%c96, %c0_165] : memref<216x512xf32, #tpu.memory_space<vmem>>, vector<8x512xf32>
      tpu.vector_store %arg11[%c96, %c0_165], %498 {strides = array<i32>} : memref<216x512xf32, #tpu.memory_space<vmem>>, vector<8x512xf32>,
      %c0_i32_166 = arith.constant 0 : i32
      %500 = vector.broadcast %c0_i32_166 : i32 to vector<1x512xi32>
      %501 = arith.addi %116, %500 : vector<1x512xi32>
      %c0_i32_167 = arith.constant 0 : i32
      %502 = vector.broadcast %c0_i32_167 : i32 to vector<1x512xi32>
      %503 = arith.addi %120, %502 : vector<1x512xi32>
      %c0_i32_168 = arith.constant 0 : i32
      %504 = vector.broadcast %c0_i32_168 : i32 to vector<1x512xi32>
      %505 = arith.addi %122, %504 : vector<1x512xi32>
      %c0_i32_169 = arith.constant 0 : i32
      %506 = vector.broadcast %c0_i32_169 : i32 to vector<1x512xi32>
      %507 = arith.cmpi sge, %501, %506 : vector<1x512xi32>
      %c8_i32_170 = arith.constant 8 : i32
      %508 = vector.broadcast %c8_i32_170 : i32 to vector<1x512xi32>
      %509 = arith.cmpi slt, %501, %508 : vector<1x512xi32>
      %510 = arith.andi %507, %509 : vector<1x512xi1>
      %c0_i32_171 = arith.constant 0 : i32
      %511 = vector.broadcast %c0_i32_171 : i32 to vector<1x512xi32>
      %512 = arith.cmpi sge, %503, %511 : vector<1x512xi32>
      %513 = arith.andi %510, %512 : vector<1x512xi1>
      %c8_i32_172 = arith.constant 8 : i32
      %514 = vector.broadcast %c8_i32_172 : i32 to vector<1x512xi32>
      %515 = arith.cmpi slt, %503, %514 : vector<1x512xi32>
      %516 = arith.andi %513, %515 : vector<1x512xi1>
      %c0_i32_173 = arith.constant 0 : i32
      %517 = vector.broadcast %c0_i32_173 : i32 to vector<1x512xi32>
      %518 = arith.cmpi sge, %505, %517 : vector<1x512xi32>
      %519 = arith.andi %516, %518 : vector<1x512xi1>
      %c8_i32_174 = arith.constant 8 : i32
      %520 = vector.broadcast %c8_i32_174 : i32 to vector<1x512xi32>
      %521 = arith.cmpi slt, %505, %520 : vector<1x512xi32>
      %522 = arith.andi %519, %521 : vector<1x512xi1>
      %523 = arith.extui %522 : vector<1x512xi1> to vector<1x512xi32>
      %524 = arith.sitofp %523 : vector<1x512xi32> to vector<1x512xf32>
      %525 = vector.broadcast %524 : vector<1x512xf32> to vector<8x512xf32>
      %526 = arith.mulf %113, %525 : vector<8x512xf32>
      %c104 = arith.constant 104 : index
      %c0_175 = arith.constant 0 : index
      %527 = vector.load %arg11[%c104, %c0_175] : memref<216x512xf32, #tpu.memory_space<vmem>>, vector<8x512xf32>
      tpu.vector_store %arg11[%c104, %c0_175], %526 {strides = array<i32>} : memref<216x512xf32, #tpu.memory_space<vmem>>, vector<8x512xf32>,
      %c511_i32 = arith.constant 511 : i32
      %528 = tpu.dynamic_rotate %113 by %c511_i32 dim 1 : vector<8x512xf32>, i32 -> vector<8x512xf32>
      %c0_i32_176 = arith.constant 0 : i32
      %529 = vector.broadcast %c0_i32_176 : i32 to vector<1x512xi32>
      %530 = arith.addi %116, %529 : vector<1x512xi32>
      %c0_i32_177 = arith.constant 0 : i32
      %531 = vector.broadcast %c0_i32_177 : i32 to vector<1x512xi32>
      %532 = arith.addi %120, %531 : vector<1x512xi32>
      %c1_i32_178 = arith.constant 1 : i32
      %533 = vector.broadcast %c1_i32_178 : i32 to vector<1x512xi32>
      %534 = arith.addi %122, %533 : vector<1x512xi32>
      %c0_i32_179 = arith.constant 0 : i32
      %535 = vector.broadcast %c0_i32_179 : i32 to vector<1x512xi32>
      %536 = arith.cmpi sge, %530, %535 : vector<1x512xi32>
      %c8_i32_180 = arith.constant 8 : i32
      %537 = vector.broadcast %c8_i32_180 : i32 to vector<1x512xi32>
      %538 = arith.cmpi slt, %530, %537 : vector<1x512xi32>
      %539 = arith.andi %536, %538 : vector<1x512xi1>
      %c0_i32_181 = arith.constant 0 : i32
      %540 = vector.broadcast %c0_i32_181 : i32 to vector<1x512xi32>
      %541 = arith.cmpi sge, %532, %540 : vector<1x512xi32>
      %542 = arith.andi %539, %541 : vector<1x512xi1>
      %c8_i32_182 = arith.constant 8 : i32
      %543 = vector.broadcast %c8_i32_182 : i32 to vector<1x512xi32>
      %544 = arith.cmpi slt, %532, %543 : vector<1x512xi32>
      %545 = arith.andi %542, %544 : vector<1x512xi1>
      %c0_i32_183 = arith.constant 0 : i32
      %546 = vector.broadcast %c0_i32_183 : i32 to vector<1x512xi32>
      %547 = arith.cmpi sge, %534, %546 : vector<1x512xi32>
      %548 = arith.andi %545, %547 : vector<1x512xi1>
      %c8_i32_184 = arith.constant 8 : i32
      %549 = vector.broadcast %c8_i32_184 : i32 to vector<1x512xi32>
      %550 = arith.cmpi slt, %534, %549 : vector<1x512xi32>
      %551 = arith.andi %548, %550 : vector<1x512xi1>
      %552 = arith.extui %551 : vector<1x512xi1> to vector<1x512xi32>
      %553 = arith.sitofp %552 : vector<1x512xi32> to vector<1x512xf32>
      %554 = vector.broadcast %553 : vector<1x512xf32> to vector<8x512xf32>
      %555 = arith.mulf %528, %554 : vector<8x512xf32>
      %c112 = arith.constant 112 : index
      %c0_185 = arith.constant 0 : index
      %556 = vector.load %arg11[%c112, %c0_185] : memref<216x512xf32, #tpu.memory_space<vmem>>, vector<8x512xf32>
      tpu.vector_store %arg11[%c112, %c0_185], %555 {strides = array<i32>} : memref<216x512xf32, #tpu.memory_space<vmem>>, vector<8x512xf32>,
      %c505_i32 = arith.constant 505 : i32
      %557 = tpu.dynamic_rotate %113 by %c505_i32 dim 1 : vector<8x512xf32>, i32 -> vector<8x512xf32>
      %c0_i32_186 = arith.constant 0 : i32
      %558 = vector.broadcast %c0_i32_186 : i32 to vector<1x512xi32>
      %559 = arith.addi %116, %558 : vector<1x512xi32>
      %c1_i32_187 = arith.constant 1 : i32
      %560 = vector.broadcast %c1_i32_187 : i32 to vector<1x512xi32>
      %561 = arith.addi %120, %560 : vector<1x512xi32>
      %c-1_i32_188 = arith.constant -1 : i32
      %562 = vector.broadcast %c-1_i32_188 : i32 to vector<1x512xi32>
      %563 = arith.addi %122, %562 : vector<1x512xi32>
      %c0_i32_189 = arith.constant 0 : i32
      %564 = vector.broadcast %c0_i32_189 : i32 to vector<1x512xi32>
      %565 = arith.cmpi sge, %559, %564 : vector<1x512xi32>
      %c8_i32_190 = arith.constant 8 : i32
      %566 = vector.broadcast %c8_i32_190 : i32 to vector<1x512xi32>
      %567 = arith.cmpi slt, %559, %566 : vector<1x512xi32>
      %568 = arith.andi %565, %567 : vector<1x512xi1>
      %c0_i32_191 = arith.constant 0 : i32
      %569 = vector.broadcast %c0_i32_191 : i32 to vector<1x512xi32>
      %570 = arith.cmpi sge, %561, %569 : vector<1x512xi32>
      %571 = arith.andi %568, %570 : vector<1x512xi1>
      %c8_i32_192 = arith.constant 8 : i32
      %572 = vector.broadcast %c8_i32_192 : i32 to vector<1x512xi32>
      %573 = arith.cmpi slt, %561, %572 : vector<1x512xi32>
      %574 = arith.andi %571, %573 : vector<1x512xi1>
      %c0_i32_193 = arith.constant 0 : i32
      %575 = vector.broadcast %c0_i32_193 : i32 to vector<1x512xi32>
      %576 = arith.cmpi sge, %563, %575 : vector<1x512xi32>
      %577 = arith.andi %574, %576 : vector<1x512xi1>
      %c8_i32_194 = arith.constant 8 : i32
      %578 = vector.broadcast %c8_i32_194 : i32 to vector<1x512xi32>
      %579 = arith.cmpi slt, %563, %578 : vector<1x512xi32>
      %580 = arith.andi %577, %579 : vector<1x512xi1>
      %581 = arith.extui %580 : vector<1x512xi1> to vector<1x512xi32>
      %582 = arith.sitofp %581 : vector<1x512xi32> to vector<1x512xf32>
      %583 = vector.broadcast %582 : vector<1x512xf32> to vector<8x512xf32>
      %584 = arith.mulf %557, %583 : vector<8x512xf32>
      %c120 = arith.constant 120 : index
      %c0_195 = arith.constant 0 : index
      %585 = vector.load %arg11[%c120, %c0_195] : memref<216x512xf32, #tpu.memory_space<vmem>>, vector<8x512xf32>
      tpu.vector_store %arg11[%c120, %c0_195], %584 {strides = array<i32>} : memref<216x512xf32, #tpu.memory_space<vmem>>, vector<8x512xf32>,
      %c504_i32 = arith.constant 504 : i32
      %586 = tpu.dynamic_rotate %113 by %c504_i32 dim 1 : vector<8x512xf32>, i32 -> vector<8x512xf32>
      %c0_i32_196 = arith.constant 0 : i32
      %587 = vector.broadcast %c0_i32_196 : i32 to vector<1x512xi32>
      %588 = arith.addi %116, %587 : vector<1x512xi32>
      %c1_i32_197 = arith.constant 1 : i32
      %589 = vector.broadcast %c1_i32_197 : i32 to vector<1x512xi32>
      %590 = arith.addi %120, %589 : vector<1x512xi32>
      %c0_i32_198 = arith.constant 0 : i32
      %591 = vector.broadcast %c0_i32_198 : i32 to vector<1x512xi32>
      %592 = arith.addi %122, %591 : vector<1x512xi32>
      %c0_i32_199 = arith.constant 0 : i32
      %593 = vector.broadcast %c0_i32_199 : i32 to vector<1x512xi32>
      %594 = arith.cmpi sge, %588, %593 : vector<1x512xi32>
      %c8_i32_200 = arith.constant 8 : i32
      %595 = vector.broadcast %c8_i32_200 : i32 to vector<1x512xi32>
      %596 = arith.cmpi slt, %588, %595 : vector<1x512xi32>
      %597 = arith.andi %594, %596 : vector<1x512xi1>
      %c0_i32_201 = arith.constant 0 : i32
      %598 = vector.broadcast %c0_i32_201 : i32 to vector<1x512xi32>
      %599 = arith.cmpi sge, %590, %598 : vector<1x512xi32>
      %600 = arith.andi %597, %599 : vector<1x512xi1>
      %c8_i32_202 = arith.constant 8 : i32
      %601 = vector.broadcast %c8_i32_202 : i32 to vector<1x512xi32>
      %602 = arith.cmpi slt, %590, %601 : vector<1x512xi32>
      %603 = arith.andi %600, %602 : vector<1x512xi1>
      %c0_i32_203 = arith.constant 0 : i32
      %604 = vector.broadcast %c0_i32_203 : i32 to vector<1x512xi32>
      %605 = arith.cmpi sge, %592, %604 : vector<1x512xi32>
      %606 = arith.andi %603, %605 : vector<1x512xi1>
      %c8_i32_204 = arith.constant 8 : i32
      %607 = vector.broadcast %c8_i32_204 : i32 to vector<1x512xi32>
      %608 = arith.cmpi slt, %592, %607 : vector<1x512xi32>
      %609 = arith.andi %606, %608 : vector<1x512xi1>
      %610 = arith.extui %609 : vector<1x512xi1> to vector<1x512xi32>
      %611 = arith.sitofp %610 : vector<1x512xi32> to vector<1x512xf32>
      %612 = vector.broadcast %611 : vector<1x512xf32> to vector<8x512xf32>
      %613 = arith.mulf %586, %612 : vector<8x512xf32>
      %c128 = arith.constant 128 : index
      %c0_205 = arith.constant 0 : index
      %614 = vector.load %arg11[%c128, %c0_205] : memref<216x512xf32, #tpu.memory_space<vmem>>, vector<8x512xf32>
      tpu.vector_store %arg11[%c128, %c0_205], %613 {strides = array<i32>} : memref<216x512xf32, #tpu.memory_space<vmem>>, vector<8x512xf32>,
      %c503_i32 = arith.constant 503 : i32
      %615 = tpu.dynamic_rotate %113 by %c503_i32 dim 1 : vector<8x512xf32>, i32 -> vector<8x512xf32>
      %c0_i32_206 = arith.constant 0 : i32
      %616 = vector.broadcast %c0_i32_206 : i32 to vector<1x512xi32>
      %617 = arith.addi %116, %616 : vector<1x512xi32>
      %c1_i32_207 = arith.constant 1 : i32
      %618 = vector.broadcast %c1_i32_207 : i32 to vector<1x512xi32>
      %619 = arith.addi %120, %618 : vector<1x512xi32>
      %c1_i32_208 = arith.constant 1 : i32
      %620 = vector.broadcast %c1_i32_208 : i32 to vector<1x512xi32>
      %621 = arith.addi %122, %620 : vector<1x512xi32>
      %c0_i32_209 = arith.constant 0 : i32
      %622 = vector.broadcast %c0_i32_209 : i32 to vector<1x512xi32>
      %623 = arith.cmpi sge, %617, %622 : vector<1x512xi32>
      %c8_i32_210 = arith.constant 8 : i32
      %624 = vector.broadcast %c8_i32_210 : i32 to vector<1x512xi32>
      %625 = arith.cmpi slt, %617, %624 : vector<1x512xi32>
      %626 = arith.andi %623, %625 : vector<1x512xi1>
      %c0_i32_211 = arith.constant 0 : i32
      %627 = vector.broadcast %c0_i32_211 : i32 to vector<1x512xi32>
      %628 = arith.cmpi sge, %619, %627 : vector<1x512xi32>
      %629 = arith.andi %626, %628 : vector<1x512xi1>
      %c8_i32_212 = arith.constant 8 : i32
      %630 = vector.broadcast %c8_i32_212 : i32 to vector<1x512xi32>
      %631 = arith.cmpi slt, %619, %630 : vector<1x512xi32>
      %632 = arith.andi %629, %631 : vector<1x512xi1>
      %c0_i32_213 = arith.constant 0 : i32
      %633 = vector.broadcast %c0_i32_213 : i32 to vector<1x512xi32>
      %634 = arith.cmpi sge, %621, %633 : vector<1x512xi32>
      %635 = arith.andi %632, %634 : vector<1x512xi1>
      %c8_i32_214 = arith.constant 8 : i32
      %636 = vector.broadcast %c8_i32_214 : i32 to vector<1x512xi32>
      %637 = arith.cmpi slt, %621, %636 : vector<1x512xi32>
      %638 = arith.andi %635, %637 : vector<1x512xi1>
      %639 = arith.extui %638 : vector<1x512xi1> to vector<1x512xi32>
      %640 = arith.sitofp %639 : vector<1x512xi32> to vector<1x512xf32>
      %641 = vector.broadcast %640 : vector<1x512xf32> to vector<8x512xf32>
      %642 = arith.mulf %615, %641 : vector<8x512xf32>
      %c136 = arith.constant 136 : index
      %c0_215 = arith.constant 0 : index
      %643 = vector.load %arg11[%c136, %c0_215] : memref<216x512xf32, #tpu.memory_space<vmem>>, vector<8x512xf32>
      tpu.vector_store %arg11[%c136, %c0_215], %642 {strides = array<i32>} : memref<216x512xf32, #tpu.memory_space<vmem>>, vector<8x512xf32>,
      %c457_i32 = arith.constant 457 : i32
      %644 = tpu.dynamic_rotate %113 by %c457_i32 dim 1 : vector<8x512xf32>, i32 -> vector<8x512xf32>
      %c1_i32_216 = arith.constant 1 : i32
      %645 = vector.broadcast %c1_i32_216 : i32 to vector<1x512xi32>
      %646 = arith.addi %116, %645 : vector<1x512xi32>
      %c-1_i32_217 = arith.constant -1 : i32
      %647 = vector.broadcast %c-1_i32_217 : i32 to vector<1x512xi32>
      %648 = arith.addi %120, %647 : vector<1x512xi32>
      %c-1_i32_218 = arith.constant -1 : i32
      %649 = vector.broadcast %c-1_i32_218 : i32 to vector<1x512xi32>
      %650 = arith.addi %122, %649 : vector<1x512xi32>
      %c0_i32_219 = arith.constant 0 : i32
      %651 = vector.broadcast %c0_i32_219 : i32 to vector<1x512xi32>
      %652 = arith.cmpi sge, %646, %651 : vector<1x512xi32>
      %c8_i32_220 = arith.constant 8 : i32
      %653 = vector.broadcast %c8_i32_220 : i32 to vector<1x512xi32>
      %654 = arith.cmpi slt, %646, %653 : vector<1x512xi32>
      %655 = arith.andi %652, %654 : vector<1x512xi1>
      %c0_i32_221 = arith.constant 0 : i32
      %656 = vector.broadcast %c0_i32_221 : i32 to vector<1x512xi32>
      %657 = arith.cmpi sge, %648, %656 : vector<1x512xi32>
      %658 = arith.andi %655, %657 : vector<1x512xi1>
      %c8_i32_222 = arith.constant 8 : i32
      %659 = vector.broadcast %c8_i32_222 : i32 to vector<1x512xi32>
      %660 = arith.cmpi slt, %648, %659 : vector<1x512xi32>
      %661 = arith.andi %658, %660 : vector<1x512xi1>
      %c0_i32_223 = arith.constant 0 : i32
      %662 = vector.broadcast %c0_i32_223 : i32 to vector<1x512xi32>
      %663 = arith.cmpi sge, %650, %662 : vector<1x512xi32>
      %664 = arith.andi %661, %663 : vector<1x512xi1>
      %c8_i32_224 = arith.constant 8 : i32
      %665 = vector.broadcast %c8_i32_224 : i32 to vector<1x512xi32>
      %666 = arith.cmpi slt, %650, %665 : vector<1x512xi32>
      %667 = arith.andi %664, %666 : vector<1x512xi1>
      %668 = arith.extui %667 : vector<1x512xi1> to vector<1x512xi32>
      %669 = arith.sitofp %668 : vector<1x512xi32> to vector<1x512xf32>
      %670 = vector.broadcast %669 : vector<1x512xf32> to vector<8x512xf32>
      %671 = arith.mulf %644, %670 : vector<8x512xf32>
      %c144 = arith.constant 144 : index
      %c0_225 = arith.constant 0 : index
      %672 = vector.load %arg11[%c144, %c0_225] : memref<216x512xf32, #tpu.memory_space<vmem>>, vector<8x512xf32>
      tpu.vector_store %arg11[%c144, %c0_225], %671 {strides = array<i32>} : memref<216x512xf32, #tpu.memory_space<vmem>>, vector<8x512xf32>,
      %c456_i32 = arith.constant 456 : i32
      %673 = tpu.dynamic_rotate %113 by %c456_i32 dim 1 : vector<8x512xf32>, i32 -> vector<8x512xf32>
      %c1_i32_226 = arith.constant 1 : i32
      %674 = vector.broadcast %c1_i32_226 : i32 to vector<1x512xi32>
      %675 = arith.addi %116, %674 : vector<1x512xi32>
      %c-1_i32_227 = arith.constant -1 : i32
      %676 = vector.broadcast %c-1_i32_227 : i32 to vector<1x512xi32>
      %677 = arith.addi %120, %676 : vector<1x512xi32>
      %c0_i32_228 = arith.constant 0 : i32
      %678 = vector.broadcast %c0_i32_228 : i32 to vector<1x512xi32>
      %679 = arith.addi %122, %678 : vector<1x512xi32>
      %c0_i32_229 = arith.constant 0 : i32
      %680 = vector.broadcast %c0_i32_229 : i32 to vector<1x512xi32>
      %681 = arith.cmpi sge, %675, %680 : vector<1x512xi32>
      %c8_i32_230 = arith.constant 8 : i32
      %682 = vector.broadcast %c8_i32_230 : i32 to vector<1x512xi32>
      %683 = arith.cmpi slt, %675, %682 : vector<1x512xi32>
      %684 = arith.andi %681, %683 : vector<1x512xi1>
      %c0_i32_231 = arith.constant 0 : i32
      %685 = vector.broadcast %c0_i32_231 : i32 to vector<1x512xi32>
      %686 = arith.cmpi sge, %677, %685 : vector<1x512xi32>
      %687 = arith.andi %684, %686 : vector<1x512xi1>
      %c8_i32_232 = arith.constant 8 : i32
      %688 = vector.broadcast %c8_i32_232 : i32 to vector<1x512xi32>
      %689 = arith.cmpi slt, %677, %688 : vector<1x512xi32>
      %690 = arith.andi %687, %689 : vector<1x512xi1>
      %c0_i32_233 = arith.constant 0 : i32
      %691 = vector.broadcast %c0_i32_233 : i32 to vector<1x512xi32>
      %692 = arith.cmpi sge, %679, %691 : vector<1x512xi32>
      %693 = arith.andi %690, %692 : vector<1x512xi1>
      %c8_i32_234 = arith.constant 8 : i32
      %694 = vector.broadcast %c8_i32_234 : i32 to vector<1x512xi32>
      %695 = arith.cmpi slt, %679, %694 : vector<1x512xi32>
      %696 = arith.andi %693, %695 : vector<1x512xi1>
      %697 = arith.extui %696 : vector<1x512xi1> to vector<1x512xi32>
      %698 = arith.sitofp %697 : vector<1x512xi32> to vector<1x512xf32>
      %699 = vector.broadcast %698 : vector<1x512xf32> to vector<8x512xf32>
      %700 = arith.mulf %673, %699 : vector<8x512xf32>
      %c152 = arith.constant 152 : index
      %c0_235 = arith.constant 0 : index
      %701 = vector.load %arg11[%c152, %c0_235] : memref<216x512xf32, #tpu.memory_space<vmem>>, vector<8x512xf32>
      tpu.vector_store %arg11[%c152, %c0_235], %700 {strides = array<i32>} : memref<216x512xf32, #tpu.memory_space<vmem>>, vector<8x512xf32>,
      %c455_i32 = arith.constant 455 : i32
      %702 = tpu.dynamic_rotate %113 by %c455_i32 dim 1 : vector<8x512xf32>, i32 -> vector<8x512xf32>
      %c1_i32_236 = arith.constant 1 : i32
      %703 = vector.broadcast %c1_i32_236 : i32 to vector<1x512xi32>
      %704 = arith.addi %116, %703 : vector<1x512xi32>
      %c-1_i32_237 = arith.constant -1 : i32
      %705 = vector.broadcast %c-1_i32_237 : i32 to vector<1x512xi32>
      %706 = arith.addi %120, %705 : vector<1x512xi32>
      %c1_i32_238 = arith.constant 1 : i32
      %707 = vector.broadcast %c1_i32_238 : i32 to vector<1x512xi32>
      %708 = arith.addi %122, %707 : vector<1x512xi32>
      %c0_i32_239 = arith.constant 0 : i32
      %709 = vector.broadcast %c0_i32_239 : i32 to vector<1x512xi32>
      %710 = arith.cmpi sge, %704, %709 : vector<1x512xi32>
      %c8_i32_240 = arith.constant 8 : i32
      %711 = vector.broadcast %c8_i32_240 : i32 to vector<1x512xi32>
      %712 = arith.cmpi slt, %704, %711 : vector<1x512xi32>
      %713 = arith.andi %710, %712 : vector<1x512xi1>
      %c0_i32_241 = arith.constant 0 : i32
      %714 = vector.broadcast %c0_i32_241 : i32 to vector<1x512xi32>
      %715 = arith.cmpi sge, %706, %714 : vector<1x512xi32>
      %716 = arith.andi %713, %715 : vector<1x512xi1>
      %c8_i32_242 = arith.constant 8 : i32
      %717 = vector.broadcast %c8_i32_242 : i32 to vector<1x512xi32>
      %718 = arith.cmpi slt, %706, %717 : vector<1x512xi32>
      %719 = arith.andi %716, %718 : vector<1x512xi1>
      %c0_i32_243 = arith.constant 0 : i32
      %720 = vector.broadcast %c0_i32_243 : i32 to vector<1x512xi32>
      %721 = arith.cmpi sge, %708, %720 : vector<1x512xi32>
      %722 = arith.andi %719, %721 : vector<1x512xi1>
      %c8_i32_244 = arith.constant 8 : i32
      %723 = vector.broadcast %c8_i32_244 : i32 to vector<1x512xi32>
      %724 = arith.cmpi slt, %708, %723 : vector<1x512xi32>
      %725 = arith.andi %722, %724 : vector<1x512xi1>
      %726 = arith.extui %725 : vector<1x512xi1> to vector<1x512xi32>
      %727 = arith.sitofp %726 : vector<1x512xi32> to vector<1x512xf32>
      %728 = vector.broadcast %727 : vector<1x512xf32> to vector<8x512xf32>
      %729 = arith.mulf %702, %728 : vector<8x512xf32>
      %c160 = arith.constant 160 : index
      %c0_245 = arith.constant 0 : index
      %730 = vector.load %arg11[%c160, %c0_245] : memref<216x512xf32, #tpu.memory_space<vmem>>, vector<8x512xf32>
      tpu.vector_store %arg11[%c160, %c0_245], %729 {strides = array<i32>} : memref<216x512xf32, #tpu.memory_space<vmem>>, vector<8x512xf32>,
      %c449_i32 = arith.constant 449 : i32
      %731 = tpu.dynamic_rotate %113 by %c449_i32 dim 1 : vector<8x512xf32>, i32 -> vector<8x512xf32>
      %c1_i32_246 = arith.constant 1 : i32
      %732 = vector.broadcast %c1_i32_246 : i32 to vector<1x512xi32>
      %733 = arith.addi %116, %732 : vector<1x512xi32>
      %c0_i32_247 = arith.constant 0 : i32
      %734 = vector.broadcast %c0_i32_247 : i32 to vector<1x512xi32>
      %735 = arith.addi %120, %734 : vector<1x512xi32>
      %c-1_i32_248 = arith.constant -1 : i32
      %736 = vector.broadcast %c-1_i32_248 : i32 to vector<1x512xi32>
      %737 = arith.addi %122, %736 : vector<1x512xi32>
      %c0_i32_249 = arith.constant 0 : i32
      %738 = vector.broadcast %c0_i32_249 : i32 to vector<1x512xi32>
      %739 = arith.cmpi sge, %733, %738 : vector<1x512xi32>
      %c8_i32_250 = arith.constant 8 : i32
      %740 = vector.broadcast %c8_i32_250 : i32 to vector<1x512xi32>
      %741 = arith.cmpi slt, %733, %740 : vector<1x512xi32>
      %742 = arith.andi %739, %741 : vector<1x512xi1>
      %c0_i32_251 = arith.constant 0 : i32
      %743 = vector.broadcast %c0_i32_251 : i32 to vector<1x512xi32>
      %744 = arith.cmpi sge, %735, %743 : vector<1x512xi32>
      %745 = arith.andi %742, %744 : vector<1x512xi1>
      %c8_i32_252 = arith.constant 8 : i32
      %746 = vector.broadcast %c8_i32_252 : i32 to vector<1x512xi32>
      %747 = arith.cmpi slt, %735, %746 : vector<1x512xi32>
      %748 = arith.andi %745, %747 : vector<1x512xi1>
      %c0_i32_253 = arith.constant 0 : i32
      %749 = vector.broadcast %c0_i32_253 : i32 to vector<1x512xi32>
      %750 = arith.cmpi sge, %737, %749 : vector<1x512xi32>
      %751 = arith.andi %748, %750 : vector<1x512xi1>
      %c8_i32_254 = arith.constant 8 : i32
      %752 = vector.broadcast %c8_i32_254 : i32 to vector<1x512xi32>
      %753 = arith.cmpi slt, %737, %752 : vector<1x512xi32>
      %754 = arith.andi %751, %753 : vector<1x512xi1>
      %755 = arith.extui %754 : vector<1x512xi1> to vector<1x512xi32>
      %756 = arith.sitofp %755 : vector<1x512xi32> to vector<1x512xf32>
      %757 = vector.broadcast %756 : vector<1x512xf32> to vector<8x512xf32>
      %758 = arith.mulf %731, %757 : vector<8x512xf32>
      %c168 = arith.constant 168 : index
      %c0_255 = arith.constant 0 : index
      %759 = vector.load %arg11[%c168, %c0_255] : memref<216x512xf32, #tpu.memory_space<vmem>>, vector<8x512xf32>
      tpu.vector_store %arg11[%c168, %c0_255], %758 {strides = array<i32>} : memref<216x512xf32, #tpu.memory_space<vmem>>, vector<8x512xf32>,
      %c448_i32 = arith.constant 448 : i32
      %760 = tpu.dynamic_rotate %113 by %c448_i32 dim 1 : vector<8x512xf32>, i32 -> vector<8x512xf32>
      %c1_i32_256 = arith.constant 1 : i32
      %761 = vector.broadcast %c1_i32_256 : i32 to vector<1x512xi32>
      %762 = arith.addi %116, %761 : vector<1x512xi32>
      %c0_i32_257 = arith.constant 0 : i32
      %763 = vector.broadcast %c0_i32_257 : i32 to vector<1x512xi32>
      %764 = arith.addi %120, %763 : vector<1x512xi32>
      %c0_i32_258 = arith.constant 0 : i32
      %765 = vector.broadcast %c0_i32_258 : i32 to vector<1x512xi32>
      %766 = arith.addi %122, %765 : vector<1x512xi32>
      %c0_i32_259 = arith.constant 0 : i32
      %767 = vector.broadcast %c0_i32_259 : i32 to vector<1x512xi32>
      %768 = arith.cmpi sge, %762, %767 : vector<1x512xi32>
      %c8_i32_260 = arith.constant 8 : i32
      %769 = vector.broadcast %c8_i32_260 : i32 to vector<1x512xi32>
      %770 = arith.cmpi slt, %762, %769 : vector<1x512xi32>
      %771 = arith.andi %768, %770 : vector<1x512xi1>
      %c0_i32_261 = arith.constant 0 : i32
      %772 = vector.broadcast %c0_i32_261 : i32 to vector<1x512xi32>
      %773 = arith.cmpi sge, %764, %772 : vector<1x512xi32>
      %774 = arith.andi %771, %773 : vector<1x512xi1>
      %c8_i32_262 = arith.constant 8 : i32
      %775 = vector.broadcast %c8_i32_262 : i32 to vector<1x512xi32>
      %776 = arith.cmpi slt, %764, %775 : vector<1x512xi32>
      %777 = arith.andi %774, %776 : vector<1x512xi1>
      %c0_i32_263 = arith.constant 0 : i32
      %778 = vector.broadcast %c0_i32_263 : i32 to vector<1x512xi32>
      %779 = arith.cmpi sge, %766, %778 : vector<1x512xi32>
      %780 = arith.andi %777, %779 : vector<1x512xi1>
      %c8_i32_264 = arith.constant 8 : i32
      %781 = vector.broadcast %c8_i32_264 : i32 to vector<1x512xi32>
      %782 = arith.cmpi slt, %766, %781 : vector<1x512xi32>
      %783 = arith.andi %780, %782 : vector<1x512xi1>
      %784 = arith.extui %783 : vector<1x512xi1> to vector<1x512xi32>
      %785 = arith.sitofp %784 : vector<1x512xi32> to vector<1x512xf32>
      %786 = vector.broadcast %785 : vector<1x512xf32> to vector<8x512xf32>
      %787 = arith.mulf %760, %786 : vector<8x512xf32>
      %c176 = arith.constant 176 : index
      %c0_265 = arith.constant 0 : index
      %788 = vector.load %arg11[%c176, %c0_265] : memref<216x512xf32, #tpu.memory_space<vmem>>, vector<8x512xf32>
      tpu.vector_store %arg11[%c176, %c0_265], %787 {strides = array<i32>} : memref<216x512xf32, #tpu.memory_space<vmem>>, vector<8x512xf32>,
      %c447_i32 = arith.constant 447 : i32
      %789 = tpu.dynamic_rotate %113 by %c447_i32 dim 1 : vector<8x512xf32>, i32 -> vector<8x512xf32>
      %c1_i32_266 = arith.constant 1 : i32
      %790 = vector.broadcast %c1_i32_266 : i32 to vector<1x512xi32>
      %791 = arith.addi %116, %790 : vector<1x512xi32>
      %c0_i32_267 = arith.constant 0 : i32
      %792 = vector.broadcast %c0_i32_267 : i32 to vector<1x512xi32>
      %793 = arith.addi %120, %792 : vector<1x512xi32>
      %c1_i32_268 = arith.constant 1 : i32
      %794 = vector.broadcast %c1_i32_268 : i32 to vector<1x512xi32>
      %795 = arith.addi %122, %794 : vector<1x512xi32>
      %c0_i32_269 = arith.constant 0 : i32
      %796 = vector.broadcast %c0_i32_269 : i32 to vector<1x512xi32>
      %797 = arith.cmpi sge, %791, %796 : vector<1x512xi32>
      %c8_i32_270 = arith.constant 8 : i32
      %798 = vector.broadcast %c8_i32_270 : i32 to vector<1x512xi32>
      %799 = arith.cmpi slt, %791, %798 : vector<1x512xi32>
      %800 = arith.andi %797, %799 : vector<1x512xi1>
      %c0_i32_271 = arith.constant 0 : i32
      %801 = vector.broadcast %c0_i32_271 : i32 to vector<1x512xi32>
      %802 = arith.cmpi sge, %793, %801 : vector<1x512xi32>
      %803 = arith.andi %800, %802 : vector<1x512xi1>
      %c8_i32_272 = arith.constant 8 : i32
      %804 = vector.broadcast %c8_i32_272 : i32 to vector<1x512xi32>
      %805 = arith.cmpi slt, %793, %804 : vector<1x512xi32>
      %806 = arith.andi %803, %805 : vector<1x512xi1>
      %c0_i32_273 = arith.constant 0 : i32
      %807 = vector.broadcast %c0_i32_273 : i32 to vector<1x512xi32>
      %808 = arith.cmpi sge, %795, %807 : vector<1x512xi32>
      %809 = arith.andi %806, %808 : vector<1x512xi1>
      %c8_i32_274 = arith.constant 8 : i32
      %810 = vector.broadcast %c8_i32_274 : i32 to vector<1x512xi32>
      %811 = arith.cmpi slt, %795, %810 : vector<1x512xi32>
      %812 = arith.andi %809, %811 : vector<1x512xi1>
      %813 = arith.extui %812 : vector<1x512xi1> to vector<1x512xi32>
      %814 = arith.sitofp %813 : vector<1x512xi32> to vector<1x512xf32>
      %815 = vector.broadcast %814 : vector<1x512xf32> to vector<8x512xf32>
      %816 = arith.mulf %789, %815 : vector<8x512xf32>
      %c184 = arith.constant 184 : index
      %c0_275 = arith.constant 0 : index
      %817 = vector.load %arg11[%c184, %c0_275] : memref<216x512xf32, #tpu.memory_space<vmem>>, vector<8x512xf32>
      tpu.vector_store %arg11[%c184, %c0_275], %816 {strides = array<i32>} : memref<216x512xf32, #tpu.memory_space<vmem>>, vector<8x512xf32>,
      %c441_i32 = arith.constant 441 : i32
      %818 = tpu.dynamic_rotate %113 by %c441_i32 dim 1 : vector<8x512xf32>, i32 -> vector<8x512xf32>
      %c1_i32_276 = arith.constant 1 : i32
      %819 = vector.broadcast %c1_i32_276 : i32 to vector<1x512xi32>
      %820 = arith.addi %116, %819 : vector<1x512xi32>
      %c1_i32_277 = arith.constant 1 : i32
      %821 = vector.broadcast %c1_i32_277 : i32 to vector<1x512xi32>
      %822 = arith.addi %120, %821 : vector<1x512xi32>
      %c-1_i32_278 = arith.constant -1 : i32
      %823 = vector.broadcast %c-1_i32_278 : i32 to vector<1x512xi32>
      %824 = arith.addi %122, %823 : vector<1x512xi32>
      %c0_i32_279 = arith.constant 0 : i32
      %825 = vector.broadcast %c0_i32_279 : i32 to vector<1x512xi32>
      %826 = arith.cmpi sge, %820, %825 : vector<1x512xi32>
      %c8_i32_280 = arith.constant 8 : i32
      %827 = vector.broadcast %c8_i32_280 : i32 to vector<1x512xi32>
      %828 = arith.cmpi slt, %820, %827 : vector<1x512xi32>
      %829 = arith.andi %826, %828 : vector<1x512xi1>
      %c0_i32_281 = arith.constant 0 : i32
      %830 = vector.broadcast %c0_i32_281 : i32 to vector<1x512xi32>
      %831 = arith.cmpi sge, %822, %830 : vector<1x512xi32>
      %832 = arith.andi %829, %831 : vector<1x512xi1>
      %c8_i32_282 = arith.constant 8 : i32
      %833 = vector.broadcast %c8_i32_282 : i32 to vector<1x512xi32>
      %834 = arith.cmpi slt, %822, %833 : vector<1x512xi32>
      %835 = arith.andi %832, %834 : vector<1x512xi1>
      %c0_i32_283 = arith.constant 0 : i32
      %836 = vector.broadcast %c0_i32_283 : i32 to vector<1x512xi32>
      %837 = arith.cmpi sge, %824, %836 : vector<1x512xi32>
      %838 = arith.andi %835, %837 : vector<1x512xi1>
      %c8_i32_284 = arith.constant 8 : i32
      %839 = vector.broadcast %c8_i32_284 : i32 to vector<1x512xi32>
      %840 = arith.cmpi slt, %824, %839 : vector<1x512xi32>
      %841 = arith.andi %838, %840 : vector<1x512xi1>
      %842 = arith.extui %841 : vector<1x512xi1> to vector<1x512xi32>
      %843 = arith.sitofp %842 : vector<1x512xi32> to vector<1x512xf32>
      %844 = vector.broadcast %843 : vector<1x512xf32> to vector<8x512xf32>
      %845 = arith.mulf %818, %844 : vector<8x512xf32>
      %c192 = arith.constant 192 : index
      %c0_285 = arith.constant 0 : index
      %846 = vector.load %arg11[%c192, %c0_285] : memref<216x512xf32, #tpu.memory_space<vmem>>, vector<8x512xf32>
      tpu.vector_store %arg11[%c192, %c0_285], %845 {strides = array<i32>} : memref<216x512xf32, #tpu.memory_space<vmem>>, vector<8x512xf32>,
      %c440_i32 = arith.constant 440 : i32
      %847 = tpu.dynamic_rotate %113 by %c440_i32 dim 1 : vector<8x512xf32>, i32 -> vector<8x512xf32>
      %c1_i32_286 = arith.constant 1 : i32
      %848 = vector.broadcast %c1_i32_286 : i32 to vector<1x512xi32>
      %849 = arith.addi %116, %848 : vector<1x512xi32>
      %c1_i32_287 = arith.constant 1 : i32
      %850 = vector.broadcast %c1_i32_287 : i32 to vector<1x512xi32>
      %851 = arith.addi %120, %850 : vector<1x512xi32>
      %c0_i32_288 = arith.constant 0 : i32
      %852 = vector.broadcast %c0_i32_288 : i32 to vector<1x512xi32>
      %853 = arith.addi %122, %852 : vector<1x512xi32>
      %c0_i32_289 = arith.constant 0 : i32
      %854 = vector.broadcast %c0_i32_289 : i32 to vector<1x512xi32>
      %855 = arith.cmpi sge, %849, %854 : vector<1x512xi32>
      %c8_i32_290 = arith.constant 8 : i32
      %856 = vector.broadcast %c8_i32_290 : i32 to vector<1x512xi32>
      %857 = arith.cmpi slt, %849, %856 : vector<1x512xi32>
      %858 = arith.andi %855, %857 : vector<1x512xi1>
      %c0_i32_291 = arith.constant 0 : i32
      %859 = vector.broadcast %c0_i32_291 : i32 to vector<1x512xi32>
      %860 = arith.cmpi sge, %851, %859 : vector<1x512xi32>
      %861 = arith.andi %858, %860 : vector<1x512xi1>
      %c8_i32_292 = arith.constant 8 : i32
      %862 = vector.broadcast %c8_i32_292 : i32 to vector<1x512xi32>
      %863 = arith.cmpi slt, %851, %862 : vector<1x512xi32>
      %864 = arith.andi %861, %863 : vector<1x512xi1>
      %c0_i32_293 = arith.constant 0 : i32
      %865 = vector.broadcast %c0_i32_293 : i32 to vector<1x512xi32>
      %866 = arith.cmpi sge, %853, %865 : vector<1x512xi32>
      %867 = arith.andi %864, %866 : vector<1x512xi1>
      %c8_i32_294 = arith.constant 8 : i32
      %868 = vector.broadcast %c8_i32_294 : i32 to vector<1x512xi32>
      %869 = arith.cmpi slt, %853, %868 : vector<1x512xi32>
      %870 = arith.andi %867, %869 : vector<1x512xi1>
      %871 = arith.extui %870 : vector<1x512xi1> to vector<1x512xi32>
      %872 = arith.sitofp %871 : vector<1x512xi32> to vector<1x512xf32>
      %873 = vector.broadcast %872 : vector<1x512xf32> to vector<8x512xf32>
      %874 = arith.mulf %847, %873 : vector<8x512xf32>
      %c200 = arith.constant 200 : index
      %c0_295 = arith.constant 0 : index
      %875 = vector.load %arg11[%c200, %c0_295] : memref<216x512xf32, #tpu.memory_space<vmem>>, vector<8x512xf32>
      tpu.vector_store %arg11[%c200, %c0_295], %874 {strides = array<i32>} : memref<216x512xf32, #tpu.memory_space<vmem>>, vector<8x512xf32>,
      %c439_i32 = arith.constant 439 : i32
      %876 = tpu.dynamic_rotate %113 by %c439_i32 dim 1 : vector<8x512xf32>, i32 -> vector<8x512xf32>
      %c1_i32_296 = arith.constant 1 : i32
      %877 = vector.broadcast %c1_i32_296 : i32 to vector<1x512xi32>
      %878 = arith.addi %116, %877 : vector<1x512xi32>
      %c1_i32_297 = arith.constant 1 : i32
      %879 = vector.broadcast %c1_i32_297 : i32 to vector<1x512xi32>
      %880 = arith.addi %120, %879 : vector<1x512xi32>
      %c1_i32_298 = arith.constant 1 : i32
      %881 = vector.broadcast %c1_i32_298 : i32 to vector<1x512xi32>
      %882 = arith.addi %122, %881 : vector<1x512xi32>
      %c0_i32_299 = arith.constant 0 : i32
      %883 = vector.broadcast %c0_i32_299 : i32 to vector<1x512xi32>
      %884 = arith.cmpi sge, %878, %883 : vector<1x512xi32>
      %c8_i32_300 = arith.constant 8 : i32
      %885 = vector.broadcast %c8_i32_300 : i32 to vector<1x512xi32>
      %886 = arith.cmpi slt, %878, %885 : vector<1x512xi32>
      %887 = arith.andi %884, %886 : vector<1x512xi1>
      %c0_i32_301 = arith.constant 0 : i32
      %888 = vector.broadcast %c0_i32_301 : i32 to vector<1x512xi32>
      %889 = arith.cmpi sge, %880, %888 : vector<1x512xi32>
      %890 = arith.andi %887, %889 : vector<1x512xi1>
      %c8_i32_302 = arith.constant 8 : i32
      %891 = vector.broadcast %c8_i32_302 : i32 to vector<1x512xi32>
      %892 = arith.cmpi slt, %880, %891 : vector<1x512xi32>
      %893 = arith.andi %890, %892 : vector<1x512xi1>
      %c0_i32_303 = arith.constant 0 : i32
      %894 = vector.broadcast %c0_i32_303 : i32 to vector<1x512xi32>
      %895 = arith.cmpi sge, %882, %894 : vector<1x512xi32>
      %896 = arith.andi %893, %895 : vector<1x512xi1>
      %c8_i32_304 = arith.constant 8 : i32
      %897 = vector.broadcast %c8_i32_304 : i32 to vector<1x512xi32>
      %898 = arith.cmpi slt, %882, %897 : vector<1x512xi32>
      %899 = arith.andi %896, %898 : vector<1x512xi1>
      %900 = arith.extui %899 : vector<1x512xi1> to vector<1x512xi32>
      %901 = arith.sitofp %900 : vector<1x512xi32> to vector<1x512xf32>
      %902 = vector.broadcast %901 : vector<1x512xf32> to vector<8x512xf32>
      %903 = arith.mulf %876, %902 : vector<8x512xf32>
      %c208 = arith.constant 208 : index
      %c0_305 = arith.constant 0 : index
      %904 = vector.load %arg11[%c208, %c0_305] : memref<216x512xf32, #tpu.memory_space<vmem>>, vector<8x512xf32>
      tpu.vector_store %arg11[%c208, %c0_305], %903 {strides = array<i32>} : memref<216x512xf32, #tpu.memory_space<vmem>>, vector<8x512xf32>,
      %c0_306 = arith.constant 0 : index
      %c0_307 = arith.constant 0 : index
      %905 = vector.load %arg3[%c0_306, %c0_307] : memref<10x216xf32, #tpu.memory_space<vmem>>, vector<10x216xf32>
      %c0_308 = arith.constant 0 : index
      %c0_309 = arith.constant 0 : index
      %906 = vector.load %arg11[%c0_308, %c0_309] : memref<216x512xf32, #tpu.memory_space<vmem>>, vector<216x512xf32>
      %cst_310 = arith.constant dense<0.000000e+00> : vector<10x512xf32>
      %907 = tpu.matmul %905, %906, %cst_310 {dimension_numbers = #tpu.dot_dimension_numbers<[1], [0], [0], [1], [0, 0, 1, 1], [], []>} : vector<10x216xf32>, vector<216x512xf32>, vector<10x512xf32> -> vector<10x512xf32>
      %cst_311 = arith.constant dense<0.000000e+00> : vector<10xf32>
      %908 = vector.multi_reduction <add>, %907, %cst_311 [1] : vector<10x512xf32> to vector<10xf32>
      %909 = vector.shape_cast %908 : vector<10xf32> to vector<10x1xf32>
      %cst_312 = arith.constant 0.001953125 : f32
      %910 = vector.broadcast %cst_312 : f32 to vector<10x1xf32>
      %911 = arith.mulf %909, %910 : vector<10x1xf32>
      %912 = vector.broadcast %911 : vector<10x1xf32> to vector<10x512xf32>
      %913 = arith.subf %907, %912 : vector<10x512xf32>
      %914 = arith.mulf %913, %913 : vector<10x512xf32>
      %cst_313 = arith.constant dense<0.000000e+00> : vector<10xf32>
      %915 = vector.multi_reduction <add>, %914, %cst_313 [1] : vector<10x512xf32> to vector<10xf32>
      %916 = vector.shape_cast %915 : vector<10xf32> to vector<10x1xf32>
      %cst_314 = arith.constant 0.001953125 : f32
      %917 = vector.broadcast %cst_314 : f32 to vector<10x1xf32>
      %918 = arith.mulf %916, %917 : vector<10x1xf32>
      %c0_315 = arith.constant 0 : index
      %c0_316 = arith.constant 0 : index
      %919 = vector.load %arg5[%c0_315, %c0_316] : memref<10x2xf32, #tpu.memory_space<vmem>>, vector<10x1xf32>
      %cst_317 = arith.constant 9.99999974E-6 : f32
      %920 = vector.broadcast %cst_317 : f32 to vector<10x1xf32>
      %921 = arith.addf %918, %920 : vector<10x1xf32>
      %922 = math.rsqrt %921 : vector<10x1xf32>
      %923 = arith.mulf %919, %922 : vector<10x1xf32>
      %924 = vector.broadcast %923 : vector<10x1xf32> to vector<10x512xf32>
      %925 = arith.mulf %913, %924 : vector<10x512xf32>
      %c0_318 = arith.constant 0 : index
      %c1 = arith.constant 1 : index
      %926 = vector.load %arg5[%c0_318, %c1] : memref<10x2xf32, #tpu.memory_space<vmem>>, vector<10x1xf32>
      %927 = vector.broadcast %926 : vector<10x1xf32> to vector<10x512xf32>
      %928 = arith.addf %925, %927 : vector<10x512xf32>
      %929 = vector.extract_strided_slice %928 {offsets = [0, 0], sizes = [2, 512], strides = [1, 1]} : vector<10x512xf32> to vector<2x512xf32>
      %cst_319 = arith.constant 0.000000e+00 : f32
      %930 = vector.broadcast %cst_319 : f32 to vector<2x512xf32>
      %931 = arith.maximumf %929, %930 : vector<2x512xf32>
      %932 = vector.extract_strided_slice %928 {offsets = [8, 0], sizes = [1, 512], strides = [1, 1]} : vector<10x512xf32> to vector<1x512xf32>
      %933 = arith.negf %932 : vector<1x512xf32>
      %934 = math.exp %933 : vector<1x512xf32>
      %cst_320 = arith.constant 1.000000e+00 : f32
      %935 = vector.broadcast %cst_320 : f32 to vector<1x512xf32>
      %936 = arith.addf %935, %934 : vector<1x512xf32>
      %937 = arith.divf %935, %936 : vector<1x512xf32>
      %938 = vector.extract_strided_slice %928 {offsets = [2, 0], sizes = [3, 512], strides = [1, 1]} : vector<10x512xf32> to vector<3x512xf32>
      %939 = vector.broadcast %937 : vector<1x512xf32> to vector<3x512xf32>
      %940 = arith.mulf %938, %939 : vector<3x512xf32>
      %941 = vector.extract_strided_slice %928 {offsets = [9, 0], sizes = [1, 512], strides = [1, 1]} : vector<10x512xf32> to vector<1x512xf32>
      %942 = arith.negf %941 : vector<1x512xf32>
      %943 = math.exp %942 : vector<1x512xf32>
      %cst_321 = arith.constant 1.000000e+00 : f32
      %944 = vector.broadcast %cst_321 : f32 to vector<1x512xf32>
      %945 = arith.addf %944, %943 : vector<1x512xf32>
      %946 = arith.divf %944, %945 : vector<1x512xf32>
      %947 = vector.extract_strided_slice %928 {offsets = [5, 0], sizes = [3, 512], strides = [1, 1]} : vector<10x512xf32> to vector<3x512xf32>
      %948 = vector.broadcast %946 : vector<1x512xf32> to vector<3x512xf32>
      %949 = arith.mulf %947, %948 : vector<3x512xf32>
      %950 = tpu.concatenate %931, %940, %949 in 0 : vector<2x512xf32>, vector<3x512xf32>, vector<3x512xf32> -> vector<8x512xf32>
      %c73_i32_322 = arith.constant 73 : i32
      %951 = tpu.dynamic_rotate %950 by %c73_i32_322 dim 1 : vector<8x512xf32>, i32 -> vector<8x512xf32>
      %c-1_i32_323 = arith.constant -1 : i32
      %952 = vector.broadcast %c-1_i32_323 : i32 to vector<1x512xi32>
      %953 = arith.addi %116, %952 : vector<1x512xi32>
      %c-1_i32_324 = arith.constant -1 : i32
      %954 = vector.broadcast %c-1_i32_324 : i32 to vector<1x512xi32>
      %955 = arith.addi %120, %954 : vector<1x512xi32>
      %c-1_i32_325 = arith.constant -1 : i32
      %956 = vector.broadcast %c-1_i32_325 : i32 to vector<1x512xi32>
      %957 = arith.addi %122, %956 : vector<1x512xi32>
      %c0_i32_326 = arith.constant 0 : i32
      %958 = vector.broadcast %c0_i32_326 : i32 to vector<1x512xi32>
      %959 = arith.cmpi sge, %953, %958 : vector<1x512xi32>
      %c8_i32_327 = arith.constant 8 : i32
      %960 = vector.broadcast %c8_i32_327 : i32 to vector<1x512xi32>
      %961 = arith.cmpi slt, %953, %960 : vector<1x512xi32>
      %962 = arith.andi %959, %961 : vector<1x512xi1>
      %c0_i32_328 = arith.constant 0 : i32
      %963 = vector.broadcast %c0_i32_328 : i32 to vector<1x512xi32>
      %964 = arith.cmpi sge, %955, %963 : vector<1x512xi32>
      %965 = arith.andi %962, %964 : vector<1x512xi1>
      %c8_i32_329 = arith.constant 8 : i32
      %966 = vector.broadcast %c8_i32_329 : i32 to vector<1x512xi32>
      %967 = arith.cmpi slt, %955, %966 : vector<1x512xi32>
      %968 = arith.andi %965, %967 : vector<1x512xi1>
      %c0_i32_330 = arith.constant 0 : i32
      %969 = vector.broadcast %c0_i32_330 : i32 to vector<1x512xi32>
      %970 = arith.cmpi sge, %957, %969 : vector<1x512xi32>
      %971 = arith.andi %968, %970 : vector<1x512xi1>
      %c8_i32_331 = arith.constant 8 : i32
      %972 = vector.broadcast %c8_i32_331 : i32 to vector<1x512xi32>
      %973 = arith.cmpi slt, %957, %972 : vector<1x512xi32>
      %974 = arith.andi %971, %973 : vector<1x512xi1>
      %975 = arith.extui %974 : vector<1x512xi1> to vector<1x512xi32>
      %976 = arith.sitofp %975 : vector<1x512xi32> to vector<1x512xf32>
      %977 = vector.broadcast %976 : vector<1x512xf32> to vector<8x512xf32>
      %978 = arith.mulf %951, %977 : vector<8x512xf32>
      %c0_332 = arith.constant 0 : index
      %c0_333 = arith.constant 0 : index
      %979 = vector.load %arg11[%c0_332, %c0_333] : memref<216x512xf32, #tpu.memory_space<vmem>>, vector<8x512xf32>
      tpu.vector_store %arg11[%c0_332, %c0_333], %978 {strides = array<i32>} : memref<216x512xf32, #tpu.memory_space<vmem>>, vector<8x512xf32>,
      %c72_i32_334 = arith.constant 72 : i32
      %980 = tpu.dynamic_rotate %950 by %c72_i32_334 dim 1 : vector<8x512xf32>, i32 -> vector<8x512xf32>
      %c-1_i32_335 = arith.constant -1 : i32
      %981 = vector.broadcast %c-1_i32_335 : i32 to vector<1x512xi32>
      %982 = arith.addi %116, %981 : vector<1x512xi32>
      %c-1_i32_336 = arith.constant -1 : i32
      %983 = vector.broadcast %c-1_i32_336 : i32 to vector<1x512xi32>
      %984 = arith.addi %120, %983 : vector<1x512xi32>
      %c0_i32_337 = arith.constant 0 : i32
      %985 = vector.broadcast %c0_i32_337 : i32 to vector<1x512xi32>
      %986 = arith.addi %122, %985 : vector<1x512xi32>
      %c0_i32_338 = arith.constant 0 : i32
      %987 = vector.broadcast %c0_i32_338 : i32 to vector<1x512xi32>
      %988 = arith.cmpi sge, %982, %987 : vector<1x512xi32>
      %c8_i32_339 = arith.constant 8 : i32
      %989 = vector.broadcast %c8_i32_339 : i32 to vector<1x512xi32>
      %990 = arith.cmpi slt, %982, %989 : vector<1x512xi32>
      %991 = arith.andi %988, %990 : vector<1x512xi1>
      %c0_i32_340 = arith.constant 0 : i32
      %992 = vector.broadcast %c0_i32_340 : i32 to vector<1x512xi32>
      %993 = arith.cmpi sge, %984, %992 : vector<1x512xi32>
      %994 = arith.andi %991, %993 : vector<1x512xi1>
      %c8_i32_341 = arith.constant 8 : i32
      %995 = vector.broadcast %c8_i32_341 : i32 to vector<1x512xi32>
      %996 = arith.cmpi slt, %984, %995 : vector<1x512xi32>
      %997 = arith.andi %994, %996 : vector<1x512xi1>
      %c0_i32_342 = arith.constant 0 : i32
      %998 = vector.broadcast %c0_i32_342 : i32 to vector<1x512xi32>
      %999 = arith.cmpi sge, %986, %998 : vector<1x512xi32>
      %1000 = arith.andi %997, %999 : vector<1x512xi1>
      %c8_i32_343 = arith.constant 8 : i32
      %1001 = vector.broadcast %c8_i32_343 : i32 to vector<1x512xi32>
      %1002 = arith.cmpi slt, %986, %1001 : vector<1x512xi32>
      %1003 = arith.andi %1000, %1002 : vector<1x512xi1>
      %1004 = arith.extui %1003 : vector<1x512xi1> to vector<1x512xi32>
      %1005 = arith.sitofp %1004 : vector<1x512xi32> to vector<1x512xf32>
      %1006 = vector.broadcast %1005 : vector<1x512xf32> to vector<8x512xf32>
      %1007 = arith.mulf %980, %1006 : vector<8x512xf32>
      %c8_344 = arith.constant 8 : index
      %c0_345 = arith.constant 0 : index
      %1008 = vector.load %arg11[%c8_344, %c0_345] : memref<216x512xf32, #tpu.memory_space<vmem>>, vector<8x512xf32>
      tpu.vector_store %arg11[%c8_344, %c0_345], %1007 {strides = array<i32>} : memref<216x512xf32, #tpu.memory_space<vmem>>, vector<8x512xf32>,
      %c71_i32_346 = arith.constant 71 : i32
      %1009 = tpu.dynamic_rotate %950 by %c71_i32_346 dim 1 : vector<8x512xf32>, i32 -> vector<8x512xf32>
      %c-1_i32_347 = arith.constant -1 : i32
      %1010 = vector.broadcast %c-1_i32_347 : i32 to vector<1x512xi32>
      %1011 = arith.addi %116, %1010 : vector<1x512xi32>
      %c-1_i32_348 = arith.constant -1 : i32
      %1012 = vector.broadcast %c-1_i32_348 : i32 to vector<1x512xi32>
      %1013 = arith.addi %120, %1012 : vector<1x512xi32>
      %c1_i32_349 = arith.constant 1 : i32
      %1014 = vector.broadcast %c1_i32_349 : i32 to vector<1x512xi32>
      %1015 = arith.addi %122, %1014 : vector<1x512xi32>
      %c0_i32_350 = arith.constant 0 : i32
      %1016 = vector.broadcast %c0_i32_350 : i32 to vector<1x512xi32>
      %1017 = arith.cmpi sge, %1011, %1016 : vector<1x512xi32>
      %c8_i32_351 = arith.constant 8 : i32
      %1018 = vector.broadcast %c8_i32_351 : i32 to vector<1x512xi32>
      %1019 = arith.cmpi slt, %1011, %1018 : vector<1x512xi32>
      %1020 = arith.andi %1017, %1019 : vector<1x512xi1>
      %c0_i32_352 = arith.constant 0 : i32
      %1021 = vector.broadcast %c0_i32_352 : i32 to vector<1x512xi32>
      %1022 = arith.cmpi sge, %1013, %1021 : vector<1x512xi32>
      %1023 = arith.andi %1020, %1022 : vector<1x512xi1>
      %c8_i32_353 = arith.constant 8 : i32
      %1024 = vector.broadcast %c8_i32_353 : i32 to vector<1x512xi32>
      %1025 = arith.cmpi slt, %1013, %1024 : vector<1x512xi32>
      %1026 = arith.andi %1023, %1025 : vector<1x512xi1>
      %c0_i32_354 = arith.constant 0 : i32
      %1027 = vector.broadcast %c0_i32_354 : i32 to vector<1x512xi32>
      %1028 = arith.cmpi sge, %1015, %1027 : vector<1x512xi32>
      %1029 = arith.andi %1026, %1028 : vector<1x512xi1>
      %c8_i32_355 = arith.constant 8 : i32
      %1030 = vector.broadcast %c8_i32_355 : i32 to vector<1x512xi32>
      %1031 = arith.cmpi slt, %1015, %1030 : vector<1x512xi32>
      %1032 = arith.andi %1029, %1031 : vector<1x512xi1>
      %1033 = arith.extui %1032 : vector<1x512xi1> to vector<1x512xi32>
      %1034 = arith.sitofp %1033 : vector<1x512xi32> to vector<1x512xf32>
      %1035 = vector.broadcast %1034 : vector<1x512xf32> to vector<8x512xf32>
      %1036 = arith.mulf %1009, %1035 : vector<8x512xf32>
      %c16_356 = arith.constant 16 : index
      %c0_357 = arith.constant 0 : index
      %1037 = vector.load %arg11[%c16_356, %c0_357] : memref<216x512xf32, #tpu.memory_space<vmem>>, vector<8x512xf32>
      tpu.vector_store %arg11[%c16_356, %c0_357], %1036 {strides = array<i32>} : memref<216x512xf32, #tpu.memory_space<vmem>>, vector<8x512xf32>,
      %c65_i32_358 = arith.constant 65 : i32
      %1038 = tpu.dynamic_rotate %950 by %c65_i32_358 dim 1 : vector<8x512xf32>, i32 -> vector<8x512xf32>
      %c-1_i32_359 = arith.constant -1 : i32
      %1039 = vector.broadcast %c-1_i32_359 : i32 to vector<1x512xi32>
      %1040 = arith.addi %116, %1039 : vector<1x512xi32>
      %c0_i32_360 = arith.constant 0 : i32
      %1041 = vector.broadcast %c0_i32_360 : i32 to vector<1x512xi32>
      %1042 = arith.addi %120, %1041 : vector<1x512xi32>
      %c-1_i32_361 = arith.constant -1 : i32
      %1043 = vector.broadcast %c-1_i32_361 : i32 to vector<1x512xi32>
      %1044 = arith.addi %122, %1043 : vector<1x512xi32>
      %c0_i32_362 = arith.constant 0 : i32
      %1045 = vector.broadcast %c0_i32_362 : i32 to vector<1x512xi32>
      %1046 = arith.cmpi sge, %1040, %1045 : vector<1x512xi32>
      %c8_i32_363 = arith.constant 8 : i32
      %1047 = vector.broadcast %c8_i32_363 : i32 to vector<1x512xi32>
      %1048 = arith.cmpi slt, %1040, %1047 : vector<1x512xi32>
      %1049 = arith.andi %1046, %1048 : vector<1x512xi1>
      %c0_i32_364 = arith.constant 0 : i32
      %1050 = vector.broadcast %c0_i32_364 : i32 to vector<1x512xi32>
      %1051 = arith.cmpi sge, %1042, %1050 : vector<1x512xi32>
      %1052 = arith.andi %1049, %1051 : vector<1x512xi1>
      %c8_i32_365 = arith.constant 8 : i32
      %1053 = vector.broadcast %c8_i32_365 : i32 to vector<1x512xi32>
      %1054 = arith.cmpi slt, %1042, %1053 : vector<1x512xi32>
      %1055 = arith.andi %1052, %1054 : vector<1x512xi1>
      %c0_i32_366 = arith.constant 0 : i32
      %1056 = vector.broadcast %c0_i32_366 : i32 to vector<1x512xi32>
      %1057 = arith.cmpi sge, %1044, %1056 : vector<1x512xi32>
      %1058 = arith.andi %1055, %1057 : vector<1x512xi1>
      %c8_i32_367 = arith.constant 8 : i32
      %1059 = vector.broadcast %c8_i32_367 : i32 to vector<1x512xi32>
      %1060 = arith.cmpi slt, %1044, %1059 : vector<1x512xi32>
      %1061 = arith.andi %1058, %1060 : vector<1x512xi1>
      %1062 = arith.extui %1061 : vector<1x512xi1> to vector<1x512xi32>
      %1063 = arith.sitofp %1062 : vector<1x512xi32> to vector<1x512xf32>
      %1064 = vector.broadcast %1063 : vector<1x512xf32> to vector<8x512xf32>
      %1065 = arith.mulf %1038, %1064 : vector<8x512xf32>
      %c24_368 = arith.constant 24 : index
      %c0_369 = arith.constant 0 : index
      %1066 = vector.load %arg11[%c24_368, %c0_369] : memref<216x512xf32, #tpu.memory_space<vmem>>, vector<8x512xf32>
      tpu.vector_store %arg11[%c24_368, %c0_369], %1065 {strides = array<i32>} : memref<216x512xf32, #tpu.memory_space<vmem>>, vector<8x512xf32>,
      %c64_i32_370 = arith.constant 64 : i32
      %1067 = tpu.dynamic_rotate %950 by %c64_i32_370 dim 1 : vector<8x512xf32>, i32 -> vector<8x512xf32>
      %c-1_i32_371 = arith.constant -1 : i32
      %1068 = vector.broadcast %c-1_i32_371 : i32 to vector<1x512xi32>
      %1069 = arith.addi %116, %1068 : vector<1x512xi32>
      %c0_i32_372 = arith.constant 0 : i32
      %1070 = vector.broadcast %c0_i32_372 : i32 to vector<1x512xi32>
      %1071 = arith.addi %120, %1070 : vector<1x512xi32>
      %c0_i32_373 = arith.constant 0 : i32
      %1072 = vector.broadcast %c0_i32_373 : i32 to vector<1x512xi32>
      %1073 = arith.addi %122, %1072 : vector<1x512xi32>
      %c0_i32_374 = arith.constant 0 : i32
      %1074 = vector.broadcast %c0_i32_374 : i32 to vector<1x512xi32>
      %1075 = arith.cmpi sge, %1069, %1074 : vector<1x512xi32>
      %c8_i32_375 = arith.constant 8 : i32
      %1076 = vector.broadcast %c8_i32_375 : i32 to vector<1x512xi32>
      %1077 = arith.cmpi slt, %1069, %1076 : vector<1x512xi32>
      %1078 = arith.andi %1075, %1077 : vector<1x512xi1>
      %c0_i32_376 = arith.constant 0 : i32
      %1079 = vector.broadcast %c0_i32_376 : i32 to vector<1x512xi32>
      %1080 = arith.cmpi sge, %1071, %1079 : vector<1x512xi32>
      %1081 = arith.andi %1078, %1080 : vector<1x512xi1>
      %c8_i32_377 = arith.constant 8 : i32
      %1082 = vector.broadcast %c8_i32_377 : i32 to vector<1x512xi32>
      %1083 = arith.cmpi slt, %1071, %1082 : vector<1x512xi32>
      %1084 = arith.andi %1081, %1083 : vector<1x512xi1>
      %c0_i32_378 = arith.constant 0 : i32
      %1085 = vector.broadcast %c0_i32_378 : i32 to vector<1x512xi32>
      %1086 = arith.cmpi sge, %1073, %1085 : vector<1x512xi32>
      %1087 = arith.andi %1084, %1086 : vector<1x512xi1>
      %c8_i32_379 = arith.constant 8 : i32
      %1088 = vector.broadcast %c8_i32_379 : i32 to vector<1x512xi32>
      %1089 = arith.cmpi slt, %1073, %1088 : vector<1x512xi32>
      %1090 = arith.andi %1087, %1089 : vector<1x512xi1>
      %1091 = arith.extui %1090 : vector<1x512xi1> to vector<1x512xi32>
      %1092 = arith.sitofp %1091 : vector<1x512xi32> to vector<1x512xf32>
      %1093 = vector.broadcast %1092 : vector<1x512xf32> to vector<8x512xf32>
      %1094 = arith.mulf %1067, %1093 : vector<8x512xf32>
      %c32_380 = arith.constant 32 : index
      %c0_381 = arith.constant 0 : index
      %1095 = vector.load %arg11[%c32_380, %c0_381] : memref<216x512xf32, #tpu.memory_space<vmem>>, vector<8x512xf32>
      tpu.vector_store %arg11[%c32_380, %c0_381], %1094 {strides = array<i32>} : memref<216x512xf32, #tpu.memory_space<vmem>>, vector<8x512xf32>,
      %c63_i32_382 = arith.constant 63 : i32
      %1096 = tpu.dynamic_rotate %950 by %c63_i32_382 dim 1 : vector<8x512xf32>, i32 -> vector<8x512xf32>
      %c-1_i32_383 = arith.constant -1 : i32
      %1097 = vector.broadcast %c-1_i32_383 : i32 to vector<1x512xi32>
      %1098 = arith.addi %116, %1097 : vector<1x512xi32>
      %c0_i32_384 = arith.constant 0 : i32
      %1099 = vector.broadcast %c0_i32_384 : i32 to vector<1x512xi32>
      %1100 = arith.addi %120, %1099 : vector<1x512xi32>
      %c1_i32_385 = arith.constant 1 : i32
      %1101 = vector.broadcast %c1_i32_385 : i32 to vector<1x512xi32>
      %1102 = arith.addi %122, %1101 : vector<1x512xi32>
      %c0_i32_386 = arith.constant 0 : i32
      %1103 = vector.broadcast %c0_i32_386 : i32 to vector<1x512xi32>
      %1104 = arith.cmpi sge, %1098, %1103 : vector<1x512xi32>
      %c8_i32_387 = arith.constant 8 : i32
      %1105 = vector.broadcast %c8_i32_387 : i32 to vector<1x512xi32>
      %1106 = arith.cmpi slt, %1098, %1105 : vector<1x512xi32>
      %1107 = arith.andi %1104, %1106 : vector<1x512xi1>
      %c0_i32_388 = arith.constant 0 : i32
      %1108 = vector.broadcast %c0_i32_388 : i32 to vector<1x512xi32>
      %1109 = arith.cmpi sge, %1100, %1108 : vector<1x512xi32>
      %1110 = arith.andi %1107, %1109 : vector<1x512xi1>
      %c8_i32_389 = arith.constant 8 : i32
      %1111 = vector.broadcast %c8_i32_389 : i32 to vector<1x512xi32>
      %1112 = arith.cmpi slt, %1100, %1111 : vector<1x512xi32>
      %1113 = arith.andi %1110, %1112 : vector<1x512xi1>
      %c0_i32_390 = arith.constant 0 : i32
      %1114 = vector.broadcast %c0_i32_390 : i32 to vector<1x512xi32>
      %1115 = arith.cmpi sge, %1102, %1114 : vector<1x512xi32>
      %1116 = arith.andi %1113, %1115 : vector<1x512xi1>
      %c8_i32_391 = arith.constant 8 : i32
      %1117 = vector.broadcast %c8_i32_391 : i32 to vector<1x512xi32>
      %1118 = arith.cmpi slt, %1102, %1117 : vector<1x512xi32>
      %1119 = arith.andi %1116, %1118 : vector<1x512xi1>
      %1120 = arith.extui %1119 : vector<1x512xi1> to vector<1x512xi32>
      %1121 = arith.sitofp %1120 : vector<1x512xi32> to vector<1x512xf32>
      %1122 = vector.broadcast %1121 : vector<1x512xf32> to vector<8x512xf32>
      %1123 = arith.mulf %1096, %1122 : vector<8x512xf32>
      %c40_392 = arith.constant 40 : index
      %c0_393 = arith.constant 0 : index
      %1124 = vector.load %arg11[%c40_392, %c0_393] : memref<216x512xf32, #tpu.memory_space<vmem>>, vector<8x512xf32>
      tpu.vector_store %arg11[%c40_392, %c0_393], %1123 {strides = array<i32>} : memref<216x512xf32, #tpu.memory_space<vmem>>, vector<8x512xf32>,
      %c57_i32_394 = arith.constant 57 : i32
      %1125 = tpu.dynamic_rotate %950 by %c57_i32_394 dim 1 : vector<8x512xf32>, i32 -> vector<8x512xf32>
      %c-1_i32_395 = arith.constant -1 : i32
      %1126 = vector.broadcast %c-1_i32_395 : i32 to vector<1x512xi32>
      %1127 = arith.addi %116, %1126 : vector<1x512xi32>
      %c1_i32_396 = arith.constant 1 : i32
      %1128 = vector.broadcast %c1_i32_396 : i32 to vector<1x512xi32>
      %1129 = arith.addi %120, %1128 : vector<1x512xi32>
      %c-1_i32_397 = arith.constant -1 : i32
      %1130 = vector.broadcast %c-1_i32_397 : i32 to vector<1x512xi32>
      %1131 = arith.addi %122, %1130 : vector<1x512xi32>
      %c0_i32_398 = arith.constant 0 : i32
      %1132 = vector.broadcast %c0_i32_398 : i32 to vector<1x512xi32>
      %1133 = arith.cmpi sge, %1127, %1132 : vector<1x512xi32>
      %c8_i32_399 = arith.constant 8 : i32
      %1134 = vector.broadcast %c8_i32_399 : i32 to vector<1x512xi32>
      %1135 = arith.cmpi slt, %1127, %1134 : vector<1x512xi32>
      %1136 = arith.andi %1133, %1135 : vector<1x512xi1>
      %c0_i32_400 = arith.constant 0 : i32
      %1137 = vector.broadcast %c0_i32_400 : i32 to vector<1x512xi32>
      %1138 = arith.cmpi sge, %1129, %1137 : vector<1x512xi32>
      %1139 = arith.andi %1136, %1138 : vector<1x512xi1>
      %c8_i32_401 = arith.constant 8 : i32
      %1140 = vector.broadcast %c8_i32_401 : i32 to vector<1x512xi32>
      %1141 = arith.cmpi slt, %1129, %1140 : vector<1x512xi32>
      %1142 = arith.andi %1139, %1141 : vector<1x512xi1>
      %c0_i32_402 = arith.constant 0 : i32
      %1143 = vector.broadcast %c0_i32_402 : i32 to vector<1x512xi32>
      %1144 = arith.cmpi sge, %1131, %1143 : vector<1x512xi32>
      %1145 = arith.andi %1142, %1144 : vector<1x512xi1>
      %c8_i32_403 = arith.constant 8 : i32
      %1146 = vector.broadcast %c8_i32_403 : i32 to vector<1x512xi32>
      %1147 = arith.cmpi slt, %1131, %1146 : vector<1x512xi32>
      %1148 = arith.andi %1145, %1147 : vector<1x512xi1>
      %1149 = arith.extui %1148 : vector<1x512xi1> to vector<1x512xi32>
      %1150 = arith.sitofp %1149 : vector<1x512xi32> to vector<1x512xf32>
      %1151 = vector.broadcast %1150 : vector<1x512xf32> to vector<8x512xf32>
      %1152 = arith.mulf %1125, %1151 : vector<8x512xf32>
      %c48_404 = arith.constant 48 : index
      %c0_405 = arith.constant 0 : index
      %1153 = vector.load %arg11[%c48_404, %c0_405] : memref<216x512xf32, #tpu.memory_space<vmem>>, vector<8x512xf32>
      tpu.vector_store %arg11[%c48_404, %c0_405], %1152 {strides = array<i32>} : memref<216x512xf32, #tpu.memory_space<vmem>>, vector<8x512xf32>,
      %c56_i32_406 = arith.constant 56 : i32
      %1154 = tpu.dynamic_rotate %950 by %c56_i32_406 dim 1 : vector<8x512xf32>, i32 -> vector<8x512xf32>
      %c-1_i32_407 = arith.constant -1 : i32
      %1155 = vector.broadcast %c-1_i32_407 : i32 to vector<1x512xi32>
      %1156 = arith.addi %116, %1155 : vector<1x512xi32>
      %c1_i32_408 = arith.constant 1 : i32
      %1157 = vector.broadcast %c1_i32_408 : i32 to vector<1x512xi32>
      %1158 = arith.addi %120, %1157 : vector<1x512xi32>
      %c0_i32_409 = arith.constant 0 : i32
      %1159 = vector.broadcast %c0_i32_409 : i32 to vector<1x512xi32>
      %1160 = arith.addi %122, %1159 : vector<1x512xi32>
      %c0_i32_410 = arith.constant 0 : i32
      %1161 = vector.broadcast %c0_i32_410 : i32 to vector<1x512xi32>
      %1162 = arith.cmpi sge, %1156, %1161 : vector<1x512xi32>
      %c8_i32_411 = arith.constant 8 : i32
      %1163 = vector.broadcast %c8_i32_411 : i32 to vector<1x512xi32>
      %1164 = arith.cmpi slt, %1156, %1163 : vector<1x512xi32>
      %1165 = arith.andi %1162, %1164 : vector<1x512xi1>
      %c0_i32_412 = arith.constant 0 : i32
      %1166 = vector.broadcast %c0_i32_412 : i32 to vector<1x512xi32>
      %1167 = arith.cmpi sge, %1158, %1166 : vector<1x512xi32>
      %1168 = arith.andi %1165, %1167 : vector<1x512xi1>
      %c8_i32_413 = arith.constant 8 : i32
      %1169 = vector.broadcast %c8_i32_413 : i32 to vector<1x512xi32>
      %1170 = arith.cmpi slt, %1158, %1169 : vector<1x512xi32>
      %1171 = arith.andi %1168, %1170 : vector<1x512xi1>
      %c0_i32_414 = arith.constant 0 : i32
      %1172 = vector.broadcast %c0_i32_414 : i32 to vector<1x512xi32>
      %1173 = arith.cmpi sge, %1160, %1172 : vector<1x512xi32>
      %1174 = arith.andi %1171, %1173 : vector<1x512xi1>
      %c8_i32_415 = arith.constant 8 : i32
      %1175 = vector.broadcast %c8_i32_415 : i32 to vector<1x512xi32>
      %1176 = arith.cmpi slt, %1160, %1175 : vector<1x512xi32>
      %1177 = arith.andi %1174, %1176 : vector<1x512xi1>
      %1178 = arith.extui %1177 : vector<1x512xi1> to vector<1x512xi32>
      %1179 = arith.sitofp %1178 : vector<1x512xi32> to vector<1x512xf32>
      %1180 = vector.broadcast %1179 : vector<1x512xf32> to vector<8x512xf32>
      %1181 = arith.mulf %1154, %1180 : vector<8x512xf32>
      %c56_416 = arith.constant 56 : index
      %c0_417 = arith.constant 0 : index
      %1182 = vector.load %arg11[%c56_416, %c0_417] : memref<216x512xf32, #tpu.memory_space<vmem>>, vector<8x512xf32>
      tpu.vector_store %arg11[%c56_416, %c0_417], %1181 {strides = array<i32>} : memref<216x512xf32, #tpu.memory_space<vmem>>, vector<8x512xf32>,
      %c55_i32_418 = arith.constant 55 : i32
      %1183 = tpu.dynamic_rotate %950 by %c55_i32_418 dim 1 : vector<8x512xf32>, i32 -> vector<8x512xf32>
      %c-1_i32_419 = arith.constant -1 : i32
      %1184 = vector.broadcast %c-1_i32_419 : i32 to vector<1x512xi32>
      %1185 = arith.addi %116, %1184 : vector<1x512xi32>
      %c1_i32_420 = arith.constant 1 : i32
      %1186 = vector.broadcast %c1_i32_420 : i32 to vector<1x512xi32>
      %1187 = arith.addi %120, %1186 : vector<1x512xi32>
      %c1_i32_421 = arith.constant 1 : i32
      %1188 = vector.broadcast %c1_i32_421 : i32 to vector<1x512xi32>
      %1189 = arith.addi %122, %1188 : vector<1x512xi32>
      %c0_i32_422 = arith.constant 0 : i32
      %1190 = vector.broadcast %c0_i32_422 : i32 to vector<1x512xi32>
      %1191 = arith.cmpi sge, %1185, %1190 : vector<1x512xi32>
      %c8_i32_423 = arith.constant 8 : i32
      %1192 = vector.broadcast %c8_i32_423 : i32 to vector<1x512xi32>
      %1193 = arith.cmpi slt, %1185, %1192 : vector<1x512xi32>
      %1194 = arith.andi %1191, %1193 : vector<1x512xi1>
      %c0_i32_424 = arith.constant 0 : i32
      %1195 = vector.broadcast %c0_i32_424 : i32 to vector<1x512xi32>
      %1196 = arith.cmpi sge, %1187, %1195 : vector<1x512xi32>
      %1197 = arith.andi %1194, %1196 : vector<1x512xi1>
      %c8_i32_425 = arith.constant 8 : i32
      %1198 = vector.broadcast %c8_i32_425 : i32 to vector<1x512xi32>
      %1199 = arith.cmpi slt, %1187, %1198 : vector<1x512xi32>
      %1200 = arith.andi %1197, %1199 : vector<1x512xi1>
      %c0_i32_426 = arith.constant 0 : i32
      %1201 = vector.broadcast %c0_i32_426 : i32 to vector<1x512xi32>
      %1202 = arith.cmpi sge, %1189, %1201 : vector<1x512xi32>
      %1203 = arith.andi %1200, %1202 : vector<1x512xi1>
      %c8_i32_427 = arith.constant 8 : i32
      %1204 = vector.broadcast %c8_i32_427 : i32 to vector<1x512xi32>
      %1205 = arith.cmpi slt, %1189, %1204 : vector<1x512xi32>
      %1206 = arith.andi %1203, %1205 : vector<1x512xi1>
      %1207 = arith.extui %1206 : vector<1x512xi1> to vector<1x512xi32>
      %1208 = arith.sitofp %1207 : vector<1x512xi32> to vector<1x512xf32>
      %1209 = vector.broadcast %1208 : vector<1x512xf32> to vector<8x512xf32>
      %1210 = arith.mulf %1183, %1209 : vector<8x512xf32>
      %c64_428 = arith.constant 64 : index
      %c0_429 = arith.constant 0 : index
      %1211 = vector.load %arg11[%c64_428, %c0_429] : memref<216x512xf32, #tpu.memory_space<vmem>>, vector<8x512xf32>
      tpu.vector_store %arg11[%c64_428, %c0_429], %1210 {strides = array<i32>} : memref<216x512xf32, #tpu.memory_space<vmem>>, vector<8x512xf32>,
      %c9_i32_430 = arith.constant 9 : i32
      %1212 = tpu.dynamic_rotate %950 by %c9_i32_430 dim 1 : vector<8x512xf32>, i32 -> vector<8x512xf32>
      %c0_i32_431 = arith.constant 0 : i32
      %1213 = vector.broadcast %c0_i32_431 : i32 to vector<1x512xi32>
      %1214 = arith.addi %116, %1213 : vector<1x512xi32>
      %c-1_i32_432 = arith.constant -1 : i32
      %1215 = vector.broadcast %c-1_i32_432 : i32 to vector<1x512xi32>
      %1216 = arith.addi %120, %1215 : vector<1x512xi32>
      %c-1_i32_433 = arith.constant -1 : i32
      %1217 = vector.broadcast %c-1_i32_433 : i32 to vector<1x512xi32>
      %1218 = arith.addi %122, %1217 : vector<1x512xi32>
      %c0_i32_434 = arith.constant 0 : i32
      %1219 = vector.broadcast %c0_i32_434 : i32 to vector<1x512xi32>
      %1220 = arith.cmpi sge, %1214, %1219 : vector<1x512xi32>
      %c8_i32_435 = arith.constant 8 : i32
      %1221 = vector.broadcast %c8_i32_435 : i32 to vector<1x512xi32>
      %1222 = arith.cmpi slt, %1214, %1221 : vector<1x512xi32>
      %1223 = arith.andi %1220, %1222 : vector<1x512xi1>
      %c0_i32_436 = arith.constant 0 : i32
      %1224 = vector.broadcast %c0_i32_436 : i32 to vector<1x512xi32>
      %1225 = arith.cmpi sge, %1216, %1224 : vector<1x512xi32>
      %1226 = arith.andi %1223, %1225 : vector<1x512xi1>
      %c8_i32_437 = arith.constant 8 : i32
      %1227 = vector.broadcast %c8_i32_437 : i32 to vector<1x512xi32>
      %1228 = arith.cmpi slt, %1216, %1227 : vector<1x512xi32>
      %1229 = arith.andi %1226, %1228 : vector<1x512xi1>
      %c0_i32_438 = arith.constant 0 : i32
      %1230 = vector.broadcast %c0_i32_438 : i32 to vector<1x512xi32>
      %1231 = arith.cmpi sge, %1218, %1230 : vector<1x512xi32>
      %1232 = arith.andi %1229, %1231 : vector<1x512xi1>
      %c8_i32_439 = arith.constant 8 : i32
      %1233 = vector.broadcast %c8_i32_439 : i32 to vector<1x512xi32>
      %1234 = arith.cmpi slt, %1218, %1233 : vector<1x512xi32>
      %1235 = arith.andi %1232, %1234 : vector<1x512xi1>
      %1236 = arith.extui %1235 : vector<1x512xi1> to vector<1x512xi32>
      %1237 = arith.sitofp %1236 : vector<1x512xi32> to vector<1x512xf32>
      %1238 = vector.broadcast %1237 : vector<1x512xf32> to vector<8x512xf32>
      %1239 = arith.mulf %1212, %1238 : vector<8x512xf32>
      %c72_440 = arith.constant 72 : index
      %c0_441 = arith.constant 0 : index
      %1240 = vector.load %arg11[%c72_440, %c0_441] : memref<216x512xf32, #tpu.memory_space<vmem>>, vector<8x512xf32>
      tpu.vector_store %arg11[%c72_440, %c0_441], %1239 {strides = array<i32>} : memref<216x512xf32, #tpu.memory_space<vmem>>, vector<8x512xf32>,
      %c8_i32_442 = arith.constant 8 : i32
      %1241 = tpu.dynamic_rotate %950 by %c8_i32_442 dim 1 : vector<8x512xf32>, i32 -> vector<8x512xf32>
      %c0_i32_443 = arith.constant 0 : i32
      %1242 = vector.broadcast %c0_i32_443 : i32 to vector<1x512xi32>
      %1243 = arith.addi %116, %1242 : vector<1x512xi32>
      %c-1_i32_444 = arith.constant -1 : i32
      %1244 = vector.broadcast %c-1_i32_444 : i32 to vector<1x512xi32>
      %1245 = arith.addi %120, %1244 : vector<1x512xi32>
      %c0_i32_445 = arith.constant 0 : i32
      %1246 = vector.broadcast %c0_i32_445 : i32 to vector<1x512xi32>
      %1247 = arith.addi %122, %1246 : vector<1x512xi32>
      %c0_i32_446 = arith.constant 0 : i32
      %1248 = vector.broadcast %c0_i32_446 : i32 to vector<1x512xi32>
      %1249 = arith.cmpi sge, %1243, %1248 : vector<1x512xi32>
      %c8_i32_447 = arith.constant 8 : i32
      %1250 = vector.broadcast %c8_i32_447 : i32 to vector<1x512xi32>
      %1251 = arith.cmpi slt, %1243, %1250 : vector<1x512xi32>
      %1252 = arith.andi %1249, %1251 : vector<1x512xi1>
      %c0_i32_448 = arith.constant 0 : i32
      %1253 = vector.broadcast %c0_i32_448 : i32 to vector<1x512xi32>
      %1254 = arith.cmpi sge, %1245, %1253 : vector<1x512xi32>
      %1255 = arith.andi %1252, %1254 : vector<1x512xi1>
      %c8_i32_449 = arith.constant 8 : i32
      %1256 = vector.broadcast %c8_i32_449 : i32 to vector<1x512xi32>
      %1257 = arith.cmpi slt, %1245, %1256 : vector<1x512xi32>
      %1258 = arith.andi %1255, %1257 : vector<1x512xi1>
      %c0_i32_450 = arith.constant 0 : i32
      %1259 = vector.broadcast %c0_i32_450 : i32 to vector<1x512xi32>
      %1260 = arith.cmpi sge, %1247, %1259 : vector<1x512xi32>
      %1261 = arith.andi %1258, %1260 : vector<1x512xi1>
      %c8_i32_451 = arith.constant 8 : i32
      %1262 = vector.broadcast %c8_i32_451 : i32 to vector<1x512xi32>
      %1263 = arith.cmpi slt, %1247, %1262 : vector<1x512xi32>
      %1264 = arith.andi %1261, %1263 : vector<1x512xi1>
      %1265 = arith.extui %1264 : vector<1x512xi1> to vector<1x512xi32>
      %1266 = arith.sitofp %1265 : vector<1x512xi32> to vector<1x512xf32>
      %1267 = vector.broadcast %1266 : vector<1x512xf32> to vector<8x512xf32>
      %1268 = arith.mulf %1241, %1267 : vector<8x512xf32>
      %c80_452 = arith.constant 80 : index
      %c0_453 = arith.constant 0 : index
      %1269 = vector.load %arg11[%c80_452, %c0_453] : memref<216x512xf32, #tpu.memory_space<vmem>>, vector<8x512xf32>
      tpu.vector_store %arg11[%c80_452, %c0_453], %1268 {strides = array<i32>} : memref<216x512xf32, #tpu.memory_space<vmem>>, vector<8x512xf32>,
      %c7_i32_454 = arith.constant 7 : i32
      %1270 = tpu.dynamic_rotate %950 by %c7_i32_454 dim 1 : vector<8x512xf32>, i32 -> vector<8x512xf32>
      %c0_i32_455 = arith.constant 0 : i32
      %1271 = vector.broadcast %c0_i32_455 : i32 to vector<1x512xi32>
      %1272 = arith.addi %116, %1271 : vector<1x512xi32>
      %c-1_i32_456 = arith.constant -1 : i32
      %1273 = vector.broadcast %c-1_i32_456 : i32 to vector<1x512xi32>
      %1274 = arith.addi %120, %1273 : vector<1x512xi32>
      %c1_i32_457 = arith.constant 1 : i32
      %1275 = vector.broadcast %c1_i32_457 : i32 to vector<1x512xi32>
      %1276 = arith.addi %122, %1275 : vector<1x512xi32>
      %c0_i32_458 = arith.constant 0 : i32
      %1277 = vector.broadcast %c0_i32_458 : i32 to vector<1x512xi32>
      %1278 = arith.cmpi sge, %1272, %1277 : vector<1x512xi32>
      %c8_i32_459 = arith.constant 8 : i32
      %1279 = vector.broadcast %c8_i32_459 : i32 to vector<1x512xi32>
      %1280 = arith.cmpi slt, %1272, %1279 : vector<1x512xi32>
      %1281 = arith.andi %1278, %1280 : vector<1x512xi1>
      %c0_i32_460 = arith.constant 0 : i32
      %1282 = vector.broadcast %c0_i32_460 : i32 to vector<1x512xi32>
      %1283 = arith.cmpi sge, %1274, %1282 : vector<1x512xi32>
      %1284 = arith.andi %1281, %1283 : vector<1x512xi1>
      %c8_i32_461 = arith.constant 8 : i32
      %1285 = vector.broadcast %c8_i32_461 : i32 to vector<1x512xi32>
      %1286 = arith.cmpi slt, %1274, %1285 : vector<1x512xi32>
      %1287 = arith.andi %1284, %1286 : vector<1x512xi1>
      %c0_i32_462 = arith.constant 0 : i32
      %1288 = vector.broadcast %c0_i32_462 : i32 to vector<1x512xi32>
      %1289 = arith.cmpi sge, %1276, %1288 : vector<1x512xi32>
      %1290 = arith.andi %1287, %1289 : vector<1x512xi1>
      %c8_i32_463 = arith.constant 8 : i32
      %1291 = vector.broadcast %c8_i32_463 : i32 to vector<1x512xi32>
      %1292 = arith.cmpi slt, %1276, %1291 : vector<1x512xi32>
      %1293 = arith.andi %1290, %1292 : vector<1x512xi1>
      %1294 = arith.extui %1293 : vector<1x512xi1> to vector<1x512xi32>
      %1295 = arith.sitofp %1294 : vector<1x512xi32> to vector<1x512xf32>
      %1296 = vector.broadcast %1295 : vector<1x512xf32> to vector<8x512xf32>
      %1297 = arith.mulf %1270, %1296 : vector<8x512xf32>
      %c88_464 = arith.constant 88 : index
      %c0_465 = arith.constant 0 : index
      %1298 = vector.load %arg11[%c88_464, %c0_465] : memref<216x512xf32, #tpu.memory_space<vmem>>, vector<8x512xf32>
      tpu.vector_store %arg11[%c88_464, %c0_465], %1297 {strides = array<i32>} : memref<216x512xf32, #tpu.memory_space<vmem>>, vector<8x512xf32>,
      %c1_i32_466 = arith.constant 1 : i32
      %1299 = tpu.dynamic_rotate %950 by %c1_i32_466 dim 1 : vector<8x512xf32>, i32 -> vector<8x512xf32>
      %c0_i32_467 = arith.constant 0 : i32
      %1300 = vector.broadcast %c0_i32_467 : i32 to vector<1x512xi32>
      %1301 = arith.addi %116, %1300 : vector<1x512xi32>
      %c0_i32_468 = arith.constant 0 : i32
      %1302 = vector.broadcast %c0_i32_468 : i32 to vector<1x512xi32>
      %1303 = arith.addi %120, %1302 : vector<1x512xi32>
      %c-1_i32_469 = arith.constant -1 : i32
      %1304 = vector.broadcast %c-1_i32_469 : i32 to vector<1x512xi32>
      %1305 = arith.addi %122, %1304 : vector<1x512xi32>
      %c0_i32_470 = arith.constant 0 : i32
      %1306 = vector.broadcast %c0_i32_470 : i32 to vector<1x512xi32>
      %1307 = arith.cmpi sge, %1301, %1306 : vector<1x512xi32>
      %c8_i32_471 = arith.constant 8 : i32
      %1308 = vector.broadcast %c8_i32_471 : i32 to vector<1x512xi32>
      %1309 = arith.cmpi slt, %1301, %1308 : vector<1x512xi32>
      %1310 = arith.andi %1307, %1309 : vector<1x512xi1>
      %c0_i32_472 = arith.constant 0 : i32
      %1311 = vector.broadcast %c0_i32_472 : i32 to vector<1x512xi32>
      %1312 = arith.cmpi sge, %1303, %1311 : vector<1x512xi32>
      %1313 = arith.andi %1310, %1312 : vector<1x512xi1>
      %c8_i32_473 = arith.constant 8 : i32
      %1314 = vector.broadcast %c8_i32_473 : i32 to vector<1x512xi32>
      %1315 = arith.cmpi slt, %1303, %1314 : vector<1x512xi32>
      %1316 = arith.andi %1313, %1315 : vector<1x512xi1>
      %c0_i32_474 = arith.constant 0 : i32
      %1317 = vector.broadcast %c0_i32_474 : i32 to vector<1x512xi32>
      %1318 = arith.cmpi sge, %1305, %1317 : vector<1x512xi32>
      %1319 = arith.andi %1316, %1318 : vector<1x512xi1>
      %c8_i32_475 = arith.constant 8 : i32
      %1320 = vector.broadcast %c8_i32_475 : i32 to vector<1x512xi32>
      %1321 = arith.cmpi slt, %1305, %1320 : vector<1x512xi32>
      %1322 = arith.andi %1319, %1321 : vector<1x512xi1>
      %1323 = arith.extui %1322 : vector<1x512xi1> to vector<1x512xi32>
      %1324 = arith.sitofp %1323 : vector<1x512xi32> to vector<1x512xf32>
      %1325 = vector.broadcast %1324 : vector<1x512xf32> to vector<8x512xf32>
      %1326 = arith.mulf %1299, %1325 : vector<8x512xf32>
      %c96_476 = arith.constant 96 : index
      %c0_477 = arith.constant 0 : index
      %1327 = vector.load %arg11[%c96_476, %c0_477] : memref<216x512xf32, #tpu.memory_space<vmem>>, vector<8x512xf32>
      tpu.vector_store %arg11[%c96_476, %c0_477], %1326 {strides = array<i32>} : memref<216x512xf32, #tpu.memory_space<vmem>>, vector<8x512xf32>,
      %c0_i32_478 = arith.constant 0 : i32
      %1328 = vector.broadcast %c0_i32_478 : i32 to vector<1x512xi32>
      %1329 = arith.addi %116, %1328 : vector<1x512xi32>
      %c0_i32_479 = arith.constant 0 : i32
      %1330 = vector.broadcast %c0_i32_479 : i32 to vector<1x512xi32>
      %1331 = arith.addi %120, %1330 : vector<1x512xi32>
      %c0_i32_480 = arith.constant 0 : i32
      %1332 = vector.broadcast %c0_i32_480 : i32 to vector<1x512xi32>
      %1333 = arith.addi %122, %1332 : vector<1x512xi32>
      %c0_i32_481 = arith.constant 0 : i32
      %1334 = vector.broadcast %c0_i32_481 : i32 to vector<1x512xi32>
      %1335 = arith.cmpi sge, %1329, %1334 : vector<1x512xi32>
      %c8_i32_482 = arith.constant 8 : i32
      %1336 = vector.broadcast %c8_i32_482 : i32 to vector<1x512xi32>
      %1337 = arith.cmpi slt, %1329, %1336 : vector<1x512xi32>
      %1338 = arith.andi %1335, %1337 : vector<1x512xi1>
      %c0_i32_483 = arith.constant 0 : i32
      %1339 = vector.broadcast %c0_i32_483 : i32 to vector<1x512xi32>
      %1340 = arith.cmpi sge, %1331, %1339 : vector<1x512xi32>
      %1341 = arith.andi %1338, %1340 : vector<1x512xi1>
      %c8_i32_484 = arith.constant 8 : i32
      %1342 = vector.broadcast %c8_i32_484 : i32 to vector<1x512xi32>
      %1343 = arith.cmpi slt, %1331, %1342 : vector<1x512xi32>
      %1344 = arith.andi %1341, %1343 : vector<1x512xi1>
      %c0_i32_485 = arith.constant 0 : i32
      %1345 = vector.broadcast %c0_i32_485 : i32 to vector<1x512xi32>
      %1346 = arith.cmpi sge, %1333, %1345 : vector<1x512xi32>
      %1347 = arith.andi %1344, %1346 : vector<1x512xi1>
      %c8_i32_486 = arith.constant 8 : i32
      %1348 = vector.broadcast %c8_i32_486 : i32 to vector<1x512xi32>
      %1349 = arith.cmpi slt, %1333, %1348 : vector<1x512xi32>
      %1350 = arith.andi %1347, %1349 : vector<1x512xi1>
      %1351 = arith.extui %1350 : vector<1x512xi1> to vector<1x512xi32>
      %1352 = arith.sitofp %1351 : vector<1x512xi32> to vector<1x512xf32>
      %1353 = vector.broadcast %1352 : vector<1x512xf32> to vector<8x512xf32>
      %1354 = arith.mulf %950, %1353 : vector<8x512xf32>
      %c104_487 = arith.constant 104 : index
      %c0_488 = arith.constant 0 : index
      %1355 = vector.load %arg11[%c104_487, %c0_488] : memref<216x512xf32, #tpu.memory_space<vmem>>, vector<8x512xf32>
      tpu.vector_store %arg11[%c104_487, %c0_488], %1354 {strides = array<i32>} : memref<216x512xf32, #tpu.memory_space<vmem>>, vector<8x512xf32>,
      %c511_i32_489 = arith.constant 511 : i32
      %1356 = tpu.dynamic_rotate %950 by %c511_i32_489 dim 1 : vector<8x512xf32>, i32 -> vector<8x512xf32>
      %c0_i32_490 = arith.constant 0 : i32
      %1357 = vector.broadcast %c0_i32_490 : i32 to vector<1x512xi32>
      %1358 = arith.addi %116, %1357 : vector<1x512xi32>
      %c0_i32_491 = arith.constant 0 : i32
      %1359 = vector.broadcast %c0_i32_491 : i32 to vector<1x512xi32>
      %1360 = arith.addi %120, %1359 : vector<1x512xi32>
      %c1_i32_492 = arith.constant 1 : i32
      %1361 = vector.broadcast %c1_i32_492 : i32 to vector<1x512xi32>
      %1362 = arith.addi %122, %1361 : vector<1x512xi32>
      %c0_i32_493 = arith.constant 0 : i32
      %1363 = vector.broadcast %c0_i32_493 : i32 to vector<1x512xi32>
      %1364 = arith.cmpi sge, %1358, %1363 : vector<1x512xi32>
      %c8_i32_494 = arith.constant 8 : i32
      %1365 = vector.broadcast %c8_i32_494 : i32 to vector<1x512xi32>
      %1366 = arith.cmpi slt, %1358, %1365 : vector<1x512xi32>
      %1367 = arith.andi %1364, %1366 : vector<1x512xi1>
      %c0_i32_495 = arith.constant 0 : i32
      %1368 = vector.broadcast %c0_i32_495 : i32 to vector<1x512xi32>
      %1369 = arith.cmpi sge, %1360, %1368 : vector<1x512xi32>
      %1370 = arith.andi %1367, %1369 : vector<1x512xi1>
      %c8_i32_496 = arith.constant 8 : i32
      %1371 = vector.broadcast %c8_i32_496 : i32 to vector<1x512xi32>
      %1372 = arith.cmpi slt, %1360, %1371 : vector<1x512xi32>
      %1373 = arith.andi %1370, %1372 : vector<1x512xi1>
      %c0_i32_497 = arith.constant 0 : i32
      %1374 = vector.broadcast %c0_i32_497 : i32 to vector<1x512xi32>
      %1375 = arith.cmpi sge, %1362, %1374 : vector<1x512xi32>
      %1376 = arith.andi %1373, %1375 : vector<1x512xi1>
      %c8_i32_498 = arith.constant 8 : i32
      %1377 = vector.broadcast %c8_i32_498 : i32 to vector<1x512xi32>
      %1378 = arith.cmpi slt, %1362, %1377 : vector<1x512xi32>
      %1379 = arith.andi %1376, %1378 : vector<1x512xi1>
      %1380 = arith.extui %1379 : vector<1x512xi1> to vector<1x512xi32>
      %1381 = arith.sitofp %1380 : vector<1x512xi32> to vector<1x512xf32>
      %1382 = vector.broadcast %1381 : vector<1x512xf32> to vector<8x512xf32>
      %1383 = arith.mulf %1356, %1382 : vector<8x512xf32>
      %c112_499 = arith.constant 112 : index
      %c0_500 = arith.constant 0 : index
      %1384 = vector.load %arg11[%c112_499, %c0_500] : memref<216x512xf32, #tpu.memory_space<vmem>>, vector<8x512xf32>
      tpu.vector_store %arg11[%c112_499, %c0_500], %1383 {strides = array<i32>} : memref<216x512xf32, #tpu.memory_space<vmem>>, vector<8x512xf32>,
      %c505_i32_501 = arith.constant 505 : i32
      %1385 = tpu.dynamic_rotate %950 by %c505_i32_501 dim 1 : vector<8x512xf32>, i32 -> vector<8x512xf32>
      %c0_i32_502 = arith.constant 0 : i32
      %1386 = vector.broadcast %c0_i32_502 : i32 to vector<1x512xi32>
      %1387 = arith.addi %116, %1386 : vector<1x512xi32>
      %c1_i32_503 = arith.constant 1 : i32
      %1388 = vector.broadcast %c1_i32_503 : i32 to vector<1x512xi32>
      %1389 = arith.addi %120, %1388 : vector<1x512xi32>
      %c-1_i32_504 = arith.constant -1 : i32
      %1390 = vector.broadcast %c-1_i32_504 : i32 to vector<1x512xi32>
      %1391 = arith.addi %122, %1390 : vector<1x512xi32>
      %c0_i32_505 = arith.constant 0 : i32
      %1392 = vector.broadcast %c0_i32_505 : i32 to vector<1x512xi32>
      %1393 = arith.cmpi sge, %1387, %1392 : vector<1x512xi32>
      %c8_i32_506 = arith.constant 8 : i32
      %1394 = vector.broadcast %c8_i32_506 : i32 to vector<1x512xi32>
      %1395 = arith.cmpi slt, %1387, %1394 : vector<1x512xi32>
      %1396 = arith.andi %1393, %1395 : vector<1x512xi1>
      %c0_i32_507 = arith.constant 0 : i32
      %1397 = vector.broadcast %c0_i32_507 : i32 to vector<1x512xi32>
      %1398 = arith.cmpi sge, %1389, %1397 : vector<1x512xi32>
      %1399 = arith.andi %1396, %1398 : vector<1x512xi1>
      %c8_i32_508 = arith.constant 8 : i32
      %1400 = vector.broadcast %c8_i32_508 : i32 to vector<1x512xi32>
      %1401 = arith.cmpi slt, %1389, %1400 : vector<1x512xi32>
      %1402 = arith.andi %1399, %1401 : vector<1x512xi1>
      %c0_i32_509 = arith.constant 0 : i32
      %1403 = vector.broadcast %c0_i32_509 : i32 to vector<1x512xi32>
      %1404 = arith.cmpi sge, %1391, %1403 : vector<1x512xi32>
      %1405 = arith.andi %1402, %1404 : vector<1x512xi1>
      %c8_i32_510 = arith.constant 8 : i32
      %1406 = vector.broadcast %c8_i32_510 : i32 to vector<1x512xi32>
      %1407 = arith.cmpi slt, %1391, %1406 : vector<1x512xi32>
      %1408 = arith.andi %1405, %1407 : vector<1x512xi1>
      %1409 = arith.extui %1408 : vector<1x512xi1> to vector<1x512xi32>
      %1410 = arith.sitofp %1409 : vector<1x512xi32> to vector<1x512xf32>
      %1411 = vector.broadcast %1410 : vector<1x512xf32> to vector<8x512xf32>
      %1412 = arith.mulf %1385, %1411 : vector<8x512xf32>
      %c120_511 = arith.constant 120 : index
      %c0_512 = arith.constant 0 : index
      %1413 = vector.load %arg11[%c120_511, %c0_512] : memref<216x512xf32, #tpu.memory_space<vmem>>, vector<8x512xf32>
      tpu.vector_store %arg11[%c120_511, %c0_512], %1412 {strides = array<i32>} : memref<216x512xf32, #tpu.memory_space<vmem>>, vector<8x512xf32>,
      %c504_i32_513 = arith.constant 504 : i32
      %1414 = tpu.dynamic_rotate %950 by %c504_i32_513 dim 1 : vector<8x512xf32>, i32 -> vector<8x512xf32>
      %c0_i32_514 = arith.constant 0 : i32
      %1415 = vector.broadcast %c0_i32_514 : i32 to vector<1x512xi32>
      %1416 = arith.addi %116, %1415 : vector<1x512xi32>
      %c1_i32_515 = arith.constant 1 : i32
      %1417 = vector.broadcast %c1_i32_515 : i32 to vector<1x512xi32>
      %1418 = arith.addi %120, %1417 : vector<1x512xi32>
      %c0_i32_516 = arith.constant 0 : i32
      %1419 = vector.broadcast %c0_i32_516 : i32 to vector<1x512xi32>
      %1420 = arith.addi %122, %1419 : vector<1x512xi32>
      %c0_i32_517 = arith.constant 0 : i32
      %1421 = vector.broadcast %c0_i32_517 : i32 to vector<1x512xi32>
      %1422 = arith.cmpi sge, %1416, %1421 : vector<1x512xi32>
      %c8_i32_518 = arith.constant 8 : i32
      %1423 = vector.broadcast %c8_i32_518 : i32 to vector<1x512xi32>
      %1424 = arith.cmpi slt, %1416, %1423 : vector<1x512xi32>
      %1425 = arith.andi %1422, %1424 : vector<1x512xi1>
      %c0_i32_519 = arith.constant 0 : i32
      %1426 = vector.broadcast %c0_i32_519 : i32 to vector<1x512xi32>
      %1427 = arith.cmpi sge, %1418, %1426 : vector<1x512xi32>
      %1428 = arith.andi %1425, %1427 : vector<1x512xi1>
      %c8_i32_520 = arith.constant 8 : i32
      %1429 = vector.broadcast %c8_i32_520 : i32 to vector<1x512xi32>
      %1430 = arith.cmpi slt, %1418, %1429 : vector<1x512xi32>
      %1431 = arith.andi %1428, %1430 : vector<1x512xi1>
      %c0_i32_521 = arith.constant 0 : i32
      %1432 = vector.broadcast %c0_i32_521 : i32 to vector<1x512xi32>
      %1433 = arith.cmpi sge, %1420, %1432 : vector<1x512xi32>
      %1434 = arith.andi %1431, %1433 : vector<1x512xi1>
      %c8_i32_522 = arith.constant 8 : i32
      %1435 = vector.broadcast %c8_i32_522 : i32 to vector<1x512xi32>
      %1436 = arith.cmpi slt, %1420, %1435 : vector<1x512xi32>
      %1437 = arith.andi %1434, %1436 : vector<1x512xi1>
      %1438 = arith.extui %1437 : vector<1x512xi1> to vector<1x512xi32>
      %1439 = arith.sitofp %1438 : vector<1x512xi32> to vector<1x512xf32>
      %1440 = vector.broadcast %1439 : vector<1x512xf32> to vector<8x512xf32>
      %1441 = arith.mulf %1414, %1440 : vector<8x512xf32>
      %c128_523 = arith.constant 128 : index
      %c0_524 = arith.constant 0 : index
      %1442 = vector.load %arg11[%c128_523, %c0_524] : memref<216x512xf32, #tpu.memory_space<vmem>>, vector<8x512xf32>
      tpu.vector_store %arg11[%c128_523, %c0_524], %1441 {strides = array<i32>} : memref<216x512xf32, #tpu.memory_space<vmem>>, vector<8x512xf32>,
      %c503_i32_525 = arith.constant 503 : i32
      %1443 = tpu.dynamic_rotate %950 by %c503_i32_525 dim 1 : vector<8x512xf32>, i32 -> vector<8x512xf32>
      %c0_i32_526 = arith.constant 0 : i32
      %1444 = vector.broadcast %c0_i32_526 : i32 to vector<1x512xi32>
      %1445 = arith.addi %116, %1444 : vector<1x512xi32>
      %c1_i32_527 = arith.constant 1 : i32
      %1446 = vector.broadcast %c1_i32_527 : i32 to vector<1x512xi32>
      %1447 = arith.addi %120, %1446 : vector<1x512xi32>
      %c1_i32_528 = arith.constant 1 : i32
      %1448 = vector.broadcast %c1_i32_528 : i32 to vector<1x512xi32>
      %1449 = arith.addi %122, %1448 : vector<1x512xi32>
      %c0_i32_529 = arith.constant 0 : i32
      %1450 = vector.broadcast %c0_i32_529 : i32 to vector<1x512xi32>
      %1451 = arith.cmpi sge, %1445, %1450 : vector<1x512xi32>
      %c8_i32_530 = arith.constant 8 : i32
      %1452 = vector.broadcast %c8_i32_530 : i32 to vector<1x512xi32>
      %1453 = arith.cmpi slt, %1445, %1452 : vector<1x512xi32>
      %1454 = arith.andi %1451, %1453 : vector<1x512xi1>
      %c0_i32_531 = arith.constant 0 : i32
      %1455 = vector.broadcast %c0_i32_531 : i32 to vector<1x512xi32>
      %1456 = arith.cmpi sge, %1447, %1455 : vector<1x512xi32>
      %1457 = arith.andi %1454, %1456 : vector<1x512xi1>
      %c8_i32_532 = arith.constant 8 : i32
      %1458 = vector.broadcast %c8_i32_532 : i32 to vector<1x512xi32>
      %1459 = arith.cmpi slt, %1447, %1458 : vector<1x512xi32>
      %1460 = arith.andi %1457, %1459 : vector<1x512xi1>
      %c0_i32_533 = arith.constant 0 : i32
      %1461 = vector.broadcast %c0_i32_533 : i32 to vector<1x512xi32>
      %1462 = arith.cmpi sge, %1449, %1461 : vector<1x512xi32>
      %1463 = arith.andi %1460, %1462 : vector<1x512xi1>
      %c8_i32_534 = arith.constant 8 : i32
      %1464 = vector.broadcast %c8_i32_534 : i32 to vector<1x512xi32>
      %1465 = arith.cmpi slt, %1449, %1464 : vector<1x512xi32>
      %1466 = arith.andi %1463, %1465 : vector<1x512xi1>
      %1467 = arith.extui %1466 : vector<1x512xi1> to vector<1x512xi32>
      %1468 = arith.sitofp %1467 : vector<1x512xi32> to vector<1x512xf32>
      %1469 = vector.broadcast %1468 : vector<1x512xf32> to vector<8x512xf32>
      %1470 = arith.mulf %1443, %1469 : vector<8x512xf32>
      %c136_535 = arith.constant 136 : index
      %c0_536 = arith.constant 0 : index
      %1471 = vector.load %arg11[%c136_535, %c0_536] : memref<216x512xf32, #tpu.memory_space<vmem>>, vector<8x512xf32>
      tpu.vector_store %arg11[%c136_535, %c0_536], %1470 {strides = array<i32>} : memref<216x512xf32, #tpu.memory_space<vmem>>, vector<8x512xf32>,
      %c457_i32_537 = arith.constant 457 : i32
      %1472 = tpu.dynamic_rotate %950 by %c457_i32_537 dim 1 : vector<8x512xf32>, i32 -> vector<8x512xf32>
      %c1_i32_538 = arith.constant 1 : i32
      %1473 = vector.broadcast %c1_i32_538 : i32 to vector<1x512xi32>
      %1474 = arith.addi %116, %1473 : vector<1x512xi32>
      %c-1_i32_539 = arith.constant -1 : i32
      %1475 = vector.broadcast %c-1_i32_539 : i32 to vector<1x512xi32>
      %1476 = arith.addi %120, %1475 : vector<1x512xi32>
      %c-1_i32_540 = arith.constant -1 : i32
      %1477 = vector.broadcast %c-1_i32_540 : i32 to vector<1x512xi32>
      %1478 = arith.addi %122, %1477 : vector<1x512xi32>
      %c0_i32_541 = arith.constant 0 : i32
      %1479 = vector.broadcast %c0_i32_541 : i32 to vector<1x512xi32>
      %1480 = arith.cmpi sge, %1474, %1479 : vector<1x512xi32>
      %c8_i32_542 = arith.constant 8 : i32
      %1481 = vector.broadcast %c8_i32_542 : i32 to vector<1x512xi32>
      %1482 = arith.cmpi slt, %1474, %1481 : vector<1x512xi32>
      %1483 = arith.andi %1480, %1482 : vector<1x512xi1>
      %c0_i32_543 = arith.constant 0 : i32
      %1484 = vector.broadcast %c0_i32_543 : i32 to vector<1x512xi32>
      %1485 = arith.cmpi sge, %1476, %1484 : vector<1x512xi32>
      %1486 = arith.andi %1483, %1485 : vector<1x512xi1>
      %c8_i32_544 = arith.constant 8 : i32
      %1487 = vector.broadcast %c8_i32_544 : i32 to vector<1x512xi32>
      %1488 = arith.cmpi slt, %1476, %1487 : vector<1x512xi32>
      %1489 = arith.andi %1486, %1488 : vector<1x512xi1>
      %c0_i32_545 = arith.constant 0 : i32
      %1490 = vector.broadcast %c0_i32_545 : i32 to vector<1x512xi32>
      %1491 = arith.cmpi sge, %1478, %1490 : vector<1x512xi32>
      %1492 = arith.andi %1489, %1491 : vector<1x512xi1>
      %c8_i32_546 = arith.constant 8 : i32
      %1493 = vector.broadcast %c8_i32_546 : i32 to vector<1x512xi32>
      %1494 = arith.cmpi slt, %1478, %1493 : vector<1x512xi32>
      %1495 = arith.andi %1492, %1494 : vector<1x512xi1>
      %1496 = arith.extui %1495 : vector<1x512xi1> to vector<1x512xi32>
      %1497 = arith.sitofp %1496 : vector<1x512xi32> to vector<1x512xf32>
      %1498 = vector.broadcast %1497 : vector<1x512xf32> to vector<8x512xf32>
      %1499 = arith.mulf %1472, %1498 : vector<8x512xf32>
      %c144_547 = arith.constant 144 : index
      %c0_548 = arith.constant 0 : index
      %1500 = vector.load %arg11[%c144_547, %c0_548] : memref<216x512xf32, #tpu.memory_space<vmem>>, vector<8x512xf32>
      tpu.vector_store %arg11[%c144_547, %c0_548], %1499 {strides = array<i32>} : memref<216x512xf32, #tpu.memory_space<vmem>>, vector<8x512xf32>,
      %c456_i32_549 = arith.constant 456 : i32
      %1501 = tpu.dynamic_rotate %950 by %c456_i32_549 dim 1 : vector<8x512xf32>, i32 -> vector<8x512xf32>
      %c1_i32_550 = arith.constant 1 : i32
      %1502 = vector.broadcast %c1_i32_550 : i32 to vector<1x512xi32>
      %1503 = arith.addi %116, %1502 : vector<1x512xi32>
      %c-1_i32_551 = arith.constant -1 : i32
      %1504 = vector.broadcast %c-1_i32_551 : i32 to vector<1x512xi32>
      %1505 = arith.addi %120, %1504 : vector<1x512xi32>
      %c0_i32_552 = arith.constant 0 : i32
      %1506 = vector.broadcast %c0_i32_552 : i32 to vector<1x512xi32>
      %1507 = arith.addi %122, %1506 : vector<1x512xi32>
      %c0_i32_553 = arith.constant 0 : i32
      %1508 = vector.broadcast %c0_i32_553 : i32 to vector<1x512xi32>
      %1509 = arith.cmpi sge, %1503, %1508 : vector<1x512xi32>
      %c8_i32_554 = arith.constant 8 : i32
      %1510 = vector.broadcast %c8_i32_554 : i32 to vector<1x512xi32>
      %1511 = arith.cmpi slt, %1503, %1510 : vector<1x512xi32>
      %1512 = arith.andi %1509, %1511 : vector<1x512xi1>
      %c0_i32_555 = arith.constant 0 : i32
      %1513 = vector.broadcast %c0_i32_555 : i32 to vector<1x512xi32>
      %1514 = arith.cmpi sge, %1505, %1513 : vector<1x512xi32>
      %1515 = arith.andi %1512, %1514 : vector<1x512xi1>
      %c8_i32_556 = arith.constant 8 : i32
      %1516 = vector.broadcast %c8_i32_556 : i32 to vector<1x512xi32>
      %1517 = arith.cmpi slt, %1505, %1516 : vector<1x512xi32>
      %1518 = arith.andi %1515, %1517 : vector<1x512xi1>
      %c0_i32_557 = arith.constant 0 : i32
      %1519 = vector.broadcast %c0_i32_557 : i32 to vector<1x512xi32>
      %1520 = arith.cmpi sge, %1507, %1519 : vector<1x512xi32>
      %1521 = arith.andi %1518, %1520 : vector<1x512xi1>
      %c8_i32_558 = arith.constant 8 : i32
      %1522 = vector.broadcast %c8_i32_558 : i32 to vector<1x512xi32>
      %1523 = arith.cmpi slt, %1507, %1522 : vector<1x512xi32>
      %1524 = arith.andi %1521, %1523 : vector<1x512xi1>
      %1525 = arith.extui %1524 : vector<1x512xi1> to vector<1x512xi32>
      %1526 = arith.sitofp %1525 : vector<1x512xi32> to vector<1x512xf32>
      %1527 = vector.broadcast %1526 : vector<1x512xf32> to vector<8x512xf32>
      %1528 = arith.mulf %1501, %1527 : vector<8x512xf32>
      %c152_559 = arith.constant 152 : index
      %c0_560 = arith.constant 0 : index
      %1529 = vector.load %arg11[%c152_559, %c0_560] : memref<216x512xf32, #tpu.memory_space<vmem>>, vector<8x512xf32>
      tpu.vector_store %arg11[%c152_559, %c0_560], %1528 {strides = array<i32>} : memref<216x512xf32, #tpu.memory_space<vmem>>, vector<8x512xf32>,
      %c455_i32_561 = arith.constant 455 : i32
      %1530 = tpu.dynamic_rotate %950 by %c455_i32_561 dim 1 : vector<8x512xf32>, i32 -> vector<8x512xf32>
      %c1_i32_562 = arith.constant 1 : i32
      %1531 = vector.broadcast %c1_i32_562 : i32 to vector<1x512xi32>
      %1532 = arith.addi %116, %1531 : vector<1x512xi32>
      %c-1_i32_563 = arith.constant -1 : i32
      %1533 = vector.broadcast %c-1_i32_563 : i32 to vector<1x512xi32>
      %1534 = arith.addi %120, %1533 : vector<1x512xi32>
      %c1_i32_564 = arith.constant 1 : i32
      %1535 = vector.broadcast %c1_i32_564 : i32 to vector<1x512xi32>
      %1536 = arith.addi %122, %1535 : vector<1x512xi32>
      %c0_i32_565 = arith.constant 0 : i32
      %1537 = vector.broadcast %c0_i32_565 : i32 to vector<1x512xi32>
      %1538 = arith.cmpi sge, %1532, %1537 : vector<1x512xi32>
      %c8_i32_566 = arith.constant 8 : i32
      %1539 = vector.broadcast %c8_i32_566 : i32 to vector<1x512xi32>
      %1540 = arith.cmpi slt, %1532, %1539 : vector<1x512xi32>
      %1541 = arith.andi %1538, %1540 : vector<1x512xi1>
      %c0_i32_567 = arith.constant 0 : i32
      %1542 = vector.broadcast %c0_i32_567 : i32 to vector<1x512xi32>
      %1543 = arith.cmpi sge, %1534, %1542 : vector<1x512xi32>
      %1544 = arith.andi %1541, %1543 : vector<1x512xi1>
      %c8_i32_568 = arith.constant 8 : i32
      %1545 = vector.broadcast %c8_i32_568 : i32 to vector<1x512xi32>
      %1546 = arith.cmpi slt, %1534, %1545 : vector<1x512xi32>
      %1547 = arith.andi %1544, %1546 : vector<1x512xi1>
      %c0_i32_569 = arith.constant 0 : i32
      %1548 = vector.broadcast %c0_i32_569 : i32 to vector<1x512xi32>
      %1549 = arith.cmpi sge, %1536, %1548 : vector<1x512xi32>
      %1550 = arith.andi %1547, %1549 : vector<1x512xi1>
      %c8_i32_570 = arith.constant 8 : i32
      %1551 = vector.broadcast %c8_i32_570 : i32 to vector<1x512xi32>
      %1552 = arith.cmpi slt, %1536, %1551 : vector<1x512xi32>
      %1553 = arith.andi %1550, %1552 : vector<1x512xi1>
      %1554 = arith.extui %1553 : vector<1x512xi1> to vector<1x512xi32>
      %1555 = arith.sitofp %1554 : vector<1x512xi32> to vector<1x512xf32>
      %1556 = vector.broadcast %1555 : vector<1x512xf32> to vector<8x512xf32>
      %1557 = arith.mulf %1530, %1556 : vector<8x512xf32>
      %c160_571 = arith.constant 160 : index
      %c0_572 = arith.constant 0 : index
      %1558 = vector.load %arg11[%c160_571, %c0_572] : memref<216x512xf32, #tpu.memory_space<vmem>>, vector<8x512xf32>
      tpu.vector_store %arg11[%c160_571, %c0_572], %1557 {strides = array<i32>} : memref<216x512xf32, #tpu.memory_space<vmem>>, vector<8x512xf32>,
      %c449_i32_573 = arith.constant 449 : i32
      %1559 = tpu.dynamic_rotate %950 by %c449_i32_573 dim 1 : vector<8x512xf32>, i32 -> vector<8x512xf32>
      %c1_i32_574 = arith.constant 1 : i32
      %1560 = vector.broadcast %c1_i32_574 : i32 to vector<1x512xi32>
      %1561 = arith.addi %116, %1560 : vector<1x512xi32>
      %c0_i32_575 = arith.constant 0 : i32
      %1562 = vector.broadcast %c0_i32_575 : i32 to vector<1x512xi32>
      %1563 = arith.addi %120, %1562 : vector<1x512xi32>
      %c-1_i32_576 = arith.constant -1 : i32
      %1564 = vector.broadcast %c-1_i32_576 : i32 to vector<1x512xi32>
      %1565 = arith.addi %122, %1564 : vector<1x512xi32>
      %c0_i32_577 = arith.constant 0 : i32
      %1566 = vector.broadcast %c0_i32_577 : i32 to vector<1x512xi32>
      %1567 = arith.cmpi sge, %1561, %1566 : vector<1x512xi32>
      %c8_i32_578 = arith.constant 8 : i32
      %1568 = vector.broadcast %c8_i32_578 : i32 to vector<1x512xi32>
      %1569 = arith.cmpi slt, %1561, %1568 : vector<1x512xi32>
      %1570 = arith.andi %1567, %1569 : vector<1x512xi1>
      %c0_i32_579 = arith.constant 0 : i32
      %1571 = vector.broadcast %c0_i32_579 : i32 to vector<1x512xi32>
      %1572 = arith.cmpi sge, %1563, %1571 : vector<1x512xi32>
      %1573 = arith.andi %1570, %1572 : vector<1x512xi1>
      %c8_i32_580 = arith.constant 8 : i32
      %1574 = vector.broadcast %c8_i32_580 : i32 to vector<1x512xi32>
      %1575 = arith.cmpi slt, %1563, %1574 : vector<1x512xi32>
      %1576 = arith.andi %1573, %1575 : vector<1x512xi1>
      %c0_i32_581 = arith.constant 0 : i32
      %1577 = vector.broadcast %c0_i32_581 : i32 to vector<1x512xi32>
      %1578 = arith.cmpi sge, %1565, %1577 : vector<1x512xi32>
      %1579 = arith.andi %1576, %1578 : vector<1x512xi1>
      %c8_i32_582 = arith.constant 8 : i32
      %1580 = vector.broadcast %c8_i32_582 : i32 to vector<1x512xi32>
      %1581 = arith.cmpi slt, %1565, %1580 : vector<1x512xi32>
      %1582 = arith.andi %1579, %1581 : vector<1x512xi1>
      %1583 = arith.extui %1582 : vector<1x512xi1> to vector<1x512xi32>
      %1584 = arith.sitofp %1583 : vector<1x512xi32> to vector<1x512xf32>
      %1585 = vector.broadcast %1584 : vector<1x512xf32> to vector<8x512xf32>
      %1586 = arith.mulf %1559, %1585 : vector<8x512xf32>
      %c168_583 = arith.constant 168 : index
      %c0_584 = arith.constant 0 : index
      %1587 = vector.load %arg11[%c168_583, %c0_584] : memref<216x512xf32, #tpu.memory_space<vmem>>, vector<8x512xf32>
      tpu.vector_store %arg11[%c168_583, %c0_584], %1586 {strides = array<i32>} : memref<216x512xf32, #tpu.memory_space<vmem>>, vector<8x512xf32>,
      %c448_i32_585 = arith.constant 448 : i32
      %1588 = tpu.dynamic_rotate %950 by %c448_i32_585 dim 1 : vector<8x512xf32>, i32 -> vector<8x512xf32>
      %c1_i32_586 = arith.constant 1 : i32
      %1589 = vector.broadcast %c1_i32_586 : i32 to vector<1x512xi32>
      %1590 = arith.addi %116, %1589 : vector<1x512xi32>
      %c0_i32_587 = arith.constant 0 : i32
      %1591 = vector.broadcast %c0_i32_587 : i32 to vector<1x512xi32>
      %1592 = arith.addi %120, %1591 : vector<1x512xi32>
      %c0_i32_588 = arith.constant 0 : i32
      %1593 = vector.broadcast %c0_i32_588 : i32 to vector<1x512xi32>
      %1594 = arith.addi %122, %1593 : vector<1x512xi32>
      %c0_i32_589 = arith.constant 0 : i32
      %1595 = vector.broadcast %c0_i32_589 : i32 to vector<1x512xi32>
      %1596 = arith.cmpi sge, %1590, %1595 : vector<1x512xi32>
      %c8_i32_590 = arith.constant 8 : i32
      %1597 = vector.broadcast %c8_i32_590 : i32 to vector<1x512xi32>
      %1598 = arith.cmpi slt, %1590, %1597 : vector<1x512xi32>
      %1599 = arith.andi %1596, %1598 : vector<1x512xi1>
      %c0_i32_591 = arith.constant 0 : i32
      %1600 = vector.broadcast %c0_i32_591 : i32 to vector<1x512xi32>
      %1601 = arith.cmpi sge, %1592, %1600 : vector<1x512xi32>
      %1602 = arith.andi %1599, %1601 : vector<1x512xi1>
      %c8_i32_592 = arith.constant 8 : i32
      %1603 = vector.broadcast %c8_i32_592 : i32 to vector<1x512xi32>
      %1604 = arith.cmpi slt, %1592, %1603 : vector<1x512xi32>
      %1605 = arith.andi %1602, %1604 : vector<1x512xi1>
      %c0_i32_593 = arith.constant 0 : i32
      %1606 = vector.broadcast %c0_i32_593 : i32 to vector<1x512xi32>
      %1607 = arith.cmpi sge, %1594, %1606 : vector<1x512xi32>
      %1608 = arith.andi %1605, %1607 : vector<1x512xi1>
      %c8_i32_594 = arith.constant 8 : i32
      %1609 = vector.broadcast %c8_i32_594 : i32 to vector<1x512xi32>
      %1610 = arith.cmpi slt, %1594, %1609 : vector<1x512xi32>
      %1611 = arith.andi %1608, %1610 : vector<1x512xi1>
      %1612 = arith.extui %1611 : vector<1x512xi1> to vector<1x512xi32>
      %1613 = arith.sitofp %1612 : vector<1x512xi32> to vector<1x512xf32>
      %1614 = vector.broadcast %1613 : vector<1x512xf32> to vector<8x512xf32>
      %1615 = arith.mulf %1588, %1614 : vector<8x512xf32>
      %c176_595 = arith.constant 176 : index
      %c0_596 = arith.constant 0 : index
      %1616 = vector.load %arg11[%c176_595, %c0_596] : memref<216x512xf32, #tpu.memory_space<vmem>>, vector<8x512xf32>
      tpu.vector_store %arg11[%c176_595, %c0_596], %1615 {strides = array<i32>} : memref<216x512xf32, #tpu.memory_space<vmem>>, vector<8x512xf32>,
      %c447_i32_597 = arith.constant 447 : i32
      %1617 = tpu.dynamic_rotate %950 by %c447_i32_597 dim 1 : vector<8x512xf32>, i32 -> vector<8x512xf32>
      %c1_i32_598 = arith.constant 1 : i32
      %1618 = vector.broadcast %c1_i32_598 : i32 to vector<1x512xi32>
      %1619 = arith.addi %116, %1618 : vector<1x512xi32>
      %c0_i32_599 = arith.constant 0 : i32
      %1620 = vector.broadcast %c0_i32_599 : i32 to vector<1x512xi32>
      %1621 = arith.addi %120, %1620 : vector<1x512xi32>
      %c1_i32_600 = arith.constant 1 : i32
      %1622 = vector.broadcast %c1_i32_600 : i32 to vector<1x512xi32>
      %1623 = arith.addi %122, %1622 : vector<1x512xi32>
      %c0_i32_601 = arith.constant 0 : i32
      %1624 = vector.broadcast %c0_i32_601 : i32 to vector<1x512xi32>
      %1625 = arith.cmpi sge, %1619, %1624 : vector<1x512xi32>
      %c8_i32_602 = arith.constant 8 : i32
      %1626 = vector.broadcast %c8_i32_602 : i32 to vector<1x512xi32>
      %1627 = arith.cmpi slt, %1619, %1626 : vector<1x512xi32>
      %1628 = arith.andi %1625, %1627 : vector<1x512xi1>
      %c0_i32_603 = arith.constant 0 : i32
      %1629 = vector.broadcast %c0_i32_603 : i32 to vector<1x512xi32>
      %1630 = arith.cmpi sge, %1621, %1629 : vector<1x512xi32>
      %1631 = arith.andi %1628, %1630 : vector<1x512xi1>
      %c8_i32_604 = arith.constant 8 : i32
      %1632 = vector.broadcast %c8_i32_604 : i32 to vector<1x512xi32>
      %1633 = arith.cmpi slt, %1621, %1632 : vector<1x512xi32>
      %1634 = arith.andi %1631, %1633 : vector<1x512xi1>
      %c0_i32_605 = arith.constant 0 : i32
      %1635 = vector.broadcast %c0_i32_605 : i32 to vector<1x512xi32>
      %1636 = arith.cmpi sge, %1623, %1635 : vector<1x512xi32>
      %1637 = arith.andi %1634, %1636 : vector<1x512xi1>
      %c8_i32_606 = arith.constant 8 : i32
      %1638 = vector.broadcast %c8_i32_606 : i32 to vector<1x512xi32>
      %1639 = arith.cmpi slt, %1623, %1638 : vector<1x512xi32>
      %1640 = arith.andi %1637, %1639 : vector<1x512xi1>
      %1641 = arith.extui %1640 : vector<1x512xi1> to vector<1x512xi32>
      %1642 = arith.sitofp %1641 : vector<1x512xi32> to vector<1x512xf32>
      %1643 = vector.broadcast %1642 : vector<1x512xf32> to vector<8x512xf32>
      %1644 = arith.mulf %1617, %1643 : vector<8x512xf32>
      %c184_607 = arith.constant 184 : index
      %c0_608 = arith.constant 0 : index
      %1645 = vector.load %arg11[%c184_607, %c0_608] : memref<216x512xf32, #tpu.memory_space<vmem>>, vector<8x512xf32>
      tpu.vector_store %arg11[%c184_607, %c0_608], %1644 {strides = array<i32>} : memref<216x512xf32, #tpu.memory_space<vmem>>, vector<8x512xf32>,
      %c441_i32_609 = arith.constant 441 : i32
      %1646 = tpu.dynamic_rotate %950 by %c441_i32_609 dim 1 : vector<8x512xf32>, i32 -> vector<8x512xf32>
      %c1_i32_610 = arith.constant 1 : i32
      %1647 = vector.broadcast %c1_i32_610 : i32 to vector<1x512xi32>
      %1648 = arith.addi %116, %1647 : vector<1x512xi32>
      %c1_i32_611 = arith.constant 1 : i32
      %1649 = vector.broadcast %c1_i32_611 : i32 to vector<1x512xi32>
      %1650 = arith.addi %120, %1649 : vector<1x512xi32>
      %c-1_i32_612 = arith.constant -1 : i32
      %1651 = vector.broadcast %c-1_i32_612 : i32 to vector<1x512xi32>
      %1652 = arith.addi %122, %1651 : vector<1x512xi32>
      %c0_i32_613 = arith.constant 0 : i32
      %1653 = vector.broadcast %c0_i32_613 : i32 to vector<1x512xi32>
      %1654 = arith.cmpi sge, %1648, %1653 : vector<1x512xi32>
      %c8_i32_614 = arith.constant 8 : i32
      %1655 = vector.broadcast %c8_i32_614 : i32 to vector<1x512xi32>
      %1656 = arith.cmpi slt, %1648, %1655 : vector<1x512xi32>
      %1657 = arith.andi %1654, %1656 : vector<1x512xi1>
      %c0_i32_615 = arith.constant 0 : i32
      %1658 = vector.broadcast %c0_i32_615 : i32 to vector<1x512xi32>
      %1659 = arith.cmpi sge, %1650, %1658 : vector<1x512xi32>
      %1660 = arith.andi %1657, %1659 : vector<1x512xi1>
      %c8_i32_616 = arith.constant 8 : i32
      %1661 = vector.broadcast %c8_i32_616 : i32 to vector<1x512xi32>
      %1662 = arith.cmpi slt, %1650, %1661 : vector<1x512xi32>
      %1663 = arith.andi %1660, %1662 : vector<1x512xi1>
      %c0_i32_617 = arith.constant 0 : i32
      %1664 = vector.broadcast %c0_i32_617 : i32 to vector<1x512xi32>
      %1665 = arith.cmpi sge, %1652, %1664 : vector<1x512xi32>
      %1666 = arith.andi %1663, %1665 : vector<1x512xi1>
      %c8_i32_618 = arith.constant 8 : i32
      %1667 = vector.broadcast %c8_i32_618 : i32 to vector<1x512xi32>
      %1668 = arith.cmpi slt, %1652, %1667 : vector<1x512xi32>
      %1669 = arith.andi %1666, %1668 : vector<1x512xi1>
      %1670 = arith.extui %1669 : vector<1x512xi1> to vector<1x512xi32>
      %1671 = arith.sitofp %1670 : vector<1x512xi32> to vector<1x512xf32>
      %1672 = vector.broadcast %1671 : vector<1x512xf32> to vector<8x512xf32>
      %1673 = arith.mulf %1646, %1672 : vector<8x512xf32>
      %c192_619 = arith.constant 192 : index
      %c0_620 = arith.constant 0 : index
      %1674 = vector.load %arg11[%c192_619, %c0_620] : memref<216x512xf32, #tpu.memory_space<vmem>>, vector<8x512xf32>
      tpu.vector_store %arg11[%c192_619, %c0_620], %1673 {strides = array<i32>} : memref<216x512xf32, #tpu.memory_space<vmem>>, vector<8x512xf32>,
      %c440_i32_621 = arith.constant 440 : i32
      %1675 = tpu.dynamic_rotate %950 by %c440_i32_621 dim 1 : vector<8x512xf32>, i32 -> vector<8x512xf32>
      %c1_i32_622 = arith.constant 1 : i32
      %1676 = vector.broadcast %c1_i32_622 : i32 to vector<1x512xi32>
      %1677 = arith.addi %116, %1676 : vector<1x512xi32>
      %c1_i32_623 = arith.constant 1 : i32
      %1678 = vector.broadcast %c1_i32_623 : i32 to vector<1x512xi32>
      %1679 = arith.addi %120, %1678 : vector<1x512xi32>
      %c0_i32_624 = arith.constant 0 : i32
      %1680 = vector.broadcast %c0_i32_624 : i32 to vector<1x512xi32>
      %1681 = arith.addi %122, %1680 : vector<1x512xi32>
      %c0_i32_625 = arith.constant 0 : i32
      %1682 = vector.broadcast %c0_i32_625 : i32 to vector<1x512xi32>
      %1683 = arith.cmpi sge, %1677, %1682 : vector<1x512xi32>
      %c8_i32_626 = arith.constant 8 : i32
      %1684 = vector.broadcast %c8_i32_626 : i32 to vector<1x512xi32>
      %1685 = arith.cmpi slt, %1677, %1684 : vector<1x512xi32>
      %1686 = arith.andi %1683, %1685 : vector<1x512xi1>
      %c0_i32_627 = arith.constant 0 : i32
      %1687 = vector.broadcast %c0_i32_627 : i32 to vector<1x512xi32>
      %1688 = arith.cmpi sge, %1679, %1687 : vector<1x512xi32>
      %1689 = arith.andi %1686, %1688 : vector<1x512xi1>
      %c8_i32_628 = arith.constant 8 : i32
      %1690 = vector.broadcast %c8_i32_628 : i32 to vector<1x512xi32>
      %1691 = arith.cmpi slt, %1679, %1690 : vector<1x512xi32>
      %1692 = arith.andi %1689, %1691 : vector<1x512xi1>
      %c0_i32_629 = arith.constant 0 : i32
      %1693 = vector.broadcast %c0_i32_629 : i32 to vector<1x512xi32>
      %1694 = arith.cmpi sge, %1681, %1693 : vector<1x512xi32>
      %1695 = arith.andi %1692, %1694 : vector<1x512xi1>
      %c8_i32_630 = arith.constant 8 : i32
      %1696 = vector.broadcast %c8_i32_630 : i32 to vector<1x512xi32>
      %1697 = arith.cmpi slt, %1681, %1696 : vector<1x512xi32>
      %1698 = arith.andi %1695, %1697 : vector<1x512xi1>
      %1699 = arith.extui %1698 : vector<1x512xi1> to vector<1x512xi32>
      %1700 = arith.sitofp %1699 : vector<1x512xi32> to vector<1x512xf32>
      %1701 = vector.broadcast %1700 : vector<1x512xf32> to vector<8x512xf32>
      %1702 = arith.mulf %1675, %1701 : vector<8x512xf32>
      %c200_631 = arith.constant 200 : index
      %c0_632 = arith.constant 0 : index
      %1703 = vector.load %arg11[%c200_631, %c0_632] : memref<216x512xf32, #tpu.memory_space<vmem>>, vector<8x512xf32>
      tpu.vector_store %arg11[%c200_631, %c0_632], %1702 {strides = array<i32>} : memref<216x512xf32, #tpu.memory_space<vmem>>, vector<8x512xf32>,
      %c439_i32_633 = arith.constant 439 : i32
      %1704 = tpu.dynamic_rotate %950 by %c439_i32_633 dim 1 : vector<8x512xf32>, i32 -> vector<8x512xf32>
      %c1_i32_634 = arith.constant 1 : i32
      %1705 = vector.broadcast %c1_i32_634 : i32 to vector<1x512xi32>
      %1706 = arith.addi %116, %1705 : vector<1x512xi32>
      %c1_i32_635 = arith.constant 1 : i32
      %1707 = vector.broadcast %c1_i32_635 : i32 to vector<1x512xi32>
      %1708 = arith.addi %120, %1707 : vector<1x512xi32>
      %c1_i32_636 = arith.constant 1 : i32
      %1709 = vector.broadcast %c1_i32_636 : i32 to vector<1x512xi32>
      %1710 = arith.addi %122, %1709 : vector<1x512xi32>
      %c0_i32_637 = arith.constant 0 : i32
      %1711 = vector.broadcast %c0_i32_637 : i32 to vector<1x512xi32>
      %1712 = arith.cmpi sge, %1706, %1711 : vector<1x512xi32>
      %c8_i32_638 = arith.constant 8 : i32
      %1713 = vector.broadcast %c8_i32_638 : i32 to vector<1x512xi32>
      %1714 = arith.cmpi slt, %1706, %1713 : vector<1x512xi32>
      %1715 = arith.andi %1712, %1714 : vector<1x512xi1>
      %c0_i32_639 = arith.constant 0 : i32
      %1716 = vector.broadcast %c0_i32_639 : i32 to vector<1x512xi32>
      %1717 = arith.cmpi sge, %1708, %1716 : vector<1x512xi32>
      %1718 = arith.andi %1715, %1717 : vector<1x512xi1>
      %c8_i32_640 = arith.constant 8 : i32
      %1719 = vector.broadcast %c8_i32_640 : i32 to vector<1x512xi32>
      %1720 = arith.cmpi slt, %1708, %1719 : vector<1x512xi32>
      %1721 = arith.andi %1718, %1720 : vector<1x512xi1>
      %c0_i32_641 = arith.constant 0 : i32
      %1722 = vector.broadcast %c0_i32_641 : i32 to vector<1x512xi32>
      %1723 = arith.cmpi sge, %1710, %1722 : vector<1x512xi32>
      %1724 = arith.andi %1721, %1723 : vector<1x512xi1>
      %c8_i32_642 = arith.constant 8 : i32
      %1725 = vector.broadcast %c8_i32_642 : i32 to vector<1x512xi32>
      %1726 = arith.cmpi slt, %1710, %1725 : vector<1x512xi32>
      %1727 = arith.andi %1724, %1726 : vector<1x512xi1>
      %1728 = arith.extui %1727 : vector<1x512xi1> to vector<1x512xi32>
      %1729 = arith.sitofp %1728 : vector<1x512xi32> to vector<1x512xf32>
      %1730 = vector.broadcast %1729 : vector<1x512xf32> to vector<8x512xf32>
      %1731 = arith.mulf %1704, %1730 : vector<8x512xf32>
      %c208_643 = arith.constant 208 : index
      %c0_644 = arith.constant 0 : index
      %1732 = vector.load %arg11[%c208_643, %c0_644] : memref<216x512xf32, #tpu.memory_space<vmem>>, vector<8x512xf32>
      tpu.vector_store %arg11[%c208_643, %c0_644], %1731 {strides = array<i32>} : memref<216x512xf32, #tpu.memory_space<vmem>>, vector<8x512xf32>,
      %c0_645 = arith.constant 0 : index
      %c0_646 = arith.constant 0 : index
      %1733 = vector.load %arg4[%c0_645, %c0_646] : memref<10x216xf32, #tpu.memory_space<vmem>>, vector<10x216xf32>
      %c0_647 = arith.constant 0 : index
      %c0_648 = arith.constant 0 : index
      %1734 = vector.load %arg11[%c0_647, %c0_648] : memref<216x512xf32, #tpu.memory_space<vmem>>, vector<216x512xf32>
      %cst_649 = arith.constant dense<0.000000e+00> : vector<10x512xf32>
      %1735 = tpu.matmul %1733, %1734, %cst_649 {dimension_numbers = #tpu.dot_dimension_numbers<[1], [0], [0], [1], [0, 0, 1, 1], [], []>} : vector<10x216xf32>, vector<216x512xf32>, vector<10x512xf32> -> vector<10x512xf32>
      %cst_650 = arith.constant dense<0.000000e+00> : vector<10xf32>
      %1736 = vector.multi_reduction <add>, %1735, %cst_650 [1] : vector<10x512xf32> to vector<10xf32>
      %1737 = vector.shape_cast %1736 : vector<10xf32> to vector<10x1xf32>
      %cst_651 = arith.constant 0.001953125 : f32
      %1738 = vector.broadcast %cst_651 : f32 to vector<10x1xf32>
      %1739 = arith.mulf %1737, %1738 : vector<10x1xf32>
      %1740 = vector.broadcast %1739 : vector<10x1xf32> to vector<10x512xf32>
      %1741 = arith.subf %1735, %1740 : vector<10x512xf32>
      %1742 = arith.mulf %1741, %1741 : vector<10x512xf32>
      %cst_652 = arith.constant dense<0.000000e+00> : vector<10xf32>
      %1743 = vector.multi_reduction <add>, %1742, %cst_652 [1] : vector<10x512xf32> to vector<10xf32>
      %1744 = vector.shape_cast %1743 : vector<10xf32> to vector<10x1xf32>
      %cst_653 = arith.constant 0.001953125 : f32
      %1745 = vector.broadcast %cst_653 : f32 to vector<10x1xf32>
      %1746 = arith.mulf %1744, %1745 : vector<10x1xf32>
      %c0_654 = arith.constant 0 : index
      %c0_655 = arith.constant 0 : index
      %1747 = vector.load %arg6[%c0_654, %c0_655] : memref<10x2xf32, #tpu.memory_space<vmem>>, vector<10x1xf32>
      %cst_656 = arith.constant 9.99999974E-6 : f32
      %1748 = vector.broadcast %cst_656 : f32 to vector<10x1xf32>
      %1749 = arith.addf %1746, %1748 : vector<10x1xf32>
      %1750 = math.rsqrt %1749 : vector<10x1xf32>
      %1751 = arith.mulf %1747, %1750 : vector<10x1xf32>
      %1752 = vector.broadcast %1751 : vector<10x1xf32> to vector<10x512xf32>
      %1753 = arith.mulf %1741, %1752 : vector<10x512xf32>
      %c0_657 = arith.constant 0 : index
      %c1_658 = arith.constant 1 : index
      %1754 = vector.load %arg6[%c0_657, %c1_658] : memref<10x2xf32, #tpu.memory_space<vmem>>, vector<10x1xf32>
      %1755 = vector.broadcast %1754 : vector<10x1xf32> to vector<10x512xf32>
      %1756 = arith.addf %1753, %1755 : vector<10x512xf32>
      %1757 = vector.extract_strided_slice %1756 {offsets = [0, 0], sizes = [2, 512], strides = [1, 1]} : vector<10x512xf32> to vector<2x512xf32>
      %cst_659 = arith.constant 0.000000e+00 : f32
      %1758 = vector.broadcast %cst_659 : f32 to vector<2x512xf32>
      %1759 = arith.maximumf %1757, %1758 : vector<2x512xf32>
      %1760 = vector.extract_strided_slice %1756 {offsets = [8, 0], sizes = [1, 512], strides = [1, 1]} : vector<10x512xf32> to vector<1x512xf32>
      %1761 = arith.negf %1760 : vector<1x512xf32>
      %1762 = math.exp %1761 : vector<1x512xf32>
      %cst_660 = arith.constant 1.000000e+00 : f32
      %1763 = vector.broadcast %cst_660 : f32 to vector<1x512xf32>
      %1764 = arith.addf %1763, %1762 : vector<1x512xf32>
      %1765 = arith.divf %1763, %1764 : vector<1x512xf32>
      %1766 = vector.extract_strided_slice %1756 {offsets = [2, 0], sizes = [3, 512], strides = [1, 1]} : vector<10x512xf32> to vector<3x512xf32>
      %1767 = vector.broadcast %1765 : vector<1x512xf32> to vector<3x512xf32>
      %1768 = arith.mulf %1766, %1767 : vector<3x512xf32>
      %1769 = vector.extract_strided_slice %1756 {offsets = [9, 0], sizes = [1, 512], strides = [1, 1]} : vector<10x512xf32> to vector<1x512xf32>
      %1770 = arith.negf %1769 : vector<1x512xf32>
      %1771 = math.exp %1770 : vector<1x512xf32>
      %cst_661 = arith.constant 1.000000e+00 : f32
      %1772 = vector.broadcast %cst_661 : f32 to vector<1x512xf32>
      %1773 = arith.addf %1772, %1771 : vector<1x512xf32>
      %1774 = arith.divf %1772, %1773 : vector<1x512xf32>
      %1775 = vector.extract_strided_slice %1756 {offsets = [5, 0], sizes = [3, 512], strides = [1, 1]} : vector<10x512xf32> to vector<3x512xf32>
      %1776 = vector.broadcast %1774 : vector<1x512xf32> to vector<3x512xf32>
      %1777 = arith.mulf %1775, %1776 : vector<3x512xf32>
      %1778 = tpu.concatenate %1759, %1768, %1777 in 0 : vector<2x512xf32>, vector<3x512xf32>, vector<3x512xf32> -> vector<8x512xf32>
      %c0_662 = arith.constant 0 : index
      %c0_663 = arith.constant 0 : index
      %1779 = vector.load %arg9[%c0_662, %c0_663] : memref<8x512xf32, #tpu.memory_space<vmem>>, vector<8x512xf32>
      tpu.vector_store %arg9[%c0_662, %c0_663], %1778 {strides = array<i32>} : memref<8x512xf32, #tpu.memory_space<vmem>>, vector<8x512xf32>,
    } else {
    }
    return
  }
  func.func @transform_0(%arg0: i32) -> (i32, i32) {
    %c0_i32 = arith.constant 0 : i32
    %c0_i32_0 = arith.constant 0 : i32
    return %c0_i32, %arg0 : i32, i32
  }
  func.func @transform_1(%arg0: i32) -> (i32, i32) {
    %c0_i32 = arith.constant 0 : i32
    %c0_i32_0 = arith.constant 0 : i32
    return %c0_i32, %arg0 : i32, i32
  }
  func.func @transform_2(%arg0: i32) -> (i32, i32) {
    %c0_i32 = arith.constant 0 : i32
    %c0_i32_0 = arith.constant 0 : i32
    %c0_i32_1 = arith.constant 0 : i32
    return %c0_i32, %c0_i32_0 : i32, i32
  }
  func.func @transform_3(%arg0: i32) -> (i32, i32) {
    %c0_i32 = arith.constant 0 : i32
    %c0_i32_0 = arith.constant 0 : i32
    %c0_i32_1 = arith.constant 0 : i32
    return %c0_i32, %c0_i32_0 : i32, i32
  }
  func.func @transform_4(%arg0: i32) -> (i32, i32) {
    %c0_i32 = arith.constant 0 : i32
    %c0_i32_0 = arith.constant 0 : i32
    %c0_i32_1 = arith.constant 0 : i32
    return %c0_i32, %c0_i32_0 : i32, i32
  }
  func.func @transform_5(%arg0: i32) -> (i32, i32) {
    %c0_i32 = arith.constant 0 : i32
    %c0_i32_0 = arith.constant 0 : i32
    %c0_i32_1 = arith.constant 0 : i32
    return %c0_i32, %c0_i32_0 : i32, i32
  }
  func.func @transform_6(%arg0: i32) -> (i32, i32) {
    %c0_i32 = arith.constant 0 : i32
    %c0_i32_0 = arith.constant 0 : i32
    return %c0_i32, %arg0 : i32, i32
  }
  func.func @transform_7(%arg0: i32) -> (i32, i32) {
    %c0_i32 = arith.constant 0 : i32
    %c0_i32_0 = arith.constant 0 : i32
    return %c0_i32, %arg0 : i32, i32
  }
  func.func @transform_8(%arg0: i32) -> (i32, i32) {
    %c0_i32 = arith.constant 0 : i32
    %c0_i32_0 = arith.constant 0 : i32
    %c0_i32_1 = arith.constant 0 : i32
    return %c0_i32, %c0_i32_0 : i32, i32
  }
}

</mosaic_0001>

<llo_original>
// kernel: feature_steering_forward.1
$region0: #{feature_steering_forward.1}
  #allocation0 [shape = 'u32[]', space=smem, size = 0x4, offset = 0x4, fixed_abs, tag = 'smem constant byte address 0x4 - core index']
  #allocation1 [shape = 'u32[144,128]{1,0:T(1,128)}', space=vmem, size = 0x12000, scoped, tag = 'internal scratch']
  #allocation2 [shape = 'f32[16,512]{1,0:T(8,128)}', space=vmem, size = 0x8000, scoped, tag = 'scratch operand']
  #allocation3 [shape = 'f32[216,512]{1,0:T(8,128)}', space=vmem, size = 0x6c000, scoped, tag = 'scratch operand']
  %s0 = inlined_call_operand.vmem [shape: f32[24,256], index: 0, kind: input, shape index: {}]
  %s1 = inlined_call_operand.vmem [shape: f32[8,256], index: 1, kind: input, shape index: {}]
  %s2 = inlined_call_operand.vmem [shape: f32[10,216], index: 2, kind: input, shape index: {}]
  %s3 = inlined_call_operand.vmem [shape: f32[10,216], index: 3, kind: input, shape index: {}]
  %s4 = inlined_call_operand.vmem [shape: f32[10,2], index: 4, kind: input, shape index: {}]
  %s5 = inlined_call_operand.vmem [shape: f32[10,2], index: 5, kind: input, shape index: {}]
  %s6 = inlined_call_operand.vmem [shape: f32[3,256], index: 6, kind: output, shape index: {0}]
  %s7 = inlined_call_operand.vmem [shape: f32[1,256], index: 7, kind: output, shape index: {1}]
  %s8 = inlined_call_operand.vmem [shape: f32[8,512], index: 8, kind: output, shape index: {2}]
  %9 = xla_tuple %s6, %s7, %s8
  %s10 = sld [smem:[#allocation0]]
  $region58: #{feature_steering_forward.1} parent=0
    _
  %s12 = ssub.s32 1, %s10
  %s13 = scalar_select 0, %s12, %s10
  // Predicated region
  $region2: #{feature_steering_forward.1} parent=0 // pred_check
    _
  $region3: #{feature_steering_forward.1} parent=0 // pred_check_branch
    %15 = sbr.rel (0) target = $region5
  $region4: #{feature_steering_forward.1} parent=0 // pred_region
    _
  $region5: #{feature_steering_forward.1} parent=0 // pred_fallthru
    _
  // Predicated region
  $region6: #{feature_steering_forward.1} parent=0 // pred_check
    _
  $region7: #{feature_steering_forward.1} parent=0 // pred_check_branch
    %17 = sbr.rel (0) target = $region9
  $region8: #{feature_steering_forward.1} parent=0 // pred_region
    _
  $region9: #{feature_steering_forward.1} parent=0 // pred_fallthru
    _
  // Predicated region
  $region10: #{feature_steering_forward.1} parent=0 // pred_check
    _
  $region11: #{feature_steering_forward.1} parent=0 // pred_check_branch
    %19 = sbr.rel (0) target = $region13
  $region12: #{feature_steering_forward.1} parent=0 // pred_region
    _
  $region13: #{feature_steering_forward.1} parent=0 // pred_fallthru
    _
  // Predicated region
  $region14: #{feature_steering_forward.1} parent=0 // pred_check
    _
  $region15: #{feature_steering_forward.1} parent=0 // pred_check_branch
    %21 = sbr.rel (0) target = $region17
  $region16: #{feature_steering_forward.1} parent=0 // pred_region
    _
  $region17: #{feature_steering_forward.1} parent=0 // pred_fallthru
    _
  // Predicated region
  $region18: #{feature_steering_forward.1} parent=0 // pred_check
    _
  $region19: #{feature_steering_forward.1} parent=0 // pred_check_branch
    %23 = sbr.rel (0) target = $region21
  $region20: #{feature_steering_forward.1} parent=0 // pred_region
    _
  $region21: #{feature_steering_forward.1} parent=0 // pred_fallthru
    _
  // Predicated region
  $region22: #{feature_steering_forward.1} parent=0 // pred_check
    _
  $region23: #{feature_steering_forward.1} parent=0 // pred_check_branch
    %25 = sbr.rel (0) target = $region25
  $region24: #{feature_steering_forward.1} parent=0 // pred_region
    _
  $region25: #{feature_steering_forward.1} parent=0 // pred_fallthru
    _
  %v26 = vld [vmem:[%s0] sm:$0xff]
  %v27 = vld [vmem:[%s0 + $0x8] sm:$0xff]
  %v28 = vld [vmem:[%s0 + $0x10] sm:$0xff]
  %v29 = vld [vmem:[%s0 + $0x18] sm:$0xff]
  %v30 = vld [vmem:[%s0 + $0x20] sm:$0xff]
  %v31 = vld [vmem:[%s0 + $0x28] sm:$0xff]
  %v32 = vld [vmem:[%s1] sm:$0xff]
  %v33 = vld [vmem:[%s1 + $0x8] sm:$0xff]
  %v36 = vrot.slane %v26, 3
  %v37 = vrot.slane %v27, 3
  %v40 = vsub.f32 %v26, %v36
  %v41 = vsub.f32 %v27, %v37
  %v42 = vadd.f32 %v26, 1e-08
  %v43 = vadd.f32 %v27, 1e-08
  %v44 = vrcp.pop %v42
  %v45 = vrcp.pop %v43
  %v46 = vlaneseq
  %v47 = vshrl.u32 %v46, 7
  %v48 = vsub.s32 0, %v47
  %v49 = vrot.slane %v40, %v48
  %v50 = vlaneseq
  %v51 = vshrl.u32 %v50, 7
  %v52 = vsub.s32 0, %v51
  %v53 = vrot.slane %v41, %v52
  %v54 = vmul.f32 %v49, %v28
  %v55 = vmul.f32 %v53, %v29
  %v56 = vlaneseq
  %v57 = vshrl.u32 %v56, 7
  %v58 = vsub.s32 1, %v57
  %v59 = vrot.slane %v40, %v58
  %v60 = vlaneseq
  %v61 = vshrl.u32 %v60, 7
  %v62 = vsub.s32 1, %v61
  %v63 = vrot.slane %v41, %v62
  %v64 = vmul.f32 %v59, %v28
  %v65 = vmul.f32 %v63, %v29
  %v68 = vrot.slane %v64, 3
  %v69 = vrot.slane %v65, 3
  %v72 = vadd.f32 %v54, %v68
  %v73 = vadd.f32 %v55, %v69
  %v74 = vlaneseq
  %v75 = vshrl.u32 %v74, 7
  %v76 = vsub.s32 2, %v75
  %v77 = vrot.slane %v40, %v76
  %v78 = vlaneseq
  %v79 = vshrl.u32 %v78, 7
  %v80 = vsub.s32 2, %v79
  %v81 = vrot.slane %v41, %v80
  %v82 = vmul.f32 %v77, %v28
  %v83 = vmul.f32 %v81, %v29
  %v84 = vmul.f32 %v77, %v30
  %v85 = vmul.f32 %v81, %v31
  %vm90 = vcmask 1041408
  %v91 = vrot.slane %v82, 6
  %v92 = vrot.slane %v84, 6
  %v93 = vsel %vm90, %v91, %v92
  %v94 = vrot.slane %v83, 6
  %v95 = vrot.slane %v85, 6
  %v96 = vsel %vm90, %v94, %v95
  %v99 = vadd.f32 %v72, %v93
  %v100 = vadd.f32 %v73, %v96
  %v101 = vlaneseq
  %v102 = vshrl.u32 %v101, 7
  %v103 = vsub.s32 6, %v102
  %v104 = vrot.slane %v44, %v103
  %v105 = vlaneseq
  %v106 = vshrl.u32 %v105, 7
  %v107 = vsub.s32 6, %v106
  %v108 = vrot.slane %v45, %v107
  %v109 = vmul.f32 %v99, %v104
  %v110 = vmul.f32 %v100, %v108
  %v113 = vcombine.low %v109, %v110
  %115 = vst [vmem:[%s6] sm:$0x77] %v113
  %v116 = vlaneseq
  %v117 = vshrl.u32 %v116, 7
  %v118 = vsub.s32 2, %v117
  %v119 = vrot.slane %v32, %v118
  %v120 = vlaneseq
  %v121 = vshrl.u32 %v120, 7
  %v122 = vsub.s32 2, %v121
  %v123 = vrot.slane %v33, %v122
  %v124 = vmul.f32 %v119, %v28
  %v125 = vmul.f32 %v123, %v29
  %v126 = vlaneseq
  %v127 = vshrl.u32 %v126, 7
  %v128 = vsub.s32 3, %v127
  %v129 = vrot.slane %v32, %v128
  %v130 = vlaneseq
  %v131 = vshrl.u32 %v130, 7
  %v132 = vsub.s32 3, %v131
  %v133 = vrot.slane %v33, %v132
  %v134 = vmul.f32 %v129, %v28
  %v135 = vmul.f32 %v133, %v29
  %v138 = vrot.slane %v134, 3
  %v139 = vrot.slane %v135, 3
  %v142 = vadd.f32 %v124, %v138
  %v143 = vadd.f32 %v125, %v139
  %v144 = vlaneseq
  %v145 = vshrl.u32 %v144, 7
  %v146 = vsub.s32 4, %v145
  %v147 = vrot.slane %v32, %v146
  %v148 = vlaneseq
  %v149 = vshrl.u32 %v148, 7
  %v150 = vsub.s32 4, %v149
  %v151 = vrot.slane %v33, %v150
  %v152 = vmul.f32 %v147, %v28
  %v153 = vmul.f32 %v151, %v29
  %v154 = vmul.f32 %v147, %v30
  %v155 = vmul.f32 %v151, %v31
  %v160 = vrot.slane %v152, 6
  %v161 = vrot.slane %v154, 6
  %v162 = vsel %vm90, %v160, %v161
  %v163 = vrot.slane %v153, 6
  %v164 = vrot.slane %v155, 6
  %v165 = vsel %vm90, %v163, %v164
  %v168 = vadd.f32 %v142, %v162
  %v169 = vadd.f32 %v143, %v165
  %v170 = vlaneseq
  %v171 = vshrl.u32 %v170, 7
  %v172 = vsub.s32 5, %v171
  %v173 = vrot.slane %v32, %v172
  %v174 = vlaneseq
  %v175 = vshrl.u32 %v174, 7
  %v176 = vsub.s32 5, %v175
  %v177 = vrot.slane %v33, %v176
  %v178 = vmul.f32 %v173, %v28
  %v179 = vmul.f32 %v177, %v29
  %v180 = vlaneseq
  %v181 = vshrl.u32 %v180, 7
  %v182 = vsub.s32 6, %v181
  %v183 = vrot.slane %v32, %v182
  %v184 = vlaneseq
  %v185 = vshrl.u32 %v184, 7
  %v186 = vsub.s32 6, %v185
  %v187 = vrot.slane %v33, %v186
  %v188 = vmul.f32 %v183, %v28
  %v189 = vmul.f32 %v187, %v29
  %v192 = vrot.slane %v188, 3
  %v193 = vrot.slane %v189, 3
  %v196 = vadd.f32 %v178, %v192
  %v197 = vadd.f32 %v179, %v193
  %v198 = vlaneseq
  %v199 = vshrl.u32 %v198, 7
  %v200 = vsub.s32 7, %v199
  %v201 = vrot.slane %v32, %v200
  %v202 = vlaneseq
  %v203 = vshrl.u32 %v202, 7
  %v204 = vsub.s32 7, %v203
  %v205 = vrot.slane %v33, %v204
  %v206 = vmul.f32 %v201, %v28
  %v207 = vmul.f32 %v205, %v29
  %v208 = vmul.f32 %v201, %v30
  %v209 = vmul.f32 %v205, %v31
  %v214 = vrot.slane %v206, 6
  %v215 = vrot.slane %v208, 6
  %v216 = vsel %vm90, %v214, %v215
  %v217 = vrot.slane %v207, 6
  %v218 = vrot.slane %v209, 6
  %v219 = vsel %vm90, %v217, %v218
  %v222 = vadd.f32 %v196, %v216
  %v223 = vadd.f32 %v197, %v219
  %v224 = vadd.f32 %v109, 1.0
  %v225 = vadd.f32 %v110, 1.0
  %v226 = vmul.f32 %v224, 4.0
  %v227 = vmul.f32 %v225, 4.0
  %v228 = vfloor.f32 %v226
  %v229 = vfloor.f32 %v227
  %v230 = vcvt.f32.s32.to.zero.pseudo %v228
  %v231 = vcvt.f32.s32.to.zero.pseudo %v229
  %vm232 = vcmp.ge.s32.totalorder %v230, 0
  %vm233 = vcmp.ge.s32.totalorder %v231, 0
  %vm234 = vcmp.lt.s32.totalorder %v230, 8
  %vm235 = vcmp.lt.s32.totalorder %v231, 8
  %vm236 = vmand %vm232, %vm234
  %vm237 = vmand %vm233, %vm235
  %v238 = vsel %vm232, 1, 0
  %v239 = vsel %vm233, 1, 0
  %v240 = vrot.slane %v238, 1
  %v241 = vrot.slane %v239, 1
  %vm242 = vcmp.ne.s32.totalorder %v240, 0
  %vm243 = vcmp.ne.s32.totalorder %v241, 0
  %vm244 = vmand %vm236, %vm242
  %vm245 = vmand %vm237, %vm243
  %v246 = vsel %vm234, 1, 0
  %v247 = vsel %vm235, 1, 0
  %v248 = vrot.slane %v246, 1
  %v249 = vrot.slane %v247, 1
  %vm250 = vcmp.ne.s32.totalorder %v248, 0
  %vm251 = vcmp.ne.s32.totalorder %v249, 0
  %vm252 = vmand %vm244, %vm250
  %vm253 = vmand %vm245, %vm251
  %v254 = vrot.slane %v238, 2
  %v255 = vrot.slane %v239, 2
  %vm256 = vcmp.ne.s32.totalorder %v254, 0
  %vm257 = vcmp.ne.s32.totalorder %v255, 0
  %vm258 = vmand %vm252, %vm256
  %vm259 = vmand %vm253, %vm257
  %v260 = vrot.slane %v246, 2
  %v261 = vrot.slane %v247, 2
  %vm262 = vcmp.ne.s32.totalorder %v260, 0
  %vm263 = vcmp.ne.s32.totalorder %v261, 0
  %vm264 = vmand %vm258, %vm262
  %vm265 = vmand %vm259, %vm263
  %vm266 = vcmp.gt.f32.partialorder %v26, 0.5
  %vm267 = vcmp.gt.f32.partialorder %v27, 0.5
  %v268 = vsel %vm266, 1, 0
  %v269 = vsel %vm267, 1, 0
  %v270 = vrot.slane %v268, 7
  %v271 = vrot.slane %v269, 7
  %vm272 = vcmp.ne.s32.totalorder %v270, 0
  %vm273 = vcmp.ne.s32.totalorder %v271, 0
  %vm274 = vmand %vm264, %vm272
  %vm275 = vmand %vm265, %vm273
  %v276 = vsel %vm274, 1, 0
  %v277 = vsel %vm275, 1, 0
  %v278 = vcvt.s32.f32 %v276
  %v279 = vcvt.s32.f32 %v277
  %v282 = vcombine.low %v278, %v279
  %v284 = vunpack.c.l.s4 1966171168
  %v285 = vunpack.c.0.s8 %v284
  %v286 = vlaneseq
  %v287 = vshrl.u32 %v286, 7
  %v288 = vsub.s32 %v285, %v287
  %v289 = vrot.slane %v282, %v288
  %v291 = vunpack.c.l.s4 1966171168
  %v292 = vunpack.c.0.s8 %v291
  %v293 = vlaneseq
  %v294 = vshrl.u32 %v293, 7
  %v295 = vsub.s32 %v292, %v294
  %v296 = vrot.slane %v289, %v295
  %v298 = vlaneseq
  %vm299 = vcmp.ge.s32.totalorder %v298, 0
  %vm300 = vcmp.lt.s32.totalorder %v298, 256
  %vm301 = vmand %vm299, %vm300
  %302 = vst.msk [vmem:[%s7] sm:$0x3] %vm301, %v296
  %v303 = vmul.u32 %v230, 64
  %v304 = vmul.u32 %v231, 64
  %v305 = vmul.u32 %v230, 8
  %v306 = vmul.u32 %v231, 8
  %v307 = vrot.slane %v305, 1
  %v308 = vrot.slane %v306, 1
  %v309 = vadd.s32 %v303, %v307
  %v310 = vadd.s32 %v304, %v308
  %v311 = vrot.slane %v230, 2
  %v312 = vrot.slane %v231, 2
  %v313 = vadd.s32 %v309, %v311
  %v314 = vadd.s32 %v310, %v312
  %v315 = vsel %vm274, %v313, 4294967295
  %v316 = vsel %vm275, %v314, 4294967295
  %v317 = vlaneseq
  %v318 = vshrl.u32 %v317, 7
  %v319 = vadd.s32 %v318, 8
  %v320 = vadd.s32 %v318, 16
  %v321 = vadd.s32 %v318, 24
  %v322 = vadd.s32 %v318, 32
  %v323 = vadd.s32 %v318, 40
  %v324 = vadd.s32 %v318, 48
  %v325 = vadd.s32 %v318, 56
  %v326 = vadd.s32 %v318, 64
  %v327 = vadd.s32 %v318, 72
  %v328 = vadd.s32 %v318, 80
  %v329 = vadd.s32 %v318, 88
  %v330 = vadd.s32 %v318, 96
  %v331 = vadd.s32 %v318, 104
  %v332 = vadd.s32 %v318, 112
  %v333 = vadd.s32 %v318, 120
  %v334 = vadd.s32 %v318, 128
  %v335 = vadd.s32 %v318, 136
  %v336 = vadd.s32 %v318, 144
  %v337 = vadd.s32 %v318, 152
  %v338 = vadd.s32 %v318, 160
  %v339 = vadd.s32 %v318, 168
  %v340 = vadd.s32 %v318, 176
  %v341 = vadd.s32 %v318, 184
  %v342 = vadd.s32 %v318, 192
  %v343 = vadd.s32 %v318, 200
  %v344 = vadd.s32 %v318, 208
  %v345 = vadd.s32 %v318, 216
  %v346 = vadd.s32 %v318, 224
  %v347 = vadd.s32 %v318, 232
  %v348 = vadd.s32 %v318, 240
  %v349 = vadd.s32 %v318, 248
  %v350 = vadd.s32 %v318, 256
  %v351 = vadd.s32 %v318, 264
  %v352 = vadd.s32 %v318, 272
  %v353 = vadd.s32 %v318, 280
  %v354 = vadd.s32 %v318, 288
  %v355 = vadd.s32 %v318, 296
  %v356 = vadd.s32 %v318, 304
  %v357 = vadd.s32 %v318, 312
  %v358 = vadd.s32 %v318, 320
  %v359 = vadd.s32 %v318, 328
  %v360 = vadd.s32 %v318, 336
  %v361 = vadd.s32 %v318, 344
  %v362 = vadd.s32 %v318, 352
  %v363 = vadd.s32 %v318, 360
  %v364 = vadd.s32 %v318, 368
  %v365 = vadd.s32 %v318, 376
  %v366 = vadd.s32 %v318, 384
  %v367 = vadd.s32 %v318, 392
  %v368 = vadd.s32 %v318, 400
  %v369 = vadd.s32 %v318, 408
  %v370 = vadd.s32 %v318, 416
  %v371 = vadd.s32 %v318, 424
  %v372 = vadd.s32 %v318, 432
  %v373 = vadd.s32 %v318, 440
  %v374 = vadd.s32 %v318, 448
  %v375 = vadd.s32 %v318, 456
  %v376 = vadd.s32 %v318, 464
  %v377 = vadd.s32 %v318, 472
  %v378 = vadd.s32 %v318, 480
  %v379 = vadd.s32 %v318, 488
  %v380 = vadd.s32 %v318, 496
  %v381 = vadd.s32 %v318, 504
  %v382 = vlaneseq
  %v383 = vshrl.u32 %v382, 7
  %v384 = vsub.s32 0, %v383
  %v385 = vrot.slane %v315, %v384
  %v386 = vlaneseq
  %v387 = vshrl.u32 %v386, 7
  %v388 = vsub.s32 0, %v387
  %v389 = vrot.slane %v316, %v388
  %vm390 = vcmp.eq.s32.totalorder %v318, %v385
  %vm391 = vcmp.eq.s32.totalorder %v318, %v389
  %vm392 = vcmp.eq.s32.totalorder %v319, %v385
  %vm393 = vcmp.eq.s32.totalorder %v319, %v389
  %vm394 = vcmp.eq.s32.totalorder %v320, %v385
  %vm395 = vcmp.eq.s32.totalorder %v320, %v389
  %vm396 = vcmp.eq.s32.totalorder %v321, %v385
  %vm397 = vcmp.eq.s32.totalorder %v321, %v389
  %vm398 = vcmp.eq.s32.totalorder %v322, %v385
  %vm399 = vcmp.eq.s32.totalorder %v322, %v389
  %vm400 = vcmp.eq.s32.totalorder %v323, %v385
  %vm401 = vcmp.eq.s32.totalorder %v323, %v389
  %vm402 = vcmp.eq.s32.totalorder %v324, %v385
  %vm403 = vcmp.eq.s32.totalorder %v324, %v389
  %vm404 = vcmp.eq.s32.totalorder %v325, %v385
  %vm405 = vcmp.eq.s32.totalorder %v325, %v389
  %vm406 = vcmp.eq.s32.totalorder %v326, %v385
  %vm407 = vcmp.eq.s32.totalorder %v326, %v389
  %vm408 = vcmp.eq.s32.totalorder %v327, %v385
  %vm409 = vcmp.eq.s32.totalorder %v327, %v389
  %vm410 = vcmp.eq.s32.totalorder %v328, %v385
  %vm411 = vcmp.eq.s32.totalorder %v328, %v389
  %vm412 = vcmp.eq.s32.totalorder %v329, %v385
  %vm413 = vcmp.eq.s32.totalorder %v329, %v389
  %vm414 = vcmp.eq.s32.totalorder %v330, %v385
  %vm415 = vcmp.eq.s32.totalorder %v330, %v389
  %vm416 = vcmp.eq.s32.totalorder %v331, %v385
  %vm417 = vcmp.eq.s32.totalorder %v331, %v389
  %vm418 = vcmp.eq.s32.totalorder %v332, %v385
  %vm419 = vcmp.eq.s32.totalorder %v332, %v389
  %vm420 = vcmp.eq.s32.totalorder %v333, %v385
  %vm421 = vcmp.eq.s32.totalorder %v333, %v389
  %vm422 = vcmp.eq.s32.totalorder %v334, %v385
  %vm423 = vcmp.eq.s32.totalorder %v334, %v389
  %vm424 = vcmp.eq.s32.totalorder %v335, %v385
  %vm425 = vcmp.eq.s32.totalorder %v335, %v389
  %vm426 = vcmp.eq.s32.totalorder %v336, %v385
  %vm427 = vcmp.eq.s32.totalorder %v336, %v389
  %vm428 = vcmp.eq.s32.totalorder %v337, %v385
  %vm429 = vcmp.eq.s32.totalorder %v337, %v389
  %vm430 = vcmp.eq.s32.totalorder %v338, %v385
  %vm431 = vcmp.eq.s32.totalorder %v338, %v389
  %vm432 = vcmp.eq.s32.totalorder %v339, %v385
  %vm433 = vcmp.eq.s32.totalorder %v339, %v389
  %vm434 = vcmp.eq.s32.totalorder %v340, %v385
  %vm435 = vcmp.eq.s32.totalorder %v340, %v389
  %vm436 = vcmp.eq.s32.totalorder %v341, %v385
  %vm437 = vcmp.eq.s32.totalorder %v341, %v389
  %vm438 = vcmp.eq.s32.totalorder %v342, %v385
  %vm439 = vcmp.eq.s32.totalorder %v342, %v389
  %vm440 = vcmp.eq.s32.totalorder %v343, %v385
  %vm441 = vcmp.eq.s32.totalorder %v343, %v389
  %vm442 = vcmp.eq.s32.totalorder %v344, %v385
  %vm443 = vcmp.eq.s32.totalorder %v344, %v389
  %vm444 = vcmp.eq.s32.totalorder %v345, %v385
  %vm445 = vcmp.eq.s32.totalorder %v345, %v389
  %vm446 = vcmp.eq.s32.totalorder %v346, %v385
  %vm447 = vcmp.eq.s32.totalorder %v346, %v389
  %vm448 = vcmp.eq.s32.totalorder %v347, %v385
  %vm449 = vcmp.eq.s32.totalorder %v347, %v389
  %vm450 = vcmp.eq.s32.totalorder %v348, %v385
  %vm451 = vcmp.eq.s32.totalorder %v348, %v389
  %vm452 = vcmp.eq.s32.totalorder %v349, %v385
  %vm453 = vcmp.eq.s32.totalorder %v349, %v389
  %vm454 = vcmp.eq.s32.totalorder %v350, %v385
  %vm455 = vcmp.eq.s32.totalorder %v350, %v389
  %vm456 = vcmp.eq.s32.totalorder %v351, %v385
  %vm457 = vcmp.eq.s32.totalorder %v351, %v389
  %vm458 = vcmp.eq.s32.totalorder %v352, %v385
  %vm459 = vcmp.eq.s32.totalorder %v352, %v389
  %vm460 = vcmp.eq.s32.totalorder %v353, %v385
  %vm461 = vcmp.eq.s32.totalorder %v353, %v389
  %vm462 = vcmp.eq.s32.totalorder %v354, %v385
  %vm463 = vcmp.eq.s32.totalorder %v354, %v389
  %vm464 = vcmp.eq.s32.totalorder %v355, %v385
  %vm465 = vcmp.eq.s32.totalorder %v355, %v389
  %vm466 = vcmp.eq.s32.totalorder %v356, %v385
  %vm467 = vcmp.eq.s32.totalorder %v356, %v389
  %vm468 = vcmp.eq.s32.totalorder %v357, %v385
  %vm469 = vcmp.eq.s32.totalorder %v357, %v389
  %vm470 = vcmp.eq.s32.totalorder %v358, %v385
  %vm471 = vcmp.eq.s32.totalorder %v358, %v389
  %vm472 = vcmp.eq.s32.totalorder %v359, %v385
  %vm473 = vcmp.eq.s32.totalorder %v359, %v389
  %vm474 = vcmp.eq.s32.totalorder %v360, %v385
  %vm475 = vcmp.eq.s32.totalorder %v360, %v389
  %vm476 = vcmp.eq.s32.totalorder %v361, %v385
  %vm477 = vcmp.eq.s32.totalorder %v361, %v389
  %vm478 = vcmp.eq.s32.totalorder %v362, %v385
  %vm479 = vcmp.eq.s32.totalorder %v362, %v389
  %vm480 = vcmp.eq.s32.totalorder %v363, %v385
  %vm481 = vcmp.eq.s32.totalorder %v363, %v389
  %vm482 = vcmp.eq.s32.totalorder %v364, %v385
  %vm483 = vcmp.eq.s32.totalorder %v364, %v389
  %vm484 = vcmp.eq.s32.totalorder %v365, %v385
  %vm485 = vcmp.eq.s32.totalorder %v365, %v389
  %vm486 = vcmp.eq.s32.totalorder %v366, %v385
  %vm487 = vcmp.eq.s32.totalorder %v366, %v389
  %vm488 = vcmp.eq.s32.totalorder %v367, %v385
  %vm489 = vcmp.eq.s32.totalorder %v367, %v389
  %vm490 = vcmp.eq.s32.totalorder %v368, %v385
  %vm491 = vcmp.eq.s32.totalorder %v368, %v389
  %vm492 = vcmp.eq.s32.totalorder %v369, %v385
  %vm493 = vcmp.eq.s32.totalorder %v369, %v389
  %vm494 = vcmp.eq.s32.totalorder %v370, %v385
  %vm495 = vcmp.eq.s32.totalorder %v370, %v389
  %vm496 = vcmp.eq.s32.totalorder %v371, %v385
  %vm497 = vcmp.eq.s32.totalorder %v371, %v389
  %vm498 = vcmp.eq.s32.totalorder %v372, %v385
  %vm499 = vcmp.eq.s32.totalorder %v372, %v389
  %vm500 = vcmp.eq.s32.totalorder %v373, %v385
  %vm501 = vcmp.eq.s32.totalorder %v373, %v389
  %vm502 = vcmp.eq.s32.totalorder %v374, %v385
  %vm503 = vcmp.eq.s32.totalorder %v374, %v389
  %vm504 = vcmp.eq.s32.totalorder %v375, %v385
  %vm505 = vcmp.eq.s32.totalorder %v375, %v389
  %vm506 = vcmp.eq.s32.totalorder %v376, %v385
  %vm507 = vcmp.eq.s32.totalorder %v376, %v389
  %vm508 = vcmp.eq.s32.totalorder %v377, %v385
  %vm509 = vcmp.eq.s32.totalorder %v377, %v389
  %vm510 = vcmp.eq.s32.totalorder %v378, %v385
  %vm511 = vcmp.eq.s32.totalorder %v378, %v389
  %vm512 = vcmp.eq.s32.totalorder %v379, %v385
  %vm513 = vcmp.eq.s32.totalorder %v379, %v389
  %vm514 = vcmp.eq.s32.totalorder %v380, %v385
  %vm515 = vcmp.eq.s32.totalorder %v380, %v389
  %vm516 = vcmp.eq.s32.totalorder %v381, %v385
  %vm517 = vcmp.eq.s32.totalorder %v381, %v389
  %v518 = vsel %vm390, 1, 0
  %v519 = vsel %vm391, 1, 0
  %v520 = vsel %vm392, 1, 0
  %v521 = vsel %vm393, 1, 0
  %v522 = vsel %vm394, 1, 0
  %v523 = vsel %vm395, 1, 0
  %v524 = vsel %vm396, 1, 0
  %v525 = vsel %vm397, 1, 0
  %v526 = vsel %vm398, 1, 0
  %v527 = vsel %vm399, 1, 0
  %v528 = vsel %vm400, 1, 0
  %v529 = vsel %vm401, 1, 0
  %v530 = vsel %vm402, 1, 0
  %v531 = vsel %vm403, 1, 0
  %v532 = vsel %vm404, 1, 0
  %v533 = vsel %vm405, 1, 0
  %v534 = vsel %vm406, 1, 0
  %v535 = vsel %vm407, 1, 0
  %v536 = vsel %vm408, 1, 0
  %v537 = vsel %vm409, 1, 0
  %v538 = vsel %vm410, 1, 0
  %v539 = vsel %vm411, 1, 0
  %v540 = vsel %vm412, 1, 0
  %v541 = vsel %vm413, 1, 0
  %v542 = vsel %vm414, 1, 0
  %v543 = vsel %vm415, 1, 0
  %v544 = vsel %vm416, 1, 0
  %v545 = vsel %vm417, 1, 0
  %v546 = vsel %vm418, 1, 0
  %v547 = vsel %vm419, 1, 0
  %v548 = vsel %vm420, 1, 0
  %v549 = vsel %vm421, 1, 0
  %v550 = vsel %vm422, 1, 0
  %v551 = vsel %vm423, 1, 0
  %v552 = vsel %vm424, 1, 0
  %v553 = vsel %vm425, 1, 0
  %v554 = vsel %vm426, 1, 0
  %v555 = vsel %vm427, 1, 0
  %v556 = vsel %vm428, 1, 0
  %v557 = vsel %vm429, 1, 0
  %v558 = vsel %vm430, 1, 0
  %v559 = vsel %vm431, 1, 0
  %v560 = vsel %vm432, 1, 0
  %v561 = vsel %vm433, 1, 0
  %v562 = vsel %vm434, 1, 0
  %v563 = vsel %vm435, 1, 0
  %v564 = vsel %vm436, 1, 0
  %v565 = vsel %vm437, 1, 0
  %v566 = vsel %vm438, 1, 0
  %v567 = vsel %vm439, 1, 0
  %v568 = vsel %vm440, 1, 0
  %v569 = vsel %vm441, 1, 0
  %v570 = vsel %vm442, 1, 0
  %v571 = vsel %vm443, 1, 0
  %v572 = vsel %vm444, 1, 0
  %v573 = vsel %vm445, 1, 0
  %v574 = vsel %vm446, 1, 0
  %v575 = vsel %vm447, 1, 0
  %v576 = vsel %vm448, 1, 0
  %v577 = vsel %vm449, 1, 0
  %v578 = vsel %vm450, 1, 0
  %v579 = vsel %vm451, 1, 0
  %v580 = vsel %vm452, 1, 0
  %v581 = vsel %vm453, 1, 0
  %v582 = vsel %vm454, 1, 0
  %v583 = vsel %vm455, 1, 0
  %v584 = vsel %vm456, 1, 0
  %v585 = vsel %vm457, 1, 0
  %v586 = vsel %vm458, 1, 0
  %v587 = vsel %vm459, 1, 0
  %v588 = vsel %vm460, 1, 0
  %v589 = vsel %vm461, 1, 0
  %v590 = vsel %vm462, 1, 0
  %v591 = vsel %vm463, 1, 0
  %v592 = vsel %vm464, 1, 0
  %v593 = vsel %vm465, 1, 0
  %v594 = vsel %vm466, 1, 0
  %v595 = vsel %vm467, 1, 0
  %v596 = vsel %vm468, 1, 0
  %v597 = vsel %vm469, 1, 0
  %v598 = vsel %vm470, 1, 0
  %v599 = vsel %vm471, 1, 0
  %v600 = vsel %vm472, 1, 0
  %v601 = vsel %vm473, 1, 0
  %v602 = vsel %vm474, 1, 0
  %v603 = vsel %vm475, 1, 0
  %v604 = vsel %vm476, 1, 0
  %v605 = vsel %vm477, 1, 0
  %v606 = vsel %vm478, 1, 0
  %v607 = vsel %vm479, 1, 0
  %v608 = vsel %vm480, 1, 0
  %v609 = vsel %vm481, 1, 0
  %v610 = vsel %vm482, 1, 0
  %v611 = vsel %vm483, 1, 0
  %v612 = vsel %vm484, 1, 0
  %v613 = vsel %vm485, 1, 0
  %v614 = vsel %vm486, 1, 0
  %v615 = vsel %vm487, 1, 0
  %v616 = vsel %vm488, 1, 0
  %v617 = vsel %vm489, 1, 0
  %v618 = vsel %vm490, 1, 0
  %v619 = vsel %vm491, 1, 0
  %v620 = vsel %vm492, 1, 0
  %v621 = vsel %vm493, 1, 0
  %v622 = vsel %vm494, 1, 0
  %v623 = vsel %vm495, 1, 0
  %v624 = vsel %vm496, 1, 0
  %v625 = vsel %vm497, 1, 0
  %v626 = vsel %vm498, 1, 0
  %v627 = vsel %vm499, 1, 0
  %v628 = vsel %vm500, 1, 0
  %v629 = vsel %vm501, 1, 0
  %v630 = vsel %vm502, 1, 0
  %v631 = vsel %vm503, 1, 0
  %v632 = vsel %vm504, 1, 0
  %v633 = vsel %vm505, 1, 0
  %v634 = vsel %vm506, 1, 0
  %v635 = vsel %vm507, 1, 0
  %v636 = vsel %vm508, 1, 0
  %v637 = vsel %vm509, 1, 0
  %v638 = vsel %vm510, 1, 0
  %v639 = vsel %vm511, 1, 0
  %v640 = vsel %vm512, 1, 0
  %v641 = vsel %vm513, 1, 0
  %v642 = vsel %vm514, 1, 0
  %v643 = vsel %vm515, 1, 0
  %v644 = vsel %vm516, 1, 0
  %v645 = vsel %vm517, 1, 0
  %v646 = vcvt.s32.f32 %v518
  %v647 = vcvt.s32.f32 %v519
  %v648 = vcvt.s32.f32 %v520
  %v649 = vcvt.s32.f32 %v521
  %v650 = vcvt.s32.f32 %v522
  %v651 = vcvt.s32.f32 %v523
  %v652 = vcvt.s32.f32 %v524
  %v653 = vcvt.s32.f32 %v525
  %v654 = vcvt.s32.f32 %v526
  %v655 = vcvt.s32.f32 %v527
  %v656 = vcvt.s32.f32 %v528
  %v657 = vcvt.s32.f32 %v529
  %v658 = vcvt.s32.f32 %v530
  %v659 = vcvt.s32.f32 %v531
  %v660 = vcvt.s32.f32 %v532
  %v661 = vcvt.s32.f32 %v533
  %v662 = vcvt.s32.f32 %v534
  %v663 = vcvt.s32.f32 %v535
  %v664 = vcvt.s32.f32 %v536
  %v665 = vcvt.s32.f32 %v537
  %v666 = vcvt.s32.f32 %v538
  %v667 = vcvt.s32.f32 %v539
  %v668 = vcvt.s32.f32 %v540
  %v669 = vcvt.s32.f32 %v541
  %v670 = vcvt.s32.f32 %v542
  %v671 = vcvt.s32.f32 %v543
  %v672 = vcvt.s32.f32 %v544
  %v673 = vcvt.s32.f32 %v545
  %v674 = vcvt.s32.f32 %v546
  %v675 = vcvt.s32.f32 %v547
  %v676 = vcvt.s32.f32 %v548
  %v677 = vcvt.s32.f32 %v549
  %v678 = vcvt.s32.f32 %v550
  %v679 = vcvt.s32.f32 %v551
  %v680 = vcvt.s32.f32 %v552
  %v681 = vcvt.s32.f32 %v553
  %v682 = vcvt.s32.f32 %v554
  %v683 = vcvt.s32.f32 %v555
  %v684 = vcvt.s32.f32 %v556
  %v685 = vcvt.s32.f32 %v557
  %v686 = vcvt.s32.f32 %v558
  %v687 = vcvt.s32.f32 %v559
  %v688 = vcvt.s32.f32 %v560
  %v689 = vcvt.s32.f32 %v561
  %v690 = vcvt.s32.f32 %v562
  %v691 = vcvt.s32.f32 %v563
  %v692 = vcvt.s32.f32 %v564
  %v693 = vcvt.s32.f32 %v565
  %v694 = vcvt.s32.f32 %v566
  %v695 = vcvt.s32.f32 %v567
  %v696 = vcvt.s32.f32 %v568
  %v697 = vcvt.s32.f32 %v569
  %v698 = vcvt.s32.f32 %v570
  %v699 = vcvt.s32.f32 %v571
  %v700 = vcvt.s32.f32 %v572
  %v701 = vcvt.s32.f32 %v573
  %v702 = vcvt.s32.f32 %v574
  %v703 = vcvt.s32.f32 %v575
  %v704 = vcvt.s32.f32 %v576
  %v705 = vcvt.s32.f32 %v577
  %v706 = vcvt.s32.f32 %v578
  %v707 = vcvt.s32.f32 %v579
  %v708 = vcvt.s32.f32 %v580
  %v709 = vcvt.s32.f32 %v581
  %v710 = vcvt.s32.f32 %v582
  %v711 = vcvt.s32.f32 %v583
  %v712 = vcvt.s32.f32 %v584
  %v713 = vcvt.s32.f32 %v585
  %v714 = vcvt.s32.f32 %v586
  %v715 = vcvt.s32.f32 %v587
  %v716 = vcvt.s32.f32 %v588
  %v717 = vcvt.s32.f32 %v589
  %v718 = vcvt.s32.f32 %v590
  %v719 = vcvt.s32.f32 %v591
  %v720 = vcvt.s32.f32 %v592
  %v721 = vcvt.s32.f32 %v593
  %v722 = vcvt.s32.f32 %v594
  %v723 = vcvt.s32.f32 %v595
  %v724 = vcvt.s32.f32 %v596
  %v725 = vcvt.s32.f32 %v597
  %v726 = vcvt.s32.f32 %v598
  %v727 = vcvt.s32.f32 %v599
  %v728 = vcvt.s32.f32 %v600
  %v729 = vcvt.s32.f32 %v601
  %v730 = vcvt.s32.f32 %v602
  %v731 = vcvt.s32.f32 %v603
  %v732 = vcvt.s32.f32 %v604
  %v733 = vcvt.s32.f32 %v605
  %v734 = vcvt.s32.f32 %v606
  %v735 = vcvt.s32.f32 %v607
  %v736 = vcvt.s32.f32 %v608
  %v737 = vcvt.s32.f32 %v609
  %v738 = vcvt.s32.f32 %v610
  %v739 = vcvt.s32.f32 %v611
  %v740 = vcvt.s32.f32 %v612
  %v741 = vcvt.s32.f32 %v613
  %v742 = vcvt.s32.f32 %v614
  %v743 = vcvt.s32.f32 %v615
  %v744 = vcvt.s32.f32 %v616
  %v745 = vcvt.s32.f32 %v617
  %v746 = vcvt.s32.f32 %v618
  %v747 = vcvt.s32.f32 %v619
  %v748 = vcvt.s32.f32 %v620
  %v749 = vcvt.s32.f32 %v621
  %v750 = vcvt.s32.f32 %v622
  %v751 = vcvt.s32.f32 %v623
  %v752 = vcvt.s32.f32 %v624
  %v753 = vcvt.s32.f32 %v625
  %v754 = vcvt.s32.f32 %v626
  %v755 = vcvt.s32.f32 %v627
  %v756 = vcvt.s32.f32 %v628
  %v757 = vcvt.s32.f32 %v629
  %v758 = vcvt.s32.f32 %v630
  %v759 = vcvt.s32.f32 %v631
  %v760 = vcvt.s32.f32 %v632
  %v761 = vcvt.s32.f32 %v633
  %v762 = vcvt.s32.f32 %v634
  %v763 = vcvt.s32.f32 %v635
  %v764 = vcvt.s32.f32 %v636
  %v765 = vcvt.s32.f32 %v637
  %v766 = vcvt.s32.f32 %v638
  %v767 = vcvt.s32.f32 %v639
  %v768 = vcvt.s32.f32 %v640
  %v769 = vcvt.s32.f32 %v641
  %v770 = vcvt.s32.f32 %v642
  %v771 = vcvt.s32.f32 %v643
  %v772 = vcvt.s32.f32 %v644
  %v773 = vcvt.s32.f32 %v645
  %v776 = vrot.slane %v168, 6
  %v777 = vrot.slane %v169, 6
  %v782 = vrot.slane %v222, 3
  %v783 = vrot.slane %v223, 3
  %v786 = vsel %vm90, %v32, %v776
  %v787 = vsel %vm90, %v33, %v777
  %vm788 = vcmask 1044480
  %v789 = vsel %vm788, %v786, %v782
  %v790 = vsel %vm788, %v787, %v783
  %vm791 = vcmask 1040384
  %v792 = vsel %vm791, 1.0, 0.0
  %793 = vmatprep.subr.mxu0 %v677
  %794 = vmatpush1.xpose.msra.mxu0 %v676
  %795 = vmatprep.subr.mxu0 %v675
  %796 = vmatpush1.xpose.msra.mxu0 %v674
  %797 = vmatprep.subr.mxu0 %v673
  %798 = vmatpush1.xpose.msra.mxu0 %v672
  %799 = vmatprep.subr.mxu0 %v671
  %800 = vmatpush1.xpose.msra.mxu0 %v670
  %801 = vmatprep.subr.mxu0 %v669
  %802 = vmatpush1.xpose.msra.mxu0 %v668
  %803 = vmatprep.subr.mxu0 %v667
  %804 = vmatpush1.xpose.msra.mxu0 %v666
  %805 = vmatprep.subr.mxu0 %v665
  %806 = vmatpush1.xpose.msra.mxu0 %v664
  %807 = vmatprep.subr.mxu0 %v663
  %808 = vmatpush1.xpose.msra.mxu0 %v662
  %809 = vmatprep.subr.mxu0 %v661
  %810 = vmatpush1.xpose.msra.mxu0 %v660
  %811 = vmatprep.subr.mxu0 %v659
  %812 = vmatpush1.xpose.msra.mxu0 %v658
  %813 = vmatprep.subr.mxu0 %v657
  %814 = vmatpush1.xpose.msra.mxu0 %v656
  %815 = vmatprep.subr.mxu0 %v655
  %816 = vmatpush1.xpose.msra.mxu0 %v654
  %817 = vmatprep.subr.mxu0 %v653
  %818 = vmatpush1.xpose.msra.mxu0 %v652
  %819 = vmatprep.subr.mxu0 %v651
  %820 = vmatpush1.xpose.msra.mxu0 %v650
  %821 = vmatprep.subr.mxu0 %v649
  %822 = vmatpush1.xpose.msra.mxu0 %v648
  %823 = vmatprep.subr.mxu0 %v647
  %824 = vmatpush1.xpose.msra.mxu0 %v646
  %825 = vmatprep.subr.mxu0 %v709
  %826 = vmatpush2.xpose.msra.mxu0 %v708
  %827 = vmatprep.subr.mxu0 %v707
  %828 = vmatpush2.xpose.msra.mxu0 %v706
  %829 = vmatprep.subr.mxu0 %v705
  %830 = vmatpush2.xpose.msra.mxu0 %v704
  %831 = vmatprep.subr.mxu0 %v703
  %832 = vmatpush2.xpose.msra.mxu0 %v702
  %833 = vmatprep.subr.mxu0 %v701
  %834 = vmatpush2.xpose.msra.mxu0 %v700
  %835 = vmatprep.subr.mxu0 %v699
  %836 = vmatpush2.xpose.msra.mxu0 %v698
  %837 = vmatprep.subr.mxu0 %v697
  %838 = vmatpush2.xpose.msra.mxu0 %v696
  %839 = vmatprep.subr.mxu0 %v695
  %840 = vmatpush2.xpose.msra.mxu0 %v694
  %841 = vmatprep.subr.mxu0 %v693
  %842 = vmatpush2.xpose.msra.mxu0 %v692
  %843 = vmatprep.subr.mxu0 %v691
  %844 = vmatpush2.xpose.msra.mxu0 %v690
  %845 = vmatprep.subr.mxu0 %v689
  %846 = vmatpush2.xpose.msra.mxu0 %v688
  %847 = vmatprep.subr.mxu0 %v687
  %848 = vmatpush2.xpose.msra.mxu0 %v686
  %849 = vmatprep.subr.mxu0 %v685
  %850 = vmatpush2.xpose.msra.mxu0 %v684
  %851 = vmatprep.subr.mxu0 %v683
  %852 = vmatpush2.xpose.msra.mxu0 %v682
  %853 = vmatprep.subr.mxu0 %v681
  %854 = vmatpush2.xpose.msra.mxu0 %v680
  %855 = vmatprep.subr.mxu0 %v679
  %856 = vmatpush2.xpose.msra.mxu0 %v678
  %857 = vmatprep.mubr.f32.mxu0 %v790
  %858 = vmatmul.mubr.f32.gmra.mxu0 %v789
  %v859 = vpop.f32.mrf.mxu0
  %v860 = vadd.f32 0.0, %v859
  %v861 = vpop.f32.mrf.mxu0
  %v862 = vadd.f32 0.0, %v861
  %863 = vmatprep.mubr.f32.mxu0 %v792
  %864 = vmatmul.mubr.f32.gmra.mxu0 %v792
  %v865 = vpop.f32.mrf.mxu0
  %v866 = vadd.f32 0.0, %v865
  %v867 = vpop.f32.mrf.mxu0
  %v868 = vadd.f32 0.0, %v867
  %869 = vdwg.mxu0
  %870 = vmatprep.subr.mxu0 %v741
  %871 = vmatpush1.xpose.msra.mxu0 %v740
  %872 = vmatprep.subr.mxu0 %v739
  %873 = vmatpush1.xpose.msra.mxu0 %v738
  %874 = vmatprep.subr.mxu0 %v737
  %875 = vmatpush1.xpose.msra.mxu0 %v736
  %876 = vmatprep.subr.mxu0 %v735
  %877 = vmatpush1.xpose.msra.mxu0 %v734
  %878 = vmatprep.subr.mxu0 %v733
  %879 = vmatpush1.xpose.msra.mxu0 %v732
  %880 = vmatprep.subr.mxu0 %v731
  %881 = vmatpush1.xpose.msra.mxu0 %v730
  %882 = vmatprep.subr.mxu0 %v729
  %883 = vmatpush1.xpose.msra.mxu0 %v728
  %884 = vmatprep.subr.mxu0 %v727
  %885 = vmatpush1.xpose.msra.mxu0 %v726
  %886 = vmatprep.subr.mxu0 %v725
  %887 = vmatpush1.xpose.msra.mxu0 %v724
  %888 = vmatprep.subr.mxu0 %v723
  %889 = vmatpush1.xpose.msra.mxu0 %v722
  %890 = vmatprep.subr.mxu0 %v721
  %891 = vmatpush1.xpose.msra.mxu0 %v720
  %892 = vmatprep.subr.mxu0 %v719
  %893 = vmatpush1.xpose.msra.mxu0 %v718
  %894 = vmatprep.subr.mxu0 %v717
  %895 = vmatpush1.xpose.msra.mxu0 %v716
  %896 = vmatprep.subr.mxu0 %v715
  %897 = vmatpush1.xpose.msra.mxu0 %v714
  %898 = vmatprep.subr.mxu0 %v713
  %899 = vmatpush1.xpose.msra.mxu0 %v712
  %900 = vmatprep.subr.mxu0 %v711
  %901 = vmatpush1.xpose.msra.mxu0 %v710
  %902 = vmatprep.subr.mxu0 %v773
  %903 = vmatpush2.xpose.msra.mxu0 %v772
  %904 = vmatprep.subr.mxu0 %v771
  %905 = vmatpush2.xpose.msra.mxu0 %v770
  %906 = vmatprep.subr.mxu0 %v769
  %907 = vmatpush2.xpose.msra.mxu0 %v768
  %908 = vmatprep.subr.mxu0 %v767
  %909 = vmatpush2.xpose.msra.mxu0 %v766
  %910 = vmatprep.subr.mxu0 %v765
  %911 = vmatpush2.xpose.msra.mxu0 %v764
  %912 = vmatprep.subr.mxu0 %v763
  %913 = vmatpush2.xpose.msra.mxu0 %v762
  %914 = vmatprep.subr.mxu0 %v761
  %915 = vmatpush2.xpose.msra.mxu0 %v760
  %916 = vmatprep.subr.mxu0 %v759
  %917 = vmatpush2.xpose.msra.mxu0 %v758
  %918 = vmatprep.subr.mxu0 %v757
  %919 = vmatpush2.xpose.msra.mxu0 %v756
  %920 = vmatprep.subr.mxu0 %v755
  %921 = vmatpush2.xpose.msra.mxu0 %v754
  %922 = vmatprep.subr.mxu0 %v753
  %923 = vmatpush2.xpose.msra.mxu0 %v752
  %924 = vmatprep.subr.mxu0 %v751
  %925 = vmatpush2.xpose.msra.mxu0 %v750
  %926 = vmatprep.subr.mxu0 %v749
  %927 = vmatpush2.xpose.msra.mxu0 %v748
  %928 = vmatprep.subr.mxu0 %v747
  %929 = vmatpush2.xpose.msra.mxu0 %v746
  %930 = vmatprep.subr.mxu0 %v745
  %931 = vmatpush2.xpose.msra.mxu0 %v744
  %932 = vmatprep.subr.mxu0 %v743
  %933 = vmatpush2.xpose.msra.mxu0 %v742
  %934 = vmatprep.mubr.f32.mxu0 %v790
  %935 = vmatmul.mubr.f32.gmra.mxu0 %v789
  %v936 = vpop.f32.mrf.mxu0
  %v937 = vadd.f32 0.0, %v936
  %v938 = vpop.f32.mrf.mxu0
  %v939 = vadd.f32 0.0, %v938
  %940 = vmatprep.mubr.f32.mxu0 %v792
  %941 = vmatmul.mubr.f32.gmra.mxu0 %v792
  %v942 = vpop.f32.mrf.mxu0
  %v943 = vadd.f32 0.0, %v942
  %v944 = vpop.f32.mrf.mxu0
  %v945 = vadd.f32 0.0, %v944
  %946 = vdwg.mxu0
  %p947 = scmp.eq.s32.totalorder 0, 0
  // Predicated region
  $region26: #{feature_steering_forward.1} parent=0 // pred_check
    %p948 = pneg %p947
  $region27: #{feature_steering_forward.1} parent=0 // pred_check_branch
    %950 = sbr.rel (%p948) target = $region29
  $region28: #{feature_steering_forward.1} parent=0 // pred_region
    %951 = vst [vmem:[#allocation2] sm:$0xff] 0.0
    %952 = vst [vmem:[#allocation2 + $0x8] sm:$0xff] 0.0
    %953 = vst [vmem:[#allocation2 + $0x10] sm:$0xff] 0.0
    %954 = vst [vmem:[#allocation2 + $0x18] sm:$0xff] 0.0
    %955 = vst [vmem:[#allocation2 + $0x20] sm:$0xff] 0.0
    %956 = vst [vmem:[#allocation2 + $0x28] sm:$0xff] 0.0
    %957 = vst [vmem:[#allocation2 + $0x30] sm:$0xff] 0.0
    %958 = vst [vmem:[#allocation2 + $0x38] sm:$0xff] 0.0
  $region29: #{feature_steering_forward.1} parent=0 // pred_fallthru
    _
  %v959 = vld [vmem:[#allocation2] sm:$0xff]
  %v960 = vld [vmem:[#allocation2 + $0x8] sm:$0xff]
  %v961 = vld [vmem:[#allocation2 + $0x10] sm:$0xff]
  %v962 = vld [vmem:[#allocation2 + $0x18] sm:$0xff]
  %v963 = vld [vmem:[#allocation2 + $0x20] sm:$0xff]
  %v964 = vld [vmem:[#allocation2 + $0x28] sm:$0xff]
  %v965 = vld [vmem:[#allocation2 + $0x30] sm:$0xff]
  %v966 = vld [vmem:[#allocation2 + $0x38] sm:$0xff]
  %v967 = vadd.f32 %v959, %v860
  %v968 = vadd.f32 %v960, %v862
  %v969 = vadd.f32 %v961, %v937
  %v970 = vadd.f32 %v962, %v939
  %v971 = vadd.f32 %v963, %v866
  %v972 = vadd.f32 %v964, %v868
  %v973 = vadd.f32 %v965, %v943
  %v974 = vadd.f32 %v966, %v945
  %975 = vst [vmem:[#allocation2] sm:$0xff] %v967
  %976 = vst [vmem:[#allocation2 + $0x8] sm:$0xff] %v968
  %977 = vst [vmem:[#allocation2 + $0x10] sm:$0xff] %v969
  %978 = vst [vmem:[#allocation2 + $0x18] sm:$0xff] %v970
  %979 = vst [vmem:[#allocation2 + $0x20] sm:$0xff] %v971
  %980 = vst [vmem:[#allocation2 + $0x28] sm:$0xff] %v972
  %981 = vst [vmem:[#allocation2 + $0x30] sm:$0xff] %v973
  %982 = vst [vmem:[#allocation2 + $0x38] sm:$0xff] %v974
  // Predicated region
  $region30: #{feature_steering_forward.1} parent=0 // pred_check
    %p983 = pneg %p947
  $region31: #{feature_steering_forward.1} parent=0 // pred_check_branch
    %985 = sbr.rel (%p983) target = $region33
  $region32: #{feature_steering_forward.1} parent=0 // pred_region
    %s986 = scalar_lea.vmem [#allocation2], 32
    %v987 = vld [vmem:[%s986] ss:$8 sm:$0xf]
    %v988 = vld [vmem:[#allocation2] sm:$0xff]
    %v989 = vld [vmem:[#allocation2 + $0x8] sm:$0xff]
    %v990 = vld [vmem:[#allocation2 + $0x10] sm:$0xff]
    %v991 = vld [vmem:[#allocation2 + $0x18] sm:$0xff]
    %v992 = vmax.f32 %v987, 1.0
    %v994 = vlaneseq
    %v995 = vshrl.u32 %v994, 7
    %v996 = vsub.s32 0, %v995
    %v997 = vrot.slane %v992, %v996
    %v998 = vlaneseq
    %v999 = vshrl.u32 %v998, 7
    %v1000 = vsub.s32 1, %v999
    %v1001 = vrot.slane %v992, %v1000
    %v1002 = vlaneseq
    %v1003 = vshrl.u32 %v1002, 7
    %v1004 = vsub.s32 2, %v1003
    %v1005 = vrot.slane %v992, %v1004
    %v1006 = vlaneseq
    %v1007 = vshrl.u32 %v1006, 7
    %v1008 = vsub.s32 3, %v1007
    %v1009 = vrot.slane %v992, %v1008
    %v1014 = vrcp.pop %v997
    %v1015 = vmul.f32 %v988, %v1014
    %v1016 = vrcp.pop %v1001
    %v1017 = vmul.f32 %v989, %v1016
    %v1018 = vrcp.pop %v1005
    %v1019 = vmul.f32 %v990, %v1018
    %v1020 = vrcp.pop %v1009
    %v1021 = vmul.f32 %v991, %v1020
    %v1022 = vlaneseq
    %v1023 = vand.u32 %v1022, 127
    %v1024 = vadd.s32 %v1023, 128
    %v1025 = vadd.s32 %v1023, 256
    %v1026 = vadd.s32 %v1023, 384
    %v1027 = vshra.s32 %v1023, 6
    %v1028 = vshra.s32 %v1024, 6
    %v1029 = vshra.s32 %v1025, 6
    %v1030 = vshra.s32 %v1026, 6
    %v1031 = vshra.s32 %v1023, 3
    %v1032 = vshra.s32 %v1024, 3
    %v1033 = vshra.s32 %v1025, 3
    %v1034 = vshra.s32 %v1026, 3
    %v1035 = vand.u32 %v1031, 7
    %v1036 = vand.u32 %v1032, 7
    %v1037 = vand.u32 %v1033, 7
    %v1038 = vand.u32 %v1034, 7
    %v1039 = vand.u32 %v1023, 7
    %v1040 = vand.u32 %v1024, 7
    %v1041 = vand.u32 %v1025, 7
    %v1042 = vand.u32 %v1026, 7
    %1043 = vrot.lane.b32.xlu0 %v1015, 73
    %v1044 = vpop.permute.xlu0 %1043
    %1045 = vrot.lane.b32.xlu0 %v1017, 73
    %v1046 = vpop.permute.xlu0 %1045
    %1047 = vrot.lane.b32.xlu0 %v1019, 73
    %v1048 = vpop.permute.xlu0 %1047
    %1049 = vrot.lane.b32.xlu0 %v1021, 73
    %v1050 = vpop.permute.xlu0 %1049
    %vm1051 = vcmp.lt.s32.totalorder %v1023, 73
    %v1052 = vsel %vm1051, %v1048, %v1050
    %v1053 = vsel %vm1051, %v1046, %v1048
    %v1054 = vsel %vm1051, %v1044, %v1046
    %v1055 = vsel %vm1051, %v1050, %v1044
    %v1056 = vadd.s32 %v1027, 4294967295
    %v1057 = vadd.s32 %v1028, 4294967295
    %v1058 = vadd.s32 %v1029, 4294967295
    %v1059 = vadd.s32 %v1030, 4294967295
    %v1060 = vadd.s32 %v1035, 4294967295
    %v1061 = vadd.s32 %v1036, 4294967295
    %v1062 = vadd.s32 %v1037, 4294967295
    %v1063 = vadd.s32 %v1038, 4294967295
    %v1064 = vadd.s32 %v1039, 4294967295
    %v1065 = vadd.s32 %v1040, 4294967295
    %v1066 = vadd.s32 %v1041, 4294967295
    %v1067 = vadd.s32 %v1042, 4294967295
    %vm1068 = vcmp.ge.s32.totalorder %v1056, 0
    %vm1069 = vcmp.ge.s32.totalorder %v1057, 0
    %vm1070 = vcmp.ge.s32.totalorder %v1058, 0
    %vm1071 = vcmp.ge.s32.totalorder %v1059, 0
    %vm1072 = vcmp.lt.s32.totalorder %v1056, 8
    %vm1073 = vcmp.lt.s32.totalorder %v1057, 8
    %vm1074 = vcmp.lt.s32.totalorder %v1058, 8
    %vm1075 = vcmp.lt.s32.totalorder %v1059, 8
    %vm1076 = vmand %vm1068, %vm1072
    %vm1077 = vmand %vm1069, %vm1073
    %vm1078 = vmand %vm1070, %vm1074
    %vm1079 = vmand %vm1071, %vm1075
    %vm1080 = vcmp.ge.s32.totalorder %v1060, 0
    %vm1081 = vcmp.ge.s32.totalorder %v1061, 0
    %vm1082 = vcmp.ge.s32.totalorder %v1062, 0
    %vm1083 = vcmp.ge.s32.totalorder %v1063, 0
    %vm1084 = vmand %vm1076, %vm1080
    %vm1085 = vmand %vm1077, %vm1081
    %vm1086 = vmand %vm1078, %vm1082
    %vm1087 = vmand %vm1079, %vm1083
    %vm1088 = vcmp.lt.s32.totalorder %v1060, 8
    %vm1089 = vcmp.lt.s32.totalorder %v1061, 8
    %vm1090 = vcmp.lt.s32.totalorder %v1062, 8
    %vm1091 = vcmp.lt.s32.totalorder %v1063, 8
    %vm1092 = vmand %vm1084, %vm1088
    %vm1093 = vmand %vm1085, %vm1089
    %vm1094 = vmand %vm1086, %vm1090
    %vm1095 = vmand %vm1087, %vm1091
    %vm1096 = vcmp.ge.s32.totalorder %v1064, 0
    %vm1097 = vcmp.ge.s32.totalorder %v1065, 0
    %vm1098 = vcmp.ge.s32.totalorder %v1066, 0
    %vm1099 = vcmp.ge.s32.totalorder %v1067, 0
    %vm1100 = vmand %vm1092, %vm1096
    %vm1101 = vmand %vm1093, %vm1097
    %vm1102 = vmand %vm1094, %vm1098
    %vm1103 = vmand %vm1095, %vm1099
    %vm1104 = vcmp.lt.s32.totalorder %v1064, 8
    %vm1105 = vcmp.lt.s32.totalorder %v1065, 8
    %vm1106 = vcmp.lt.s32.totalorder %v1066, 8
    %vm1107 = vcmp.lt.s32.totalorder %v1067, 8
    %vm1108 = vmand %vm1100, %vm1104
    %vm1109 = vmand %vm1101, %vm1105
    %vm1110 = vmand %vm1102, %vm1106
    %vm1111 = vmand %vm1103, %vm1107
    %v1112 = vsel %vm1108, 1, 0
    %v1113 = vsel %vm1109, 1, 0
    %v1114 = vsel %vm1110, 1, 0
    %v1115 = vsel %vm1111, 1, 0
    %v1116 = vcvt.s32.f32 %v1112
    %v1117 = vcvt.s32.f32 %v1113
    %v1118 = vcvt.s32.f32 %v1114
    %v1119 = vcvt.s32.f32 %v1115
    %v1120 = vmul.f32 %v1055, %v1116
    %v1121 = vmul.f32 %v1054, %v1117
    %v1122 = vmul.f32 %v1053, %v1118
    %v1123 = vmul.f32 %v1052, %v1119
    %1124 = vst [vmem:[#allocation3] sm:$0xff] %v1120
    %1125 = vst [vmem:[#allocation3 + $0x8] sm:$0xff] %v1121
    %1126 = vst [vmem:[#allocation3 + $0x10] sm:$0xff] %v1122
    %1127 = vst [vmem:[#allocation3 + $0x18] sm:$0xff] %v1123
    %1128 = vrot.lane.b32.xlu0 %v1015, 72
    %v1129 = vpop.permute.xlu0 %1128
    %1130 = vrot.lane.b32.xlu0 %v1017, 72
    %v1131 = vpop.permute.xlu0 %1130
    %1132 = vrot.lane.b32.xlu0 %v1019, 72
    %v1133 = vpop.permute.xlu0 %1132
    %1134 = vrot.lane.b32.xlu0 %v1021, 72
    %v1135 = vpop.permute.xlu0 %1134
    %vm1136 = vcmp.lt.s32.totalorder %v1023, 72
    %v1137 = vsel %vm1136, %v1133, %v1135
    %v1138 = vsel %vm1136, %v1131, %v1133
    %v1139 = vsel %vm1136, %v1129, %v1131
    %v1140 = vsel %vm1136, %v1135, %v1129
    %vm1141 = vcmp.ge.s32.totalorder %v1039, 0
    %vm1142 = vcmp.ge.s32.totalorder %v1040, 0
    %vm1143 = vcmp.ge.s32.totalorder %v1041, 0
    %vm1144 = vcmp.ge.s32.totalorder %v1042, 0
    %vm1145 = vmand %vm1092, %vm1141
    %vm1146 = vmand %vm1093, %vm1142
    %vm1147 = vmand %vm1094, %vm1143
    %vm1148 = vmand %vm1095, %vm1144
    %vm1149 = vcmp.lt.s32.totalorder %v1039, 8
    %vm1150 = vcmp.lt.s32.totalorder %v1040, 8
    %vm1151 = vcmp.lt.s32.totalorder %v1041, 8
    %vm1152 = vcmp.lt.s32.totalorder %v1042, 8
    %vm1153 = vmand %vm1145, %vm1149
    %vm1154 = vmand %vm1146, %vm1150
    %vm1155 = vmand %vm1147, %vm1151
    %vm1156 = vmand %vm1148, %vm1152
    %v1157 = vsel %vm1153, 1, 0
    %v1158 = vsel %vm1154, 1, 0
    %v1159 = vsel %vm1155, 1, 0
    %v1160 = vsel %vm1156, 1, 0
    %v1161 = vcvt.s32.f32 %v1157
    %v1162 = vcvt.s32.f32 %v1158
    %v1163 = vcvt.s32.f32 %v1159
    %v1164 = vcvt.s32.f32 %v1160
    %v1165 = vmul.f32 %v1140, %v1161
    %v1166 = vmul.f32 %v1139, %v1162
    %v1167 = vmul.f32 %v1138, %v1163
    %v1168 = vmul.f32 %v1137, %v1164
    %1169 = vst [vmem:[#allocation3 + $0x20] sm:$0xff] %v1165
    %1170 = vst [vmem:[#allocation3 + $0x28] sm:$0xff] %v1166
    %1171 = vst [vmem:[#allocation3 + $0x30] sm:$0xff] %v1167
    %1172 = vst [vmem:[#allocation3 + $0x38] sm:$0xff] %v1168
    %1173 = vrot.lane.b32.xlu0 %v1015, 71
    %v1174 = vpop.permute.xlu0 %1173
    %1175 = vrot.lane.b32.xlu0 %v1017, 71
    %v1176 = vpop.permute.xlu0 %1175
    %1177 = vrot.lane.b32.xlu0 %v1019, 71
    %v1178 = vpop.permute.xlu0 %1177
    %1179 = vrot.lane.b32.xlu0 %v1021, 71
    %v1180 = vpop.permute.xlu0 %1179
    %vm1181 = vcmp.lt.s32.totalorder %v1023, 71
    %v1182 = vsel %vm1181, %v1178, %v1180
    %v1183 = vsel %vm1181, %v1176, %v1178
    %v1184 = vsel %vm1181, %v1174, %v1176
    %v1185 = vsel %vm1181, %v1180, %v1174
    %v1186 = vadd.s32 %v1039, 1
    %v1187 = vadd.s32 %v1040, 1
    %v1188 = vadd.s32 %v1041, 1
    %v1189 = vadd.s32 %v1042, 1
    %vm1190 = vcmp.ge.s32.totalorder %v1186, 0
    %vm1191 = vcmp.ge.s32.totalorder %v1187, 0
    %vm1192 = vcmp.ge.s32.totalorder %v1188, 0
    %vm1193 = vcmp.ge.s32.totalorder %v1189, 0
    %vm1194 = vmand %vm1092, %vm1190
    %vm1195 = vmand %vm1093, %vm1191
    %vm1196 = vmand %vm1094, %vm1192
    %vm1197 = vmand %vm1095, %vm1193
    %vm1198 = vcmp.lt.s32.totalorder %v1186, 8
    %vm1199 = vcmp.lt.s32.totalorder %v1187, 8
    %vm1200 = vcmp.lt.s32.totalorder %v1188, 8
    %vm1201 = vcmp.lt.s32.totalorder %v1189, 8
    %vm1202 = vmand %vm1194, %vm1198
    %vm1203 = vmand %vm1195, %vm1199
    %vm1204 = vmand %vm1196, %vm1200
    %vm1205 = vmand %vm1197, %vm1201
    %v1206 = vsel %vm1202, 1, 0
    %v1207 = vsel %vm1203, 1, 0
    %v1208 = vsel %vm1204, 1, 0
    %v1209 = vsel %vm1205, 1, 0
    %v1210 = vcvt.s32.f32 %v1206
    %v1211 = vcvt.s32.f32 %v1207
    %v1212 = vcvt.s32.f32 %v1208
    %v1213 = vcvt.s32.f32 %v1209
    %v1214 = vmul.f32 %v1185, %v1210
    %v1215 = vmul.f32 %v1184, %v1211
    %v1216 = vmul.f32 %v1183, %v1212
    %v1217 = vmul.f32 %v1182, %v1213
    %1218 = vst [vmem:[#allocation3 + $0x40] sm:$0xff] %v1214
    %1219 = vst [vmem:[#allocation3 + $0x48] sm:$0xff] %v1215
    %1220 = vst [vmem:[#allocation3 + $0x50] sm:$0xff] %v1216
    %1221 = vst [vmem:[#allocation3 + $0x58] sm:$0xff] %v1217
    %1222 = vrot.lane.b32.xlu0 %v1015, 65
    %v1223 = vpop.permute.xlu0 %1222
    %1224 = vrot.lane.b32.xlu0 %v1017, 65
    %v1225 = vpop.permute.xlu0 %1224
    %1226 = vrot.lane.b32.xlu0 %v1019, 65
    %v1227 = vpop.permute.xlu0 %1226
    %1228 = vrot.lane.b32.xlu0 %v1021, 65
    %v1229 = vpop.permute.xlu0 %1228
    %vm1230 = vcmp.lt.s32.totalorder %v1023, 65
    %v1231 = vsel %vm1230, %v1227, %v1229
    %v1232 = vsel %vm1230, %v1225, %v1227
    %v1233 = vsel %vm1230, %v1223, %v1225
    %v1234 = vsel %vm1230, %v1229, %v1223
    %vm1235 = vcmp.ge.s32.totalorder %v1035, 0
    %vm1236 = vcmp.ge.s32.totalorder %v1036, 0
    %vm1237 = vcmp.ge.s32.totalorder %v1037, 0
    %vm1238 = vcmp.ge.s32.totalorder %v1038, 0
    %vm1239 = vmand %vm1076, %vm1235
    %vm1240 = vmand %vm1077, %vm1236
    %vm1241 = vmand %vm1078, %vm1237
    %vm1242 = vmand %vm1079, %vm1238
    %vm1243 = vcmp.lt.s32.totalorder %v1035, 8
    %vm1244 = vcmp.lt.s32.totalorder %v1036, 8
    %vm1245 = vcmp.lt.s32.totalorder %v1037, 8
    %vm1246 = vcmp.lt.s32.totalorder %v1038, 8
    %vm1247 = vmand %vm1239, %vm1243
    %vm1248 = vmand %vm1240, %vm1244
    %vm1249 = vmand %vm1241, %vm1245
    %vm1250 = vmand %vm1242, %vm1246
    %vm1251 = vmand %vm1247, %vm1096
    %vm1252 = vmand %vm1248, %vm1097
    %vm1253 = vmand %vm1249, %vm1098
    %vm1254 = vmand %vm1250, %vm1099
    %vm1255 = vmand %vm1251, %vm1104
    %vm1256 = vmand %vm1252, %vm1105
    %vm1257 = vmand %vm1253, %vm1106
    %vm1258 = vmand %vm1254, %vm1107
    %v1259 = vsel %vm1255, 1, 0
    %v1260 = vsel %vm1256, 1, 0
    %v1261 = vsel %vm1257, 1, 0
    %v1262 = vsel %vm1258, 1, 0
    %v1263 = vcvt.s32.f32 %v1259
    %v1264 = vcvt.s32.f32 %v1260
    %v1265 = vcvt.s32.f32 %v1261
    %v1266 = vcvt.s32.f32 %v1262
    %v1267 = vmul.f32 %v1234, %v1263
    %v1268 = vmul.f32 %v1233, %v1264
    %v1269 = vmul.f32 %v1232, %v1265
    %v1270 = vmul.f32 %v1231, %v1266
    %1271 = vst [vmem:[#allocation3 + $0x60] sm:$0xff] %v1267
    %1272 = vst [vmem:[#allocation3 + $0x68] sm:$0xff] %v1268
    %1273 = vst [vmem:[#allocation3 + $0x70] sm:$0xff] %v1269
    %1274 = vst [vmem:[#allocation3 + $0x78] sm:$0xff] %v1270
    %1275 = vrot.lane.b32.xlu0 %v1015, 64
    %v1276 = vpop.permute.xlu0 %1275
    %1277 = vrot.lane.b32.xlu0 %v1017, 64
    %v1278 = vpop.permute.xlu0 %1277
    %1279 = vrot.lane.b32.xlu0 %v1019, 64
    %v1280 = vpop.permute.xlu0 %1279
    %1281 = vrot.lane.b32.xlu0 %v1021, 64
    %v1282 = vpop.permute.xlu0 %1281
    %vm1283 = vcmp.lt.s32.totalorder %v1023, 64
    %v1284 = vsel %vm1283, %v1280, %v1282
    %v1285 = vsel %vm1283, %v1278, %v1280
    %v1286 = vsel %vm1283, %v1276, %v1278
    %v1287 = vsel %vm1283, %v1282, %v1276
    %vm1288 = vmand %vm1247, %vm1141
    %vm1289 = vmand %vm1248, %vm1142
    %vm1290 = vmand %vm1249, %vm1143
    %vm1291 = vmand %vm1250, %vm1144
    %vm1292 = vmand %vm1288, %vm1149
    %vm1293 = vmand %vm1289, %vm1150
    %vm1294 = vmand %vm1290, %vm1151
    %vm1295 = vmand %vm1291, %vm1152
    %v1296 = vsel %vm1292, 1, 0
    %v1297 = vsel %vm1293, 1, 0
    %v1298 = vsel %vm1294, 1, 0
    %v1299 = vsel %vm1295, 1, 0
    %v1300 = vcvt.s32.f32 %v1296
    %v1301 = vcvt.s32.f32 %v1297
    %v1302 = vcvt.s32.f32 %v1298
    %v1303 = vcvt.s32.f32 %v1299
    %v1304 = vmul.f32 %v1287, %v1300
    %v1305 = vmul.f32 %v1286, %v1301
    %v1306 = vmul.f32 %v1285, %v1302
    %v1307 = vmul.f32 %v1284, %v1303
    %1308 = vst [vmem:[#allocation3 + $0x80] sm:$0xff] %v1304
    %1309 = vst [vmem:[#allocation3 + $0x88] sm:$0xff] %v1305
    %1310 = vst [vmem:[#allocation3 + $0x90] sm:$0xff] %v1306
    %1311 = vst [vmem:[#allocation3 + $0x98] sm:$0xff] %v1307
    %1312 = vrot.lane.b32.xlu0 %v1015, 63
    %v1313 = vpop.permute.xlu0 %1312
    %1314 = vrot.lane.b32.xlu0 %v1017, 63
    %v1315 = vpop.permute.xlu0 %1314
    %1316 = vrot.lane.b32.xlu0 %v1019, 63
    %v1317 = vpop.permute.xlu0 %1316
    %1318 = vrot.lane.b32.xlu0 %v1021, 63
    %v1319 = vpop.permute.xlu0 %1318
    %vm1320 = vcmp.lt.s32.totalorder %v1023, 63
    %v1321 = vsel %vm1320, %v1317, %v1319
    %v1322 = vsel %vm1320, %v1315, %v1317
    %v1323 = vsel %vm1320, %v1313, %v1315
    %v1324 = vsel %vm1320, %v1319, %v1313
    %vm1325 = vmand %vm1247, %vm1190
    %vm1326 = vmand %vm1248, %vm1191
    %vm1327 = vmand %vm1249, %vm1192
    %vm1328 = vmand %vm1250, %vm1193
    %vm1329 = vmand %vm1325, %vm1198
    %vm1330 = vmand %vm1326, %vm1199
    %vm1331 = vmand %vm1327, %vm1200
    %vm1332 = vmand %vm1328, %vm1201
    %v1333 = vsel %vm1329, 1, 0
    %v1334 = vsel %vm1330, 1, 0
    %v1335 = vsel %vm1331, 1, 0
    %v1336 = vsel %vm1332, 1, 0
    %v1337 = vcvt.s32.f32 %v1333
    %v1338 = vcvt.s32.f32 %v1334
    %v1339 = vcvt.s32.f32 %v1335
    %v1340 = vcvt.s32.f32 %v1336
    %v1341 = vmul.f32 %v1324, %v1337
    %v1342 = vmul.f32 %v1323, %v1338
    %v1343 = vmul.f32 %v1322, %v1339
    %v1344 = vmul.f32 %v1321, %v1340
    %1345 = vst [vmem:[#allocation3 + $0xa0] sm:$0xff] %v1341
    %1346 = vst [vmem:[#allocation3 + $0xa8] sm:$0xff] %v1342
    %1347 = vst [vmem:[#allocation3 + $0xb0] sm:$0xff] %v1343
    %1348 = vst [vmem:[#allocation3 + $0xb8] sm:$0xff] %v1344
    %1349 = vrot.lane.b32.xlu0 %v1015, 57
    %v1350 = vpop.permute.xlu0 %1349
    %1351 = vrot.lane.b32.xlu0 %v1017, 57
    %v1352 = vpop.permute.xlu0 %1351
    %1353 = vrot.lane.b32.xlu0 %v1019, 57
    %v1354 = vpop.permute.xlu0 %1353
    %1355 = vrot.lane.b32.xlu0 %v1021, 57
    %v1356 = vpop.permute.xlu0 %1355
    %vm1357 = vcmp.lt.s32.totalorder %v1023, 57
    %v1358 = vsel %vm1357, %v1354, %v1356
    %v1359 = vsel %vm1357, %v1352, %v1354
    %v1360 = vsel %vm1357, %v1350, %v1352
    %v1361 = vsel %vm1357, %v1356, %v1350
    %v1362 = vadd.s32 %v1035, 1
    %v1363 = vadd.s32 %v1036, 1
    %v1364 = vadd.s32 %v1037, 1
    %v1365 = vadd.s32 %v1038, 1
    %vm1366 = vcmp.ge.s32.totalorder %v1362, 0
    %vm1367 = vcmp.ge.s32.totalorder %v1363, 0
    %vm1368 = vcmp.ge.s32.totalorder %v1364, 0
    %vm1369 = vcmp.ge.s32.totalorder %v1365, 0
    %vm1370 = vmand %vm1076, %vm1366
    %vm1371 = vmand %vm1077, %vm1367
    %vm1372 = vmand %vm1078, %vm1368
    %vm1373 = vmand %vm1079, %vm1369
    %vm1374 = vcmp.lt.s32.totalorder %v1362, 8
    %vm1375 = vcmp.lt.s32.totalorder %v1363, 8
    %vm1376 = vcmp.lt.s32.totalorder %v1364, 8
    %vm1377 = vcmp.lt.s32.totalorder %v1365, 8
    %vm1378 = vmand %vm1370, %vm1374
    %vm1379 = vmand %vm1371, %vm1375
    %vm1380 = vmand %vm1372, %vm1376
    %vm1381 = vmand %vm1373, %vm1377
    %vm1382 = vmand %vm1378, %vm1096
    %vm1383 = vmand %vm1379, %vm1097
    %vm1384 = vmand %vm1380, %vm1098
    %vm1385 = vmand %vm1381, %vm1099
    %vm1386 = vmand %vm1382, %vm1104
    %vm1387 = vmand %vm1383, %vm1105
    %vm1388 = vmand %vm1384, %vm1106
    %vm1389 = vmand %vm1385, %vm1107
    %v1390 = vsel %vm1386, 1, 0
    %v1391 = vsel %vm1387, 1, 0
    %v1392 = vsel %vm1388, 1, 0
    %v1393 = vsel %vm1389, 1, 0
    %v1394 = vcvt.s32.f32 %v1390
    %v1395 = vcvt.s32.f32 %v1391
    %v1396 = vcvt.s32.f32 %v1392
    %v1397 = vcvt.s32.f32 %v1393
    %v1398 = vmul.f32 %v1361, %v1394
    %v1399 = vmul.f32 %v1360, %v1395
    %v1400 = vmul.f32 %v1359, %v1396
    %v1401 = vmul.f32 %v1358, %v1397
    %1402 = vst [vmem:[#allocation3 + $0xc0] sm:$0xff] %v1398
    %1403 = vst [vmem:[#allocation3 + $0xc8] sm:$0xff] %v1399
    %1404 = vst [vmem:[#allocation3 + $0xd0] sm:$0xff] %v1400
    %1405 = vst [vmem:[#allocation3 + $0xd8] sm:$0xff] %v1401
    %1406 = vrot.lane.b32.xlu0 %v1015, 56
    %v1407 = vpop.permute.xlu0 %1406
    %1408 = vrot.lane.b32.xlu0 %v1017, 56
    %v1409 = vpop.permute.xlu0 %1408
    %1410 = vrot.lane.b32.xlu0 %v1019, 56
    %v1411 = vpop.permute.xlu0 %1410
    %1412 = vrot.lane.b32.xlu0 %v1021, 56
    %v1413 = vpop.permute.xlu0 %1412
    %vm1414 = vcmp.lt.s32.totalorder %v1023, 56
    %v1415 = vsel %vm1414, %v1411, %v1413
    %v1416 = vsel %vm1414, %v1409, %v1411
    %v1417 = vsel %vm1414, %v1407, %v1409
    %v1418 = vsel %vm1414, %v1413, %v1407
    %vm1419 = vmand %vm1378, %vm1141
    %vm1420 = vmand %vm1379, %vm1142
    %vm1421 = vmand %vm1380, %vm1143
    %vm1422 = vmand %vm1381, %vm1144
    %vm1423 = vmand %vm1419, %vm1149
    %vm1424 = vmand %vm1420, %vm1150
    %vm1425 = vmand %vm1421, %vm1151
    %vm1426 = vmand %vm1422, %vm1152
    %v1427 = vsel %vm1423, 1, 0
    %v1428 = vsel %vm1424, 1, 0
    %v1429 = vsel %vm1425, 1, 0
    %v1430 = vsel %vm1426, 1, 0
    %v1431 = vcvt.s32.f32 %v1427
    %v1432 = vcvt.s32.f32 %v1428
    %v1433 = vcvt.s32.f32 %v1429
    %v1434 = vcvt.s32.f32 %v1430
    %v1435 = vmul.f32 %v1418, %v1431
    %v1436 = vmul.f32 %v1417, %v1432
    %v1437 = vmul.f32 %v1416, %v1433
    %v1438 = vmul.f32 %v1415, %v1434
    %1439 = vst [vmem:[#allocation3 + $0xe0] sm:$0xff] %v1435
    %1440 = vst [vmem:[#allocation3 + $0xe8] sm:$0xff] %v1436
    %1441 = vst [vmem:[#allocation3 + $0xf0] sm:$0xff] %v1437
    %1442 = vst [vmem:[#allocation3 + $0xf8] sm:$0xff] %v1438
    %1443 = vrot.lane.b32.xlu0 %v1015, 55
    %v1444 = vpop.permute.xlu0 %1443
    %1445 = vrot.lane.b32.xlu0 %v1017, 55
    %v1446 = vpop.permute.xlu0 %1445
    %1447 = vrot.lane.b32.xlu0 %v1019, 55
    %v1448 = vpop.permute.xlu0 %1447
    %1449 = vrot.lane.b32.xlu0 %v1021, 55
    %v1450 = vpop.permute.xlu0 %1449
    %vm1451 = vcmp.lt.s32.totalorder %v1023, 55
    %v1452 = vsel %vm1451, %v1448, %v1450
    %v1453 = vsel %vm1451, %v1446, %v1448
    %v1454 = vsel %vm1451, %v1444, %v1446
    %v1455 = vsel %vm1451, %v1450, %v1444
    %vm1456 = vmand %vm1378, %vm1190
    %vm1457 = vmand %vm1379, %vm1191
    %vm1458 = vmand %vm1380, %vm1192
    %vm1459 = vmand %vm1381, %vm1193
    %vm1460 = vmand %vm1456, %vm1198
    %vm1461 = vmand %vm1457, %vm1199
    %vm1462 = vmand %vm1458, %vm1200
    %vm1463 = vmand %vm1459, %vm1201
    %v1464 = vsel %vm1460, 1, 0
    %v1465 = vsel %vm1461, 1, 0
    %v1466 = vsel %vm1462, 1, 0
    %v1467 = vsel %vm1463, 1, 0
    %v1468 = vcvt.s32.f32 %v1464
    %v1469 = vcvt.s32.f32 %v1465
    %v1470 = vcvt.s32.f32 %v1466
    %v1471 = vcvt.s32.f32 %v1467
    %v1472 = vmul.f32 %v1455, %v1468
    %v1473 = vmul.f32 %v1454, %v1469
    %v1474 = vmul.f32 %v1453, %v1470
    %v1475 = vmul.f32 %v1452, %v1471
    %1476 = vst [vmem:[#allocation3 + $0x100] sm:$0xff] %v1472
    %1477 = vst [vmem:[#allocation3 + $0x108] sm:$0xff] %v1473
    %1478 = vst [vmem:[#allocation3 + $0x110] sm:$0xff] %v1474
    %1479 = vst [vmem:[#allocation3 + $0x118] sm:$0xff] %v1475
    %1480 = vrot.lane.b32.xlu0 %v1015, 9
    %v1481 = vpop.permute.xlu0 %1480
    %1482 = vrot.lane.b32.xlu0 %v1017, 9
    %v1483 = vpop.permute.xlu0 %1482
    %1484 = vrot.lane.b32.xlu0 %v1019, 9
    %v1485 = vpop.permute.xlu0 %1484
    %1486 = vrot.lane.b32.xlu0 %v1021, 9
    %v1487 = vpop.permute.xlu0 %1486
    %vm1488 = vcmp.lt.s32.totalorder %v1023, 9
    %v1489 = vsel %vm1488, %v1485, %v1487
    %v1490 = vsel %vm1488, %v1483, %v1485
    %v1491 = vsel %vm1488, %v1481, %v1483
    %v1492 = vsel %vm1488, %v1487, %v1481
    %vm1493 = vcmp.ge.s32.totalorder %v1027, 0
    %vm1494 = vcmp.ge.s32.totalorder %v1028, 0
    %vm1495 = vcmp.ge.s32.totalorder %v1029, 0
    %vm1496 = vcmp.ge.s32.totalorder %v1030, 0
    %vm1497 = vcmp.lt.s32.totalorder %v1027, 8
    %vm1498 = vcmp.lt.s32.totalorder %v1028, 8
    %vm1499 = vcmp.lt.s32.totalorder %v1029, 8
    %vm1500 = vcmp.lt.s32.totalorder %v1030, 8
    %vm1501 = vmand %vm1493, %vm1497
    %vm1502 = vmand %vm1494, %vm1498
    %vm1503 = vmand %vm1495, %vm1499
    %vm1504 = vmand %vm1496, %vm1500
    %vm1505 = vmand %vm1501, %vm1080
    %vm1506 = vmand %vm1502, %vm1081
    %vm1507 = vmand %vm1503, %vm1082
    %vm1508 = vmand %vm1504, %vm1083
    %vm1509 = vmand %vm1505, %vm1088
    %vm1510 = vmand %vm1506, %vm1089
    %vm1511 = vmand %vm1507, %vm1090
    %vm1512 = vmand %vm1508, %vm1091
    %vm1513 = vmand %vm1509, %vm1096
    %vm1514 = vmand %vm1510, %vm1097
    %vm1515 = vmand %vm1511, %vm1098
    %vm1516 = vmand %vm1512, %vm1099
    %vm1517 = vmand %vm1513, %vm1104
    %vm1518 = vmand %vm1514, %vm1105
    %vm1519 = vmand %vm1515, %vm1106
    %vm1520 = vmand %vm1516, %vm1107
    %v1521 = vsel %vm1517, 1, 0
    %v1522 = vsel %vm1518, 1, 0
    %v1523 = vsel %vm1519, 1, 0
    %v1524 = vsel %vm1520, 1, 0
    %v1525 = vcvt.s32.f32 %v1521
    %v1526 = vcvt.s32.f32 %v1522
    %v1527 = vcvt.s32.f32 %v1523
    %v1528 = vcvt.s32.f32 %v1524
    %v1529 = vmul.f32 %v1492, %v1525
    %v1530 = vmul.f32 %v1491, %v1526
    %v1531 = vmul.f32 %v1490, %v1527
    %v1532 = vmul.f32 %v1489, %v1528
    %1533 = vst [vmem:[#allocation3 + $0x120] sm:$0xff] %v1529
    %1534 = vst [vmem:[#allocation3 + $0x128] sm:$0xff] %v1530
    %1535 = vst [vmem:[#allocation3 + $0x130] sm:$0xff] %v1531
    %1536 = vst [vmem:[#allocation3 + $0x138] sm:$0xff] %v1532
    %1537 = vrot.lane.b32.xlu0 %v1015, 8
    %v1538 = vpop.permute.xlu0 %1537
    %1539 = vrot.lane.b32.xlu0 %v1017, 8
    %v1540 = vpop.permute.xlu0 %1539
    %1541 = vrot.lane.b32.xlu0 %v1019, 8
    %v1542 = vpop.permute.xlu0 %1541
    %1543 = vrot.lane.b32.xlu0 %v1021, 8
    %v1544 = vpop.permute.xlu0 %1543
    %vm1545 = vcmp.lt.s32.totalorder %v1023, 8
    %v1546 = vsel %vm1545, %v1542, %v1544
    %v1547 = vsel %vm1545, %v1540, %v1542
    %v1548 = vsel %vm1545, %v1538, %v1540
    %v1549 = vsel %vm1545, %v1544, %v1538
    %vm1550 = vmand %vm1509, %vm1141
    %vm1551 = vmand %vm1510, %vm1142
    %vm1552 = vmand %vm1511, %vm1143
    %vm1553 = vmand %vm1512, %vm1144
    %vm1554 = vmand %vm1550, %vm1149
    %vm1555 = vmand %vm1551, %vm1150
    %vm1556 = vmand %vm1552, %vm1151
    %vm1557 = vmand %vm1553, %vm1152
    %v1558 = vsel %vm1554, 1, 0
    %v1559 = vsel %vm1555, 1, 0
    %v1560 = vsel %vm1556, 1, 0
    %v1561 = vsel %vm1557, 1, 0
    %v1562 = vcvt.s32.f32 %v1558
    %v1563 = vcvt.s32.f32 %v1559
    %v1564 = vcvt.s32.f32 %v1560
    %v1565 = vcvt.s32.f32 %v1561
    %v1566 = vmul.f32 %v1549, %v1562
    %v1567 = vmul.f32 %v1548, %v1563
    %v1568 = vmul.f32 %v1547, %v1564
    %v1569 = vmul.f32 %v1546, %v1565
    %1570 = vst [vmem:[#allocation3 + $0x140] sm:$0xff] %v1566
    %1571 = vst [vmem:[#allocation3 + $0x148] sm:$0xff] %v1567
    %1572 = vst [vmem:[#allocation3 + $0x150] sm:$0xff] %v1568
    %1573 = vst [vmem:[#allocation3 + $0x158] sm:$0xff] %v1569
    %1574 = vrot.lane.b32.xlu0 %v1015, 7
    %v1575 = vpop.permute.xlu0 %1574
    %1576 = vrot.lane.b32.xlu0 %v1017, 7
    %v1577 = vpop.permute.xlu0 %1576
    %1578 = vrot.lane.b32.xlu0 %v1019, 7
    %v1579 = vpop.permute.xlu0 %1578
    %1580 = vrot.lane.b32.xlu0 %v1021, 7
    %v1581 = vpop.permute.xlu0 %1580
    %vm1582 = vcmp.lt.s32.totalorder %v1023, 7
    %v1583 = vsel %vm1582, %v1579, %v1581
    %v1584 = vsel %vm1582, %v1577, %v1579
    %v1585 = vsel %vm1582, %v1575, %v1577
    %v1586 = vsel %vm1582, %v1581, %v1575
    %vm1587 = vmand %vm1509, %vm1190
    %vm1588 = vmand %vm1510, %vm1191
    %vm1589 = vmand %vm1511, %vm1192
    %vm1590 = vmand %vm1512, %vm1193
    %vm1591 = vmand %vm1587, %vm1198
    %vm1592 = vmand %vm1588, %vm1199
    %vm1593 = vmand %vm1589, %vm1200
    %vm1594 = vmand %vm1590, %vm1201
    %v1595 = vsel %vm1591, 1, 0
    %v1596 = vsel %vm1592, 1, 0
    %v1597 = vsel %vm1593, 1, 0
    %v1598 = vsel %vm1594, 1, 0
    %v1599 = vcvt.s32.f32 %v1595
    %v1600 = vcvt.s32.f32 %v1596
    %v1601 = vcvt.s32.f32 %v1597
    %v1602 = vcvt.s32.f32 %v1598
    %v1603 = vmul.f32 %v1586, %v1599
    %v1604 = vmul.f32 %v1585, %v1600
    %v1605 = vmul.f32 %v1584, %v1601
    %v1606 = vmul.f32 %v1583, %v1602
    %1607 = vst [vmem:[#allocation3 + $0x160] sm:$0xff] %v1603
    %1608 = vst [vmem:[#allocation3 + $0x168] sm:$0xff] %v1604
    %1609 = vst [vmem:[#allocation3 + $0x170] sm:$0xff] %v1605
    %1610 = vst [vmem:[#allocation3 + $0x178] sm:$0xff] %v1606
    %1611 = vrot.lane.b32.xlu0 %v1015, 1
    %v1612 = vpop.permute.xlu0 %1611
    %1613 = vrot.lane.b32.xlu0 %v1017, 1
    %v1614 = vpop.permute.xlu0 %1613
    %1615 = vrot.lane.b32.xlu0 %v1019, 1
    %v1616 = vpop.permute.xlu0 %1615
    %1617 = vrot.lane.b32.xlu0 %v1021, 1
    %v1618 = vpop.permute.xlu0 %1617
    %vm1619 = vcmp.lt.s32.totalorder %v1023, 1
    %v1620 = vsel %vm1619, %v1616, %v1618
    %v1621 = vsel %vm1619, %v1614, %v1616
    %v1622 = vsel %vm1619, %v1612, %v1614
    %v1623 = vsel %vm1619, %v1618, %v1612
    %vm1624 = vmand %vm1501, %vm1235
    %vm1625 = vmand %vm1502, %vm1236
    %vm1626 = vmand %vm1503, %vm1237
    %vm1627 = vmand %vm1504, %vm1238
    %vm1628 = vmand %vm1624, %vm1243
    %vm1629 = vmand %vm1625, %vm1244
    %vm1630 = vmand %vm1626, %vm1245
    %vm1631 = vmand %vm1627, %vm1246
    %vm1632 = vmand %vm1628, %vm1096
    %vm1633 = vmand %vm1629, %vm1097
    %vm1634 = vmand %vm1630, %vm1098
    %vm1635 = vmand %vm1631, %vm1099
    %vm1636 = vmand %vm1632, %vm1104
    %vm1637 = vmand %vm1633, %vm1105
    %vm1638 = vmand %vm1634, %vm1106
    %vm1639 = vmand %vm1635, %vm1107
    %v1640 = vsel %vm1636, 1, 0
    %v1641 = vsel %vm1637, 1, 0
    %v1642 = vsel %vm1638, 1, 0
    %v1643 = vsel %vm1639, 1, 0
    %v1644 = vcvt.s32.f32 %v1640
    %v1645 = vcvt.s32.f32 %v1641
    %v1646 = vcvt.s32.f32 %v1642
    %v1647 = vcvt.s32.f32 %v1643
    %v1648 = vmul.f32 %v1623, %v1644
    %v1649 = vmul.f32 %v1622, %v1645
    %v1650 = vmul.f32 %v1621, %v1646
    %v1651 = vmul.f32 %v1620, %v1647
    %1652 = vst [vmem:[#allocation3 + $0x180] sm:$0xff] %v1648
    %1653 = vst [vmem:[#allocation3 + $0x188] sm:$0xff] %v1649
    %1654 = vst [vmem:[#allocation3 + $0x190] sm:$0xff] %v1650
    %1655 = vst [vmem:[#allocation3 + $0x198] sm:$0xff] %v1651
    %vm1656 = vmand %vm1628, %vm1141
    %vm1657 = vmand %vm1629, %vm1142
    %vm1658 = vmand %vm1630, %vm1143
    %vm1659 = vmand %vm1631, %vm1144
    %vm1660 = vmand %vm1656, %vm1149
    %vm1661 = vmand %vm1657, %vm1150
    %vm1662 = vmand %vm1658, %vm1151
    %vm1663 = vmand %vm1659, %vm1152
    %v1664 = vsel %vm1660, 1, 0
    %v1665 = vsel %vm1661, 1, 0
    %v1666 = vsel %vm1662, 1, 0
    %v1667 = vsel %vm1663, 1, 0
    %v1668 = vcvt.s32.f32 %v1664
    %v1669 = vcvt.s32.f32 %v1665
    %v1670 = vcvt.s32.f32 %v1666
    %v1671 = vcvt.s32.f32 %v1667
    %v1672 = vmul.f32 %v1015, %v1668
    %v1673 = vmul.f32 %v1017, %v1669
    %v1674 = vmul.f32 %v1019, %v1670
    %v1675 = vmul.f32 %v1021, %v1671
    %1676 = vst [vmem:[#allocation3 + $0x1a0] sm:$0xff] %v1672
    %1677 = vst [vmem:[#allocation3 + $0x1a8] sm:$0xff] %v1673
    %1678 = vst [vmem:[#allocation3 + $0x1b0] sm:$0xff] %v1674
    %1679 = vst [vmem:[#allocation3 + $0x1b8] sm:$0xff] %v1675
    %1680 = vrot.lane.b32.xlu0 %v1015, 127
    %v1681 = vpop.permute.xlu0 %1680
    %1682 = vrot.lane.b32.xlu0 %v1017, 127
    %v1683 = vpop.permute.xlu0 %1682
    %1684 = vrot.lane.b32.xlu0 %v1019, 127
    %v1685 = vpop.permute.xlu0 %1684
    %1686 = vrot.lane.b32.xlu0 %v1021, 127
    %v1687 = vpop.permute.xlu0 %1686
    %vm1688 = vcmp.lt.s32.totalorder %v1023, 127
    %v1689 = vsel %vm1688, %v1685, %v1687
    %v1690 = vsel %vm1688, %v1683, %v1685
    %v1691 = vsel %vm1688, %v1681, %v1683
    %v1692 = vsel %vm1688, %v1687, %v1681
    %vm1693 = vmand %vm1628, %vm1190
    %vm1694 = vmand %vm1629, %vm1191
    %vm1695 = vmand %vm1630, %vm1192
    %vm1696 = vmand %vm1631, %vm1193
    %vm1697 = vmand %vm1693, %vm1198
    %vm1698 = vmand %vm1694, %vm1199
    %vm1699 = vmand %vm1695, %vm1200
    %vm1700 = vmand %vm1696, %vm1201
    %v1701 = vsel %vm1697, 1, 0
    %v1702 = vsel %vm1698, 1, 0
    %v1703 = vsel %vm1699, 1, 0
    %v1704 = vsel %vm1700, 1, 0
    %v1705 = vcvt.s32.f32 %v1701
    %v1706 = vcvt.s32.f32 %v1702
    %v1707 = vcvt.s32.f32 %v1703
    %v1708 = vcvt.s32.f32 %v1704
    %v1709 = vmul.f32 %v1691, %v1705
    %v1710 = vmul.f32 %v1690, %v1706
    %v1711 = vmul.f32 %v1689, %v1707
    %v1712 = vmul.f32 %v1692, %v1708
    %1713 = vst [vmem:[#allocation3 + $0x1c0] sm:$0xff] %v1709
    %1714 = vst [vmem:[#allocation3 + $0x1c8] sm:$0xff] %v1710
    %1715 = vst [vmem:[#allocation3 + $0x1d0] sm:$0xff] %v1711
    %1716 = vst [vmem:[#allocation3 + $0x1d8] sm:$0xff] %v1712
    %1717 = vrot.lane.b32.xlu0 %v1015, 121
    %v1718 = vpop.permute.xlu0 %1717
    %1719 = vrot.lane.b32.xlu0 %v1017, 121
    %v1720 = vpop.permute.xlu0 %1719
    %1721 = vrot.lane.b32.xlu0 %v1019, 121
    %v1722 = vpop.permute.xlu0 %1721
    %1723 = vrot.lane.b32.xlu0 %v1021, 121
    %v1724 = vpop.permute.xlu0 %1723
    %vm1725 = vcmp.lt.s32.totalorder %v1023, 121
    %v1726 = vsel %vm1725, %v1722, %v1724
    %v1727 = vsel %vm1725, %v1720, %v1722
    %v1728 = vsel %vm1725, %v1718, %v1720
    %v1729 = vsel %vm1725, %v1724, %v1718
    %vm1730 = vmand %vm1501, %vm1366
    %vm1731 = vmand %vm1502, %vm1367
    %vm1732 = vmand %vm1503, %vm1368
    %vm1733 = vmand %vm1504, %vm1369
    %vm1734 = vmand %vm1730, %vm1374
    %vm1735 = vmand %vm1731, %vm1375
    %vm1736 = vmand %vm1732, %vm1376
    %vm1737 = vmand %vm1733, %vm1377
    %vm1738 = vmand %vm1734, %vm1096
    %vm1739 = vmand %vm1735, %vm1097
    %vm1740 = vmand %vm1736, %vm1098
    %vm1741 = vmand %vm1737, %vm1099
    %vm1742 = vmand %vm1738, %vm1104
    %vm1743 = vmand %vm1739, %vm1105
    %vm1744 = vmand %vm1740, %vm1106
    %vm1745 = vmand %vm1741, %vm1107
    %v1746 = vsel %vm1742, 1, 0
    %v1747 = vsel %vm1743, 1, 0
    %v1748 = vsel %vm1744, 1, 0
    %v1749 = vsel %vm1745, 1, 0
    %v1750 = vcvt.s32.f32 %v1746
    %v1751 = vcvt.s32.f32 %v1747
    %v1752 = vcvt.s32.f32 %v1748
    %v1753 = vcvt.s32.f32 %v1749
    %v1754 = vmul.f32 %v1728, %v1750
    %v1755 = vmul.f32 %v1727, %v1751
    %v1756 = vmul.f32 %v1726, %v1752
    %v1757 = vmul.f32 %v1729, %v1753
    %1758 = vst [vmem:[#allocation3 + $0x1e0] sm:$0xff] %v1754
    %1759 = vst [vmem:[#allocation3 + $0x1e8] sm:$0xff] %v1755
    %1760 = vst [vmem:[#allocation3 + $0x1f0] sm:$0xff] %v1756
    %1761 = vst [vmem:[#allocation3 + $0x1f8] sm:$0xff] %v1757
    %1762 = vrot.lane.b32.xlu0 %v1015, 120
    %v1763 = vpop.permute.xlu0 %1762
    %1764 = vrot.lane.b32.xlu0 %v1017, 120
    %v1765 = vpop.permute.xlu0 %1764
    %1766 = vrot.lane.b32.xlu0 %v1019, 120
    %v1767 = vpop.permute.xlu0 %1766
    %1768 = vrot.lane.b32.xlu0 %v1021, 120
    %v1769 = vpop.permute.xlu0 %1768
    %vm1770 = vcmp.lt.s32.totalorder %v1023, 120
    %v1771 = vsel %vm1770, %v1767, %v1769
    %v1772 = vsel %vm1770, %v1765, %v1767
    %v1773 = vsel %vm1770, %v1763, %v1765
    %v1774 = vsel %vm1770, %v1769, %v1763
    %vm1775 = vmand %vm1734, %vm1141
    %vm1776 = vmand %vm1735, %vm1142
    %vm1777 = vmand %vm1736, %vm1143
    %vm1778 = vmand %vm1737, %vm1144
    %vm1779 = vmand %vm1775, %vm1149
    %vm1780 = vmand %vm1776, %vm1150
    %vm1781 = vmand %vm1777, %vm1151
    %vm1782 = vmand %vm1778, %vm1152
    %v1783 = vsel %vm1779, 1, 0
    %v1784 = vsel %vm1780, 1, 0
    %v1785 = vsel %vm1781, 1, 0
    %v1786 = vsel %vm1782, 1, 0
    %v1787 = vcvt.s32.f32 %v1783
    %v1788 = vcvt.s32.f32 %v1784
    %v1789 = vcvt.s32.f32 %v1785
    %v1790 = vcvt.s32.f32 %v1786
    %v1791 = vmul.f32 %v1773, %v1787
    %v1792 = vmul.f32 %v1772, %v1788
    %v1793 = vmul.f32 %v1771, %v1789
    %v1794 = vmul.f32 %v1774, %v1790
    %1795 = vst [vmem:[#allocation3 + $0x200] sm:$0xff] %v1791
    %1796 = vst [vmem:[#allocation3 + $0x208] sm:$0xff] %v1792
    %1797 = vst [vmem:[#allocation3 + $0x210] sm:$0xff] %v1793
    %1798 = vst [vmem:[#allocation3 + $0x218] sm:$0xff] %v1794
    %1799 = vrot.lane.b32.xlu0 %v1015, 119
    %v1800 = vpop.permute.xlu0 %1799
    %1801 = vrot.lane.b32.xlu0 %v1017, 119
    %v1802 = vpop.permute.xlu0 %1801
    %1803 = vrot.lane.b32.xlu0 %v1019, 119
    %v1804 = vpop.permute.xlu0 %1803
    %1805 = vrot.lane.b32.xlu0 %v1021, 119
    %v1806 = vpop.permute.xlu0 %1805
    %vm1807 = vcmp.lt.s32.totalorder %v1023, 119
    %v1808 = vsel %vm1807, %v1804, %v1806
    %v1809 = vsel %vm1807, %v1802, %v1804
    %v1810 = vsel %vm1807, %v1800, %v1802
    %v1811 = vsel %vm1807, %v1806, %v1800
    %vm1812 = vmand %vm1734, %vm1190
    %vm1813 = vmand %vm1735, %vm1191
    %vm1814 = vmand %vm1736, %vm1192
    %vm1815 = vmand %vm1737, %vm1193
    %vm1816 = vmand %vm1812, %vm1198
    %vm1817 = vmand %vm1813, %vm1199
    %vm1818 = vmand %vm1814, %vm1200
    %vm1819 = vmand %vm1815, %vm1201
    %v1820 = vsel %vm1816, 1, 0
    %v1821 = vsel %vm1817, 1, 0
    %v1822 = vsel %vm1818, 1, 0
    %v1823 = vsel %vm1819, 1, 0
    %v1824 = vcvt.s32.f32 %v1820
    %v1825 = vcvt.s32.f32 %v1821
    %v1826 = vcvt.s32.f32 %v1822
    %v1827 = vcvt.s32.f32 %v1823
    %v1828 = vmul.f32 %v1810, %v1824
    %v1829 = vmul.f32 %v1809, %v1825
    %v1830 = vmul.f32 %v1808, %v1826
    %v1831 = vmul.f32 %v1811, %v1827
    %1832 = vst [vmem:[#allocation3 + $0x220] sm:$0xff] %v1828
    %1833 = vst [vmem:[#allocation3 + $0x228] sm:$0xff] %v1829
    %1834 = vst [vmem:[#allocation3 + $0x230] sm:$0xff] %v1830
    %1835 = vst [vmem:[#allocation3 + $0x238] sm:$0xff] %v1831
    %v1836 = vadd.s32 %v1027, 1
    %v1837 = vadd.s32 %v1028, 1
    %v1838 = vadd.s32 %v1029, 1
    %v1839 = vadd.s32 %v1030, 1
    %vm1840 = vcmp.ge.s32.totalorder %v1836, 0
    %vm1841 = vcmp.ge.s32.totalorder %v1837, 0
    %vm1842 = vcmp.ge.s32.totalorder %v1838, 0
    %vm1843 = vcmp.ge.s32.totalorder %v1839, 0
    %vm1844 = vcmp.lt.s32.totalorder %v1836, 8
    %vm1845 = vcmp.lt.s32.totalorder %v1837, 8
    %vm1846 = vcmp.lt.s32.totalorder %v1838, 8
    %vm1847 = vcmp.lt.s32.totalorder %v1839, 8
    %vm1848 = vmand %vm1840, %vm1844
    %vm1849 = vmand %vm1841, %vm1845
    %vm1850 = vmand %vm1842, %vm1846
    %vm1851 = vmand %vm1843, %vm1847
    %vm1852 = vmand %vm1848, %vm1080
    %vm1853 = vmand %vm1849, %vm1081
    %vm1854 = vmand %vm1850, %vm1082
    %vm1855 = vmand %vm1851, %vm1083
    %vm1856 = vmand %vm1852, %vm1088
    %vm1857 = vmand %vm1853, %vm1089
    %vm1858 = vmand %vm1854, %vm1090
    %vm1859 = vmand %vm1855, %vm1091
    %vm1860 = vmand %vm1856, %vm1096
    %vm1861 = vmand %vm1857, %vm1097
    %vm1862 = vmand %vm1858, %vm1098
    %vm1863 = vmand %vm1859, %vm1099
    %vm1864 = vmand %vm1860, %vm1104
    %vm1865 = vmand %vm1861, %vm1105
    %vm1866 = vmand %vm1862, %vm1106
    %vm1867 = vmand %vm1863, %vm1107
    %v1868 = vsel %vm1864, 1, 0
    %v1869 = vsel %vm1865, 1, 0
    %v1870 = vsel %vm1866, 1, 0
    %v1871 = vsel %vm1867, 1, 0
    %v1872 = vcvt.s32.f32 %v1868
    %v1873 = vcvt.s32.f32 %v1869
    %v1874 = vcvt.s32.f32 %v1870
    %v1875 = vcvt.s32.f32 %v1871
    %v1876 = vmul.f32 %v1054, %v1872
    %v1877 = vmul.f32 %v1053, %v1873
    %v1878 = vmul.f32 %v1052, %v1874
    %v1879 = vmul.f32 %v1055, %v1875
    %1880 = vst [vmem:[#allocation3 + $0x240] sm:$0xff] %v1876
    %1881 = vst [vmem:[#allocation3 + $0x248] sm:$0xff] %v1877
    %1882 = vst [vmem:[#allocation3 + $0x250] sm:$0xff] %v1878
    %1883 = vst [vmem:[#allocation3 + $0x258] sm:$0xff] %v1879
    %vm1884 = vmand %vm1856, %vm1141
    %vm1885 = vmand %vm1857, %vm1142
    %vm1886 = vmand %vm1858, %vm1143
    %vm1887 = vmand %vm1859, %vm1144
    %vm1888 = vmand %vm1884, %vm1149
    %vm1889 = vmand %vm1885, %vm1150
    %vm1890 = vmand %vm1886, %vm1151
    %vm1891 = vmand %vm1887, %vm1152
    %v1892 = vsel %vm1888, 1, 0
    %v1893 = vsel %vm1889, 1, 0
    %v1894 = vsel %vm1890, 1, 0
    %v1895 = vsel %vm1891, 1, 0
    %v1896 = vcvt.s32.f32 %v1892
    %v1897 = vcvt.s32.f32 %v1893
    %v1898 = vcvt.s32.f32 %v1894
    %v1899 = vcvt.s32.f32 %v1895
    %v1900 = vmul.f32 %v1139, %v1896
    %v1901 = vmul.f32 %v1138, %v1897
    %v1902 = vmul.f32 %v1137, %v1898
    %v1903 = vmul.f32 %v1140, %v1899
    %1904 = vst [vmem:[#allocation3 + $0x260] sm:$0xff] %v1900
    %1905 = vst [vmem:[#allocation3 + $0x268] sm:$0xff] %v1901
    %1906 = vst [vmem:[#allocation3 + $0x270] sm:$0xff] %v1902
    %1907 = vst [vmem:[#allocation3 + $0x278] sm:$0xff] %v1903
    %vm1908 = vmand %vm1856, %vm1190
    %vm1909 = vmand %vm1857, %vm1191
    %vm1910 = vmand %vm1858, %vm1192
    %vm1911 = vmand %vm1859, %vm1193
    %vm1912 = vmand %vm1908, %vm1198
    %vm1913 = vmand %vm1909, %vm1199
    %vm1914 = vmand %vm1910, %vm1200
    %vm1915 = vmand %vm1911, %vm1201
    %v1916 = vsel %vm1912, 1, 0
    %v1917 = vsel %vm1913, 1, 0
    %v1918 = vsel %vm1914, 1, 0
    %v1919 = vsel %vm1915, 1, 0
    %v1920 = vcvt.s32.f32 %v1916
    %v1921 = vcvt.s32.f32 %v1917
    %v1922 = vcvt.s32.f32 %v1918
    %v1923 = vcvt.s32.f32 %v1919
    %v1924 = vmul.f32 %v1184, %v1920
    %v1925 = vmul.f32 %v1183, %v1921
    %v1926 = vmul.f32 %v1182, %v1922
    %v1927 = vmul.f32 %v1185, %v1923
    %1928 = vst [vmem:[#allocation3 + $0x280] sm:$0xff] %v1924
    %1929 = vst [vmem:[#allocation3 + $0x288] sm:$0xff] %v1925
    %1930 = vst [vmem:[#allocation3 + $0x290] sm:$0xff] %v1926
    %1931 = vst [vmem:[#allocation3 + $0x298] sm:$0xff] %v1927
    %vm1932 = vmand %vm1848, %vm1235
    %vm1933 = vmand %vm1849, %vm1236
    %vm1934 = vmand %vm1850, %vm1237
    %vm1935 = vmand %vm1851, %vm1238
    %vm1936 = vmand %vm1932, %vm1243
    %vm1937 = vmand %vm1933, %vm1244
    %vm1938 = vmand %vm1934, %vm1245
    %vm1939 = vmand %vm1935, %vm1246
    %vm1940 = vmand %vm1936, %vm1096
    %vm1941 = vmand %vm1937, %vm1097
    %vm1942 = vmand %vm1938, %vm1098
    %vm1943 = vmand %vm1939, %vm1099
    %vm1944 = vmand %vm1940, %vm1104
    %vm1945 = vmand %vm1941, %vm1105
    %vm1946 = vmand %vm1942, %vm1106
    %vm1947 = vmand %vm1943, %vm1107
    %v1948 = vsel %vm1944, 1, 0
    %v1949 = vsel %vm1945, 1, 0
    %v1950 = vsel %vm1946, 1, 0
    %v1951 = vsel %vm1947, 1, 0
    %v1952 = vcvt.s32.f32 %v1948
    %v1953 = vcvt.s32.f32 %v1949
    %v1954 = vcvt.s32.f32 %v1950
    %v1955 = vcvt.s32.f32 %v1951
    %v1956 = vmul.f32 %v1233, %v1952
    %v1957 = vmul.f32 %v1232, %v1953
    %v1958 = vmul.f32 %v1231, %v1954
    %v1959 = vmul.f32 %v1234, %v1955
    %1960 = vst [vmem:[#allocation3 + $0x2a0] sm:$0xff] %v1956
    %1961 = vst [vmem:[#allocation3 + $0x2a8] sm:$0xff] %v1957
    %1962 = vst [vmem:[#allocation3 + $0x2b0] sm:$0xff] %v1958
    %1963 = vst [vmem:[#allocation3 + $0x2b8] sm:$0xff] %v1959
    %vm1964 = vmand %vm1936, %vm1141
    %vm1965 = vmand %vm1937, %vm1142
    %vm1966 = vmand %vm1938, %vm1143
    %vm1967 = vmand %vm1939, %vm1144
    %vm1968 = vmand %vm1964, %vm1149
    %vm1969 = vmand %vm1965, %vm1150
    %vm1970 = vmand %vm1966, %vm1151
    %vm1971 = vmand %vm1967, %vm1152
    %v1972 = vsel %vm1968, 1, 0
    %v1973 = vsel %vm1969, 1, 0
    %v1974 = vsel %vm1970, 1, 0
    %v1975 = vsel %vm1971, 1, 0
    %v1976 = vcvt.s32.f32 %v1972
    %v1977 = vcvt.s32.f32 %v1973
    %v1978 = vcvt.s32.f32 %v1974
    %v1979 = vcvt.s32.f32 %v1975
    %v1980 = vmul.f32 %v1286, %v1976
    %v1981 = vmul.f32 %v1285, %v1977
    %v1982 = vmul.f32 %v1284, %v1978
    %v1983 = vmul.f32 %v1287, %v1979
    %1984 = vst [vmem:[#allocation3 + $0x2c0] sm:$0xff] %v1980
    %1985 = vst [vmem:[#allocation3 + $0x2c8] sm:$0xff] %v1981
    %1986 = vst [vmem:[#allocation3 + $0x2d0] sm:$0xff] %v1982
    %1987 = vst [vmem:[#allocation3 + $0x2d8] sm:$0xff] %v1983
    %vm1988 = vmand %vm1936, %vm1190
    %vm1989 = vmand %vm1937, %vm1191
    %vm1990 = vmand %vm1938, %vm1192
    %vm1991 = vmand %vm1939, %vm1193
    %vm1992 = vmand %vm1988, %vm1198
    %vm1993 = vmand %vm1989, %vm1199
    %vm1994 = vmand %vm1990, %vm1200
    %vm1995 = vmand %vm1991, %vm1201
    %v1996 = vsel %vm1992, 1, 0
    %v1997 = vsel %vm1993, 1, 0
    %v1998 = vsel %vm1994, 1, 0
    %v1999 = vsel %vm1995, 1, 0
    %v2000 = vcvt.s32.f32 %v1996
    %v2001 = vcvt.s32.f32 %v1997
    %v2002 = vcvt.s32.f32 %v1998
    %v2003 = vcvt.s32.f32 %v1999
    %v2004 = vmul.f32 %v1323, %v2000
    %v2005 = vmul.f32 %v1322, %v2001
    %v2006 = vmul.f32 %v1321, %v2002
    %v2007 = vmul.f32 %v1324, %v2003
    %2008 = vst [vmem:[#allocation3 + $0x2e0] sm:$0xff] %v2004
    %2009 = vst [vmem:[#allocation3 + $0x2e8] sm:$0xff] %v2005
    %2010 = vst [vmem:[#allocation3 + $0x2f0] sm:$0xff] %v2006
    %2011 = vst [vmem:[#allocation3 + $0x2f8] sm:$0xff] %v2007
    %vm2012 = vmand %vm1848, %vm1366
    %vm2013 = vmand %vm1849, %vm1367
    %vm2014 = vmand %vm1850, %vm1368
    %vm2015 = vmand %vm1851, %vm1369
    %vm2016 = vmand %vm2012, %vm1374
    %vm2017 = vmand %vm2013, %vm1375
    %vm2018 = vmand %vm2014, %vm1376
    %vm2019 = vmand %vm2015, %vm1377
    %vm2020 = vmand %vm2016, %vm1096
    %vm2021 = vmand %vm2017, %vm1097
    %vm2022 = vmand %vm2018, %vm1098
    %vm2023 = vmand %vm2019, %vm1099
    %vm2024 = vmand %vm2020, %vm1104
    %vm2025 = vmand %vm2021, %vm1105
    %vm2026 = vmand %vm2022, %vm1106
    %vm2027 = vmand %vm2023, %vm1107
    %v2028 = vsel %vm2024, 1, 0
    %v2029 = vsel %vm2025, 1, 0
    %v2030 = vsel %vm2026, 1, 0
    %v2031 = vsel %vm2027, 1, 0
    %v2032 = vcvt.s32.f32 %v2028
    %v2033 = vcvt.s32.f32 %v2029
    %v2034 = vcvt.s32.f32 %v2030
    %v2035 = vcvt.s32.f32 %v2031
    %v2036 = vmul.f32 %v1360, %v2032
    %v2037 = vmul.f32 %v1359, %v2033
    %v2038 = vmul.f32 %v1358, %v2034
    %v2039 = vmul.f32 %v1361, %v2035
    %2040 = vst [vmem:[#allocation3 + $0x300] sm:$0xff] %v2036
    %2041 = vst [vmem:[#allocation3 + $0x308] sm:$0xff] %v2037
    %2042 = vst [vmem:[#allocation3 + $0x310] sm:$0xff] %v2038
    %2043 = vst [vmem:[#allocation3 + $0x318] sm:$0xff] %v2039
    %vm2044 = vmand %vm2016, %vm1141
    %vm2045 = vmand %vm2017, %vm1142
    %vm2046 = vmand %vm2018, %vm1143
    %vm2047 = vmand %vm2019, %vm1144
    %vm2048 = vmand %vm2044, %vm1149
    %vm2049 = vmand %vm2045, %vm1150
    %vm2050 = vmand %vm2046, %vm1151
    %vm2051 = vmand %vm2047, %vm1152
    %v2052 = vsel %vm2048, 1, 0
    %v2053 = vsel %vm2049, 1, 0
    %v2054 = vsel %vm2050, 1, 0
    %v2055 = vsel %vm2051, 1, 0
    %v2056 = vcvt.s32.f32 %v2052
    %v2057 = vcvt.s32.f32 %v2053
    %v2058 = vcvt.s32.f32 %v2054
    %v2059 = vcvt.s32.f32 %v2055
    %v2060 = vmul.f32 %v1417, %v2056
    %v2061 = vmul.f32 %v1416, %v2057
    %v2062 = vmul.f32 %v1415, %v2058
    %v2063 = vmul.f32 %v1418, %v2059
    %2064 = vst [vmem:[#allocation3 + $0x320] sm:$0xff] %v2060
    %2065 = vst [vmem:[#allocation3 + $0x328] sm:$0xff] %v2061
    %2066 = vst [vmem:[#allocation3 + $0x330] sm:$0xff] %v2062
    %2067 = vst [vmem:[#allocation3 + $0x338] sm:$0xff] %v2063
    %vm2068 = vmand %vm2016, %vm1190
    %vm2069 = vmand %vm2017, %vm1191
    %vm2070 = vmand %vm2018, %vm1192
    %vm2071 = vmand %vm2019, %vm1193
    %vm2072 = vmand %vm2068, %vm1198
    %vm2073 = vmand %vm2069, %vm1199
    %vm2074 = vmand %vm2070, %vm1200
    %vm2075 = vmand %vm2071, %vm1201
    %v2076 = vsel %vm2072, 1, 0
    %v2077 = vsel %vm2073, 1, 0
    %v2078 = vsel %vm2074, 1, 0
    %v2079 = vsel %vm2075, 1, 0
    %v2080 = vcvt.s32.f32 %v2076
    %v2081 = vcvt.s32.f32 %v2077
    %v2082 = vcvt.s32.f32 %v2078
    %v2083 = vcvt.s32.f32 %v2079
    %v2084 = vmul.f32 %v1454, %v2080
    %v2085 = vmul.f32 %v1453, %v2081
    %v2086 = vmul.f32 %v1452, %v2082
    %v2087 = vmul.f32 %v1455, %v2083
    %2088 = vst [vmem:[#allocation3 + $0x340] sm:$0xff] %v2084
    %2089 = vst [vmem:[#allocation3 + $0x348] sm:$0xff] %v2085
    %2090 = vst [vmem:[#allocation3 + $0x350] sm:$0xff] %v2086
    %2091 = vst [vmem:[#allocation3 + $0x358] sm:$0xff] %v2087
    %v2092 = vld [vmem:[%s2] sm:$0xff]
    %v2093 = vld [vmem:[%s2 + $0x8] sm:$0xff]
    %v2094 = vld [vmem:[%s2 + $0x10] sm:$0x3]
    %v2095 = vld [vmem:[%s2 + $0x18] sm:$0x3]
    %v2096 = vld [vmem:[#allocation3] sm:$0xff]
    %v2097 = vld [vmem:[#allocation3 + $0x8] sm:$0xff]
    %v2098 = vld [vmem:[#allocation3 + $0x10] sm:$0xff]
    %v2099 = vld [vmem:[#allocation3 + $0x18] sm:$0xff]
    %v2100 = vld [vmem:[#allocation3 + $0x20] sm:$0xff]
    %v2101 = vld [vmem:[#allocation3 + $0x28] sm:$0xff]
    %v2102 = vld [vmem:[#allocation3 + $0x30] sm:$0xff]
    %v2103 = vld [vmem:[#allocation3 + $0x38] sm:$0xff]
    %v2104 = vld [vmem:[#allocation3 + $0x40] sm:$0xff]
    %v2105 = vld [vmem:[#allocation3 + $0x48] sm:$0xff]
    %v2106 = vld [vmem:[#allocation3 + $0x50] sm:$0xff]
    %v2107 = vld [vmem:[#allocation3 + $0x58] sm:$0xff]
    %v2108 = vld [vmem:[#allocation3 + $0x60] sm:$0xff]
    %v2109 = vld [vmem:[#allocation3 + $0x68] sm:$0xff]
    %v2110 = vld [vmem:[#allocation3 + $0x70] sm:$0xff]
    %v2111 = vld [vmem:[#allocation3 + $0x78] sm:$0xff]
    %v2112 = vld [vmem:[#allocation3 + $0x80] sm:$0xff]
    %v2113 = vld [vmem:[#allocation3 + $0x88] sm:$0xff]
    %v2114 = vld [vmem:[#allocation3 + $0x90] sm:$0xff]
    %v2115 = vld [vmem:[#allocation3 + $0x98] sm:$0xff]
    %v2116 = vld [vmem:[#allocation3 + $0xa0] sm:$0xff]
    %v2117 = vld [vmem:[#allocation3 + $0xa8] sm:$0xff]
    %v2118 = vld [vmem:[#allocation3 + $0xb0] sm:$0xff]
    %v2119 = vld [vmem:[#allocation3 + $0xb8] sm:$0xff]
    %v2120 = vld [vmem:[#allocation3 + $0xc0] sm:$0xff]
    %v2121 = vld [vmem:[#allocation3 + $0xc8] sm:$0xff]
    %v2122 = vld [vmem:[#allocation3 + $0xd0] sm:$0xff]
    %v2123 = vld [vmem:[#allocation3 + $0xd8] sm:$0xff]
    %v2124 = vld [vmem:[#allocation3 + $0xe0] sm:$0xff]
    %v2125 = vld [vmem:[#allocation3 + $0xe8] sm:$0xff]
    %v2126 = vld [vmem:[#allocation3 + $0xf0] sm:$0xff]
    %v2127 = vld [vmem:[#allocation3 + $0xf8] sm:$0xff]
    %v2128 = vld [vmem:[#allocation3 + $0x100] sm:$0xff]
    %v2129 = vld [vmem:[#allocation3 + $0x108] sm:$0xff]
    %v2130 = vld [vmem:[#allocation3 + $0x110] sm:$0xff]
    %v2131 = vld [vmem:[#allocation3 + $0x118] sm:$0xff]
    %v2132 = vld [vmem:[#allocation3 + $0x120] sm:$0xff]
    %v2133 = vld [vmem:[#allocation3 + $0x128] sm:$0xff]
    %v2134 = vld [vmem:[#allocation3 + $0x130] sm:$0xff]
    %v2135 = vld [vmem:[#allocation3 + $0x138] sm:$0xff]
    %v2136 = vld [vmem:[#allocation3 + $0x140] sm:$0xff]
    %v2137 = vld [vmem:[#allocation3 + $0x148] sm:$0xff]
    %v2138 = vld [vmem:[#allocation3 + $0x150] sm:$0xff]
    %v2139 = vld [vmem:[#allocation3 + $0x158] sm:$0xff]
    %v2140 = vld [vmem:[#allocation3 + $0x160] sm:$0xff]
    %v2141 = vld [vmem:[#allocation3 + $0x168] sm:$0xff]
    %v2142 = vld [vmem:[#allocation3 + $0x170] sm:$0xff]
    %v2143 = vld [vmem:[#allocation3 + $0x178] sm:$0xff]
    %v2144 = vld [vmem:[#allocation3 + $0x180] sm:$0xff]
    %v2145 = vld [vmem:[#allocation3 + $0x188] sm:$0xff]
    %v2146 = vld [vmem:[#allocation3 + $0x190] sm:$0xff]
    %v2147 = vld [vmem:[#allocation3 + $0x198] sm:$0xff]
    %v2148 = vld [vmem:[#allocation3 + $0x1a0] sm:$0xff]
    %v2149 = vld [vmem:[#allocation3 + $0x1a8] sm:$0xff]
    %v2150 = vld [vmem:[#allocation3 + $0x1b0] sm:$0xff]
    %v2151 = vld [vmem:[#allocation3 + $0x1b8] sm:$0xff]
    %v2152 = vld [vmem:[#allocation3 + $0x1c0] sm:$0xff]
    %v2153 = vld [vmem:[#allocation3 + $0x1c8] sm:$0xff]
    %v2154 = vld [vmem:[#allocation3 + $0x1d0] sm:$0xff]
    %v2155 = vld [vmem:[#allocation3 + $0x1d8] sm:$0xff]
    %v2156 = vld [vmem:[#allocation3 + $0x1e0] sm:$0xff]
    %v2157 = vld [vmem:[#allocation3 + $0x1e8] sm:$0xff]
    %v2158 = vld [vmem:[#allocation3 + $0x1f0] sm:$0xff]
    %v2159 = vld [vmem:[#allocation3 + $0x1f8] sm:$0xff]
    %v2160 = vld [vmem:[#allocation3 + $0x200] sm:$0xff]
    %v2161 = vld [vmem:[#allocation3 + $0x208] sm:$0xff]
    %v2162 = vld [vmem:[#allocation3 + $0x210] sm:$0xff]
    %v2163 = vld [vmem:[#allocation3 + $0x218] sm:$0xff]
    %v2164 = vld [vmem:[#allocation3 + $0x220] sm:$0xff]
    %v2165 = vld [vmem:[#allocation3 + $0x228] sm:$0xff]
    %v2166 = vld [vmem:[#allocation3 + $0x230] sm:$0xff]
    %v2167 = vld [vmem:[#allocation3 + $0x238] sm:$0xff]
    %v2168 = vld [vmem:[#allocation3 + $0x240] sm:$0xff]
    %v2169 = vld [vmem:[#allocation3 + $0x248] sm:$0xff]
    %v2170 = vld [vmem:[#allocation3 + $0x250] sm:$0xff]
    %v2171 = vld [vmem:[#allocation3 + $0x258] sm:$0xff]
    %v2172 = vld [vmem:[#allocation3 + $0x260] sm:$0xff]
    %v2173 = vld [vmem:[#allocation3 + $0x268] sm:$0xff]
    %v2174 = vld [vmem:[#allocation3 + $0x270] sm:$0xff]
    %v2175 = vld [vmem:[#allocation3 + $0x278] sm:$0xff]
    %v2176 = vld [vmem:[#allocation3 + $0x280] sm:$0xff]
    %v2177 = vld [vmem:[#allocation3 + $0x288] sm:$0xff]
    %v2178 = vld [vmem:[#allocation3 + $0x290] sm:$0xff]
    %v2179 = vld [vmem:[#allocation3 + $0x298] sm:$0xff]
    %v2180 = vld [vmem:[#allocation3 + $0x2a0] sm:$0xff]
    %v2181 = vld [vmem:[#allocation3 + $0x2a8] sm:$0xff]
    %v2182 = vld [vmem:[#allocation3 + $0x2b0] sm:$0xff]
    %v2183 = vld [vmem:[#allocation3 + $0x2b8] sm:$0xff]
    %v2184 = vld [vmem:[#allocation3 + $0x2c0] sm:$0xff]
    %v2185 = vld [vmem:[#allocation3 + $0x2c8] sm:$0xff]
    %v2186 = vld [vmem:[#allocation3 + $0x2d0] sm:$0xff]
    %v2187 = vld [vmem:[#allocation3 + $0x2d8] sm:$0xff]
    %v2188 = vld [vmem:[#allocation3 + $0x2e0] sm:$0xff]
    %v2189 = vld [vmem:[#allocation3 + $0x2e8] sm:$0xff]
    %v2190 = vld [vmem:[#allocation3 + $0x2f0] sm:$0xff]
    %v2191 = vld [vmem:[#allocation3 + $0x2f8] sm:$0xff]
    %v2192 = vld [vmem:[#allocation3 + $0x300] sm:$0xff]
    %v2193 = vld [vmem:[#allocation3 + $0x308] sm:$0xff]
    %v2194 = vld [vmem:[#allocation3 + $0x310] sm:$0xff]
    %v2195 = vld [vmem:[#allocation3 + $0x318] sm:$0xff]
    %v2196 = vld [vmem:[#allocation3 + $0x320] sm:$0xff]
    %v2197 = vld [vmem:[#allocation3 + $0x328] sm:$0xff]
    %v2198 = vld [vmem:[#allocation3 + $0x330] sm:$0xff]
    %v2199 = vld [vmem:[#allocation3 + $0x338] sm:$0xff]
    %v2200 = vld [vmem:[#allocation3 + $0x340] sm:$0xff]
    %v2201 = vld [vmem:[#allocation3 + $0x348] sm:$0xff]
    %v2202 = vld [vmem:[#allocation3 + $0x350] sm:$0xff]
    %v2203 = vld [vmem:[#allocation3 + $0x358] sm:$0xff]
    %vm2204 = vcmask 719872
    %v2206 = vsel %vm2204, %v2093, 0
    %v2209 = vsel %vm2204, %v2095, 0
    %2211 = vmatprep.subr.mxu0 %v2157
    %2212 = vmatpush1.msra.mxu0 %v2156
    %2213 = vmatprep.subr.mxu0 %v2153
    %2214 = vmatpush1.msra.mxu0 %v2152
    %2215 = vmatprep.subr.mxu0 %v2149
    %2216 = vmatpush1.msra.mxu0 %v2148
    %2217 = vmatprep.subr.mxu0 %v2145
    %2218 = vmatpush1.msra.mxu0 %v2144
    %2219 = vmatprep.subr.mxu0 %v2141
    %2220 = vmatpush1.msra.mxu0 %v2140
    %2221 = vmatprep.subr.mxu0 %v2137
    %2222 = vmatpush1.msra.mxu0 %v2136
    %2223 = vmatprep.subr.mxu0 %v2133
    %2224 = vmatpush1.msra.mxu0 %v2132
    %2225 = vmatprep.subr.mxu0 %v2129
    %2226 = vmatpush1.msra.mxu0 %v2128
    %2227 = vmatprep.subr.mxu0 %v2125
    %2228 = vmatpush1.msra.mxu0 %v2124
    %2229 = vmatprep.subr.mxu0 %v2121
    %2230 = vmatpush1.msra.mxu0 %v2120
    %2231 = vmatprep.subr.mxu0 %v2117
    %2232 = vmatpush1.msra.mxu0 %v2116
    %2233 = vmatprep.subr.mxu0 %v2113
    %2234 = vmatpush1.msra.mxu0 %v2112
    %2235 = vmatprep.subr.mxu0 %v2109
    %2236 = vmatpush1.msra.mxu0 %v2108
    %2237 = vmatprep.subr.mxu0 %v2105
    %2238 = vmatpush1.msra.mxu0 %v2104
    %2239 = vmatprep.subr.mxu0 %v2101
    %2240 = vmatpush1.msra.mxu0 %v2100
    %2241 = vmatprep.subr.mxu0 %v2097
    %2242 = vmatpush1.msra.mxu0 %v2096
    %2243 = vmatprep.subr.mxu0 0.0
    %2244 = vmatpush2.msra.mxu0 0.0
    %2245 = vmatprep.subr.mxu0 0.0
    %2246 = vmatpush2.msra.mxu0 0.0
    %2247 = vmatprep.subr.mxu0 0.0
    %2248 = vmatpush2.msra.mxu0 0.0
    %2249 = vmatprep.subr.mxu0 0.0
    %2250 = vmatpush2.msra.mxu0 0.0
    %2251 = vmatprep.subr.mxu0 0.0
    %2252 = vmatpush2.msra.mxu0 0.0
    %2253 = vmatprep.subr.mxu0 %v2201
    %2254 = vmatpush2.msra.mxu0 %v2200
    %2255 = vmatprep.subr.mxu0 %v2197
    %2256 = vmatpush2.msra.mxu0 %v2196
    %2257 = vmatprep.subr.mxu0 %v2193
    %2258 = vmatpush2.msra.mxu0 %v2192
    %2259 = vmatprep.subr.mxu0 %v2189
    %2260 = vmatpush2.msra.mxu0 %v2188
    %2261 = vmatprep.subr.mxu0 %v2185
    %2262 = vmatpush2.msra.mxu0 %v2184
    %2263 = vmatprep.subr.mxu0 %v2181
    %2264 = vmatpush2.msra.mxu0 %v2180
    %2265 = vmatprep.subr.mxu0 %v2177
    %2266 = vmatpush2.msra.mxu0 %v2176
    %2267 = vmatprep.subr.mxu0 %v2173
    %2268 = vmatpush2.msra.mxu0 %v2172
    %2269 = vmatprep.subr.mxu0 %v2169
    %2270 = vmatpush2.msra.mxu0 %v2168
    %2271 = vmatprep.subr.mxu0 %v2165
    %2272 = vmatpush2.msra.mxu0 %v2164
    %2273 = vmatprep.subr.mxu0 %v2161
    %2274 = vmatpush2.msra.mxu0 %v2160
    %2275 = vmatprep.mubr.f32.mxu0 %v2206
    %2276 = vmatmul.mubr.f32.gmra.mxu0 %v2092
    %v2277 = vpop.f32.mrf.mxu0
    %v2278 = vadd.f32 0.0, %v2277
    %v2279 = vpop.f32.mrf.mxu0
    %v2280 = vadd.f32 0.0, %v2279
    %2281 = vmatprep.mubr.f32.mxu0 %v2209
    %2282 = vmatmul.mubr.f32.gmra.mxu0 %v2094
    %v2283 = vpop.f32.mrf.mxu0
    %v2284 = vadd.f32 0.0, %v2283
    %v2285 = vpop.f32.mrf.mxu0
    %v2286 = vadd.f32 0.0, %v2285
    %2287 = vdwg.mxu0
    %2288 = vmatprep.subr.mxu0 %v2159
    %2289 = vmatpush1.msra.mxu0 %v2158
    %2290 = vmatprep.subr.mxu0 %v2155
    %2291 = vmatpush1.msra.mxu0 %v2154
    %2292 = vmatprep.subr.mxu0 %v2151
    %2293 = vmatpush1.msra.mxu0 %v2150
    %2294 = vmatprep.subr.mxu0 %v2147
    %2295 = vmatpush1.msra.mxu0 %v2146
    %2296 = vmatprep.subr.mxu0 %v2143
    %2297 = vmatpush1.msra.mxu0 %v2142
    %2298 = vmatprep.subr.mxu0 %v2139
    %2299 = vmatpush1.msra.mxu0 %v2138
    %2300 = vmatprep.subr.mxu0 %v2135
    %2301 = vmatpush1.msra.mxu0 %v2134
    %2302 = vmatprep.subr.mxu0 %v2131
    %2303 = vmatpush1.msra.mxu0 %v2130
    %2304 = vmatprep.subr.mxu0 %v2127
    %2305 = vmatpush1.msra.mxu0 %v2126
    %2306 = vmatprep.subr.mxu0 %v2123
    %2307 = vmatpush1.msra.mxu0 %v2122
    %2308 = vmatprep.subr.mxu0 %v2119
    %2309 = vmatpush1.msra.mxu0 %v2118
    %2310 = vmatprep.subr.mxu0 %v2115
    %2311 = vmatpush1.msra.mxu0 %v2114
    %2312 = vmatprep.subr.mxu0 %v2111
    %2313 = vmatpush1.msra.mxu0 %v2110
    %2314 = vmatprep.subr.mxu0 %v2107
    %2315 = vmatpush1.msra.mxu0 %v2106
    %2316 = vmatprep.subr.mxu0 %v2103
    %2317 = vmatpush1.msra.mxu0 %v2102
    %2318 = vmatprep.subr.mxu0 %v2099
    %2319 = vmatpush1.msra.mxu0 %v2098
    %2320 = vmatprep.subr.mxu0 0.0
    %2321 = vmatpush2.msra.mxu0 0.0
    %2322 = vmatprep.subr.mxu0 0.0
    %2323 = vmatpush2.msra.mxu0 0.0
    %2324 = vmatprep.subr.mxu0 0.0
    %2325 = vmatpush2.msra.mxu0 0.0
    %2326 = vmatprep.subr.mxu0 0.0
    %2327 = vmatpush2.msra.mxu0 0.0
    %2328 = vmatprep.subr.mxu0 0.0
    %2329 = vmatpush2.msra.mxu0 0.0
    %2330 = vmatprep.subr.mxu0 %v2203
    %2331 = vmatpush2.msra.mxu0 %v2202
    %2332 = vmatprep.subr.mxu0 %v2199
    %2333 = vmatpush2.msra.mxu0 %v2198
    %2334 = vmatprep.subr.mxu0 %v2195
    %2335 = vmatpush2.msra.mxu0 %v2194
    %2336 = vmatprep.subr.mxu0 %v2191
    %2337 = vmatpush2.msra.mxu0 %v2190
    %2338 = vmatprep.subr.mxu0 %v2187
    %2339 = vmatpush2.msra.mxu0 %v2186
    %2340 = vmatprep.subr.mxu0 %v2183
    %2341 = vmatpush2.msra.mxu0 %v2182
    %2342 = vmatprep.subr.mxu0 %v2179
    %2343 = vmatpush2.msra.mxu0 %v2178
    %2344 = vmatprep.subr.mxu0 %v2175
    %2345 = vmatpush2.msra.mxu0 %v2174
    %2346 = vmatprep.subr.mxu0 %v2171
    %2347 = vmatpush2.msra.mxu0 %v2170
    %2348 = vmatprep.subr.mxu0 %v2167
    %2349 = vmatpush2.msra.mxu0 %v2166
    %2350 = vmatprep.subr.mxu0 %v2163
    %2351 = vmatpush2.msra.mxu0 %v2162
    %2352 = vmatprep.mubr.f32.mxu0 %v2206
    %2353 = vmatmul.mubr.f32.gmra.mxu0 %v2092
    %v2354 = vpop.f32.mrf.mxu0
    %v2355 = vadd.f32 0.0, %v2354
    %v2356 = vpop.f32.mrf.mxu0
    %v2357 = vadd.f32 0.0, %v2356
    %2358 = vmatprep.mubr.f32.mxu0 %v2209
    %2359 = vmatmul.mubr.f32.gmra.mxu0 %v2094
    %v2360 = vpop.f32.mrf.mxu0
    %v2361 = vadd.f32 0.0, %v2360
    %v2362 = vpop.f32.mrf.mxu0
    %v2363 = vadd.f32 0.0, %v2362
    %2364 = vdwg.mxu0
    %v2365 = vadd.f32 %v2278, %v2280
    %v2366 = vadd.f32 %v2365, %v2355
    %v2367 = vadd.f32 %v2366, %v2357
    %2368 = vadd.xlane.f32.xlu0 %v2367
    %v2369 = vpop.xlane.xlu0 %2368
    %v2370 = vsel %vm90, %v2284, 0.0
    %v2371 = vsel %vm90, %v2286, 0.0
    %v2372 = vadd.f32 %v2370, %v2371
    %v2373 = vsel %vm90, %v2361, 0.0
    %v2374 = vadd.f32 %v2372, %v2373
    %v2375 = vsel %vm90, %v2363, 0.0
    %v2376 = vadd.f32 %v2374, %v2375
    %2377 = vadd.xlane.f32.xlu0 %v2376
    %v2378 = vpop.xlane.xlu0 %2377
    %v2379 = vmul.f32 %v2369, 0.001953125
    %v2380 = vmul.f32 %v2378, 0.001953125
    %v2381 = vsub.f32 %v2278, %v2379
    %v2382 = vsub.f32 %v2280, %v2379
    %v2383 = vsub.f32 %v2355, %v2379
    %v2384 = vsub.f32 %v2357, %v2379
    %v2385 = vsub.f32 %v2284, %v2380
    %v2386 = vsub.f32 %v2286, %v2380
    %v2387 = vsub.f32 %v2361, %v2380
    %v2388 = vsub.f32 %v2363, %v2380
    %v2389 = vmul.f32 %v2381, %v2381
    %v2390 = vmul.f32 %v2382, %v2382
    %v2391 = vmul.f32 %v2383, %v2383
    %v2392 = vmul.f32 %v2384, %v2384
    %v2393 = vmul.f32 %v2385, %v2385
    %v2394 = vmul.f32 %v2386, %v2386
    %v2395 = vmul.f32 %v2387, %v2387
    %v2396 = vmul.f32 %v2388, %v2388
    %v2397 = vadd.f32 %v2389, %v2390
    %v2398 = vadd.f32 %v2397, %v2391
    %v2399 = vadd.f32 %v2398, %v2392
    %2400 = vadd.xlane.f32.xlu0 %v2399
    %v2401 = vpop.xlane.xlu0 %2400
    %v2402 = vsel %vm90, %v2393, 0.0
    %v2403 = vsel %vm90, %v2394, 0.0
    %v2404 = vadd.f32 %v2402, %v2403
    %v2405 = vsel %vm90, %v2395, 0.0
    %v2406 = vadd.f32 %v2404, %v2405
    %v2407 = vsel %vm90, %v2396, 0.0
    %v2408 = vadd.f32 %v2406, %v2407
    %2409 = vadd.xlane.f32.xlu0 %v2408
    %v2410 = vpop.xlane.xlu0 %2409
    %v2411 = vmul.f32 %v2401, 0.001953125
    %v2412 = vmul.f32 %v2410, 0.001953125
    %v2413 = vld [vmem:[%s4] sm:$0xff]
    %v2414 = vld [vmem:[%s4 + $0x8] sm:$0x3]
    %v2415 = vadd.f32 %v2411, 1e-05
    %v2416 = vadd.f32 %v2412, 1e-05
    %v2417 = vrsqrt.pop %v2415
    %v2418 = vrsqrt.pop %v2416
    %v2419 = vmul.f32 %v2413, %v2417
    %v2420 = vmul.f32 %v2414, %v2418
    %2422 = vset.pattern.permute.xlu0 0
    %2423 = vperm.xlu0 %2422, %v2419
    %v2424 = vpop.permute.xlu0 %2423
    %2427 = vset.pattern.permute.xlu0 0
    %2428 = vperm.xlu0 %2427, %v2420
    %v2429 = vpop.permute.xlu0 %2428
    %v2431 = vmul.f32 %v2381, %v2424
    %v2432 = vmul.f32 %v2382, %v2424
    %v2433 = vmul.f32 %v2383, %v2424
    %v2434 = vmul.f32 %v2384, %v2424
    %v2435 = vmul.f32 %v2385, %v2429
    %v2436 = vmul.f32 %v2386, %v2429
    %v2437 = vmul.f32 %v2387, %v2429
    %v2438 = vmul.f32 %v2388, %v2429
    %2440 = vset.pattern.permute.xlu0 1
    %2441 = vperm.xlu0 %2440, %v2413
    %v2442 = vpop.permute.xlu0 %2441
    %2445 = vset.pattern.permute.xlu0 1
    %2446 = vperm.xlu0 %2445, %v2414
    %v2447 = vpop.permute.xlu0 %2446
    %v2449 = vadd.f32 %v2431, %v2442
    %v2450 = vadd.f32 %v2432, %v2442
    %v2451 = vadd.f32 %v2433, %v2442
    %v2452 = vadd.f32 %v2434, %v2442
    %v2453 = vadd.f32 %v2435, %v2447
    %v2454 = vadd.f32 %v2436, %v2447
    %v2455 = vadd.f32 %v2437, %v2447
    %v2456 = vadd.f32 %v2438, %v2447
    %v2457 = vmax.f32 %v2449, 0.0
    %v2458 = vmax.f32 %v2450, 0.0
    %v2459 = vmax.f32 %v2451, 0.0
    %v2460 = vmax.f32 %v2452, 0.0
    %v2461 = vxor.u32 %v2453, 2147483648
    %v2462 = vxor.u32 %v2454, 2147483648
    %v2463 = vxor.u32 %v2455, 2147483648
    %v2464 = vxor.u32 %v2456, 2147483648
    %v2465 = vmul.f32 %v2461, 1.442695
    %v2466 = vpow.pop %v2465
    %v2467 = vmul.f32 %v2462, 1.442695
    %v2468 = vpow.pop %v2467
    %v2469 = vmul.f32 %v2463, 1.442695
    %v2470 = vpow.pop %v2469
    %v2471 = vmul.f32 %v2464, 1.442695
    %v2472 = vpow.pop %v2471
    %v2473 = vadd.f32 %v2466, 1.0
    %v2474 = vadd.f32 %v2468, 1.0
    %v2475 = vadd.f32 %v2470, 1.0
    %v2476 = vadd.f32 %v2472, 1.0
    %v2477 = vrcp.pop %v2473
    %v2478 = vmul.f32 1.0, %v2477
    %v2479 = vrcp.pop %v2474
    %v2480 = vmul.f32 1.0, %v2479
    %v2481 = vrcp.pop %v2475
    %v2482 = vmul.f32 1.0, %v2481
    %v2483 = vrcp.pop %v2476
    %v2484 = vmul.f32 1.0, %v2483
    %v2485 = vlaneseq
    %v2486 = vshrl.u32 %v2485, 7
    %v2487 = vsub.s32 0, %v2486
    %v2488 = vrot.slane %v2478, %v2487
    %v2489 = vlaneseq
    %v2490 = vshrl.u32 %v2489, 7
    %v2491 = vsub.s32 0, %v2490
    %v2492 = vrot.slane %v2480, %v2491
    %v2493 = vlaneseq
    %v2494 = vshrl.u32 %v2493, 7
    %v2495 = vsub.s32 0, %v2494
    %v2496 = vrot.slane %v2482, %v2495
    %v2497 = vlaneseq
    %v2498 = vshrl.u32 %v2497, 7
    %v2499 = vsub.s32 0, %v2498
    %v2500 = vrot.slane %v2484, %v2499
    %v2501 = vmul.f32 %v2449, %v2488
    %v2502 = vmul.f32 %v2450, %v2492
    %v2503 = vmul.f32 %v2451, %v2496
    %v2504 = vmul.f32 %v2452, %v2500
    %v2505 = vlaneseq
    %v2506 = vshrl.u32 %v2505, 7
    %v2507 = vsub.s32 1, %v2506
    %v2508 = vrot.slane %v2478, %v2507
    %v2509 = vlaneseq
    %v2510 = vshrl.u32 %v2509, 7
    %v2511 = vsub.s32 1, %v2510
    %v2512 = vrot.slane %v2480, %v2511
    %v2513 = vlaneseq
    %v2514 = vshrl.u32 %v2513, 7
    %v2515 = vsub.s32 1, %v2514
    %v2516 = vrot.slane %v2482, %v2515
    %v2517 = vlaneseq
    %v2518 = vshrl.u32 %v2517, 7
    %v2519 = vsub.s32 1, %v2518
    %v2520 = vrot.slane %v2484, %v2519
    %v2521 = vmul.f32 %v2449, %v2508
    %v2522 = vmul.f32 %v2450, %v2512
    %v2523 = vmul.f32 %v2451, %v2516
    %v2524 = vmul.f32 %v2452, %v2520
    %v2525 = vsel %vm90, %v2457, %v2501
    %v2526 = vsel %vm90, %v2458, %v2502
    %v2527 = vsel %vm90, %v2459, %v2503
    %v2528 = vsel %vm90, %v2460, %v2504
    %v2529 = vsel %vm788, %v2525, %v2521
    %v2530 = vsel %vm788, %v2526, %v2522
    %v2531 = vsel %vm788, %v2527, %v2523
    %v2532 = vsel %vm788, %v2528, %v2524
    %2533 = vrot.lane.b32.xlu0 %v2529, 73
    %v2534 = vpop.permute.xlu0 %2533
    %2535 = vrot.lane.b32.xlu0 %v2530, 73
    %v2536 = vpop.permute.xlu0 %2535
    %2537 = vrot.lane.b32.xlu0 %v2531, 73
    %v2538 = vpop.permute.xlu0 %2537
    %2539 = vrot.lane.b32.xlu0 %v2532, 73
    %v2540 = vpop.permute.xlu0 %2539
    %v2541 = vsel %vm1051, %v2538, %v2540
    %v2542 = vsel %vm1051, %v2536, %v2538
    %v2543 = vsel %vm1051, %v2534, %v2536
    %v2544 = vsel %vm1051, %v2540, %v2534
    %v2545 = vmul.f32 %v2544, %v1116
    %v2546 = vmul.f32 %v2543, %v1117
    %v2547 = vmul.f32 %v2542, %v1118
    %v2548 = vmul.f32 %v2541, %v1119
    %2549 = vst [vmem:[#allocation3] sm:$0xff] %v2545
    %2550 = vst [vmem:[#allocation3 + $0x8] sm:$0xff] %v2546
    %2551 = vst [vmem:[#allocation3 + $0x10] sm:$0xff] %v2547
    %2552 = vst [vmem:[#allocation3 + $0x18] sm:$0xff] %v2548
    %2553 = vrot.lane.b32.xlu0 %v2529, 72
    %v2554 = vpop.permute.xlu0 %2553
    %2555 = vrot.lane.b32.xlu0 %v2530, 72
    %v2556 = vpop.permute.xlu0 %2555
    %2557 = vrot.lane.b32.xlu0 %v2531, 72
    %v2558 = vpop.permute.xlu0 %2557
    %2559 = vrot.lane.b32.xlu0 %v2532, 72
    %v2560 = vpop.permute.xlu0 %2559
    %v2561 = vsel %vm1136, %v2558, %v2560
    %v2562 = vsel %vm1136, %v2556, %v2558
    %v2563 = vsel %vm1136, %v2554, %v2556
    %v2564 = vsel %vm1136, %v2560, %v2554
    %v2565 = vmul.f32 %v2564, %v1161
    %v2566 = vmul.f32 %v2563, %v1162
    %v2567 = vmul.f32 %v2562, %v1163
    %v2568 = vmul.f32 %v2561, %v1164
    %2569 = vst [vmem:[#allocation3 + $0x20] sm:$0xff] %v2565
    %2570 = vst [vmem:[#allocation3 + $0x28] sm:$0xff] %v2566
    %2571 = vst [vmem:[#allocation3 + $0x30] sm:$0xff] %v2567
    %2572 = vst [vmem:[#allocation3 + $0x38] sm:$0xff] %v2568
    %2573 = vrot.lane.b32.xlu0 %v2529, 71
    %v2574 = vpop.permute.xlu0 %2573
    %2575 = vrot.lane.b32.xlu0 %v2530, 71
    %v2576 = vpop.permute.xlu0 %2575
    %2577 = vrot.lane.b32.xlu0 %v2531, 71
    %v2578 = vpop.permute.xlu0 %2577
    %2579 = vrot.lane.b32.xlu0 %v2532, 71
    %v2580 = vpop.permute.xlu0 %2579
    %v2581 = vsel %vm1181, %v2578, %v2580
    %v2582 = vsel %vm1181, %v2576, %v2578
    %v2583 = vsel %vm1181, %v2574, %v2576
    %v2584 = vsel %vm1181, %v2580, %v2574
    %v2585 = vmul.f32 %v2584, %v1210
    %v2586 = vmul.f32 %v2583, %v1211
    %v2587 = vmul.f32 %v2582, %v1212
    %v2588 = vmul.f32 %v2581, %v1213
    %2589 = vst [vmem:[#allocation3 + $0x40] sm:$0xff] %v2585
    %2590 = vst [vmem:[#allocation3 + $0x48] sm:$0xff] %v2586
    %2591 = vst [vmem:[#allocation3 + $0x50] sm:$0xff] %v2587
    %2592 = vst [vmem:[#allocation3 + $0x58] sm:$0xff] %v2588
    %2593 = vrot.lane.b32.xlu0 %v2529, 65
    %v2594 = vpop.permute.xlu0 %2593
    %2595 = vrot.lane.b32.xlu0 %v2530, 65
    %v2596 = vpop.permute.xlu0 %2595
    %2597 = vrot.lane.b32.xlu0 %v2531, 65
    %v2598 = vpop.permute.xlu0 %2597
    %2599 = vrot.lane.b32.xlu0 %v2532, 65
    %v2600 = vpop.permute.xlu0 %2599
    %v2601 = vsel %vm1230, %v2598, %v2600
    %v2602 = vsel %vm1230, %v2596, %v2598
    %v2603 = vsel %vm1230, %v2594, %v2596
    %v2604 = vsel %vm1230, %v2600, %v2594
    %v2605 = vmul.f32 %v2604, %v1263
    %v2606 = vmul.f32 %v2603, %v1264
    %v2607 = vmul.f32 %v2602, %v1265
    %v2608 = vmul.f32 %v2601, %v1266
    %2609 = vst [vmem:[#allocation3 + $0x60] sm:$0xff] %v2605
    %2610 = vst [vmem:[#allocation3 + $0x68] sm:$0xff] %v2606
    %2611 = vst [vmem:[#allocation3 + $0x70] sm:$0xff] %v2607
    %2612 = vst [vmem:[#allocation3 + $0x78] sm:$0xff] %v2608
    %2613 = vrot.lane.b32.xlu0 %v2529, 64
    %v2614 = vpop.permute.xlu0 %2613
    %2615 = vrot.lane.b32.xlu0 %v2530, 64
    %v2616 = vpop.permute.xlu0 %2615
    %2617 = vrot.lane.b32.xlu0 %v2531, 64
    %v2618 = vpop.permute.xlu0 %2617
    %2619 = vrot.lane.b32.xlu0 %v2532, 64
    %v2620 = vpop.permute.xlu0 %2619
    %v2621 = vsel %vm1283, %v2618, %v2620
    %v2622 = vsel %vm1283, %v2616, %v2618
    %v2623 = vsel %vm1283, %v2614, %v2616
    %v2624 = vsel %vm1283, %v2620, %v2614
    %v2625 = vmul.f32 %v2624, %v1300
    %v2626 = vmul.f32 %v2623, %v1301
    %v2627 = vmul.f32 %v2622, %v1302
    %v2628 = vmul.f32 %v2621, %v1303
    %2629 = vst [vmem:[#allocation3 + $0x80] sm:$0xff] %v2625
    %2630 = vst [vmem:[#allocation3 + $0x88] sm:$0xff] %v2626
    %2631 = vst [vmem:[#allocation3 + $0x90] sm:$0xff] %v2627
    %2632 = vst [vmem:[#allocation3 + $0x98] sm:$0xff] %v2628
    %2633 = vrot.lane.b32.xlu0 %v2529, 63
    %v2634 = vpop.permute.xlu0 %2633
    %2635 = vrot.lane.b32.xlu0 %v2530, 63
    %v2636 = vpop.permute.xlu0 %2635
    %2637 = vrot.lane.b32.xlu0 %v2531, 63
    %v2638 = vpop.permute.xlu0 %2637
    %2639 = vrot.lane.b32.xlu0 %v2532, 63
    %v2640 = vpop.permute.xlu0 %2639
    %v2641 = vsel %vm1320, %v2638, %v2640
    %v2642 = vsel %vm1320, %v2636, %v2638
    %v2643 = vsel %vm1320, %v2634, %v2636
    %v2644 = vsel %vm1320, %v2640, %v2634
    %v2645 = vmul.f32 %v2644, %v1337
    %v2646 = vmul.f32 %v2643, %v1338
    %v2647 = vmul.f32 %v2642, %v1339
    %v2648 = vmul.f32 %v2641, %v1340
    %2649 = vst [vmem:[#allocation3 + $0xa0] sm:$0xff] %v2645
    %2650 = vst [vmem:[#allocation3 + $0xa8] sm:$0xff] %v2646
    %2651 = vst [vmem:[#allocation3 + $0xb0] sm:$0xff] %v2647
    %2652 = vst [vmem:[#allocation3 + $0xb8] sm:$0xff] %v2648
    %2653 = vrot.lane.b32.xlu0 %v2529, 57
    %v2654 = vpop.permute.xlu0 %2653
    %2655 = vrot.lane.b32.xlu0 %v2530, 57
    %v2656 = vpop.permute.xlu0 %2655
    %2657 = vrot.lane.b32.xlu0 %v2531, 57
    %v2658 = vpop.permute.xlu0 %2657
    %2659 = vrot.lane.b32.xlu0 %v2532, 57
    %v2660 = vpop.permute.xlu0 %2659
    %v2661 = vsel %vm1357, %v2658, %v2660
    %v2662 = vsel %vm1357, %v2656, %v2658
    %v2663 = vsel %vm1357, %v2654, %v2656
    %v2664 = vsel %vm1357, %v2660, %v2654
    %v2665 = vmul.f32 %v2664, %v1394
    %v2666 = vmul.f32 %v2663, %v1395
    %v2667 = vmul.f32 %v2662, %v1396
    %v2668 = vmul.f32 %v2661, %v1397
    %2669 = vst [vmem:[#allocation3 + $0xc0] sm:$0xff] %v2665
    %2670 = vst [vmem:[#allocation3 + $0xc8] sm:$0xff] %v2666
    %2671 = vst [vmem:[#allocation3 + $0xd0] sm:$0xff] %v2667
    %2672 = vst [vmem:[#allocation3 + $0xd8] sm:$0xff] %v2668
    %2673 = vrot.lane.b32.xlu0 %v2529, 56
    %v2674 = vpop.permute.xlu0 %2673
    %2675 = vrot.lane.b32.xlu0 %v2530, 56
    %v2676 = vpop.permute.xlu0 %2675
    %2677 = vrot.lane.b32.xlu0 %v2531, 56
    %v2678 = vpop.permute.xlu0 %2677
    %2679 = vrot.lane.b32.xlu0 %v2532, 56
    %v2680 = vpop.permute.xlu0 %2679
    %v2681 = vsel %vm1414, %v2678, %v2680
    %v2682 = vsel %vm1414, %v2676, %v2678
    %v2683 = vsel %vm1414, %v2674, %v2676
    %v2684 = vsel %vm1414, %v2680, %v2674
    %v2685 = vmul.f32 %v2684, %v1431
    %v2686 = vmul.f32 %v2683, %v1432
    %v2687 = vmul.f32 %v2682, %v1433
    %v2688 = vmul.f32 %v2681, %v1434
    %2689 = vst [vmem:[#allocation3 + $0xe0] sm:$0xff] %v2685
    %2690 = vst [vmem:[#allocation3 + $0xe8] sm:$0xff] %v2686
    %2691 = vst [vmem:[#allocation3 + $0xf0] sm:$0xff] %v2687
    %2692 = vst [vmem:[#allocation3 + $0xf8] sm:$0xff] %v2688
    %2693 = vrot.lane.b32.xlu0 %v2529, 55
    %v2694 = vpop.permute.xlu0 %2693
    %2695 = vrot.lane.b32.xlu0 %v2530, 55
    %v2696 = vpop.permute.xlu0 %2695
    %2697 = vrot.lane.b32.xlu0 %v2531, 55
    %v2698 = vpop.permute.xlu0 %2697
    %2699 = vrot.lane.b32.xlu0 %v2532, 55
    %v2700 = vpop.permute.xlu0 %2699
    %v2701 = vsel %vm1451, %v2698, %v2700
    %v2702 = vsel %vm1451, %v2696, %v2698
    %v2703 = vsel %vm1451, %v2694, %v2696
    %v2704 = vsel %vm1451, %v2700, %v2694
    %v2705 = vmul.f32 %v2704, %v1468
    %v2706 = vmul.f32 %v2703, %v1469
    %v2707 = vmul.f32 %v2702, %v1470
    %v2708 = vmul.f32 %v2701, %v1471
    %2709 = vst [vmem:[#allocation3 + $0x100] sm:$0xff] %v2705
    %2710 = vst [vmem:[#allocation3 + $0x108] sm:$0xff] %v2706
    %2711 = vst [vmem:[#allocation3 + $0x110] sm:$0xff] %v2707
    %2712 = vst [vmem:[#allocation3 + $0x118] sm:$0xff] %v2708
    %2713 = vrot.lane.b32.xlu0 %v2529, 9
    %v2714 = vpop.permute.xlu0 %2713
    %2715 = vrot.lane.b32.xlu0 %v2530, 9
    %v2716 = vpop.permute.xlu0 %2715
    %2717 = vrot.lane.b32.xlu0 %v2531, 9
    %v2718 = vpop.permute.xlu0 %2717
    %2719 = vrot.lane.b32.xlu0 %v2532, 9
    %v2720 = vpop.permute.xlu0 %2719
    %v2721 = vsel %vm1488, %v2718, %v2720
    %v2722 = vsel %vm1488, %v2716, %v2718
    %v2723 = vsel %vm1488, %v2714, %v2716
    %v2724 = vsel %vm1488, %v2720, %v2714
    %v2725 = vmul.f32 %v2724, %v1525
    %v2726 = vmul.f32 %v2723, %v1526
    %v2727 = vmul.f32 %v2722, %v1527
    %v2728 = vmul.f32 %v2721, %v1528
    %2729 = vst [vmem:[#allocation3 + $0x120] sm:$0xff] %v2725
    %2730 = vst [vmem:[#allocation3 + $0x128] sm:$0xff] %v2726
    %2731 = vst [vmem:[#allocation3 + $0x130] sm:$0xff] %v2727
    %2732 = vst [vmem:[#allocation3 + $0x138] sm:$0xff] %v2728
    %2733 = vrot.lane.b32.xlu0 %v2529, 8
    %v2734 = vpop.permute.xlu0 %2733
    %2735 = vrot.lane.b32.xlu0 %v2530, 8
    %v2736 = vpop.permute.xlu0 %2735
    %2737 = vrot.lane.b32.xlu0 %v2531, 8
    %v2738 = vpop.permute.xlu0 %2737
    %2739 = vrot.lane.b32.xlu0 %v2532, 8
    %v2740 = vpop.permute.xlu0 %2739
    %v2741 = vsel %vm1545, %v2738, %v2740
    %v2742 = vsel %vm1545, %v2736, %v2738
    %v2743 = vsel %vm1545, %v2734, %v2736
    %v2744 = vsel %vm1545, %v2740, %v2734
    %v2745 = vmul.f32 %v2744, %v1562
    %v2746 = vmul.f32 %v2743, %v1563
    %v2747 = vmul.f32 %v2742, %v1564
    %v2748 = vmul.f32 %v2741, %v1565
    %2749 = vst [vmem:[#allocation3 + $0x140] sm:$0xff] %v2745
    %2750 = vst [vmem:[#allocation3 + $0x148] sm:$0xff] %v2746
    %2751 = vst [vmem:[#allocation3 + $0x150] sm:$0xff] %v2747
    %2752 = vst [vmem:[#allocation3 + $0x158] sm:$0xff] %v2748
    %2753 = vrot.lane.b32.xlu0 %v2529, 7
    %v2754 = vpop.permute.xlu0 %2753
    %2755 = vrot.lane.b32.xlu0 %v2530, 7
    %v2756 = vpop.permute.xlu0 %2755
    %2757 = vrot.lane.b32.xlu0 %v2531, 7
    %v2758 = vpop.permute.xlu0 %2757
    %2759 = vrot.lane.b32.xlu0 %v2532, 7
    %v2760 = vpop.permute.xlu0 %2759
    %v2761 = vsel %vm1582, %v2758, %v2760
    %v2762 = vsel %vm1582, %v2756, %v2758
    %v2763 = vsel %vm1582, %v2754, %v2756
    %v2764 = vsel %vm1582, %v2760, %v2754
    %v2765 = vmul.f32 %v2764, %v1599
    %v2766 = vmul.f32 %v2763, %v1600
    %v2767 = vmul.f32 %v2762, %v1601
    %v2768 = vmul.f32 %v2761, %v1602
    %2769 = vst [vmem:[#allocation3 + $0x160] sm:$0xff] %v2765
    %2770 = vst [vmem:[#allocation3 + $0x168] sm:$0xff] %v2766
    %2771 = vst [vmem:[#allocation3 + $0x170] sm:$0xff] %v2767
    %2772 = vst [vmem:[#allocation3 + $0x178] sm:$0xff] %v2768
    %2773 = vrot.lane.b32.xlu0 %v2529, 1
    %v2774 = vpop.permute.xlu0 %2773
    %2775 = vrot.lane.b32.xlu0 %v2530, 1
    %v2776 = vpop.permute.xlu0 %2775
    %2777 = vrot.lane.b32.xlu0 %v2531, 1
    %v2778 = vpop.permute.xlu0 %2777
    %2779 = vrot.lane.b32.xlu0 %v2532, 1
    %v2780 = vpop.permute.xlu0 %2779
    %v2781 = vsel %vm1619, %v2778, %v2780
    %v2782 = vsel %vm1619, %v2776, %v2778
    %v2783 = vsel %vm1619, %v2774, %v2776
    %v2784 = vsel %vm1619, %v2780, %v2774
    %v2785 = vmul.f32 %v2784, %v1644
    %v2786 = vmul.f32 %v2783, %v1645
    %v2787 = vmul.f32 %v2782, %v1646
    %v2788 = vmul.f32 %v2781, %v1647
    %2789 = vst [vmem:[#allocation3 + $0x180] sm:$0xff] %v2785
    %2790 = vst [vmem:[#allocation3 + $0x188] sm:$0xff] %v2786
    %2791 = vst [vmem:[#allocation3 + $0x190] sm:$0xff] %v2787
    %2792 = vst [vmem:[#allocation3 + $0x198] sm:$0xff] %v2788
    %v2793 = vmul.f32 %v2529, %v1668
    %v2794 = vmul.f32 %v2530, %v1669
    %v2795 = vmul.f32 %v2531, %v1670
    %v2796 = vmul.f32 %v2532, %v1671
    %2797 = vst [vmem:[#allocation3 + $0x1a0] sm:$0xff] %v2793
    %2798 = vst [vmem:[#allocation3 + $0x1a8] sm:$0xff] %v2794
    %2799 = vst [vmem:[#allocation3 + $0x1b0] sm:$0xff] %v2795
    %2800 = vst [vmem:[#allocation3 + $0x1b8] sm:$0xff] %v2796
    %2801 = vrot.lane.b32.xlu0 %v2529, 127
    %v2802 = vpop.permute.xlu0 %2801
    %2803 = vrot.lane.b32.xlu0 %v2530, 127
    %v2804 = vpop.permute.xlu0 %2803
    %2805 = vrot.lane.b32.xlu0 %v2531, 127
    %v2806 = vpop.permute.xlu0 %2805
    %2807 = vrot.lane.b32.xlu0 %v2532, 127
    %v2808 = vpop.permute.xlu0 %2807
    %v2809 = vsel %vm1688, %v2806, %v2808
    %v2810 = vsel %vm1688, %v2804, %v2806
    %v2811 = vsel %vm1688, %v2802, %v2804
    %v2812 = vsel %vm1688, %v2808, %v2802
    %v2813 = vmul.f32 %v2811, %v1705
    %v2814 = vmul.f32 %v2810, %v1706
    %v2815 = vmul.f32 %v2809, %v1707
    %v2816 = vmul.f32 %v2812, %v1708
    %2817 = vst [vmem:[#allocation3 + $0x1c0] sm:$0xff] %v2813
    %2818 = vst [vmem:[#allocation3 + $0x1c8] sm:$0xff] %v2814
    %2819 = vst [vmem:[#allocation3 + $0x1d0] sm:$0xff] %v2815
    %2820 = vst [vmem:[#allocation3 + $0x1d8] sm:$0xff] %v2816
    %2821 = vrot.lane.b32.xlu0 %v2529, 121
    %v2822 = vpop.permute.xlu0 %2821
    %2823 = vrot.lane.b32.xlu0 %v2530, 121
    %v2824 = vpop.permute.xlu0 %2823
    %2825 = vrot.lane.b32.xlu0 %v2531, 121
    %v2826 = vpop.permute.xlu0 %2825
    %2827 = vrot.lane.b32.xlu0 %v2532, 121
    %v2828 = vpop.permute.xlu0 %2827
    %v2829 = vsel %vm1725, %v2826, %v2828
    %v2830 = vsel %vm1725, %v2824, %v2826
    %v2831 = vsel %vm1725, %v2822, %v2824
    %v2832 = vsel %vm1725, %v2828, %v2822
    %v2833 = vmul.f32 %v2831, %v1750
    %v2834 = vmul.f32 %v2830, %v1751
    %v2835 = vmul.f32 %v2829, %v1752
    %v2836 = vmul.f32 %v2832, %v1753
    %2837 = vst [vmem:[#allocation3 + $0x1e0] sm:$0xff] %v2833
    %2838 = vst [vmem:[#allocation3 + $0x1e8] sm:$0xff] %v2834
    %2839 = vst [vmem:[#allocation3 + $0x1f0] sm:$0xff] %v2835
    %2840 = vst [vmem:[#allocation3 + $0x1f8] sm:$0xff] %v2836
    %2841 = vrot.lane.b32.xlu0 %v2529, 120
    %v2842 = vpop.permute.xlu0 %2841
    %2843 = vrot.lane.b32.xlu0 %v2530, 120
    %v2844 = vpop.permute.xlu0 %2843
    %2845 = vrot.lane.b32.xlu0 %v2531, 120
    %v2846 = vpop.permute.xlu0 %2845
    %2847 = vrot.lane.b32.xlu0 %v2532, 120
    %v2848 = vpop.permute.xlu0 %2847
    %v2849 = vsel %vm1770, %v2846, %v2848
    %v2850 = vsel %vm1770, %v2844, %v2846
    %v2851 = vsel %vm1770, %v2842, %v2844
    %v2852 = vsel %vm1770, %v2848, %v2842
    %v2853 = vmul.f32 %v2851, %v1787
    %v2854 = vmul.f32 %v2850, %v1788
    %v2855 = vmul.f32 %v2849, %v1789
    %v2856 = vmul.f32 %v2852, %v1790
    %2857 = vst [vmem:[#allocation3 + $0x200] sm:$0xff] %v2853
    %2858 = vst [vmem:[#allocation3 + $0x208] sm:$0xff] %v2854
    %2859 = vst [vmem:[#allocation3 + $0x210] sm:$0xff] %v2855
    %2860 = vst [vmem:[#allocation3 + $0x218] sm:$0xff] %v2856
    %2861 = vrot.lane.b32.xlu0 %v2529, 119
    %v2862 = vpop.permute.xlu0 %2861
    %2863 = vrot.lane.b32.xlu0 %v2530, 119
    %v2864 = vpop.permute.xlu0 %2863
    %2865 = vrot.lane.b32.xlu0 %v2531, 119
    %v2866 = vpop.permute.xlu0 %2865
    %2867 = vrot.lane.b32.xlu0 %v2532, 119
    %v2868 = vpop.permute.xlu0 %2867
    %v2869 = vsel %vm1807, %v2866, %v2868
    %v2870 = vsel %vm1807, %v2864, %v2866
    %v2871 = vsel %vm1807, %v2862, %v2864
    %v2872 = vsel %vm1807, %v2868, %v2862
    %v2873 = vmul.f32 %v2871, %v1824
    %v2874 = vmul.f32 %v2870, %v1825
    %v2875 = vmul.f32 %v2869, %v1826
    %v2876 = vmul.f32 %v2872, %v1827
    %2877 = vst [vmem:[#allocation3 + $0x220] sm:$0xff] %v2873
    %2878 = vst [vmem:[#allocation3 + $0x228] sm:$0xff] %v2874
    %2879 = vst [vmem:[#allocation3 + $0x230] sm:$0xff] %v2875
    %2880 = vst [vmem:[#allocation3 + $0x238] sm:$0xff] %v2876
    %v2881 = vmul.f32 %v2543, %v1872
    %v2882 = vmul.f32 %v2542, %v1873
    %v2883 = vmul.f32 %v2541, %v1874
    %v2884 = vmul.f32 %v2544, %v1875
    %2885 = vst [vmem:[#allocation3 + $0x240] sm:$0xff] %v2881
    %2886 = vst [vmem:[#allocation3 + $0x248] sm:$0xff] %v2882
    %2887 = vst [vmem:[#allocation3 + $0x250] sm:$0xff] %v2883
    %2888 = vst [vmem:[#allocation3 + $0x258] sm:$0xff] %v2884
    %v2889 = vmul.f32 %v2563, %v1896
    %v2890 = vmul.f32 %v2562, %v1897
    %v2891 = vmul.f32 %v2561, %v1898
    %v2892 = vmul.f32 %v2564, %v1899
    %2893 = vst [vmem:[#allocation3 + $0x260] sm:$0xff] %v2889
    %2894 = vst [vmem:[#allocation3 + $0x268] sm:$0xff] %v2890
    %2895 = vst [vmem:[#allocation3 + $0x270] sm:$0xff] %v2891
    %2896 = vst [vmem:[#allocation3 + $0x278] sm:$0xff] %v2892
    %v2897 = vmul.f32 %v2583, %v1920
    %v2898 = vmul.f32 %v2582, %v1921
    %v2899 = vmul.f32 %v2581, %v1922
    %v2900 = vmul.f32 %v2584, %v1923
    %2901 = vst [vmem:[#allocation3 + $0x280] sm:$0xff] %v2897
    %2902 = vst [vmem:[#allocation3 + $0x288] sm:$0xff] %v2898
    %2903 = vst [vmem:[#allocation3 + $0x290] sm:$0xff] %v2899
    %2904 = vst [vmem:[#allocation3 + $0x298] sm:$0xff] %v2900
    %v2905 = vmul.f32 %v2603, %v1952
    %v2906 = vmul.f32 %v2602, %v1953
    %v2907 = vmul.f32 %v2601, %v1954
    %v2908 = vmul.f32 %v2604, %v1955
    %2909 = vst [vmem:[#allocation3 + $0x2a0] sm:$0xff] %v2905
    %2910 = vst [vmem:[#allocation3 + $0x2a8] sm:$0xff] %v2906
    %2911 = vst [vmem:[#allocation3 + $0x2b0] sm:$0xff] %v2907
    %2912 = vst [vmem:[#allocation3 + $0x2b8] sm:$0xff] %v2908
    %v2913 = vmul.f32 %v2623, %v1976
    %v2914 = vmul.f32 %v2622, %v1977
    %v2915 = vmul.f32 %v2621, %v1978
    %v2916 = vmul.f32 %v2624, %v1979
    %2917 = vst [vmem:[#allocation3 + $0x2c0] sm:$0xff] %v2913
    %2918 = vst [vmem:[#allocation3 + $0x2c8] sm:$0xff] %v2914
    %2919 = vst [vmem:[#allocation3 + $0x2d0] sm:$0xff] %v2915
    %2920 = vst [vmem:[#allocation3 + $0x2d8] sm:$0xff] %v2916
    %v2921 = vmul.f32 %v2643, %v2000
    %v2922 = vmul.f32 %v2642, %v2001
    %v2923 = vmul.f32 %v2641, %v2002
    %v2924 = vmul.f32 %v2644, %v2003
    %2925 = vst [vmem:[#allocation3 + $0x2e0] sm:$0xff] %v2921
    %2926 = vst [vmem:[#allocation3 + $0x2e8] sm:$0xff] %v2922
    %2927 = vst [vmem:[#allocation3 + $0x2f0] sm:$0xff] %v2923
    %2928 = vst [vmem:[#allocation3 + $0x2f8] sm:$0xff] %v2924
    %v2929 = vmul.f32 %v2663, %v2032
    %v2930 = vmul.f32 %v2662, %v2033
    %v2931 = vmul.f32 %v2661, %v2034
    %v2932 = vmul.f32 %v2664, %v2035
    %2933 = vst [vmem:[#allocation3 + $0x300] sm:$0xff] %v2929
    %2934 = vst [vmem:[#allocation3 + $0x308] sm:$0xff] %v2930
    %2935 = vst [vmem:[#allocation3 + $0x310] sm:$0xff] %v2931
    %2936 = vst [vmem:[#allocation3 + $0x318] sm:$0xff] %v2932
    %v2937 = vmul.f32 %v2683, %v2056
    %v2938 = vmul.f32 %v2682, %v2057
    %v2939 = vmul.f32 %v2681, %v2058
    %v2940 = vmul.f32 %v2684, %v2059
    %2941 = vst [vmem:[#allocation3 + $0x320] sm:$0xff] %v2937
    %2942 = vst [vmem:[#allocation3 + $0x328] sm:$0xff] %v2938
    %2943 = vst [vmem:[#allocation3 + $0x330] sm:$0xff] %v2939
    %2944 = vst [vmem:[#allocation3 + $0x338] sm:$0xff] %v2940
    %v2945 = vmul.f32 %v2703, %v2080
    %v2946 = vmul.f32 %v2702, %v2081
    %v2947 = vmul.f32 %v2701, %v2082
    %v2948 = vmul.f32 %v2704, %v2083
    %2949 = vst [vmem:[#allocation3 + $0x340] sm:$0xff] %v2945
    %2950 = vst [vmem:[#allocation3 + $0x348] sm:$0xff] %v2946
    %2951 = vst [vmem:[#allocation3 + $0x350] sm:$0xff] %v2947
    %2952 = vst [vmem:[#allocation3 + $0x358] sm:$0xff] %v2948
    %v2953 = vld [vmem:[%s3] sm:$0xff]
    %v2954 = vld [vmem:[%s3 + $0x8] sm:$0xff]
    %v2955 = vld [vmem:[%s3 + $0x10] sm:$0x3]
    %v2956 = vld [vmem:[%s3 + $0x18] sm:$0x3]
    %v2957 = vld [vmem:[#allocation3] sm:$0xff]
    %v2958 = vld [vmem:[#allocation3 + $0x8] sm:$0xff]
    %v2959 = vld [vmem:[#allocation3 + $0x10] sm:$0xff]
    %v2960 = vld [vmem:[#allocation3 + $0x18] sm:$0xff]
    %v2961 = vld [vmem:[#allocation3 + $0x20] sm:$0xff]
    %v2962 = vld [vmem:[#allocation3 + $0x28] sm:$0xff]
    %v2963 = vld [vmem:[#allocation3 + $0x30] sm:$0xff]
    %v2964 = vld [vmem:[#allocation3 + $0x38] sm:$0xff]
    %v2965 = vld [vmem:[#allocation3 + $0x40] sm:$0xff]
    %v2966 = vld [vmem:[#allocation3 + $0x48] sm:$0xff]
    %v2967 = vld [vmem:[#allocation3 + $0x50] sm:$0xff]
    %v2968 = vld [vmem:[#allocation3 + $0x58] sm:$0xff]
    %v2969 = vld [vmem:[#allocation3 + $0x60] sm:$0xff]
    %v2970 = vld [vmem:[#allocation3 + $0x68] sm:$0xff]
    %v2971 = vld [vmem:[#allocation3 + $0x70] sm:$0xff]
    %v2972 = vld [vmem:[#allocation3 + $0x78] sm:$0xff]
    %v2973 = vld [vmem:[#allocation3 + $0x80] sm:$0xff]
    %v2974 = vld [vmem:[#allocation3 + $0x88] sm:$0xff]
    %v2975 = vld [vmem:[#allocation3 + $0x90] sm:$0xff]
    %v2976 = vld [vmem:[#allocation3 + $0x98] sm:$0xff]
    %v2977 = vld [vmem:[#allocation3 + $0xa0] sm:$0xff]
    %v2978 = vld [vmem:[#allocation3 + $0xa8] sm:$0xff]
    %v2979 = vld [vmem:[#allocation3 + $0xb0] sm:$0xff]
    %v2980 = vld [vmem:[#allocation3 + $0xb8] sm:$0xff]
    %v2981 = vld [vmem:[#allocation3 + $0xc0] sm:$0xff]
    %v2982 = vld [vmem:[#allocation3 + $0xc8] sm:$0xff]
    %v2983 = vld [vmem:[#allocation3 + $0xd0] sm:$0xff]
    %v2984 = vld [vmem:[#allocation3 + $0xd8] sm:$0xff]
    %v2985 = vld [vmem:[#allocation3 + $0xe0] sm:$0xff]
    %v2986 = vld [vmem:[#allocation3 + $0xe8] sm:$0xff]
    %v2987 = vld [vmem:[#allocation3 + $0xf0] sm:$0xff]
    %v2988 = vld [vmem:[#allocation3 + $0xf8] sm:$0xff]
    %v2989 = vld [vmem:[#allocation3 + $0x100] sm:$0xff]
    %v2990 = vld [vmem:[#allocation3 + $0x108] sm:$0xff]
    %v2991 = vld [vmem:[#allocation3 + $0x110] sm:$0xff]
    %v2992 = vld [vmem:[#allocation3 + $0x118] sm:$0xff]
    %v2993 = vld [vmem:[#allocation3 + $0x120] sm:$0xff]
    %v2994 = vld [vmem:[#allocation3 + $0x128] sm:$0xff]
    %v2995 = vld [vmem:[#allocation3 + $0x130] sm:$0xff]
    %v2996 = vld [vmem:[#allocation3 + $0x138] sm:$0xff]
    %v2997 = vld [vmem:[#allocation3 + $0x140] sm:$0xff]
    %v2998 = vld [vmem:[#allocation3 + $0x148] sm:$0xff]
    %v2999 = vld [vmem:[#allocation3 + $0x150] sm:$0xff]
    %v3000 = vld [vmem:[#allocation3 + $0x158] sm:$0xff]
    %v3001 = vld [vmem:[#allocation3 + $0x160] sm:$0xff]
    %v3002 = vld [vmem:[#allocation3 + $0x168] sm:$0xff]
    %v3003 = vld [vmem:[#allocation3 + $0x170] sm:$0xff]
    %v3004 = vld [vmem:[#allocation3 + $0x178] sm:$0xff]
    %v3005 = vld [vmem:[#allocation3 + $0x180] sm:$0xff]
    %v3006 = vld [vmem:[#allocation3 + $0x188] sm:$0xff]
    %v3007 = vld [vmem:[#allocation3 + $0x190] sm:$0xff]
    %v3008 = vld [vmem:[#allocation3 + $0x198] sm:$0xff]
    %v3009 = vld [vmem:[#allocation3 + $0x1a0] sm:$0xff]
    %v3010 = vld [vmem:[#allocation3 + $0x1a8] sm:$0xff]
    %v3011 = vld [vmem:[#allocation3 + $0x1b0] sm:$0xff]
    %v3012 = vld [vmem:[#allocation3 + $0x1b8] sm:$0xff]
    %v3013 = vld [vmem:[#allocation3 + $0x1c0] sm:$0xff]
    %v3014 = vld [vmem:[#allocation3 + $0x1c8] sm:$0xff]
    %v3015 = vld [vmem:[#allocation3 + $0x1d0] sm:$0xff]
    %v3016 = vld [vmem:[#allocation3 + $0x1d8] sm:$0xff]
    %v3017 = vld [vmem:[#allocation3 + $0x1e0] sm:$0xff]
    %v3018 = vld [vmem:[#allocation3 + $0x1e8] sm:$0xff]
    %v3019 = vld [vmem:[#allocation3 + $0x1f0] sm:$0xff]
    %v3020 = vld [vmem:[#allocation3 + $0x1f8] sm:$0xff]
    %v3021 = vld [vmem:[#allocation3 + $0x200] sm:$0xff]
    %v3022 = vld [vmem:[#allocation3 + $0x208] sm:$0xff]
    %v3023 = vld [vmem:[#allocation3 + $0x210] sm:$0xff]
    %v3024 = vld [vmem:[#allocation3 + $0x218] sm:$0xff]
    %v3025 = vld [vmem:[#allocation3 + $0x220] sm:$0xff]
    %v3026 = vld [vmem:[#allocation3 + $0x228] sm:$0xff]
    %v3027 = vld [vmem:[#allocation3 + $0x230] sm:$0xff]
    %v3028 = vld [vmem:[#allocation3 + $0x238] sm:$0xff]
    %v3029 = vld [vmem:[#allocation3 + $0x240] sm:$0xff]
    %v3030 = vld [vmem:[#allocation3 + $0x248] sm:$0xff]
    %v3031 = vld [vmem:[#allocation3 + $0x250] sm:$0xff]
    %v3032 = vld [vmem:[#allocation3 + $0x258] sm:$0xff]
    %v3033 = vld [vmem:[#allocation3 + $0x260] sm:$0xff]
    %v3034 = vld [vmem:[#allocation3 + $0x268] sm:$0xff]
    %v3035 = vld [vmem:[#allocation3 + $0x270] sm:$0xff]
    %v3036 = vld [vmem:[#allocation3 + $0x278] sm:$0xff]
    %v3037 = vld [vmem:[#allocation3 + $0x280] sm:$0xff]
    %v3038 = vld [vmem:[#allocation3 + $0x288] sm:$0xff]
    %v3039 = vld [vmem:[#allocation3 + $0x290] sm:$0xff]
    %v3040 = vld [vmem:[#allocation3 + $0x298] sm:$0xff]
    %v3041 = vld [vmem:[#allocation3 + $0x2a0] sm:$0xff]
    %v3042 = vld [vmem:[#allocation3 + $0x2a8] sm:$0xff]
    %v3043 = vld [vmem:[#allocation3 + $0x2b0] sm:$0xff]
    %v3044 = vld [vmem:[#allocation3 + $0x2b8] sm:$0xff]
    %v3045 = vld [vmem:[#allocation3 + $0x2c0] sm:$0xff]
    %v3046 = vld [vmem:[#allocation3 + $0x2c8] sm:$0xff]
    %v3047 = vld [vmem:[#allocation3 + $0x2d0] sm:$0xff]
    %v3048 = vld [vmem:[#allocation3 + $0x2d8] sm:$0xff]
    %v3049 = vld [vmem:[#allocation3 + $0x2e0] sm:$0xff]
    %v3050 = vld [vmem:[#allocation3 + $0x2e8] sm:$0xff]
    %v3051 = vld [vmem:[#allocation3 + $0x2f0] sm:$0xff]
    %v3052 = vld [vmem:[#allocation3 + $0x2f8] sm:$0xff]
    %v3053 = vld [vmem:[#allocation3 + $0x300] sm:$0xff]
    %v3054 = vld [vmem:[#allocation3 + $0x308] sm:$0xff]
    %v3055 = vld [vmem:[#allocation3 + $0x310] sm:$0xff]
    %v3056 = vld [vmem:[#allocation3 + $0x318] sm:$0xff]
    %v3057 = vld [vmem:[#allocation3 + $0x320] sm:$0xff]
    %v3058 = vld [vmem:[#allocation3 + $0x328] sm:$0xff]
    %v3059 = vld [vmem:[#allocation3 + $0x330] sm:$0xff]
    %v3060 = vld [vmem:[#allocation3 + $0x338] sm:$0xff]
    %v3061 = vld [vmem:[#allocation3 + $0x340] sm:$0xff]
    %v3062 = vld [vmem:[#allocation3 + $0x348] sm:$0xff]
    %v3063 = vld [vmem:[#allocation3 + $0x350] sm:$0xff]
    %v3064 = vld [vmem:[#allocation3 + $0x358] sm:$0xff]
    %v3066 = vsel %vm2204, %v2954, 0
    %v3069 = vsel %vm2204, %v2956, 0
    %3071 = vmatprep.subr.mxu0 %v3018
    %3072 = vmatpush1.msra.mxu0 %v3017
    %3073 = vmatprep.subr.mxu0 %v3014
    %3074 = vmatpush1.msra.mxu0 %v3013
    %3075 = vmatprep.subr.mxu0 %v3010
    %3076 = vmatpush1.msra.mxu0 %v3009
    %3077 = vmatprep.subr.mxu0 %v3006
    %3078 = vmatpush1.msra.mxu0 %v3005
    %3079 = vmatprep.subr.mxu0 %v3002
    %3080 = vmatpush1.msra.mxu0 %v3001
    %3081 = vmatprep.subr.mxu0 %v2998
    %3082 = vmatpush1.msra.mxu0 %v2997
    %3083 = vmatprep.subr.mxu0 %v2994
    %3084 = vmatpush1.msra.mxu0 %v2993
    %3085 = vmatprep.subr.mxu0 %v2990
    %3086 = vmatpush1.msra.mxu0 %v2989
    %3087 = vmatprep.subr.mxu0 %v2986
    %3088 = vmatpush1.msra.mxu0 %v2985
    %3089 = vmatprep.subr.mxu0 %v2982
    %3090 = vmatpush1.msra.mxu0 %v2981
    %3091 = vmatprep.subr.mxu0 %v2978
    %3092 = vmatpush1.msra.mxu0 %v2977
    %3093 = vmatprep.subr.mxu0 %v2974
    %3094 = vmatpush1.msra.mxu0 %v2973
    %3095 = vmatprep.subr.mxu0 %v2970
    %3096 = vmatpush1.msra.mxu0 %v2969
    %3097 = vmatprep.subr.mxu0 %v2966
    %3098 = vmatpush1.msra.mxu0 %v2965
    %3099 = vmatprep.subr.mxu0 %v2962
    %3100 = vmatpush1.msra.mxu0 %v2961
    %3101 = vmatprep.subr.mxu0 %v2958
    %3102 = vmatpush1.msra.mxu0 %v2957
    %3103 = vmatprep.subr.mxu0 0.0
    %3104 = vmatpush2.msra.mxu0 0.0
    %3105 = vmatprep.subr.mxu0 0.0
    %3106 = vmatpush2.msra.mxu0 0.0
    %3107 = vmatprep.subr.mxu0 0.0
    %3108 = vmatpush2.msra.mxu0 0.0
    %3109 = vmatprep.subr.mxu0 0.0
    %3110 = vmatpush2.msra.mxu0 0.0
    %3111 = vmatprep.subr.mxu0 0.0
    %3112 = vmatpush2.msra.mxu0 0.0
    %3113 = vmatprep.subr.mxu0 %v3062
    %3114 = vmatpush2.msra.mxu0 %v3061
    %3115 = vmatprep.subr.mxu0 %v3058
    %3116 = vmatpush2.msra.mxu0 %v3057
    %3117 = vmatprep.subr.mxu0 %v3054
    %3118 = vmatpush2.msra.mxu0 %v3053
    %3119 = vmatprep.subr.mxu0 %v3050
    %3120 = vmatpush2.msra.mxu0 %v3049
    %3121 = vmatprep.subr.mxu0 %v3046
    %3122 = vmatpush2.msra.mxu0 %v3045
    %3123 = vmatprep.subr.mxu0 %v3042
    %3124 = vmatpush2.msra.mxu0 %v3041
    %3125 = vmatprep.subr.mxu0 %v3038
    %3126 = vmatpush2.msra.mxu0 %v3037
    %3127 = vmatprep.subr.mxu0 %v3034
    %3128 = vmatpush2.msra.mxu0 %v3033
    %3129 = vmatprep.subr.mxu0 %v3030
    %3130 = vmatpush2.msra.mxu0 %v3029
    %3131 = vmatprep.subr.mxu0 %v3026
    %3132 = vmatpush2.msra.mxu0 %v3025
    %3133 = vmatprep.subr.mxu0 %v3022
    %3134 = vmatpush2.msra.mxu0 %v3021
    %3135 = vmatprep.mubr.f32.mxu0 %v3066
    %3136 = vmatmul.mubr.f32.gmra.mxu0 %v2953
    %v3137 = vpop.f32.mrf.mxu0
    %v3138 = vadd.f32 0.0, %v3137
    %v3139 = vpop.f32.mrf.mxu0
    %v3140 = vadd.f32 0.0, %v3139
    %3141 = vmatprep.mubr.f32.mxu0 %v3069
    %3142 = vmatmul.mubr.f32.gmra.mxu0 %v2955
    %v3143 = vpop.f32.mrf.mxu0
    %v3144 = vadd.f32 0.0, %v3143
    %v3145 = vpop.f32.mrf.mxu0
    %v3146 = vadd.f32 0.0, %v3145
    %3147 = vdwg.mxu0
    %3148 = vmatprep.subr.mxu0 %v3020
    %3149 = vmatpush1.msra.mxu0 %v3019
    %3150 = vmatprep.subr.mxu0 %v3016
    %3151 = vmatpush1.msra.mxu0 %v3015
    %3152 = vmatprep.subr.mxu0 %v3012
    %3153 = vmatpush1.msra.mxu0 %v3011
    %3154 = vmatprep.subr.mxu0 %v3008
    %3155 = vmatpush1.msra.mxu0 %v3007
    %3156 = vmatprep.subr.mxu0 %v3004
    %3157 = vmatpush1.msra.mxu0 %v3003
    %3158 = vmatprep.subr.mxu0 %v3000
    %3159 = vmatpush1.msra.mxu0 %v2999
    %3160 = vmatprep.subr.mxu0 %v2996
    %3161 = vmatpush1.msra.mxu0 %v2995
    %3162 = vmatprep.subr.mxu0 %v2992
    %3163 = vmatpush1.msra.mxu0 %v2991
    %3164 = vmatprep.subr.mxu0 %v2988
    %3165 = vmatpush1.msra.mxu0 %v2987
    %3166 = vmatprep.subr.mxu0 %v2984
    %3167 = vmatpush1.msra.mxu0 %v2983
    %3168 = vmatprep.subr.mxu0 %v2980
    %3169 = vmatpush1.msra.mxu0 %v2979
    %3170 = vmatprep.subr.mxu0 %v2976
    %3171 = vmatpush1.msra.mxu0 %v2975
    %3172 = vmatprep.subr.mxu0 %v2972
    %3173 = vmatpush1.msra.mxu0 %v2971
    %3174 = vmatprep.subr.mxu0 %v2968
    %3175 = vmatpush1.msra.mxu0 %v2967
    %3176 = vmatprep.subr.mxu0 %v2964
    %3177 = vmatpush1.msra.mxu0 %v2963
    %3178 = vmatprep.subr.mxu0 %v2960
    %3179 = vmatpush1.msra.mxu0 %v2959
    %3180 = vmatprep.subr.mxu0 0.0
    %3181 = vmatpush2.msra.mxu0 0.0
    %3182 = vmatprep.subr.mxu0 0.0
    %3183 = vmatpush2.msra.mxu0 0.0
    %3184 = vmatprep.subr.mxu0 0.0
    %3185 = vmatpush2.msra.mxu0 0.0
    %3186 = vmatprep.subr.mxu0 0.0
    %3187 = vmatpush2.msra.mxu0 0.0
    %3188 = vmatprep.subr.mxu0 0.0
    %3189 = vmatpush2.msra.mxu0 0.0
    %3190 = vmatprep.subr.mxu0 %v3064
    %3191 = vmatpush2.msra.mxu0 %v3063
    %3192 = vmatprep.subr.mxu0 %v3060
    %3193 = vmatpush2.msra.mxu0 %v3059
    %3194 = vmatprep.subr.mxu0 %v3056
    %3195 = vmatpush2.msra.mxu0 %v3055
    %3196 = vmatprep.subr.mxu0 %v3052
    %3197 = vmatpush2.msra.mxu0 %v3051
    %3198 = vmatprep.subr.mxu0 %v3048
    %3199 = vmatpush2.msra.mxu0 %v3047
    %3200 = vmatprep.subr.mxu0 %v3044
    %3201 = vmatpush2.msra.mxu0 %v3043
    %3202 = vmatprep.subr.mxu0 %v3040
    %3203 = vmatpush2.msra.mxu0 %v3039
    %3204 = vmatprep.subr.mxu0 %v3036
    %3205 = vmatpush2.msra.mxu0 %v3035
    %3206 = vmatprep.subr.mxu0 %v3032
    %3207 = vmatpush2.msra.mxu0 %v3031
    %3208 = vmatprep.subr.mxu0 %v3028
    %3209 = vmatpush2.msra.mxu0 %v3027
    %3210 = vmatprep.subr.mxu0 %v3024
    %3211 = vmatpush2.msra.mxu0 %v3023
    %3212 = vmatprep.mubr.f32.mxu0 %v3066
    %3213 = vmatmul.mubr.f32.gmra.mxu0 %v2953
    %v3214 = vpop.f32.mrf.mxu0
    %v3215 = vadd.f32 0.0, %v3214
    %v3216 = vpop.f32.mrf.mxu0
    %v3217 = vadd.f32 0.0, %v3216
    %3218 = vmatprep.mubr.f32.mxu0 %v3069
    %3219 = vmatmul.mubr.f32.gmra.mxu0 %v2955
    %v3220 = vpop.f32.mrf.mxu0
    %v3221 = vadd.f32 0.0, %v3220
    %v3222 = vpop.f32.mrf.mxu0
    %v3223 = vadd.f32 0.0, %v3222
    %3224 = vdwg.mxu0
    %v3225 = vadd.f32 %v3138, %v3140
    %v3226 = vadd.f32 %v3225, %v3215
    %v3227 = vadd.f32 %v3226, %v3217
    %3228 = vadd.xlane.f32.xlu0 %v3227
    %v3229 = vpop.xlane.xlu0 %3228
    %v3230 = vsel %vm90, %v3144, 0.0
    %v3231 = vsel %vm90, %v3146, 0.0
    %v3232 = vadd.f32 %v3230, %v3231
    %v3233 = vsel %vm90, %v3221, 0.0
    %v3234 = vadd.f32 %v3232, %v3233
    %v3235 = vsel %vm90, %v3223, 0.0
    %v3236 = vadd.f32 %v3234, %v3235
    %3237 = vadd.xlane.f32.xlu0 %v3236
    %v3238 = vpop.xlane.xlu0 %3237
    %v3239 = vmul.f32 %v3229, 0.001953125
    %v3240 = vmul.f32 %v3238, 0.001953125
    %v3241 = vsub.f32 %v3138, %v3239
    %v3242 = vsub.f32 %v3140, %v3239
    %v3243 = vsub.f32 %v3215, %v3239
    %v3244 = vsub.f32 %v3217, %v3239
    %v3245 = vsub.f32 %v3144, %v3240
    %v3246 = vsub.f32 %v3146, %v3240
    %v3247 = vsub.f32 %v3221, %v3240
    %v3248 = vsub.f32 %v3223, %v3240
    %v3249 = vmul.f32 %v3241, %v3241
    %v3250 = vmul.f32 %v3242, %v3242
    %v3251 = vmul.f32 %v3243, %v3243
    %v3252 = vmul.f32 %v3244, %v3244
    %v3253 = vmul.f32 %v3245, %v3245
    %v3254 = vmul.f32 %v3246, %v3246
    %v3255 = vmul.f32 %v3247, %v3247
    %v3256 = vmul.f32 %v3248, %v3248
    %v3257 = vadd.f32 %v3249, %v3250
    %v3258 = vadd.f32 %v3257, %v3251
    %v3259 = vadd.f32 %v3258, %v3252
    %3260 = vadd.xlane.f32.xlu0 %v3259
    %v3261 = vpop.xlane.xlu0 %3260
    %v3262 = vsel %vm90, %v3253, 0.0
    %v3263 = vsel %vm90, %v3254, 0.0
    %v3264 = vadd.f32 %v3262, %v3263
    %v3265 = vsel %vm90, %v3255, 0.0
    %v3266 = vadd.f32 %v3264, %v3265
    %v3267 = vsel %vm90, %v3256, 0.0
    %v3268 = vadd.f32 %v3266, %v3267
    %3269 = vadd.xlane.f32.xlu0 %v3268
    %v3270 = vpop.xlane.xlu0 %3269
    %v3271 = vmul.f32 %v3261, 0.001953125
    %v3272 = vmul.f32 %v3270, 0.001953125
    %v3273 = vld [vmem:[%s5] sm:$0xff]
    %v3274 = vld [vmem:[%s5 + $0x8] sm:$0x3]
    %v3275 = vadd.f32 %v3271, 1e-05
    %v3276 = vadd.f32 %v3272, 1e-05
    %v3277 = vrsqrt.pop %v3275
    %v3278 = vrsqrt.pop %v3276
    %v3279 = vmul.f32 %v3273, %v3277
    %v3280 = vmul.f32 %v3274, %v3278
    %3282 = vset.pattern.permute.xlu0 0
    %3283 = vperm.xlu0 %3282, %v3279
    %v3284 = vpop.permute.xlu0 %3283
    %3287 = vset.pattern.permute.xlu0 0
    %3288 = vperm.xlu0 %3287, %v3280
    %v3289 = vpop.permute.xlu0 %3288
    %v3291 = vmul.f32 %v3241, %v3284
    %v3292 = vmul.f32 %v3242, %v3284
    %v3293 = vmul.f32 %v3243, %v3284
    %v3294 = vmul.f32 %v3244, %v3284
    %v3295 = vmul.f32 %v3245, %v3289
    %v3296 = vmul.f32 %v3246, %v3289
    %v3297 = vmul.f32 %v3247, %v3289
    %v3298 = vmul.f32 %v3248, %v3289
    %3300 = vset.pattern.permute.xlu0 1
    %3301 = vperm.xlu0 %3300, %v3273
    %v3302 = vpop.permute.xlu0 %3301
    %3305 = vset.pattern.permute.xlu0 1
    %3306 = vperm.xlu0 %3305, %v3274
    %v3307 = vpop.permute.xlu0 %3306
    %v3309 = vadd.f32 %v3291, %v3302
    %v3310 = vadd.f32 %v3292, %v3302
    %v3311 = vadd.f32 %v3293, %v3302
    %v3312 = vadd.f32 %v3294, %v3302
    %v3313 = vadd.f32 %v3295, %v3307
    %v3314 = vadd.f32 %v3296, %v3307
    %v3315 = vadd.f32 %v3297, %v3307
    %v3316 = vadd.f32 %v3298, %v3307
    %v3317 = vmax.f32 %v3309, 0.0
    %v3318 = vmax.f32 %v3310, 0.0
    %v3319 = vmax.f32 %v3311, 0.0
    %v3320 = vmax.f32 %v3312, 0.0
    %v3321 = vxor.u32 %v3313, 2147483648
    %v3322 = vxor.u32 %v3314, 2147483648
    %v3323 = vxor.u32 %v3315, 2147483648
    %v3324 = vxor.u32 %v3316, 2147483648
    %v3325 = vmul.f32 %v3321, 1.442695
    %v3326 = vpow.pop %v3325
    %v3327 = vmul.f32 %v3322, 1.442695
    %v3328 = vpow.pop %v3327
    %v3329 = vmul.f32 %v3323, 1.442695
    %v3330 = vpow.pop %v3329
    %v3331 = vmul.f32 %v3324, 1.442695
    %v3332 = vpow.pop %v3331
    %v3333 = vadd.f32 %v3326, 1.0
    %v3334 = vadd.f32 %v3328, 1.0
    %v3335 = vadd.f32 %v3330, 1.0
    %v3336 = vadd.f32 %v3332, 1.0
    %v3337 = vrcp.pop %v3333
    %v3338 = vmul.f32 1.0, %v3337
    %v3339 = vrcp.pop %v3334
    %v3340 = vmul.f32 1.0, %v3339
    %v3341 = vrcp.pop %v3335
    %v3342 = vmul.f32 1.0, %v3341
    %v3343 = vrcp.pop %v3336
    %v3344 = vmul.f32 1.0, %v3343
    %v3345 = vlaneseq
    %v3346 = vshrl.u32 %v3345, 7
    %v3347 = vsub.s32 0, %v3346
    %v3348 = vrot.slane %v3338, %v3347
    %v3349 = vlaneseq
    %v3350 = vshrl.u32 %v3349, 7
    %v3351 = vsub.s32 0, %v3350
    %v3352 = vrot.slane %v3340, %v3351
    %v3353 = vlaneseq
    %v3354 = vshrl.u32 %v3353, 7
    %v3355 = vsub.s32 0, %v3354
    %v3356 = vrot.slane %v3342, %v3355
    %v3357 = vlaneseq
    %v3358 = vshrl.u32 %v3357, 7
    %v3359 = vsub.s32 0, %v3358
    %v3360 = vrot.slane %v3344, %v3359
    %v3361 = vmul.f32 %v3309, %v3348
    %v3362 = vmul.f32 %v3310, %v3352
    %v3363 = vmul.f32 %v3311, %v3356
    %v3364 = vmul.f32 %v3312, %v3360
    %v3365 = vlaneseq
    %v3366 = vshrl.u32 %v3365, 7
    %v3367 = vsub.s32 1, %v3366
    %v3368 = vrot.slane %v3338, %v3367
    %v3369 = vlaneseq
    %v3370 = vshrl.u32 %v3369, 7
    %v3371 = vsub.s32 1, %v3370
    %v3372 = vrot.slane %v3340, %v3371
    %v3373 = vlaneseq
    %v3374 = vshrl.u32 %v3373, 7
    %v3375 = vsub.s32 1, %v3374
    %v3376 = vrot.slane %v3342, %v3375
    %v3377 = vlaneseq
    %v3378 = vshrl.u32 %v3377, 7
    %v3379 = vsub.s32 1, %v3378
    %v3380 = vrot.slane %v3344, %v3379
    %v3381 = vmul.f32 %v3309, %v3368
    %v3382 = vmul.f32 %v3310, %v3372
    %v3383 = vmul.f32 %v3311, %v3376
    %v3384 = vmul.f32 %v3312, %v3380
    %v3385 = vsel %vm90, %v3317, %v3361
    %v3386 = vsel %vm90, %v3318, %v3362
    %v3387 = vsel %vm90, %v3319, %v3363
    %v3388 = vsel %vm90, %v3320, %v3364
    %v3389 = vsel %vm788, %v3385, %v3381
    %v3390 = vsel %vm788, %v3386, %v3382
    %v3391 = vsel %vm788, %v3387, %v3383
    %v3392 = vsel %vm788, %v3388, %v3384
    %3393 = vst [vmem:[%s8] sm:$0xff] %v3389
    %3394 = vst [vmem:[%s8 + $0x8] sm:$0xff] %v3390
    %3395 = vst [vmem:[%s8 + $0x10] sm:$0xff] %v3391
    %3396 = vst [vmem:[%s8 + $0x18] sm:$0xff] %v3392
  $region33: #{feature_steering_forward.1} parent=0 // pred_fallthru
    _
  // Predicated region
  $region34: #{feature_steering_forward.1} parent=0 // pred_check
    _
  $region35: #{feature_steering_forward.1} parent=0 // pred_check_branch
    %3398 = sbr.rel (0) target = $region37
  $region36: #{feature_steering_forward.1} parent=0 // pred_region
    _
  $region37: #{feature_steering_forward.1} parent=0 // pred_fallthru
    _
  // Predicated region
  $region38: #{feature_steering_forward.1} parent=0 // pred_check
    _
  $region39: #{feature_steering_forward.1} parent=0 // pred_check_branch
    %3400 = sbr.rel (0) target = $region41
  $region40: #{feature_steering_forward.1} parent=0 // pred_region
    _
  $region41: #{feature_steering_forward.1} parent=0 // pred_fallthru
    _
  // Predicated region
  $region42: #{feature_steering_forward.1} parent=0 // pred_check
    _
  $region43: #{feature_steering_forward.1} parent=0 // pred_check_branch
    %3402 = sbr.rel (0) target = $region45
  $region44: #{feature_steering_forward.1} parent=0 // pred_region
    _
  $region45: #{feature_steering_forward.1} parent=0 // pred_fallthru
    _
  // Predicated region
  $region46: #{feature_steering_forward.1} parent=0 // pred_check
    _
  $region47: #{feature_steering_forward.1} parent=0 // pred_check_branch
    %3404 = sbr.rel (0) target = $region49
  $region48: #{feature_steering_forward.1} parent=0 // pred_region
    _
  $region49: #{feature_steering_forward.1} parent=0 // pred_fallthru
    _
  // Predicated region
  $region50: #{feature_steering_forward.1} parent=0 // pred_check
    _
  $region51: #{feature_steering_forward.1} parent=0 // pred_check_branch
    %3406 = sbr.rel (0) target = $region53
  $region52: #{feature_steering_forward.1} parent=0 // pred_region
    _
  $region53: #{feature_steering_forward.1} parent=0 // pred_fallthru
    _
  // Predicated region
  $region54: #{feature_steering_forward.1} parent=0 // pred_check
    _
  $region55: #{feature_steering_forward.1} parent=0 // pred_check_branch
    %3408 = sbr.rel (0) target = $region57
  $region56: #{feature_steering_forward.1} parent=0 // pred_region
    _
  $region57: #{feature_steering_forward.1} parent=0 // pred_fallthru
    _

</llo_original>
